<compile_context>
chip_gen: v7x
topology: tpu7x:2x2x1
jax: 0.10.0
libtpu: 0.0.40
codegen_flags: <defaults>
</compile_context>

<pallas_src>
import functools

import jax
import jax.numpy as jnp
from jax.experimental import pallas as pl
from jax.experimental.pallas import tpu as pltpu


def _cdiv(a, b):
    return (a + b - 1) // b


def _round_up(a, b):
    return _cdiv(a, b) * b


# -----------------------------------------------------------------------------
# Kernel: full VAE forward for one batch tile (weights resident across tiles)
# -----------------------------------------------------------------------------
def vae_kernel(
    x_ref, eps_ref,
    w1_ref, b1_ref, w2_ref, b2_ref, w3_ref, b3_ref, w4_ref, b4_ref,
    w5_ref, b5_ref, w6_ref, b6_ref, w7_ref, b7_ref, w8_ref, b8_ref,
    recon_ref, mlz_ref,
    *, z_dim, mlz_pad,
):
    x = x_ref[...]                                  # already bf16

    def linear(h, w_ref, b_ref):
        # bf16 x bf16 on the MXU, f32 accumulate, f32 bias add.
        return jnp.dot(h.astype(jnp.bfloat16), w_ref[...],
                       preferred_element_type=jnp.float32) + b_ref[...]

    def relu_bf16(a):
        # ReLU in f32 on the VPU (no bf16 VPU on v5e), cast only at the
        # spill boundary so layer-to-layer intermediates live as bf16.
        return jnp.maximum(a, 0.0).astype(jnp.bfloat16)

    # ---- Encoder ----
    h1 = relu_bf16(linear(x, w1_ref, b1_ref))       # (tm, 1024) bf16
    h2 = relu_bf16(linear(h1, w2_ref, b2_ref))      # (tm, 512)  bf16
    h3 = relu_bf16(linear(h2, w3_ref, b3_ref))      # (tm, 256)  bf16
    head = linear(h3, w4_ref, b4_ref)               # (tm, 2*z_dim) f32 = [mu | logvar]
    mu = head[:, :z_dim]
    logvar = head[:, z_dim:]

    # ---- Reparametrize: z = mu + exp(0.5*logvar) * eps  (f32) ----
    eps = eps_ref[:, :z_dim]                        # eps is lane-padded to 128
    z = mu + jnp.exp(0.5 * logvar) * eps

    # ---- Decoder ----
    d1 = relu_bf16(linear(z, w5_ref, b5_ref))       # (tm, 256)  bf16
    d2 = relu_bf16(linear(d1, w6_ref, b6_ref))      # (tm, 512)  bf16
    d3 = relu_bf16(linear(d2, w7_ref, b7_ref))      # (tm, 1024) bf16
    h4 = linear(d3, w8_ref, b8_ref)                 # (tm, out_dim*out_nc) f32

    # sigmoid via tanh (EUP), numerically stable.
    recon_ref[...] = 0.5 * (jnp.tanh(0.5 * h4) + 1.0)

    # Pack mu | logvar | z into fixed lane sub-ranges of a 128-lane-dense slab.
    mlz_ref[:, :2 * z_dim] = head
    mlz_ref[:, 2 * z_dim:3 * z_dim] = z
    if mlz_pad:                                     # static python branch
        mlz_ref[:, 3 * z_dim:] = jnp.zeros((head.shape[0], mlz_pad), jnp.float32)


# -----------------------------------------------------------------------------
# Batch tile selection (megacore-aware, VMEM-bounded, padding-friendly)
# -----------------------------------------------------------------------------
def _choose_batch_tile(B):
    """Return (tile_m, padded_B).

    * B <= 128 : one padded tile (sublane multiple of 8).
    * 128 < B < 256 : two tiles so both v7x TensorCores get work.
    * B >= 256 : tile in {512, 256, 128}; prefer least padding, then an even
      step count (v7x megacore), then the largest tile (amortizes the ~0.35us
      per-step overhead on v6e's big VMEM). Cap at 512 keeps VMEM bounded on
      v7x's 64 MiB.
    """
    if B <= 128:
        tile = _round_up(max(B, 8), 8)
        return tile, tile
    if B < 256:
        tile = _round_up(_cdiv(B, 2), 8)
        return tile, 2 * tile
    best_key, best_tile, best_steps = None, None, None
    for t in (512, 256, 128):
        steps = _cdiv(B, t)
        if steps < 2:
            continue
        pad = steps * t - B
        key = (pad, steps % 2, -t)   # least pad, then even steps, then larger tile
        if best_key is None or key < best_key:
            best_key, best_tile, best_steps = key, t, steps
    return best_tile, best_steps * best_tile


# -----------------------------------------------------------------------------
# Wrapper
# -----------------------------------------------------------------------------
def vae_forward(x, eps, params, *, tile_m=None):
    """x: (B, input_dim*in_nc) f32, eps: (B, z_dim) f32.

    params: prepared flat list [w1,b1,...,w8,b8] with the fc41/fc42 head fused
    into (w4, b4); weights bf16 (in, out), biases f32 (1, out)."""
    B, in_features = x.shape
    z_dim = eps.shape[1]
    out_features = params[-1].shape[1]          # b8 is (1, out_dim*out_nc)

    if tile_m is None:
        tile_m, padded_B = _choose_batch_tile(B)
    else:
        padded_B = _round_up(B, tile_m)
    grid = (padded_B // tile_m,)

    # Lane-dense shapes for the small-lane tensors.
    z_lanes = _round_up(z_dim, 128)
    mlz_lanes = _round_up(3 * z_dim, 128)
    mlz_pad = mlz_lanes - 3 * z_dim

    # Cast x to bf16 (kernel consumes bf16 anyway) and zero-pad batch / lanes.
    x_bf16 = x.astype(jnp.bfloat16)
    if padded_B != B:
        x_bf16 = jnp.pad(x_bf16, ((0, padded_B - B), (0, 0)))
    eps_p = jnp.pad(eps, ((0, padded_B - B), (0, z_lanes - z_dim)))

    def batch_spec(feat):
        return pl.BlockSpec((tile_m, feat), lambda i: (i, 0))

    def const_spec(shape):
        # Constant block index -> the array is DMA'd once and stays resident.
        return pl.BlockSpec(shape, lambda i: (0, 0))

    in_specs = [batch_spec(in_features), batch_spec(z_lanes)]
    in_specs += [const_spec(p.shape) for p in params]
    out_specs = [batch_spec(out_features), batch_spec(mlz_lanes)]

    # Advisory cost estimate (memory-bound; weight bytes dominate at small B).
    weights = params[0::2]
    flops = int(2 * padded_B * sum(w.shape[0] * w.shape[1] for w in weights))
    bytes_accessed = int(
        sum(p.size * p.dtype.itemsize for p in params)
        + x_bf16.size * 2 + eps_p.size * 4
        + padded_B * (out_features + mlz_lanes) * 4
    )
    transcendentals = int(padded_B * (z_dim + out_features))

    kernel = pl.pallas_call(
        functools.partial(vae_kernel, z_dim=z_dim, mlz_pad=mlz_pad),
        out_shape=(
            jax.ShapeDtypeStruct((padded_B, out_features), jnp.float32),  # recon_x
            jax.ShapeDtypeStruct((padded_B, mlz_lanes), jnp.float32),     # mu|logvar|z|pad
        ),
        grid_spec=pltpu.PrefetchScalarGridSpec(
            num_scalar_prefetch=0,
            grid=grid,
            in_specs=in_specs,
            out_specs=out_specs,
        ),
        compiler_params=pltpu.CompilerParams(
            dimension_semantics=("parallel",),
            vmem_limit_bytes=48 << 20,   # < v7x's 64 MiB physical VMEM
        ),
        cost_estimate=pl.CostEstimate(
            flops=flops, transcendentals=transcendentals,
            bytes_accessed=bytes_accessed),
    )
    recon_p, mlz_p = kernel(x_bf16, eps_p, *params)

    recon = recon_p[:B]
    mu = mlz_p[:B, :z_dim]
    logvar = mlz_p[:B, z_dim:2 * z_dim]
    z = mlz_p[:B, 2 * z_dim:3 * z_dim]
    return recon, mu, logvar, z


def init_params(key, input_dim, in_nc, out_nc, z_dim):
    """Deterministic synthetic weights matching the PyTorch module's Linear shapes.

    Each nn.Linear(in_f, out_f) becomes (W: (in_f, out_f) f32, b: (1, out_f) f32)."""
    shapes = [
        (input_dim * in_nc, 1024),   # fc1
        (1024, 512),                 # fc2
        (512, 256),                  # fc3
        (256, z_dim),                # fc41
        (256, z_dim),                # fc42
        (z_dim, 256),                # fc5
        (256, 512),                  # fc6
        (512, 1024),                 # fc7
        (1024, input_dim * out_nc),  # fc8
    ]
    params = []
    for i, (fin, fout) in enumerate(shapes):
        kw, kb = jax.random.split(jax.random.fold_in(key, i))
        scale = 1.0 / jnp.sqrt(jnp.float32(fin))
        w = jax.random.uniform(kw, (fin, fout), jnp.float32, -scale, scale)
        b = jax.random.uniform(kb, (1, fout), jnp.float32, -scale, scale)
        params += [w, b]
    return params


def prepare_params(raw_params):
    """Fuse fc41/fc42 into one head and cast weights to bf16 (biases stay f32)."""
    (w1, b1, w2, b2, w3, b3, w41, b41, w42, b42,
     w5, b5, w6, b6, w7, b7, w8, b8) = raw_params
    w4 = jnp.concatenate([w41, w42], axis=1)
    b4 = jnp.concatenate([b41, b42], axis=1)
    weights = [w1, w2, w3, w4, w5, w6, w7, w8]
    biases = [b1, b2, b3, b4, b5, b6, b7, b8]
    out = []
    for w, b in zip(weights, biases):
        out += [w.astype(jnp.bfloat16), b.astype(jnp.float32)]
    return out


def vae_reference(x, eps, params):
    """Plain-JAX reference mirroring the kernel math (bf16 matmuls, f32 accumulate)."""
    (w1, b1, w2, b2, w3, b3, w4, b4,
     w5, b5, w6, b6, w7, b7, w8, b8) = params
    z_dim = eps.shape[1]

    def linear(h, w, b):
        return jnp.dot(h.astype(jnp.bfloat16), w,
                       preferred_element_type=jnp.float32) + b

    def relu_bf16(a):
        return jnp.maximum(a, 0.0).astype(jnp.bfloat16)

    h1 = relu_bf16(linear(x, w1, b1))
    h2 = relu_bf16(linear(h1, w2, b2))
    h3 = relu_bf16(linear(h2, w3, b3))
    head = linear(h3, w4, b4)
    mu, logvar = head[:, :z_dim], head[:, z_dim:]
    z = mu + jnp.exp(0.5 * logvar) * eps
    d1 = relu_bf16(linear(z, w5, b5))
    d2 = relu_bf16(linear(d1, w6, b6))
    d3 = relu_bf16(linear(d2, w7, b7))
    h4 = linear(d3, w8, b8)
    recon = 0.5 * (jnp.tanh(0.5 * h4) + 1.0)
    return recon, mu, logvar, z


if __name__ == "__main__":
    # Small shapes consistent with the module defaults.
    B = 8
    input_dim = 256
    in_nc = 2
    out_nc = 2
    z_dim = 32

    key = jax.random.PRNGKey(0)
    k_x, k_eps, k_p = jax.random.split(key, 3)

    x = jax.random.normal(k_x, (B, input_dim * in_nc), dtype=jnp.float32)
    eps = jax.random.normal(k_eps, (B, z_dim), dtype=jnp.float32)
    raw_params = init_params(k_p, input_dim, in_nc, out_nc, z_dim)
    params = prepare_params(raw_params)

    recon_x, mu, logvar, z = vae_forward(x, eps, params)
    jax.block_until_ready((recon_x, mu, logvar, z))

    # Sanity check against pure-JAX reference (same bf16 weight/activation math).
    r_ref, mu_ref, lv_ref, z_ref = vae_reference(x, eps, params)
    assert recon_x.shape == (B, input_dim * out_nc)
    assert mu.shape == (B, z_dim) and logvar.shape == (B, z_dim) and z.shape == (B, z_dim)
    for a, b in ((recon_x, r_ref), (mu, mu_ref), (logvar, lv_ref), (z, z_ref)):
        assert jnp.allclose(a, b, atol=5e-3, rtol=5e-3)

    print("KERNEL_OK")
</pallas_src>

<mosaic_0001>
module attributes {stable_mosaic.version = 11 : i64} {
  func.func @vae_kernel(%arg0: i32, %arg1: memref<8x512xbf16, #tpu.memory_space<vmem>>, %arg2: memref<8x128xf32, #tpu.memory_space<vmem>>, %arg3: memref<512x1024xbf16, #tpu.memory_space<vmem>>, %arg4: memref<1x1024xf32, #tpu.memory_space<vmem>>, %arg5: memref<1024x512xbf16, #tpu.memory_space<vmem>>, %arg6: memref<1x512xf32, #tpu.memory_space<vmem>>, %arg7: memref<512x256xbf16, #tpu.memory_space<vmem>>, %arg8: memref<1x256xf32, #tpu.memory_space<vmem>>, %arg9: memref<256x64xbf16, #tpu.memory_space<vmem>>, %arg10: memref<1x64xf32, #tpu.memory_space<vmem>>, %arg11: memref<32x256xbf16, #tpu.memory_space<vmem>>, %arg12: memref<1x256xf32, #tpu.memory_space<vmem>>, %arg13: memref<256x512xbf16, #tpu.memory_space<vmem>>, %arg14: memref<1x512xf32, #tpu.memory_space<vmem>>, %arg15: memref<512x1024xbf16, #tpu.memory_space<vmem>>, %arg16: memref<1x1024xf32, #tpu.memory_space<vmem>>, %arg17: memref<1024x512xbf16, #tpu.memory_space<vmem>>, %arg18: memref<1x512xf32, #tpu.memory_space<vmem>>, %arg19: memref<8x512xf32, #tpu.memory_space<vmem>>, %arg20: memref<8x128xf32, #tpu.memory_space<vmem>>) attributes {dimension_semantics = [#tpu.dimension_semantics<parallel>], iteration_bounds = array<i64: 1>, scalar_prefetch = 0 : i64, scratch_operands = 0 : i64, tpu.core_type = #tpu.core_type<tc>, window_params = [{transform_indices = @transform_0, window_bounds = array<i64: 8, 512>}, {transform_indices = @transform_1, window_bounds = array<i64: 8, 128>}, {pipeline_mode = #tpu.pipeline_mode<synchronous>, transform_indices = @transform_2, window_bounds = array<i64: 512, 1024>}, {pipeline_mode = #tpu.pipeline_mode<synchronous>, transform_indices = @transform_3, window_bounds = array<i64: 1, 1024>}, {pipeline_mode = #tpu.pipeline_mode<synchronous>, transform_indices = @transform_4, window_bounds = array<i64: 1024, 512>}, {pipeline_mode = #tpu.pipeline_mode<synchronous>, transform_indices = @transform_5, window_bounds = array<i64: 1, 512>}, {pipeline_mode = #tpu.pipeline_mode<synchronous>, transform_indices = @transform_6, window_bounds = array<i64: 512, 256>}, {pipeline_mode = #tpu.pipeline_mode<synchronous>, transform_indices = @transform_7, window_bounds = array<i64: 1, 256>}, {pipeline_mode = #tpu.pipeline_mode<synchronous>, transform_indices = @transform_8, window_bounds = array<i64: 256, 64>}, {pipeline_mode = #tpu.pipeline_mode<synchronous>, transform_indices = @transform_9, window_bounds = array<i64: 1, 64>}, {pipeline_mode = #tpu.pipeline_mode<synchronous>, transform_indices = @transform_10, window_bounds = array<i64: 32, 256>}, {pipeline_mode = #tpu.pipeline_mode<synchronous>, transform_indices = @transform_11, window_bounds = array<i64: 1, 256>}, {pipeline_mode = #tpu.pipeline_mode<synchronous>, transform_indices = @transform_12, window_bounds = array<i64: 256, 512>}, {pipeline_mode = #tpu.pipeline_mode<synchronous>, transform_indices = @transform_13, window_bounds = array<i64: 1, 512>}, {pipeline_mode = #tpu.pipeline_mode<synchronous>, transform_indices = @transform_14, window_bounds = array<i64: 512, 1024>}, {pipeline_mode = #tpu.pipeline_mode<synchronous>, transform_indices = @transform_15, window_bounds = array<i64: 1, 1024>}, {pipeline_mode = #tpu.pipeline_mode<synchronous>, transform_indices = @transform_16, window_bounds = array<i64: 1024, 512>}, {pipeline_mode = #tpu.pipeline_mode<synchronous>, transform_indices = @transform_17, window_bounds = array<i64: 1, 512>}, {transform_indices = @transform_18, window_bounds = array<i64: 8, 512>}, {transform_indices = @transform_19, window_bounds = array<i64: 8, 128>}]} {
    %c0 = arith.constant 0 : index
    %c0_0 = arith.constant 0 : index
    %0 = vector.load %arg1[%c0, %c0_0] : memref<8x512xbf16, #tpu.memory_space<vmem>>, vector<8x512xbf16>
    %c0_1 = arith.constant 0 : index
    %c0_2 = arith.constant 0 : index
    %1 = vector.load %arg3[%c0_1, %c0_2] : memref<512x1024xbf16, #tpu.memory_space<vmem>>, vector<512x1024xbf16>
    %cst = arith.constant dense<0.000000e+00> : vector<8x1024xf32>
    %2 = tpu.matmul %0, %1, %cst {dimension_numbers = #tpu.dot_dimension_numbers<[1], [0], [0], [1], [0, 0, 1, 1], [], []>} : vector<8x512xbf16>, vector<512x1024xbf16>, vector<8x1024xf32> -> vector<8x1024xf32>
    %c0_3 = arith.constant 0 : index
    %c0_4 = arith.constant 0 : index
    %3 = vector.load %arg4[%c0_3, %c0_4] : memref<1x1024xf32, #tpu.memory_space<vmem>>, vector<1x1024xf32>
    %4 = vector.broadcast %3 : vector<1x1024xf32> to vector<8x1024xf32>
    %5 = arith.addf %2, %4 : vector<8x1024xf32>
    %cst_5 = arith.constant 0.000000e+00 : f32
    %6 = vector.broadcast %cst_5 : f32 to vector<8x1024xf32>
    %7 = arith.maximumf %5, %6 : vector<8x1024xf32>
    %8 = arith.truncf %7 : vector<8x1024xf32> to vector<8x1024xbf16>
    %c0_6 = arith.constant 0 : index
    %c0_7 = arith.constant 0 : index
    %9 = vector.load %arg5[%c0_6, %c0_7] : memref<1024x512xbf16, #tpu.memory_space<vmem>>, vector<1024x512xbf16>
    %cst_8 = arith.constant dense<0.000000e+00> : vector<8x512xf32>
    %10 = tpu.matmul %8, %9, %cst_8 {dimension_numbers = #tpu.dot_dimension_numbers<[1], [0], [0], [1], [0, 0, 1, 1], [], []>} : vector<8x1024xbf16>, vector<1024x512xbf16>, vector<8x512xf32> -> vector<8x512xf32>
    %c0_9 = arith.constant 0 : index
    %c0_10 = arith.constant 0 : index
    %11 = vector.load %arg6[%c0_9, %c0_10] : memref<1x512xf32, #tpu.memory_space<vmem>>, vector<1x512xf32>
    %12 = vector.broadcast %11 : vector<1x512xf32> to vector<8x512xf32>
    %13 = arith.addf %10, %12 : vector<8x512xf32>
    %cst_11 = arith.constant 0.000000e+00 : f32
    %14 = vector.broadcast %cst_11 : f32 to vector<8x512xf32>
    %15 = arith.maximumf %13, %14 : vector<8x512xf32>
    %16 = arith.truncf %15 : vector<8x512xf32> to vector<8x512xbf16>
    %c0_12 = arith.constant 0 : index
    %c0_13 = arith.constant 0 : index
    %17 = vector.load %arg7[%c0_12, %c0_13] : memref<512x256xbf16, #tpu.memory_space<vmem>>, vector<512x256xbf16>
    %cst_14 = arith.constant dense<0.000000e+00> : vector<8x256xf32>
    %18 = tpu.matmul %16, %17, %cst_14 {dimension_numbers = #tpu.dot_dimension_numbers<[1], [0], [0], [1], [0, 0, 1, 1], [], []>} : vector<8x512xbf16>, vector<512x256xbf16>, vector<8x256xf32> -> vector<8x256xf32>
    %c0_15 = arith.constant 0 : index
    %c0_16 = arith.constant 0 : index
    %19 = vector.load %arg8[%c0_15, %c0_16] : memref<1x256xf32, #tpu.memory_space<vmem>>, vector<1x256xf32>
    %20 = vector.broadcast %19 : vector<1x256xf32> to vector<8x256xf32>
    %21 = arith.addf %18, %20 : vector<8x256xf32>
    %cst_17 = arith.constant 0.000000e+00 : f32
    %22 = vector.broadcast %cst_17 : f32 to vector<8x256xf32>
    %23 = arith.maximumf %21, %22 : vector<8x256xf32>
    %24 = arith.truncf %23 : vector<8x256xf32> to vector<8x256xbf16>
    %c0_18 = arith.constant 0 : index
    %c0_19 = arith.constant 0 : index
    %25 = vector.load %arg9[%c0_18, %c0_19] : memref<256x64xbf16, #tpu.memory_space<vmem>>, vector<256x64xbf16>
    %cst_20 = arith.constant dense<0.000000e+00> : vector<8x64xf32>
    %26 = tpu.matmul %24, %25, %cst_20 {dimension_numbers = #tpu.dot_dimension_numbers<[1], [0], [0], [1], [0, 0, 1, 1], [], []>} : vector<8x256xbf16>, vector<256x64xbf16>, vector<8x64xf32> -> vector<8x64xf32>
    %c0_21 = arith.constant 0 : index
    %c0_22 = arith.constant 0 : index
    %27 = vector.load %arg10[%c0_21, %c0_22] : memref<1x64xf32, #tpu.memory_space<vmem>>, vector<1x64xf32>
    %28 = vector.broadcast %27 : vector<1x64xf32> to vector<8x64xf32>
    %29 = arith.addf %26, %28 : vector<8x64xf32>
    %30 = vector.extract_strided_slice %29 {offsets = [0, 0], sizes = [8, 32], strides = [1, 1]} : vector<8x64xf32> to vector<8x32xf32>
    %31 = vector.extract_strided_slice %29 {offsets = [0, 32], sizes = [8, 32], strides = [1, 1]} : vector<8x64xf32> to vector<8x32xf32>
    %c0_23 = arith.constant 0 : index
    %c0_24 = arith.constant 0 : index
    %32 = vector.load %arg2[%c0_23, %c0_24] : memref<8x128xf32, #tpu.memory_space<vmem>>, vector<8x32xf32>
    %cst_25 = arith.constant 5.000000e-01 : f32
    %33 = vector.broadcast %cst_25 : f32 to vector<8x32xf32>
    %34 = arith.mulf %33, %31 : vector<8x32xf32>
    %35 = math.exp %34 : vector<8x32xf32>
    %36 = arith.mulf %35, %32 : vector<8x32xf32>
    %37 = arith.addf %30, %36 : vector<8x32xf32>
    %38 = arith.truncf %37 : vector<8x32xf32> to vector<8x32xbf16>
    %c0_26 = arith.constant 0 : index
    %c0_27 = arith.constant 0 : index
    %39 = vector.load %arg11[%c0_26, %c0_27] : memref<32x256xbf16, #tpu.memory_space<vmem>>, vector<32x256xbf16>
    %cst_28 = arith.constant dense<0.000000e+00> : vector<8x256xf32>
    %40 = tpu.matmul %38, %39, %cst_28 {dimension_numbers = #tpu.dot_dimension_numbers<[1], [0], [0], [1], [0, 0, 1, 1], [], []>} : vector<8x32xbf16>, vector<32x256xbf16>, vector<8x256xf32> -> vector<8x256xf32>
    %c0_29 = arith.constant 0 : index
    %c0_30 = arith.constant 0 : index
    %41 = vector.load %arg12[%c0_29, %c0_30] : memref<1x256xf32, #tpu.memory_space<vmem>>, vector<1x256xf32>
    %42 = vector.broadcast %41 : vector<1x256xf32> to vector<8x256xf32>
    %43 = arith.addf %40, %42 : vector<8x256xf32>
    %cst_31 = arith.constant 0.000000e+00 : f32
    %44 = vector.broadcast %cst_31 : f32 to vector<8x256xf32>
    %45 = arith.maximumf %43, %44 : vector<8x256xf32>
    %46 = arith.truncf %45 : vector<8x256xf32> to vector<8x256xbf16>
    %c0_32 = arith.constant 0 : index
    %c0_33 = arith.constant 0 : index
    %47 = vector.load %arg13[%c0_32, %c0_33] : memref<256x512xbf16, #tpu.memory_space<vmem>>, vector<256x512xbf16>
    %cst_34 = arith.constant dense<0.000000e+00> : vector<8x512xf32>
    %48 = tpu.matmul %46, %47, %cst_34 {dimension_numbers = #tpu.dot_dimension_numbers<[1], [0], [0], [1], [0, 0, 1, 1], [], []>} : vector<8x256xbf16>, vector<256x512xbf16>, vector<8x512xf32> -> vector<8x512xf32>
    %c0_35 = arith.constant 0 : index
    %c0_36 = arith.constant 0 : index
    %49 = vector.load %arg14[%c0_35, %c0_36] : memref<1x512xf32, #tpu.memory_space<vmem>>, vector<1x512xf32>
    %50 = vector.broadcast %49 : vector<1x512xf32> to vector<8x512xf32>
    %51 = arith.addf %48, %50 : vector<8x512xf32>
    %cst_37 = arith.constant 0.000000e+00 : f32
    %52 = vector.broadcast %cst_37 : f32 to vector<8x512xf32>
    %53 = arith.maximumf %51, %52 : vector<8x512xf32>
    %54 = arith.truncf %53 : vector<8x512xf32> to vector<8x512xbf16>
    %c0_38 = arith.constant 0 : index
    %c0_39 = arith.constant 0 : index
    %55 = vector.load %arg15[%c0_38, %c0_39] : memref<512x1024xbf16, #tpu.memory_space<vmem>>, vector<512x1024xbf16>
    %cst_40 = arith.constant dense<0.000000e+00> : vector<8x1024xf32>
    %56 = tpu.matmul %54, %55, %cst_40 {dimension_numbers = #tpu.dot_dimension_numbers<[1], [0], [0], [1], [0, 0, 1, 1], [], []>} : vector<8x512xbf16>, vector<512x1024xbf16>, vector<8x1024xf32> -> vector<8x1024xf32>
    %c0_41 = arith.constant 0 : index
    %c0_42 = arith.constant 0 : index
    %57 = vector.load %arg16[%c0_41, %c0_42] : memref<1x1024xf32, #tpu.memory_space<vmem>>, vector<1x1024xf32>
    %58 = vector.broadcast %57 : vector<1x1024xf32> to vector<8x1024xf32>
    %59 = arith.addf %56, %58 : vector<8x1024xf32>
    %cst_43 = arith.constant 0.000000e+00 : f32
    %60 = vector.broadcast %cst_43 : f32 to vector<8x1024xf32>
    %61 = arith.maximumf %59, %60 : vector<8x1024xf32>
    %62 = arith.truncf %61 : vector<8x1024xf32> to vector<8x1024xbf16>
    %c0_44 = arith.constant 0 : index
    %c0_45 = arith.constant 0 : index
    %63 = vector.load %arg17[%c0_44, %c0_45] : memref<1024x512xbf16, #tpu.memory_space<vmem>>, vector<1024x512xbf16>
    %cst_46 = arith.constant dense<0.000000e+00> : vector<8x512xf32>
    %64 = tpu.matmul %62, %63, %cst_46 {dimension_numbers = #tpu.dot_dimension_numbers<[1], [0], [0], [1], [0, 0, 1, 1], [], []>} : vector<8x1024xbf16>, vector<1024x512xbf16>, vector<8x512xf32> -> vector<8x512xf32>
    %c0_47 = arith.constant 0 : index
    %c0_48 = arith.constant 0 : index
    %65 = vector.load %arg18[%c0_47, %c0_48] : memref<1x512xf32, #tpu.memory_space<vmem>>, vector<1x512xf32>
    %66 = vector.broadcast %65 : vector<1x512xf32> to vector<8x512xf32>
    %67 = arith.addf %64, %66 : vector<8x512xf32>
    %cst_49 = arith.constant 5.000000e-01 : f32
    %68 = vector.broadcast %cst_49 : f32 to vector<8x512xf32>
    %69 = arith.mulf %68, %67 : vector<8x512xf32>
    %70 = math.tanh %69 : vector<8x512xf32>
    %cst_50 = arith.constant 1.000000e+00 : f32
    %71 = vector.broadcast %cst_50 : f32 to vector<8x512xf32>
    %72 = arith.addf %70, %71 : vector<8x512xf32>
    %cst_51 = arith.constant 5.000000e-01 : f32
    %73 = vector.broadcast %cst_51 : f32 to vector<8x512xf32>
    %74 = arith.mulf %73, %72 : vector<8x512xf32>
    %c0_52 = arith.constant 0 : index
    %c0_53 = arith.constant 0 : index
    %75 = vector.load %arg19[%c0_52, %c0_53] : memref<8x512xf32, #tpu.memory_space<vmem>>, vector<8x512xf32>
    tpu.vector_store %arg19[%c0_52, %c0_53], %74 {strides = array<i32>} : memref<8x512xf32, #tpu.memory_space<vmem>>, vector<8x512xf32>,
    %c0_54 = arith.constant 0 : index
    %c0_55 = arith.constant 0 : index
    %76 = vector.load %arg20[%c0_54, %c0_55] : memref<8x128xf32, #tpu.memory_space<vmem>>, vector<8x64xf32>
    tpu.vector_store %arg20[%c0_54, %c0_55], %29 {strides = array<i32>} : memref<8x128xf32, #tpu.memory_space<vmem>>, vector<8x64xf32>,
    %c0_56 = arith.constant 0 : index
    %c64 = arith.constant 64 : index
    %77 = vector.load %arg20[%c0_56, %c64] : memref<8x128xf32, #tpu.memory_space<vmem>>, vector<8x32xf32>
    tpu.vector_store %arg20[%c0_56, %c64], %37 {strides = array<i32>} : memref<8x128xf32, #tpu.memory_space<vmem>>, vector<8x32xf32>,
    %cst_57 = arith.constant 0.000000e+00 : f32
    %78 = vector.broadcast %cst_57 : f32 to vector<8x32xf32>
    %c0_58 = arith.constant 0 : index
    %c96 = arith.constant 96 : index
    %79 = vector.load %arg20[%c0_58, %c96] : memref<8x128xf32, #tpu.memory_space<vmem>>, vector<8x32xf32>
    tpu.vector_store %arg20[%c0_58, %c96], %78 {strides = array<i32>} : memref<8x128xf32, #tpu.memory_space<vmem>>, vector<8x32xf32>,
    return
  }
  func.func @transform_0(%arg0: i32) -> (i32, i32) {
    %c0_i32 = arith.constant 0 : i32
    %c0_i32_0 = arith.constant 0 : i32
    return %arg0, %c0_i32 : i32, i32
  }
  func.func @transform_1(%arg0: i32) -> (i32, i32) {
    %c0_i32 = arith.constant 0 : i32
    %c0_i32_0 = arith.constant 0 : i32
    return %arg0, %c0_i32 : i32, i32
  }
  func.func @transform_2(%arg0: i32) -> (i32, i32) {
    %c0_i32 = arith.constant 0 : i32
    %c0_i32_0 = arith.constant 0 : i32
    %c0_i32_1 = arith.constant 0 : i32
    return %c0_i32, %c0_i32_0 : i32, i32
  }
  func.func @transform_3(%arg0: i32) -> (i32, i32) {
    %c0_i32 = arith.constant 0 : i32
    %c0_i32_0 = arith.constant 0 : i32
    %c0_i32_1 = arith.constant 0 : i32
    return %c0_i32, %c0_i32_0 : i32, i32
  }
  func.func @transform_4(%arg0: i32) -> (i32, i32) {
    %c0_i32 = arith.constant 0 : i32
    %c0_i32_0 = arith.constant 0 : i32
    %c0_i32_1 = arith.constant 0 : i32
    return %c0_i32, %c0_i32_0 : i32, i32
  }
  func.func @transform_5(%arg0: i32) -> (i32, i32) {
    %c0_i32 = arith.constant 0 : i32
    %c0_i32_0 = arith.constant 0 : i32
    %c0_i32_1 = arith.constant 0 : i32
    return %c0_i32, %c0_i32_0 : i32, i32
  }
  func.func @transform_6(%arg0: i32) -> (i32, i32) {
    %c0_i32 = arith.constant 0 : i32
    %c0_i32_0 = arith.constant 0 : i32
    %c0_i32_1 = arith.constant 0 : i32
    return %c0_i32, %c0_i32_0 : i32, i32
  }
  func.func @transform_7(%arg0: i32) -> (i32, i32) {
    %c0_i32 = arith.constant 0 : i32
    %c0_i32_0 = arith.constant 0 : i32
    %c0_i32_1 = arith.constant 0 : i32
    return %c0_i32, %c0_i32_0 : i32, i32
  }
  func.func @transform_8(%arg0: i32) -> (i32, i32) {
    %c0_i32 = arith.constant 0 : i32
    %c0_i32_0 = arith.constant 0 : i32
    %c0_i32_1 = arith.constant 0 : i32
    return %c0_i32, %c0_i32_0 : i32, i32
  }
  func.func @transform_9(%arg0: i32) -> (i32, i32) {
    %c0_i32 = arith.constant 0 : i32
    %c0_i32_0 = arith.constant 0 : i32
    %c0_i32_1 = arith.constant 0 : i32
    return %c0_i32, %c0_i32_0 : i32, i32
  }
  func.func @transform_10(%arg0: i32) -> (i32, i32) {
    %c0_i32 = arith.constant 0 : i32
    %c0_i32_0 = arith.constant 0 : i32
    %c0_i32_1 = arith.constant 0 : i32
    return %c0_i32, %c0_i32_0 : i32, i32
  }
  func.func @transform_11(%arg0: i32) -> (i32, i32) {
    %c0_i32 = arith.constant 0 : i32
    %c0_i32_0 = arith.constant 0 : i32
    %c0_i32_1 = arith.constant 0 : i32
    return %c0_i32, %c0_i32_0 : i32, i32
  }
  func.func @transform_12(%arg0: i32) -> (i32, i32) {
    %c0_i32 = arith.constant 0 : i32
    %c0_i32_0 = arith.constant 0 : i32
    %c0_i32_1 = arith.constant 0 : i32
    return %c0_i32, %c0_i32_0 : i32, i32
  }
  func.func @transform_13(%arg0: i32) -> (i32, i32) {
    %c0_i32 = arith.constant 0 : i32
    %c0_i32_0 = arith.constant 0 : i32
    %c0_i32_1 = arith.constant 0 : i32
    return %c0_i32, %c0_i32_0 : i32, i32
  }
  func.func @transform_14(%arg0: i32) -> (i32, i32) {
    %c0_i32 = arith.constant 0 : i32
    %c0_i32_0 = arith.constant 0 : i32
    %c0_i32_1 = arith.constant 0 : i32
    return %c0_i32, %c0_i32_0 : i32, i32
  }
  func.func @transform_15(%arg0: i32) -> (i32, i32) {
    %c0_i32 = arith.constant 0 : i32
    %c0_i32_0 = arith.constant 0 : i32
    %c0_i32_1 = arith.constant 0 : i32
    return %c0_i32, %c0_i32_0 : i32, i32
  }
  func.func @transform_16(%arg0: i32) -> (i32, i32) {
    %c0_i32 = arith.constant 0 : i32
    %c0_i32_0 = arith.constant 0 : i32
    %c0_i32_1 = arith.constant 0 : i32
    return %c0_i32, %c0_i32_0 : i32, i32
  }
  func.func @transform_17(%arg0: i32) -> (i32, i32) {
    %c0_i32 = arith.constant 0 : i32
    %c0_i32_0 = arith.constant 0 : i32
    %c0_i32_1 = arith.constant 0 : i32
    return %c0_i32, %c0_i32_0 : i32, i32
  }
  func.func @transform_18(%arg0: i32) -> (i32, i32) {
    %c0_i32 = arith.constant 0 : i32
    %c0_i32_0 = arith.constant 0 : i32
    return %arg0, %c0_i32 : i32, i32
  }
  func.func @transform_19(%arg0: i32) -> (i32, i32) {
    %c0_i32 = arith.constant 0 : i32
    %c0_i32_0 = arith.constant 0 : i32
    return %arg0, %c0_i32 : i32, i32
  }
}

</mosaic_0001>

<llo_original>
// kernel: tpu_custom_call.1
$region0: #{tpu_custom_call.1}
  #allocation0 [shape = 'u32[]', space=smem, size = 0x4, offset = 0x4, fixed_abs, tag = 'smem constant byte address 0x4 - core index']
  #allocation1 [shape = 'u32[144,128]{1,0:T(1,128)}', space=vmem, size = 0x12000, scoped, tag = 'internal scratch']
  %s0 = inlined_call_operand.vmem [shape: bf16[8,512], index: 0, kind: input, shape index: {}]
  %s1 = inlined_call_operand.vmem [shape: f32[8,128], index: 1, kind: input, shape index: {}]
  %s2 = inlined_call_operand.hbm [shape: bf16[512,1024], index: 2, kind: input, shape index: {}]
  %s3 = inlined_call_operand.vmem [shape: f32[1,1024], index: 3, kind: input, shape index: {}]
  %s4 = inlined_call_operand.hbm [shape: bf16[1024,512], index: 4, kind: input, shape index: {}]
  %s5 = inlined_call_operand.vmem [shape: f32[1,512], index: 5, kind: input, shape index: {}]
  %s6 = inlined_call_operand.hbm [shape: bf16[512,256], index: 6, kind: input, shape index: {}]
  %s7 = inlined_call_operand.vmem [shape: f32[1,256], index: 7, kind: input, shape index: {}]
  %s8 = inlined_call_operand.vmem [shape: bf16[256,64], index: 8, kind: input, shape index: {}]
  %s9 = inlined_call_operand.vmem [shape: f32[1,64], index: 9, kind: input, shape index: {}]
  %s10 = inlined_call_operand.vmem [shape: bf16[32,256], index: 10, kind: input, shape index: {}]
  %s11 = inlined_call_operand.vmem [shape: f32[1,256], index: 11, kind: input, shape index: {}]
  %s12 = inlined_call_operand.hbm [shape: bf16[256,512], index: 12, kind: input, shape index: {}]
  %s13 = inlined_call_operand.vmem [shape: f32[1,512], index: 13, kind: input, shape index: {}]
  %s14 = inlined_call_operand.hbm [shape: bf16[512,1024], index: 14, kind: input, shape index: {}]
  %s15 = inlined_call_operand.vmem [shape: f32[1,1024], index: 15, kind: input, shape index: {}]
  %s16 = inlined_call_operand.hbm [shape: bf16[1024,512], index: 16, kind: input, shape index: {}]
  %s17 = inlined_call_operand.vmem [shape: f32[1,512], index: 17, kind: input, shape index: {}]
  %s18 = inlined_call_operand.hbm [shape: f32[8,512], index: 18, kind: output, shape index: {0}]
  %s19 = inlined_call_operand.hbm [shape: f32[8,128], index: 19, kind: output, shape index: {1}]
  %20 = xla_tuple %s18, %s19
  %s21 = sld [smem:[#allocation0]]
  $region114: #{tpu_custom_call.1} parent=0
    _
  %s23 = ssub.s32 1, %s21
  %s24 = scalar_select 0, %s23, %s21
  $region1: #{tpu_custom_call.1} parent=0
    #allocation2 [shape = 'u8[1048576]{0}', space=vmem, size = 0x100000, scoped, tag = 'input window, operand 2, single buffered']
    #allocation3 [shape = 's32[1]{0}', space=sflag, size = 0x4, scoped, tag = 'scoped memory for tpu_custom_call.1']
    #allocation4 [shape = 's32[1]{0}', space=sflag, size = 0x4, scoped, tag = 'scoped memory for tpu_custom_call.1']
    #allocation5 [shape = 'u8[1048576]{0}', space=vmem, size = 0x100000, scoped, tag = 'input window, operand 4, single buffered']
    #allocation6 [shape = 's32[1]{0}', space=sflag, size = 0x4, scoped, tag = 'scoped memory for tpu_custom_call.1']
    #allocation7 [shape = 'u8[262144]{0}', space=vmem, size = 0x40000, scoped, tag = 'input window, operand 6, single buffered']
    #allocation8 [shape = 'u8[262144]{0}', space=vmem, size = 0x40000, scoped, tag = 'input window, operand 12, single buffered']
    #allocation9 [shape = 's32[1]{0}', space=sflag, size = 0x4, scoped, tag = 'scoped memory for tpu_custom_call.1']
    #allocation10 [shape = 'u8[1048576]{0}', space=vmem, size = 0x100000, scoped, tag = 'input window, operand 14, single buffered']
    #allocation11 [shape = 'u8[1048576]{0}', space=vmem, size = 0x100000, scoped, tag = 'input window, operand 16, single buffered']
    #allocation12 [shape = 's32[1]{0}', space=sflag, size = 0x4, scoped, tag = 'scoped memory for tpu_custom_call.1']
    #allocation13 [shape = 'u8[16384]{0}', space=vmem, size = 0x4000, scoped, tag = 'output window, operand 0, single buffered']
    #allocation14 [shape = 'u8[4096]{0}', space=vmem, size = 0x1000, scoped, tag = 'output window, operand 1, single buffered']
    #allocation15 [shape = 's32[1]{0}', space=sflag, size = 0x4, scoped, tag = 'scoped memory for tpu_custom_call.1']
    %25 = vsyncpa [#allocation3], 0
    %26 = vsyncpa [#allocation6], 0
    %27 = vsyncpa [#allocation9], 0
    %28 = vsyncpa [#allocation12], 0
    %29 = vsyncpa [#allocation4], 0
    %30 = vsyncpa [#allocation15], 0
    // Predicated region
    $region2: #{tpu_custom_call.1} parent=1 // pred_check
      _
    $region3: #{tpu_custom_call.1} parent=1 // pred_check_branch
      %32 = sbr.rel (0) target = $region5
    $region4: #{tpu_custom_call.1} parent=1 // pred_region
      _
    $region5: #{tpu_custom_call.1} parent=1 // pred_fallthru
      _
    // Predicated region
    $region6: #{tpu_custom_call.1} parent=1 // pred_check
      _
    $region7: #{tpu_custom_call.1} parent=1 // pred_check_branch
      %34 = sbr.rel (0) target = $region9
    $region8: #{tpu_custom_call.1} parent=1 // pred_region
      _
    $region9: #{tpu_custom_call.1} parent=1 // pred_fallthru
      _
    // Predicated region
    $region10: #{tpu_custom_call.1} parent=1 // pred_check
      _
    $region11: #{tpu_custom_call.1} parent=1 // pred_check_branch
      %36 = sbr.rel (0) target = $region13
    $region12: #{tpu_custom_call.1} parent=1 // pred_region
      %s38 = ssub.s32 32768, 32768
      %39 = vsyncadd [#allocation3], %s38
      %s40 = sshll.u32 [#allocation2], 4
      %s41 = int_to_ptr.vmem [resolvable:$true] %s40
      %46 = dma.hbm_to_vmem [thread:$0]  %s2, 32768, %s41, [#allocation3], 512, 512, 32
    $region13: #{tpu_custom_call.1} parent=1 // pred_fallthru
      _
    // Predicated region
    $region14: #{tpu_custom_call.1} parent=1 // pred_check
      _
    $region15: #{tpu_custom_call.1} parent=1 // pred_check_branch
      %48 = sbr.rel (0) target = $region17
    $region16: #{tpu_custom_call.1} parent=1 // pred_region
      _
    $region17: #{tpu_custom_call.1} parent=1 // pred_fallthru
      _
    // Predicated region
    $region18: #{tpu_custom_call.1} parent=1 // pred_check
      _
    $region19: #{tpu_custom_call.1} parent=1 // pred_check_branch
      %50 = sbr.rel (0) target = $region21
    $region20: #{tpu_custom_call.1} parent=1 // pred_region
      %s52 = ssub.s32 32768, 32768
      %53 = vsyncadd [#allocation6], %s52
      %s54 = sshll.u32 [#allocation5], 4
      %s55 = int_to_ptr.vmem [resolvable:$true] %s54
      %60 = dma.hbm_to_vmem [thread:$0]  %s4, 32768, %s55, [#allocation6], 256, 256, 16
    $region21: #{tpu_custom_call.1} parent=1 // pred_fallthru
      _
    // Predicated region
    $region22: #{tpu_custom_call.1} parent=1 // pred_check
      _
    $region23: #{tpu_custom_call.1} parent=1 // pred_check_branch
      %62 = sbr.rel (0) target = $region25
    $region24: #{tpu_custom_call.1} parent=1 // pred_region
      _
    $region25: #{tpu_custom_call.1} parent=1 // pred_fallthru
      _
    // Predicated region
    $region26: #{tpu_custom_call.1} parent=1 // pred_check
      _
    $region27: #{tpu_custom_call.1} parent=1 // pred_check_branch
      %64 = sbr.rel (0) target = $region29
    $region28: #{tpu_custom_call.1} parent=1 // pred_region
      %s66 = ssub.s32 8192, 8192
      %67 = vsyncadd [#allocation6], %s66
      %s68 = sshll.u32 [#allocation7], 4
      %s69 = int_to_ptr.vmem [resolvable:$true] %s68
      %74 = dma.hbm_to_vmem [thread:$0]  %s6, 8192, %s69, [#allocation6], 128, 128, 8
    $region29: #{tpu_custom_call.1} parent=1 // pred_fallthru
      _
    // Predicated region
    $region30: #{tpu_custom_call.1} parent=1 // pred_check
      _
    $region31: #{tpu_custom_call.1} parent=1 // pred_check_branch
      %76 = sbr.rel (0) target = $region33
    $region32: #{tpu_custom_call.1} parent=1 // pred_region
      _
    $region33: #{tpu_custom_call.1} parent=1 // pred_fallthru
      _
    // Predicated region
    $region34: #{tpu_custom_call.1} parent=1 // pred_check
      _
    $region35: #{tpu_custom_call.1} parent=1 // pred_check_branch
      %78 = sbr.rel (0) target = $region37
    $region36: #{tpu_custom_call.1} parent=1 // pred_region
      _
    $region37: #{tpu_custom_call.1} parent=1 // pred_fallthru
      _
    // Predicated region
    $region38: #{tpu_custom_call.1} parent=1 // pred_check
      _
    $region39: #{tpu_custom_call.1} parent=1 // pred_check_branch
      %80 = sbr.rel (0) target = $region41
    $region40: #{tpu_custom_call.1} parent=1 // pred_region
      _
    $region41: #{tpu_custom_call.1} parent=1 // pred_fallthru
      _
    // Predicated region
    $region42: #{tpu_custom_call.1} parent=1 // pred_check
      _
    $region43: #{tpu_custom_call.1} parent=1 // pred_check_branch
      %82 = sbr.rel (0) target = $region45
    $region44: #{tpu_custom_call.1} parent=1 // pred_region
      _
    $region45: #{tpu_custom_call.1} parent=1 // pred_fallthru
      _
    // Predicated region
    $region46: #{tpu_custom_call.1} parent=1 // pred_check
      _
    $region47: #{tpu_custom_call.1} parent=1 // pred_check_branch
      %84 = sbr.rel (0) target = $region49
    $region48: #{tpu_custom_call.1} parent=1 // pred_region
      _
    $region49: #{tpu_custom_call.1} parent=1 // pred_fallthru
      _
    // Predicated region
    $region50: #{tpu_custom_call.1} parent=1 // pred_check
      _
    $region51: #{tpu_custom_call.1} parent=1 // pred_check_branch
      %86 = sbr.rel (0) target = $region53
    $region52: #{tpu_custom_call.1} parent=1 // pred_region
      %s88 = ssub.s32 8192, 8192
      %89 = vsyncadd [#allocation9], %s88
      %s90 = sshll.u32 [#allocation8], 4
      %s91 = int_to_ptr.vmem [resolvable:$true] %s90
      %96 = dma.hbm_to_vmem [thread:$0]  %s12, 8192, %s91, [#allocation9], 256, 256, 16
    $region53: #{tpu_custom_call.1} parent=1 // pred_fallthru
      _
    // Predicated region
    $region54: #{tpu_custom_call.1} parent=1 // pred_check
      _
    $region55: #{tpu_custom_call.1} parent=1 // pred_check_branch
      %98 = sbr.rel (0) target = $region57
    $region56: #{tpu_custom_call.1} parent=1 // pred_region
      _
    $region57: #{tpu_custom_call.1} parent=1 // pred_fallthru
      _
    // Predicated region
    $region58: #{tpu_custom_call.1} parent=1 // pred_check
      _
    $region59: #{tpu_custom_call.1} parent=1 // pred_check_branch
      %100 = sbr.rel (0) target = $region61
    $region60: #{tpu_custom_call.1} parent=1 // pred_region
      %s102 = ssub.s32 32768, 32768
      %103 = vsyncadd [#allocation9], %s102
      %s104 = sshll.u32 [#allocation10], 4
      %s105 = int_to_ptr.vmem [resolvable:$true] %s104
      %110 = dma.hbm_to_vmem [thread:$0]  %s14, 32768, %s105, [#allocation9], 512, 512, 32
    $region61: #{tpu_custom_call.1} parent=1 // pred_fallthru
      _
    // Predicated region
    $region62: #{tpu_custom_call.1} parent=1 // pred_check
      _
    $region63: #{tpu_custom_call.1} parent=1 // pred_check_branch
      %112 = sbr.rel (0) target = $region65
    $region64: #{tpu_custom_call.1} parent=1 // pred_region
      _
    $region65: #{tpu_custom_call.1} parent=1 // pred_fallthru
      _
    // Predicated region
    $region66: #{tpu_custom_call.1} parent=1 // pred_check
      _
    $region67: #{tpu_custom_call.1} parent=1 // pred_check_branch
      %114 = sbr.rel (0) target = $region69
    $region68: #{tpu_custom_call.1} parent=1 // pred_region
      %s116 = ssub.s32 32768, 32768
      %117 = vsyncadd [#allocation12], %s116
      %s118 = sshll.u32 [#allocation11], 4
      %s119 = int_to_ptr.vmem [resolvable:$true] %s118
      %124 = dma.hbm_to_vmem [thread:$0]  %s16, 32768, %s119, [#allocation12], 256, 256, 16
    $region69: #{tpu_custom_call.1} parent=1 // pred_fallthru
      _
    // Predicated region
    $region70: #{tpu_custom_call.1} parent=1 // pred_check
      _
    $region71: #{tpu_custom_call.1} parent=1 // pred_check_branch
      %126 = sbr.rel (0) target = $region73
    $region72: #{tpu_custom_call.1} parent=1 // pred_region
      _
    $region73: #{tpu_custom_call.1} parent=1 // pred_fallthru
      _
    // Predicated region
    $region74: #{tpu_custom_call.1} parent=1 // pred_check
      _
    $region75: #{tpu_custom_call.1} parent=1 // pred_check_branch
      %128 = sbr.rel (0) target = $region77
    $region76: #{tpu_custom_call.1} parent=1 // pred_region
      %129 = dma.done [#allocation3], 32768
    $region77: #{tpu_custom_call.1} parent=1 // pred_fallthru
      _
    // Predicated region
    $region78: #{tpu_custom_call.1} parent=1 // pred_check
      _
    $region79: #{tpu_custom_call.1} parent=1 // pred_check_branch
      %131 = sbr.rel (0) target = $region81
    $region80: #{tpu_custom_call.1} parent=1 // pred_region
      %132 = dma.done [#allocation6], 32768
    $region81: #{tpu_custom_call.1} parent=1 // pred_fallthru
      _
    // Predicated region
    $region82: #{tpu_custom_call.1} parent=1 // pred_check
      _
    $region83: #{tpu_custom_call.1} parent=1 // pred_check_branch
      %134 = sbr.rel (0) target = $region85
    $region84: #{tpu_custom_call.1} parent=1 // pred_region
      %135 = dma.done [#allocation6], 8192
    $region85: #{tpu_custom_call.1} parent=1 // pred_fallthru
      _
    // Predicated region
    $region86: #{tpu_custom_call.1} parent=1 // pred_check
      _
    $region87: #{tpu_custom_call.1} parent=1 // pred_check_branch
      %137 = sbr.rel (0) target = $region89
    $region88: #{tpu_custom_call.1} parent=1 // pred_region
      %138 = dma.done [#allocation9], 8192
    $region89: #{tpu_custom_call.1} parent=1 // pred_fallthru
      _
    // Predicated region
    $region90: #{tpu_custom_call.1} parent=1 // pred_check
      _
    $region91: #{tpu_custom_call.1} parent=1 // pred_check_branch
      %140 = sbr.rel (0) target = $region93
    $region92: #{tpu_custom_call.1} parent=1 // pred_region
      %141 = dma.done [#allocation9], 32768
    $region93: #{tpu_custom_call.1} parent=1 // pred_fallthru
      _
    // Predicated region
    $region94: #{tpu_custom_call.1} parent=1 // pred_check
      _
    $region95: #{tpu_custom_call.1} parent=1 // pred_check_branch
      %143 = sbr.rel (0) target = $region97
    $region96: #{tpu_custom_call.1} parent=1 // pred_region
      %144 = dma.done [#allocation12], 32768
    $region97: #{tpu_custom_call.1} parent=1 // pred_fallthru
      _
    %v146 = vld [vmem:[%s0] sm:$0xff]
    %v147 = vld [vmem:[%s0 + $0x8] sm:$0xff]
    %v148 = vld [vmem:[#allocation2] sm:$0xff]
    %v149 = vld [vmem:[#allocation2 + $0x8] sm:$0xff]
    %v150 = vld [vmem:[#allocation2 + $0x10] sm:$0xff]
    %v151 = vld [vmem:[#allocation2 + $0x18] sm:$0xff]
    %v152 = vld [vmem:[#allocation2 + $0x20] sm:$0xff]
    %v153 = vld [vmem:[#allocation2 + $0x28] sm:$0xff]
    %v154 = vld [vmem:[#allocation2 + $0x30] sm:$0xff]
    %v155 = vld [vmem:[#allocation2 + $0x38] sm:$0xff]
    %v156 = vld [vmem:[#allocation2 + $0x40] sm:$0xff]
    %v157 = vld [vmem:[#allocation2 + $0x48] sm:$0xff]
    %v158 = vld [vmem:[#allocation2 + $0x50] sm:$0xff]
    %v159 = vld [vmem:[#allocation2 + $0x58] sm:$0xff]
    %v160 = vld [vmem:[#allocation2 + $0x60] sm:$0xff]
    %v161 = vld [vmem:[#allocation2 + $0x68] sm:$0xff]
    %v162 = vld [vmem:[#allocation2 + $0x70] sm:$0xff]
    %v163 = vld [vmem:[#allocation2 + $0x78] sm:$0xff]
    %v164 = vld [vmem:[#allocation2 + $0x80] sm:$0xff]
    %v165 = vld [vmem:[#allocation2 + $0x88] sm:$0xff]
    %v166 = vld [vmem:[#allocation2 + $0x90] sm:$0xff]
    %v167 = vld [vmem:[#allocation2 + $0x98] sm:$0xff]
    %v168 = vld [vmem:[#allocation2 + $0xa0] sm:$0xff]
    %v169 = vld [vmem:[#allocation2 + $0xa8] sm:$0xff]
    %v170 = vld [vmem:[#allocation2 + $0xb0] sm:$0xff]
    %v171 = vld [vmem:[#allocation2 + $0xb8] sm:$0xff]
    %v172 = vld [vmem:[#allocation2 + $0xc0] sm:$0xff]
    %v173 = vld [vmem:[#allocation2 + $0xc8] sm:$0xff]
    %v174 = vld [vmem:[#allocation2 + $0xd0] sm:$0xff]
    %v175 = vld [vmem:[#allocation2 + $0xd8] sm:$0xff]
    %v176 = vld [vmem:[#allocation2 + $0xe0] sm:$0xff]
    %v177 = vld [vmem:[#allocation2 + $0xe8] sm:$0xff]
    %v178 = vld [vmem:[#allocation2 + $0xf0] sm:$0xff]
    %v179 = vld [vmem:[#allocation2 + $0xf8] sm:$0xff]
    %v180 = vld [vmem:[#allocation2 + $0x100] sm:$0xff]
    %v181 = vld [vmem:[#allocation2 + $0x108] sm:$0xff]
    %v182 = vld [vmem:[#allocation2 + $0x110] sm:$0xff]
    %v183 = vld [vmem:[#allocation2 + $0x118] sm:$0xff]
    %v184 = vld [vmem:[#allocation2 + $0x120] sm:$0xff]
    %v185 = vld [vmem:[#allocation2 + $0x128] sm:$0xff]
    %v186 = vld [vmem:[#allocation2 + $0x130] sm:$0xff]
    %v187 = vld [vmem:[#allocation2 + $0x138] sm:$0xff]
    %v188 = vld [vmem:[#allocation2 + $0x140] sm:$0xff]
    %v189 = vld [vmem:[#allocation2 + $0x148] sm:$0xff]
    %v190 = vld [vmem:[#allocation2 + $0x150] sm:$0xff]
    %v191 = vld [vmem:[#allocation2 + $0x158] sm:$0xff]
    %v192 = vld [vmem:[#allocation2 + $0x160] sm:$0xff]
    %v193 = vld [vmem:[#allocation2 + $0x168] sm:$0xff]
    %v194 = vld [vmem:[#allocation2 + $0x170] sm:$0xff]
    %v195 = vld [vmem:[#allocation2 + $0x178] sm:$0xff]
    %v196 = vld [vmem:[#allocation2 + $0x180] sm:$0xff]
    %v197 = vld [vmem:[#allocation2 + $0x188] sm:$0xff]
    %v198 = vld [vmem:[#allocation2 + $0x190] sm:$0xff]
    %v199 = vld [vmem:[#allocation2 + $0x198] sm:$0xff]
    %v200 = vld [vmem:[#allocation2 + $0x1a0] sm:$0xff]
    %v201 = vld [vmem:[#allocation2 + $0x1a8] sm:$0xff]
    %v202 = vld [vmem:[#allocation2 + $0x1b0] sm:$0xff]
    %v203 = vld [vmem:[#allocation2 + $0x1b8] sm:$0xff]
    %v204 = vld [vmem:[#allocation2 + $0x1c0] sm:$0xff]
    %v205 = vld [vmem:[#allocation2 + $0x1c8] sm:$0xff]
    %v206 = vld [vmem:[#allocation2 + $0x1d0] sm:$0xff]
    %v207 = vld [vmem:[#allocation2 + $0x1d8] sm:$0xff]
    %v208 = vld [vmem:[#allocation2 + $0x1e0] sm:$0xff]
    %v209 = vld [vmem:[#allocation2 + $0x1e8] sm:$0xff]
    %v210 = vld [vmem:[#allocation2 + $0x1f0] sm:$0xff]
    %v211 = vld [vmem:[#allocation2 + $0x1f8] sm:$0xff]
    %v212 = vld [vmem:[#allocation2 + $0x200] sm:$0xff]
    %v213 = vld [vmem:[#allocation2 + $0x208] sm:$0xff]
    %v214 = vld [vmem:[#allocation2 + $0x210] sm:$0xff]
    %v215 = vld [vmem:[#allocation2 + $0x218] sm:$0xff]
    %v216 = vld [vmem:[#allocation2 + $0x220] sm:$0xff]
    %v217 = vld [vmem:[#allocation2 + $0x228] sm:$0xff]
    %v218 = vld [vmem:[#allocation2 + $0x230] sm:$0xff]
    %v219 = vld [vmem:[#allocation2 + $0x238] sm:$0xff]
    %v220 = vld [vmem:[#allocation2 + $0x240] sm:$0xff]
    %v221 = vld [vmem:[#allocation2 + $0x248] sm:$0xff]
    %v222 = vld [vmem:[#allocation2 + $0x250] sm:$0xff]
    %v223 = vld [vmem:[#allocation2 + $0x258] sm:$0xff]
    %v224 = vld [vmem:[#allocation2 + $0x260] sm:$0xff]
    %v225 = vld [vmem:[#allocation2 + $0x268] sm:$0xff]
    %v226 = vld [vmem:[#allocation2 + $0x270] sm:$0xff]
    %v227 = vld [vmem:[#allocation2 + $0x278] sm:$0xff]
    %v228 = vld [vmem:[#allocation2 + $0x280] sm:$0xff]
    %v229 = vld [vmem:[#allocation2 + $0x288] sm:$0xff]
    %v230 = vld [vmem:[#allocation2 + $0x290] sm:$0xff]
    %v231 = vld [vmem:[#allocation2 + $0x298] sm:$0xff]
    %v232 = vld [vmem:[#allocation2 + $0x2a0] sm:$0xff]
    %v233 = vld [vmem:[#allocation2 + $0x2a8] sm:$0xff]
    %v234 = vld [vmem:[#allocation2 + $0x2b0] sm:$0xff]
    %v235 = vld [vmem:[#allocation2 + $0x2b8] sm:$0xff]
    %v236 = vld [vmem:[#allocation2 + $0x2c0] sm:$0xff]
    %v237 = vld [vmem:[#allocation2 + $0x2c8] sm:$0xff]
    %v238 = vld [vmem:[#allocation2 + $0x2d0] sm:$0xff]
    %v239 = vld [vmem:[#allocation2 + $0x2d8] sm:$0xff]
    %v240 = vld [vmem:[#allocation2 + $0x2e0] sm:$0xff]
    %v241 = vld [vmem:[#allocation2 + $0x2e8] sm:$0xff]
    %v242 = vld [vmem:[#allocation2 + $0x2f0] sm:$0xff]
    %v243 = vld [vmem:[#allocation2 + $0x2f8] sm:$0xff]
    %v244 = vld [vmem:[#allocation2 + $0x300] sm:$0xff]
    %v245 = vld [vmem:[#allocation2 + $0x308] sm:$0xff]
    %v246 = vld [vmem:[#allocation2 + $0x310] sm:$0xff]
    %v247 = vld [vmem:[#allocation2 + $0x318] sm:$0xff]
    %v248 = vld [vmem:[#allocation2 + $0x320] sm:$0xff]
    %v249 = vld [vmem:[#allocation2 + $0x328] sm:$0xff]
    %v250 = vld [vmem:[#allocation2 + $0x330] sm:$0xff]
    %v251 = vld [vmem:[#allocation2 + $0x338] sm:$0xff]
    %v252 = vld [vmem:[#allocation2 + $0x340] sm:$0xff]
    %v253 = vld [vmem:[#allocation2 + $0x348] sm:$0xff]
    %v254 = vld [vmem:[#allocation2 + $0x350] sm:$0xff]
    %v255 = vld [vmem:[#allocation2 + $0x358] sm:$0xff]
    %v256 = vld [vmem:[#allocation2 + $0x360] sm:$0xff]
    %v257 = vld [vmem:[#allocation2 + $0x368] sm:$0xff]
    %v258 = vld [vmem:[#allocation2 + $0x370] sm:$0xff]
    %v259 = vld [vmem:[#allocation2 + $0x378] sm:$0xff]
    %v260 = vld [vmem:[#allocation2 + $0x380] sm:$0xff]
    %v261 = vld [vmem:[#allocation2 + $0x388] sm:$0xff]
    %v262 = vld [vmem:[#allocation2 + $0x390] sm:$0xff]
    %v263 = vld [vmem:[#allocation2 + $0x398] sm:$0xff]
    %v264 = vld [vmem:[#allocation2 + $0x3a0] sm:$0xff]
    %v265 = vld [vmem:[#allocation2 + $0x3a8] sm:$0xff]
    %v266 = vld [vmem:[#allocation2 + $0x3b0] sm:$0xff]
    %v267 = vld [vmem:[#allocation2 + $0x3b8] sm:$0xff]
    %v268 = vld [vmem:[#allocation2 + $0x3c0] sm:$0xff]
    %v269 = vld [vmem:[#allocation2 + $0x3c8] sm:$0xff]
    %v270 = vld [vmem:[#allocation2 + $0x3d0] sm:$0xff]
    %v271 = vld [vmem:[#allocation2 + $0x3d8] sm:$0xff]
    %v272 = vld [vmem:[#allocation2 + $0x3e0] sm:$0xff]
    %v273 = vld [vmem:[#allocation2 + $0x3e8] sm:$0xff]
    %v274 = vld [vmem:[#allocation2 + $0x3f0] sm:$0xff]
    %v275 = vld [vmem:[#allocation2 + $0x3f8] sm:$0xff]
    %v276 = vld [vmem:[#allocation2 + $0x400] sm:$0xff]
    %v277 = vld [vmem:[#allocation2 + $0x408] sm:$0xff]
    %v278 = vld [vmem:[#allocation2 + $0x410] sm:$0xff]
    %v279 = vld [vmem:[#allocation2 + $0x418] sm:$0xff]
    %v280 = vld [vmem:[#allocation2 + $0x420] sm:$0xff]
    %v281 = vld [vmem:[#allocation2 + $0x428] sm:$0xff]
    %v282 = vld [vmem:[#allocation2 + $0x430] sm:$0xff]
    %v283 = vld [vmem:[#allocation2 + $0x438] sm:$0xff]
    %v284 = vld [vmem:[#allocation2 + $0x440] sm:$0xff]
    %v285 = vld [vmem:[#allocation2 + $0x448] sm:$0xff]
    %v286 = vld [vmem:[#allocation2 + $0x450] sm:$0xff]
    %v287 = vld [vmem:[#allocation2 + $0x458] sm:$0xff]
    %v288 = vld [vmem:[#allocation2 + $0x460] sm:$0xff]
    %v289 = vld [vmem:[#allocation2 + $0x468] sm:$0xff]
    %v290 = vld [vmem:[#allocation2 + $0x470] sm:$0xff]
    %v291 = vld [vmem:[#allocation2 + $0x478] sm:$0xff]
    %v292 = vld [vmem:[#allocation2 + $0x480] sm:$0xff]
    %v293 = vld [vmem:[#allocation2 + $0x488] sm:$0xff]
    %v294 = vld [vmem:[#allocation2 + $0x490] sm:$0xff]
    %v295 = vld [vmem:[#allocation2 + $0x498] sm:$0xff]
    %v296 = vld [vmem:[#allocation2 + $0x4a0] sm:$0xff]
    %v297 = vld [vmem:[#allocation2 + $0x4a8] sm:$0xff]
    %v298 = vld [vmem:[#allocation2 + $0x4b0] sm:$0xff]
    %v299 = vld [vmem:[#allocation2 + $0x4b8] sm:$0xff]
    %v300 = vld [vmem:[#allocation2 + $0x4c0] sm:$0xff]
    %v301 = vld [vmem:[#allocation2 + $0x4c8] sm:$0xff]
    %v302 = vld [vmem:[#allocation2 + $0x4d0] sm:$0xff]
    %v303 = vld [vmem:[#allocation2 + $0x4d8] sm:$0xff]
    %v304 = vld [vmem:[#allocation2 + $0x4e0] sm:$0xff]
    %v305 = vld [vmem:[#allocation2 + $0x4e8] sm:$0xff]
    %v306 = vld [vmem:[#allocation2 + $0x4f0] sm:$0xff]
    %v307 = vld [vmem:[#allocation2 + $0x4f8] sm:$0xff]
    %v308 = vld [vmem:[#allocation2 + $0x500] sm:$0xff]
    %v309 = vld [vmem:[#allocation2 + $0x508] sm:$0xff]
    %v310 = vld [vmem:[#allocation2 + $0x510] sm:$0xff]
    %v311 = vld [vmem:[#allocation2 + $0x518] sm:$0xff]
    %v312 = vld [vmem:[#allocation2 + $0x520] sm:$0xff]
    %v313 = vld [vmem:[#allocation2 + $0x528] sm:$0xff]
    %v314 = vld [vmem:[#allocation2 + $0x530] sm:$0xff]
    %v315 = vld [vmem:[#allocation2 + $0x538] sm:$0xff]
    %v316 = vld [vmem:[#allocation2 + $0x540] sm:$0xff]
    %v317 = vld [vmem:[#allocation2 + $0x548] sm:$0xff]
    %v318 = vld [vmem:[#allocation2 + $0x550] sm:$0xff]
    %v319 = vld [vmem:[#allocation2 + $0x558] sm:$0xff]
    %v320 = vld [vmem:[#allocation2 + $0x560] sm:$0xff]
    %v321 = vld [vmem:[#allocation2 + $0x568] sm:$0xff]
    %v322 = vld [vmem:[#allocation2 + $0x570] sm:$0xff]
    %v323 = vld [vmem:[#allocation2 + $0x578] sm:$0xff]
    %v324 = vld [vmem:[#allocation2 + $0x580] sm:$0xff]
    %v325 = vld [vmem:[#allocation2 + $0x588] sm:$0xff]
    %v326 = vld [vmem:[#allocation2 + $0x590] sm:$0xff]
    %v327 = vld [vmem:[#allocation2 + $0x598] sm:$0xff]
    %v328 = vld [vmem:[#allocation2 + $0x5a0] sm:$0xff]
    %v329 = vld [vmem:[#allocation2 + $0x5a8] sm:$0xff]
    %v330 = vld [vmem:[#allocation2 + $0x5b0] sm:$0xff]
    %v331 = vld [vmem:[#allocation2 + $0x5b8] sm:$0xff]
    %v332 = vld [vmem:[#allocation2 + $0x5c0] sm:$0xff]
    %v333 = vld [vmem:[#allocation2 + $0x5c8] sm:$0xff]
    %v334 = vld [vmem:[#allocation2 + $0x5d0] sm:$0xff]
    %v335 = vld [vmem:[#allocation2 + $0x5d8] sm:$0xff]
    %v336 = vld [vmem:[#allocation2 + $0x5e0] sm:$0xff]
    %v337 = vld [vmem:[#allocation2 + $0x5e8] sm:$0xff]
    %v338 = vld [vmem:[#allocation2 + $0x5f0] sm:$0xff]
    %v339 = vld [vmem:[#allocation2 + $0x5f8] sm:$0xff]
    %v340 = vld [vmem:[#allocation2 + $0x600] sm:$0xff]
    %v341 = vld [vmem:[#allocation2 + $0x608] sm:$0xff]
    %v342 = vld [vmem:[#allocation2 + $0x610] sm:$0xff]
    %v343 = vld [vmem:[#allocation2 + $0x618] sm:$0xff]
    %v344 = vld [vmem:[#allocation2 + $0x620] sm:$0xff]
    %v345 = vld [vmem:[#allocation2 + $0x628] sm:$0xff]
    %v346 = vld [vmem:[#allocation2 + $0x630] sm:$0xff]
    %v347 = vld [vmem:[#allocation2 + $0x638] sm:$0xff]
    %v348 = vld [vmem:[#allocation2 + $0x640] sm:$0xff]
    %v349 = vld [vmem:[#allocation2 + $0x648] sm:$0xff]
    %v350 = vld [vmem:[#allocation2 + $0x650] sm:$0xff]
    %v351 = vld [vmem:[#allocation2 + $0x658] sm:$0xff]
    %v352 = vld [vmem:[#allocation2 + $0x660] sm:$0xff]
    %v353 = vld [vmem:[#allocation2 + $0x668] sm:$0xff]
    %v354 = vld [vmem:[#allocation2 + $0x670] sm:$0xff]
    %v355 = vld [vmem:[#allocation2 + $0x678] sm:$0xff]
    %v356 = vld [vmem:[#allocation2 + $0x680] sm:$0xff]
    %v357 = vld [vmem:[#allocation2 + $0x688] sm:$0xff]
    %v358 = vld [vmem:[#allocation2 + $0x690] sm:$0xff]
    %v359 = vld [vmem:[#allocation2 + $0x698] sm:$0xff]
    %v360 = vld [vmem:[#allocation2 + $0x6a0] sm:$0xff]
    %v361 = vld [vmem:[#allocation2 + $0x6a8] sm:$0xff]
    %v362 = vld [vmem:[#allocation2 + $0x6b0] sm:$0xff]
    %v363 = vld [vmem:[#allocation2 + $0x6b8] sm:$0xff]
    %v364 = vld [vmem:[#allocation2 + $0x6c0] sm:$0xff]
    %v365 = vld [vmem:[#allocation2 + $0x6c8] sm:$0xff]
    %v366 = vld [vmem:[#allocation2 + $0x6d0] sm:$0xff]
    %v367 = vld [vmem:[#allocation2 + $0x6d8] sm:$0xff]
    %v368 = vld [vmem:[#allocation2 + $0x6e0] sm:$0xff]
    %v369 = vld [vmem:[#allocation2 + $0x6e8] sm:$0xff]
    %v370 = vld [vmem:[#allocation2 + $0x6f0] sm:$0xff]
    %v371 = vld [vmem:[#allocation2 + $0x6f8] sm:$0xff]
    %v372 = vld [vmem:[#allocation2 + $0x700] sm:$0xff]
    %v373 = vld [vmem:[#allocation2 + $0x708] sm:$0xff]
    %v374 = vld [vmem:[#allocation2 + $0x710] sm:$0xff]
    %v375 = vld [vmem:[#allocation2 + $0x718] sm:$0xff]
    %v376 = vld [vmem:[#allocation2 + $0x720] sm:$0xff]
    %v377 = vld [vmem:[#allocation2 + $0x728] sm:$0xff]
    %v378 = vld [vmem:[#allocation2 + $0x730] sm:$0xff]
    %v379 = vld [vmem:[#allocation2 + $0x738] sm:$0xff]
    %v380 = vld [vmem:[#allocation2 + $0x740] sm:$0xff]
    %v381 = vld [vmem:[#allocation2 + $0x748] sm:$0xff]
    %v382 = vld [vmem:[#allocation2 + $0x750] sm:$0xff]
    %v383 = vld [vmem:[#allocation2 + $0x758] sm:$0xff]
    %v384 = vld [vmem:[#allocation2 + $0x760] sm:$0xff]
    %v385 = vld [vmem:[#allocation2 + $0x768] sm:$0xff]
    %v386 = vld [vmem:[#allocation2 + $0x770] sm:$0xff]
    %v387 = vld [vmem:[#allocation2 + $0x778] sm:$0xff]
    %v388 = vld [vmem:[#allocation2 + $0x780] sm:$0xff]
    %v389 = vld [vmem:[#allocation2 + $0x788] sm:$0xff]
    %v390 = vld [vmem:[#allocation2 + $0x790] sm:$0xff]
    %v391 = vld [vmem:[#allocation2 + $0x798] sm:$0xff]
    %v392 = vld [vmem:[#allocation2 + $0x7a0] sm:$0xff]
    %v393 = vld [vmem:[#allocation2 + $0x7a8] sm:$0xff]
    %v394 = vld [vmem:[#allocation2 + $0x7b0] sm:$0xff]
    %v395 = vld [vmem:[#allocation2 + $0x7b8] sm:$0xff]
    %v396 = vld [vmem:[#allocation2 + $0x7c0] sm:$0xff]
    %v397 = vld [vmem:[#allocation2 + $0x7c8] sm:$0xff]
    %v398 = vld [vmem:[#allocation2 + $0x7d0] sm:$0xff]
    %v399 = vld [vmem:[#allocation2 + $0x7d8] sm:$0xff]
    %v400 = vld [vmem:[#allocation2 + $0x7e0] sm:$0xff]
    %v401 = vld [vmem:[#allocation2 + $0x7e8] sm:$0xff]
    %v402 = vld [vmem:[#allocation2 + $0x7f0] sm:$0xff]
    %v403 = vld [vmem:[#allocation2 + $0x7f8] sm:$0xff]
    %v404 = vld [vmem:[%s3] sm:$0xff]
    %v406 = vlaneseq
    %v407 = vshrl.u32 %v406, 7
    %v408 = vsub.s32 0, %v407
    %v409 = vrot.slane %v404, %v408
    %v410 = vlaneseq
    %v411 = vshrl.u32 %v410, 7
    %v412 = vsub.s32 1, %v411
    %v413 = vrot.slane %v404, %v412
    %v414 = vlaneseq
    %v415 = vshrl.u32 %v414, 7
    %v416 = vsub.s32 2, %v415
    %v417 = vrot.slane %v404, %v416
    %v418 = vlaneseq
    %v419 = vshrl.u32 %v418, 7
    %v420 = vsub.s32 3, %v419
    %v421 = vrot.slane %v404, %v420
    %v422 = vlaneseq
    %v423 = vshrl.u32 %v422, 7
    %v424 = vsub.s32 4, %v423
    %v425 = vrot.slane %v404, %v424
    %v426 = vlaneseq
    %v427 = vshrl.u32 %v426, 7
    %v428 = vsub.s32 5, %v427
    %v429 = vrot.slane %v404, %v428
    %v430 = vlaneseq
    %v431 = vshrl.u32 %v430, 7
    %v432 = vsub.s32 6, %v431
    %v433 = vrot.slane %v404, %v432
    %v434 = vlaneseq
    %v435 = vshrl.u32 %v434, 7
    %v436 = vsub.s32 7, %v435
    %v437 = vrot.slane %v404, %v436
    %v448 = vunpack.c.l.b16 %v146
    %v449 = vunpack.c.h.b16 %v146
    %v450 = vunpack.c.l.b16 %v147
    %v451 = vunpack.c.h.b16 %v147
    %v452 = vpack.c.b16 %v448, %v448
    %v453 = vpack.c.b16 %v449, %v449
    %v454 = vpack.c.b16 %v450, %v450
    %v455 = vpack.c.b16 %v451, %v451
    %v716 = vunpack.c.l.b16 %v148
    %v717 = vunpack.c.h.b16 %v148
    %v718 = vunpack.c.l.b16 %v149
    %v719 = vunpack.c.h.b16 %v149
    %v720 = vunpack.c.l.b16 %v150
    %v721 = vunpack.c.h.b16 %v150
    %v722 = vunpack.c.l.b16 %v151
    %v723 = vunpack.c.h.b16 %v151
    %v724 = vunpack.c.l.b16 %v152
    %v725 = vunpack.c.h.b16 %v152
    %v726 = vunpack.c.l.b16 %v153
    %v727 = vunpack.c.h.b16 %v153
    %v728 = vunpack.c.l.b16 %v154
    %v729 = vunpack.c.h.b16 %v154
    %v730 = vunpack.c.l.b16 %v155
    %v731 = vunpack.c.h.b16 %v155
    %v732 = vunpack.c.l.b16 %v156
    %v733 = vunpack.c.h.b16 %v156
    %v734 = vunpack.c.l.b16 %v157
    %v735 = vunpack.c.h.b16 %v157
    %v736 = vunpack.c.l.b16 %v158
    %v737 = vunpack.c.h.b16 %v158
    %v738 = vunpack.c.l.b16 %v159
    %v739 = vunpack.c.h.b16 %v159
    %v740 = vunpack.c.l.b16 %v160
    %v741 = vunpack.c.h.b16 %v160
    %v742 = vunpack.c.l.b16 %v161
    %v743 = vunpack.c.h.b16 %v161
    %v744 = vunpack.c.l.b16 %v162
    %v745 = vunpack.c.h.b16 %v162
    %v746 = vunpack.c.l.b16 %v163
    %v747 = vunpack.c.h.b16 %v163
    %v748 = vunpack.c.l.b16 %v164
    %v749 = vunpack.c.h.b16 %v164
    %v750 = vunpack.c.l.b16 %v165
    %v751 = vunpack.c.h.b16 %v165
    %v752 = vunpack.c.l.b16 %v166
    %v753 = vunpack.c.h.b16 %v166
    %v754 = vunpack.c.l.b16 %v167
    %v755 = vunpack.c.h.b16 %v167
    %v756 = vunpack.c.l.b16 %v168
    %v757 = vunpack.c.h.b16 %v168
    %v758 = vunpack.c.l.b16 %v169
    %v759 = vunpack.c.h.b16 %v169
    %v760 = vunpack.c.l.b16 %v170
    %v761 = vunpack.c.h.b16 %v170
    %v762 = vunpack.c.l.b16 %v171
    %v763 = vunpack.c.h.b16 %v171
    %v764 = vunpack.c.l.b16 %v172
    %v765 = vunpack.c.h.b16 %v172
    %v766 = vunpack.c.l.b16 %v173
    %v767 = vunpack.c.h.b16 %v173
    %v768 = vunpack.c.l.b16 %v174
    %v769 = vunpack.c.h.b16 %v174
    %v770 = vunpack.c.l.b16 %v175
    %v771 = vunpack.c.h.b16 %v175
    %v772 = vunpack.c.l.b16 %v176
    %v773 = vunpack.c.h.b16 %v176
    %v774 = vunpack.c.l.b16 %v177
    %v775 = vunpack.c.h.b16 %v177
    %v776 = vunpack.c.l.b16 %v178
    %v777 = vunpack.c.h.b16 %v178
    %v778 = vunpack.c.l.b16 %v179
    %v779 = vunpack.c.h.b16 %v179
    %v780 = vunpack.c.l.b16 %v180
    %v781 = vunpack.c.h.b16 %v180
    %v782 = vunpack.c.l.b16 %v181
    %v783 = vunpack.c.h.b16 %v181
    %v784 = vunpack.c.l.b16 %v182
    %v785 = vunpack.c.h.b16 %v182
    %v786 = vunpack.c.l.b16 %v183
    %v787 = vunpack.c.h.b16 %v183
    %v788 = vunpack.c.l.b16 %v184
    %v789 = vunpack.c.h.b16 %v184
    %v790 = vunpack.c.l.b16 %v185
    %v791 = vunpack.c.h.b16 %v185
    %v792 = vunpack.c.l.b16 %v186
    %v793 = vunpack.c.h.b16 %v186
    %v794 = vunpack.c.l.b16 %v187
    %v795 = vunpack.c.h.b16 %v187
    %v796 = vunpack.c.l.b16 %v188
    %v797 = vunpack.c.h.b16 %v188
    %v798 = vunpack.c.l.b16 %v189
    %v799 = vunpack.c.h.b16 %v189
    %v800 = vunpack.c.l.b16 %v190
    %v801 = vunpack.c.h.b16 %v190
    %v802 = vunpack.c.l.b16 %v191
    %v803 = vunpack.c.h.b16 %v191
    %v804 = vunpack.c.l.b16 %v192
    %v805 = vunpack.c.h.b16 %v192
    %v806 = vunpack.c.l.b16 %v193
    %v807 = vunpack.c.h.b16 %v193
    %v808 = vunpack.c.l.b16 %v194
    %v809 = vunpack.c.h.b16 %v194
    %v810 = vunpack.c.l.b16 %v195
    %v811 = vunpack.c.h.b16 %v195
    %v812 = vunpack.c.l.b16 %v196
    %v813 = vunpack.c.h.b16 %v196
    %v814 = vunpack.c.l.b16 %v197
    %v815 = vunpack.c.h.b16 %v197
    %v816 = vunpack.c.l.b16 %v198
    %v817 = vunpack.c.h.b16 %v198
    %v818 = vunpack.c.l.b16 %v199
    %v819 = vunpack.c.h.b16 %v199
    %v820 = vunpack.c.l.b16 %v200
    %v821 = vunpack.c.h.b16 %v200
    %v822 = vunpack.c.l.b16 %v201
    %v823 = vunpack.c.h.b16 %v201
    %v824 = vunpack.c.l.b16 %v202
    %v825 = vunpack.c.h.b16 %v202
    %v826 = vunpack.c.l.b16 %v203
    %v827 = vunpack.c.h.b16 %v203
    %v828 = vunpack.c.l.b16 %v204
    %v829 = vunpack.c.h.b16 %v204
    %v830 = vunpack.c.l.b16 %v205
    %v831 = vunpack.c.h.b16 %v205
    %v832 = vunpack.c.l.b16 %v206
    %v833 = vunpack.c.h.b16 %v206
    %v834 = vunpack.c.l.b16 %v207
    %v835 = vunpack.c.h.b16 %v207
    %v836 = vunpack.c.l.b16 %v208
    %v837 = vunpack.c.h.b16 %v208
    %v838 = vunpack.c.l.b16 %v209
    %v839 = vunpack.c.h.b16 %v209
    %v840 = vunpack.c.l.b16 %v210
    %v841 = vunpack.c.h.b16 %v210
    %v842 = vunpack.c.l.b16 %v211
    %v843 = vunpack.c.h.b16 %v211
    %v844 = vunpack.c.l.b16 %v212
    %v845 = vunpack.c.h.b16 %v212
    %v846 = vunpack.c.l.b16 %v213
    %v847 = vunpack.c.h.b16 %v213
    %v848 = vunpack.c.l.b16 %v214
    %v849 = vunpack.c.h.b16 %v214
    %v850 = vunpack.c.l.b16 %v215
    %v851 = vunpack.c.h.b16 %v215
    %v852 = vunpack.c.l.b16 %v216
    %v853 = vunpack.c.h.b16 %v216
    %v854 = vunpack.c.l.b16 %v217
    %v855 = vunpack.c.h.b16 %v217
    %v856 = vunpack.c.l.b16 %v218
    %v857 = vunpack.c.h.b16 %v218
    %v858 = vunpack.c.l.b16 %v219
    %v859 = vunpack.c.h.b16 %v219
    %v860 = vunpack.c.l.b16 %v220
    %v861 = vunpack.c.h.b16 %v220
    %v862 = vunpack.c.l.b16 %v221
    %v863 = vunpack.c.h.b16 %v221
    %v864 = vunpack.c.l.b16 %v222
    %v865 = vunpack.c.h.b16 %v222
    %v866 = vunpack.c.l.b16 %v223
    %v867 = vunpack.c.h.b16 %v223
    %v868 = vunpack.c.l.b16 %v224
    %v869 = vunpack.c.h.b16 %v224
    %v870 = vunpack.c.l.b16 %v225
    %v871 = vunpack.c.h.b16 %v225
    %v872 = vunpack.c.l.b16 %v226
    %v873 = vunpack.c.h.b16 %v226
    %v874 = vunpack.c.l.b16 %v227
    %v875 = vunpack.c.h.b16 %v227
    %v876 = vunpack.c.l.b16 %v228
    %v877 = vunpack.c.h.b16 %v228
    %v878 = vunpack.c.l.b16 %v229
    %v879 = vunpack.c.h.b16 %v229
    %v880 = vunpack.c.l.b16 %v230
    %v881 = vunpack.c.h.b16 %v230
    %v882 = vunpack.c.l.b16 %v231
    %v883 = vunpack.c.h.b16 %v231
    %v884 = vunpack.c.l.b16 %v232
    %v885 = vunpack.c.h.b16 %v232
    %v886 = vunpack.c.l.b16 %v233
    %v887 = vunpack.c.h.b16 %v233
    %v888 = vunpack.c.l.b16 %v234
    %v889 = vunpack.c.h.b16 %v234
    %v890 = vunpack.c.l.b16 %v235
    %v891 = vunpack.c.h.b16 %v235
    %v892 = vunpack.c.l.b16 %v236
    %v893 = vunpack.c.h.b16 %v236
    %v894 = vunpack.c.l.b16 %v237
    %v895 = vunpack.c.h.b16 %v237
    %v896 = vunpack.c.l.b16 %v238
    %v897 = vunpack.c.h.b16 %v238
    %v898 = vunpack.c.l.b16 %v239
    %v899 = vunpack.c.h.b16 %v239
    %v900 = vunpack.c.l.b16 %v240
    %v901 = vunpack.c.h.b16 %v240
    %v902 = vunpack.c.l.b16 %v241
    %v903 = vunpack.c.h.b16 %v241
    %v904 = vunpack.c.l.b16 %v242
    %v905 = vunpack.c.h.b16 %v242
    %v906 = vunpack.c.l.b16 %v243
    %v907 = vunpack.c.h.b16 %v243
    %v908 = vunpack.c.l.b16 %v244
    %v909 = vunpack.c.h.b16 %v244
    %v910 = vunpack.c.l.b16 %v245
    %v911 = vunpack.c.h.b16 %v245
    %v912 = vunpack.c.l.b16 %v246
    %v913 = vunpack.c.h.b16 %v246
    %v914 = vunpack.c.l.b16 %v247
    %v915 = vunpack.c.h.b16 %v247
    %v916 = vunpack.c.l.b16 %v248
    %v917 = vunpack.c.h.b16 %v248
    %v918 = vunpack.c.l.b16 %v249
    %v919 = vunpack.c.h.b16 %v249
    %v920 = vunpack.c.l.b16 %v250
    %v921 = vunpack.c.h.b16 %v250
    %v922 = vunpack.c.l.b16 %v251
    %v923 = vunpack.c.h.b16 %v251
    %v924 = vunpack.c.l.b16 %v252
    %v925 = vunpack.c.h.b16 %v252
    %v926 = vunpack.c.l.b16 %v253
    %v927 = vunpack.c.h.b16 %v253
    %v928 = vunpack.c.l.b16 %v254
    %v929 = vunpack.c.h.b16 %v254
    %v930 = vunpack.c.l.b16 %v255
    %v931 = vunpack.c.h.b16 %v255
    %v932 = vunpack.c.l.b16 %v256
    %v933 = vunpack.c.h.b16 %v256
    %v934 = vunpack.c.l.b16 %v257
    %v935 = vunpack.c.h.b16 %v257
    %v936 = vunpack.c.l.b16 %v258
    %v937 = vunpack.c.h.b16 %v258
    %v938 = vunpack.c.l.b16 %v259
    %v939 = vunpack.c.h.b16 %v259
    %v940 = vunpack.c.l.b16 %v260
    %v941 = vunpack.c.h.b16 %v260
    %v942 = vunpack.c.l.b16 %v261
    %v943 = vunpack.c.h.b16 %v261
    %v944 = vunpack.c.l.b16 %v262
    %v945 = vunpack.c.h.b16 %v262
    %v946 = vunpack.c.l.b16 %v263
    %v947 = vunpack.c.h.b16 %v263
    %v948 = vunpack.c.l.b16 %v264
    %v949 = vunpack.c.h.b16 %v264
    %v950 = vunpack.c.l.b16 %v265
    %v951 = vunpack.c.h.b16 %v265
    %v952 = vunpack.c.l.b16 %v266
    %v953 = vunpack.c.h.b16 %v266
    %v954 = vunpack.c.l.b16 %v267
    %v955 = vunpack.c.h.b16 %v267
    %v956 = vunpack.c.l.b16 %v268
    %v957 = vunpack.c.h.b16 %v268
    %v958 = vunpack.c.l.b16 %v269
    %v959 = vunpack.c.h.b16 %v269
    %v960 = vunpack.c.l.b16 %v270
    %v961 = vunpack.c.h.b16 %v270
    %v962 = vunpack.c.l.b16 %v271
    %v963 = vunpack.c.h.b16 %v271
    %v964 = vunpack.c.l.b16 %v272
    %v965 = vunpack.c.h.b16 %v272
    %v966 = vunpack.c.l.b16 %v273
    %v967 = vunpack.c.h.b16 %v273
    %v968 = vunpack.c.l.b16 %v274
    %v969 = vunpack.c.h.b16 %v274
    %v970 = vunpack.c.l.b16 %v275
    %v971 = vunpack.c.h.b16 %v275
    %v972 = vunpack.c.l.b16 %v276
    %v973 = vunpack.c.h.b16 %v276
    %v974 = vunpack.c.l.b16 %v277
    %v975 = vunpack.c.h.b16 %v277
    %v976 = vunpack.c.l.b16 %v278
    %v977 = vunpack.c.h.b16 %v278
    %v978 = vunpack.c.l.b16 %v279
    %v979 = vunpack.c.h.b16 %v279
    %v980 = vunpack.c.l.b16 %v280
    %v981 = vunpack.c.h.b16 %v280
    %v982 = vunpack.c.l.b16 %v281
    %v983 = vunpack.c.h.b16 %v281
    %v984 = vunpack.c.l.b16 %v282
    %v985 = vunpack.c.h.b16 %v282
    %v986 = vunpack.c.l.b16 %v283
    %v987 = vunpack.c.h.b16 %v283
    %v988 = vunpack.c.l.b16 %v284
    %v989 = vunpack.c.h.b16 %v284
    %v990 = vunpack.c.l.b16 %v285
    %v991 = vunpack.c.h.b16 %v285
    %v992 = vunpack.c.l.b16 %v286
    %v993 = vunpack.c.h.b16 %v286
    %v994 = vunpack.c.l.b16 %v287
    %v995 = vunpack.c.h.b16 %v287
    %v996 = vunpack.c.l.b16 %v288
    %v997 = vunpack.c.h.b16 %v288
    %v998 = vunpack.c.l.b16 %v289
    %v999 = vunpack.c.h.b16 %v289
    %v1000 = vunpack.c.l.b16 %v290
    %v1001 = vunpack.c.h.b16 %v290
    %v1002 = vunpack.c.l.b16 %v291
    %v1003 = vunpack.c.h.b16 %v291
    %v1004 = vunpack.c.l.b16 %v292
    %v1005 = vunpack.c.h.b16 %v292
    %v1006 = vunpack.c.l.b16 %v293
    %v1007 = vunpack.c.h.b16 %v293
    %v1008 = vunpack.c.l.b16 %v294
    %v1009 = vunpack.c.h.b16 %v294
    %v1010 = vunpack.c.l.b16 %v295
    %v1011 = vunpack.c.h.b16 %v295
    %v1012 = vunpack.c.l.b16 %v296
    %v1013 = vunpack.c.h.b16 %v296
    %v1014 = vunpack.c.l.b16 %v297
    %v1015 = vunpack.c.h.b16 %v297
    %v1016 = vunpack.c.l.b16 %v298
    %v1017 = vunpack.c.h.b16 %v298
    %v1018 = vunpack.c.l.b16 %v299
    %v1019 = vunpack.c.h.b16 %v299
    %v1020 = vunpack.c.l.b16 %v300
    %v1021 = vunpack.c.h.b16 %v300
    %v1022 = vunpack.c.l.b16 %v301
    %v1023 = vunpack.c.h.b16 %v301
    %v1024 = vunpack.c.l.b16 %v302
    %v1025 = vunpack.c.h.b16 %v302
    %v1026 = vunpack.c.l.b16 %v303
    %v1027 = vunpack.c.h.b16 %v303
    %v1028 = vunpack.c.l.b16 %v304
    %v1029 = vunpack.c.h.b16 %v304
    %v1030 = vunpack.c.l.b16 %v305
    %v1031 = vunpack.c.h.b16 %v305
    %v1032 = vunpack.c.l.b16 %v306
    %v1033 = vunpack.c.h.b16 %v306
    %v1034 = vunpack.c.l.b16 %v307
    %v1035 = vunpack.c.h.b16 %v307
    %v1036 = vunpack.c.l.b16 %v308
    %v1037 = vunpack.c.h.b16 %v308
    %v1038 = vunpack.c.l.b16 %v309
    %v1039 = vunpack.c.h.b16 %v309
    %v1040 = vunpack.c.l.b16 %v310
    %v1041 = vunpack.c.h.b16 %v310
    %v1042 = vunpack.c.l.b16 %v311
    %v1043 = vunpack.c.h.b16 %v311
    %v1044 = vunpack.c.l.b16 %v312
    %v1045 = vunpack.c.h.b16 %v312
    %v1046 = vunpack.c.l.b16 %v313
    %v1047 = vunpack.c.h.b16 %v313
    %v1048 = vunpack.c.l.b16 %v314
    %v1049 = vunpack.c.h.b16 %v314
    %v1050 = vunpack.c.l.b16 %v315
    %v1051 = vunpack.c.h.b16 %v315
    %v1052 = vunpack.c.l.b16 %v316
    %v1053 = vunpack.c.h.b16 %v316
    %v1054 = vunpack.c.l.b16 %v317
    %v1055 = vunpack.c.h.b16 %v317
    %v1056 = vunpack.c.l.b16 %v318
    %v1057 = vunpack.c.h.b16 %v318
    %v1058 = vunpack.c.l.b16 %v319
    %v1059 = vunpack.c.h.b16 %v319
    %v1060 = vunpack.c.l.b16 %v320
    %v1061 = vunpack.c.h.b16 %v320
    %v1062 = vunpack.c.l.b16 %v321
    %v1063 = vunpack.c.h.b16 %v321
    %v1064 = vunpack.c.l.b16 %v322
    %v1065 = vunpack.c.h.b16 %v322
    %v1066 = vunpack.c.l.b16 %v323
    %v1067 = vunpack.c.h.b16 %v323
    %v1068 = vunpack.c.l.b16 %v324
    %v1069 = vunpack.c.h.b16 %v324
    %v1070 = vunpack.c.l.b16 %v325
    %v1071 = vunpack.c.h.b16 %v325
    %v1072 = vunpack.c.l.b16 %v326
    %v1073 = vunpack.c.h.b16 %v326
    %v1074 = vunpack.c.l.b16 %v327
    %v1075 = vunpack.c.h.b16 %v327
    %v1076 = vunpack.c.l.b16 %v328
    %v1077 = vunpack.c.h.b16 %v328
    %v1078 = vunpack.c.l.b16 %v329
    %v1079 = vunpack.c.h.b16 %v329
    %v1080 = vunpack.c.l.b16 %v330
    %v1081 = vunpack.c.h.b16 %v330
    %v1082 = vunpack.c.l.b16 %v331
    %v1083 = vunpack.c.h.b16 %v331
    %v1084 = vunpack.c.l.b16 %v332
    %v1085 = vunpack.c.h.b16 %v332
    %v1086 = vunpack.c.l.b16 %v333
    %v1087 = vunpack.c.h.b16 %v333
    %v1088 = vunpack.c.l.b16 %v334
    %v1089 = vunpack.c.h.b16 %v334
    %v1090 = vunpack.c.l.b16 %v335
    %v1091 = vunpack.c.h.b16 %v335
    %v1092 = vunpack.c.l.b16 %v336
    %v1093 = vunpack.c.h.b16 %v336
    %v1094 = vunpack.c.l.b16 %v337
    %v1095 = vunpack.c.h.b16 %v337
    %v1096 = vunpack.c.l.b16 %v338
    %v1097 = vunpack.c.h.b16 %v338
    %v1098 = vunpack.c.l.b16 %v339
    %v1099 = vunpack.c.h.b16 %v339
    %v1100 = vunpack.c.l.b16 %v340
    %v1101 = vunpack.c.h.b16 %v340
    %v1102 = vunpack.c.l.b16 %v341
    %v1103 = vunpack.c.h.b16 %v341
    %v1104 = vunpack.c.l.b16 %v342
    %v1105 = vunpack.c.h.b16 %v342
    %v1106 = vunpack.c.l.b16 %v343
    %v1107 = vunpack.c.h.b16 %v343
    %v1108 = vunpack.c.l.b16 %v344
    %v1109 = vunpack.c.h.b16 %v344
    %v1110 = vunpack.c.l.b16 %v345
    %v1111 = vunpack.c.h.b16 %v345
    %v1112 = vunpack.c.l.b16 %v346
    %v1113 = vunpack.c.h.b16 %v346
    %v1114 = vunpack.c.l.b16 %v347
    %v1115 = vunpack.c.h.b16 %v347
    %v1116 = vunpack.c.l.b16 %v348
    %v1117 = vunpack.c.h.b16 %v348
    %v1118 = vunpack.c.l.b16 %v349
    %v1119 = vunpack.c.h.b16 %v349
    %v1120 = vunpack.c.l.b16 %v350
    %v1121 = vunpack.c.h.b16 %v350
    %v1122 = vunpack.c.l.b16 %v351
    %v1123 = vunpack.c.h.b16 %v351
    %v1124 = vunpack.c.l.b16 %v352
    %v1125 = vunpack.c.h.b16 %v352
    %v1126 = vunpack.c.l.b16 %v353
    %v1127 = vunpack.c.h.b16 %v353
    %v1128 = vunpack.c.l.b16 %v354
    %v1129 = vunpack.c.h.b16 %v354
    %v1130 = vunpack.c.l.b16 %v355
    %v1131 = vunpack.c.h.b16 %v355
    %v1132 = vunpack.c.l.b16 %v356
    %v1133 = vunpack.c.h.b16 %v356
    %v1134 = vunpack.c.l.b16 %v357
    %v1135 = vunpack.c.h.b16 %v357
    %v1136 = vunpack.c.l.b16 %v358
    %v1137 = vunpack.c.h.b16 %v358
    %v1138 = vunpack.c.l.b16 %v359
    %v1139 = vunpack.c.h.b16 %v359
    %v1140 = vunpack.c.l.b16 %v360
    %v1141 = vunpack.c.h.b16 %v360
    %v1142 = vunpack.c.l.b16 %v361
    %v1143 = vunpack.c.h.b16 %v361
    %v1144 = vunpack.c.l.b16 %v362
    %v1145 = vunpack.c.h.b16 %v362
    %v1146 = vunpack.c.l.b16 %v363
    %v1147 = vunpack.c.h.b16 %v363
    %v1148 = vunpack.c.l.b16 %v364
    %v1149 = vunpack.c.h.b16 %v364
    %v1150 = vunpack.c.l.b16 %v365
    %v1151 = vunpack.c.h.b16 %v365
    %v1152 = vunpack.c.l.b16 %v366
    %v1153 = vunpack.c.h.b16 %v366
    %v1154 = vunpack.c.l.b16 %v367
    %v1155 = vunpack.c.h.b16 %v367
    %v1156 = vunpack.c.l.b16 %v368
    %v1157 = vunpack.c.h.b16 %v368
    %v1158 = vunpack.c.l.b16 %v369
    %v1159 = vunpack.c.h.b16 %v369
    %v1160 = vunpack.c.l.b16 %v370
    %v1161 = vunpack.c.h.b16 %v370
    %v1162 = vunpack.c.l.b16 %v371
    %v1163 = vunpack.c.h.b16 %v371
    %v1164 = vunpack.c.l.b16 %v372
    %v1165 = vunpack.c.h.b16 %v372
    %v1166 = vunpack.c.l.b16 %v373
    %v1167 = vunpack.c.h.b16 %v373
    %v1168 = vunpack.c.l.b16 %v374
    %v1169 = vunpack.c.h.b16 %v374
    %v1170 = vunpack.c.l.b16 %v375
    %v1171 = vunpack.c.h.b16 %v375
    %v1172 = vunpack.c.l.b16 %v376
    %v1173 = vunpack.c.h.b16 %v376
    %v1174 = vunpack.c.l.b16 %v377
    %v1175 = vunpack.c.h.b16 %v377
    %v1176 = vunpack.c.l.b16 %v378
    %v1177 = vunpack.c.h.b16 %v378
    %v1178 = vunpack.c.l.b16 %v379
    %v1179 = vunpack.c.h.b16 %v379
    %v1180 = vunpack.c.l.b16 %v380
    %v1181 = vunpack.c.h.b16 %v380
    %v1182 = vunpack.c.l.b16 %v381
    %v1183 = vunpack.c.h.b16 %v381
    %v1184 = vunpack.c.l.b16 %v382
    %v1185 = vunpack.c.h.b16 %v382
    %v1186 = vunpack.c.l.b16 %v383
    %v1187 = vunpack.c.h.b16 %v383
    %v1188 = vunpack.c.l.b16 %v384
    %v1189 = vunpack.c.h.b16 %v384
    %v1190 = vunpack.c.l.b16 %v385
    %v1191 = vunpack.c.h.b16 %v385
    %v1192 = vunpack.c.l.b16 %v386
    %v1193 = vunpack.c.h.b16 %v386
    %v1194 = vunpack.c.l.b16 %v387
    %v1195 = vunpack.c.h.b16 %v387
    %v1196 = vunpack.c.l.b16 %v388
    %v1197 = vunpack.c.h.b16 %v388
    %v1198 = vunpack.c.l.b16 %v389
    %v1199 = vunpack.c.h.b16 %v389
    %v1200 = vunpack.c.l.b16 %v390
    %v1201 = vunpack.c.h.b16 %v390
    %v1202 = vunpack.c.l.b16 %v391
    %v1203 = vunpack.c.h.b16 %v391
    %v1204 = vunpack.c.l.b16 %v392
    %v1205 = vunpack.c.h.b16 %v392
    %v1206 = vunpack.c.l.b16 %v393
    %v1207 = vunpack.c.h.b16 %v393
    %v1208 = vunpack.c.l.b16 %v394
    %v1209 = vunpack.c.h.b16 %v394
    %v1210 = vunpack.c.l.b16 %v395
    %v1211 = vunpack.c.h.b16 %v395
    %v1212 = vunpack.c.l.b16 %v396
    %v1213 = vunpack.c.h.b16 %v396
    %v1214 = vunpack.c.l.b16 %v397
    %v1215 = vunpack.c.h.b16 %v397
    %v1216 = vunpack.c.l.b16 %v398
    %v1217 = vunpack.c.h.b16 %v398
    %v1218 = vunpack.c.l.b16 %v399
    %v1219 = vunpack.c.h.b16 %v399
    %v1220 = vunpack.c.l.b16 %v400
    %v1221 = vunpack.c.h.b16 %v400
    %v1222 = vunpack.c.l.b16 %v401
    %v1223 = vunpack.c.h.b16 %v401
    %v1224 = vunpack.c.l.b16 %v402
    %v1225 = vunpack.c.h.b16 %v402
    %v1226 = vunpack.c.l.b16 %v403
    %v1227 = vunpack.c.h.b16 %v403
    %v1228 = vpack.c.b16 %v724, %v716
    %v1229 = vpack.c.b16 %v725, %v717
    %v1230 = vpack.c.b16 %v726, %v718
    %v1231 = vpack.c.b16 %v727, %v719
    %v1232 = vpack.c.b16 %v728, %v720
    %v1233 = vpack.c.b16 %v729, %v721
    %v1234 = vpack.c.b16 %v730, %v722
    %v1235 = vpack.c.b16 %v731, %v723
    %v1236 = vpack.c.b16 %v740, %v732
    %v1237 = vpack.c.b16 %v741, %v733
    %v1238 = vpack.c.b16 %v742, %v734
    %v1239 = vpack.c.b16 %v743, %v735
    %v1240 = vpack.c.b16 %v744, %v736
    %v1241 = vpack.c.b16 %v745, %v737
    %v1242 = vpack.c.b16 %v746, %v738
    %v1243 = vpack.c.b16 %v747, %v739
    %v1244 = vpack.c.b16 %v756, %v748
    %v1245 = vpack.c.b16 %v757, %v749
    %v1246 = vpack.c.b16 %v758, %v750
    %v1247 = vpack.c.b16 %v759, %v751
    %v1248 = vpack.c.b16 %v760, %v752
    %v1249 = vpack.c.b16 %v761, %v753
    %v1250 = vpack.c.b16 %v762, %v754
    %v1251 = vpack.c.b16 %v763, %v755
    %v1252 = vpack.c.b16 %v772, %v764
    %v1253 = vpack.c.b16 %v773, %v765
    %v1254 = vpack.c.b16 %v774, %v766
    %v1255 = vpack.c.b16 %v775, %v767
    %v1256 = vpack.c.b16 %v776, %v768
    %v1257 = vpack.c.b16 %v777, %v769
    %v1258 = vpack.c.b16 %v778, %v770
    %v1259 = vpack.c.b16 %v779, %v771
    %v1260 = vpack.c.b16 %v788, %v780
    %v1261 = vpack.c.b16 %v789, %v781
    %v1262 = vpack.c.b16 %v790, %v782
    %v1263 = vpack.c.b16 %v791, %v783
    %v1264 = vpack.c.b16 %v792, %v784
    %v1265 = vpack.c.b16 %v793, %v785
    %v1266 = vpack.c.b16 %v794, %v786
    %v1267 = vpack.c.b16 %v795, %v787
    %v1268 = vpack.c.b16 %v804, %v796
    %v1269 = vpack.c.b16 %v805, %v797
    %v1270 = vpack.c.b16 %v806, %v798
    %v1271 = vpack.c.b16 %v807, %v799
    %v1272 = vpack.c.b16 %v808, %v800
    %v1273 = vpack.c.b16 %v809, %v801
    %v1274 = vpack.c.b16 %v810, %v802
    %v1275 = vpack.c.b16 %v811, %v803
    %v1276 = vpack.c.b16 %v820, %v812
    %v1277 = vpack.c.b16 %v821, %v813
    %v1278 = vpack.c.b16 %v822, %v814
    %v1279 = vpack.c.b16 %v823, %v815
    %v1280 = vpack.c.b16 %v824, %v816
    %v1281 = vpack.c.b16 %v825, %v817
    %v1282 = vpack.c.b16 %v826, %v818
    %v1283 = vpack.c.b16 %v827, %v819
    %v1284 = vpack.c.b16 %v836, %v828
    %v1285 = vpack.c.b16 %v837, %v829
    %v1286 = vpack.c.b16 %v838, %v830
    %v1287 = vpack.c.b16 %v839, %v831
    %v1288 = vpack.c.b16 %v840, %v832
    %v1289 = vpack.c.b16 %v841, %v833
    %v1290 = vpack.c.b16 %v842, %v834
    %v1291 = vpack.c.b16 %v843, %v835
    %v1292 = vpack.c.b16 %v852, %v844
    %v1293 = vpack.c.b16 %v853, %v845
    %v1294 = vpack.c.b16 %v854, %v846
    %v1295 = vpack.c.b16 %v855, %v847
    %v1296 = vpack.c.b16 %v856, %v848
    %v1297 = vpack.c.b16 %v857, %v849
    %v1298 = vpack.c.b16 %v858, %v850
    %v1299 = vpack.c.b16 %v859, %v851
    %v1300 = vpack.c.b16 %v868, %v860
    %v1301 = vpack.c.b16 %v869, %v861
    %v1302 = vpack.c.b16 %v870, %v862
    %v1303 = vpack.c.b16 %v871, %v863
    %v1304 = vpack.c.b16 %v872, %v864
    %v1305 = vpack.c.b16 %v873, %v865
    %v1306 = vpack.c.b16 %v874, %v866
    %v1307 = vpack.c.b16 %v875, %v867
    %v1308 = vpack.c.b16 %v884, %v876
    %v1309 = vpack.c.b16 %v885, %v877
    %v1310 = vpack.c.b16 %v886, %v878
    %v1311 = vpack.c.b16 %v887, %v879
    %v1312 = vpack.c.b16 %v888, %v880
    %v1313 = vpack.c.b16 %v889, %v881
    %v1314 = vpack.c.b16 %v890, %v882
    %v1315 = vpack.c.b16 %v891, %v883
    %v1316 = vpack.c.b16 %v900, %v892
    %v1317 = vpack.c.b16 %v901, %v893
    %v1318 = vpack.c.b16 %v902, %v894
    %v1319 = vpack.c.b16 %v903, %v895
    %v1320 = vpack.c.b16 %v904, %v896
    %v1321 = vpack.c.b16 %v905, %v897
    %v1322 = vpack.c.b16 %v906, %v898
    %v1323 = vpack.c.b16 %v907, %v899
    %v1324 = vpack.c.b16 %v916, %v908
    %v1325 = vpack.c.b16 %v917, %v909
    %v1326 = vpack.c.b16 %v918, %v910
    %v1327 = vpack.c.b16 %v919, %v911
    %v1328 = vpack.c.b16 %v920, %v912
    %v1329 = vpack.c.b16 %v921, %v913
    %v1330 = vpack.c.b16 %v922, %v914
    %v1331 = vpack.c.b16 %v923, %v915
    %v1332 = vpack.c.b16 %v932, %v924
    %v1333 = vpack.c.b16 %v933, %v925
    %v1334 = vpack.c.b16 %v934, %v926
    %v1335 = vpack.c.b16 %v935, %v927
    %v1336 = vpack.c.b16 %v936, %v928
    %v1337 = vpack.c.b16 %v937, %v929
    %v1338 = vpack.c.b16 %v938, %v930
    %v1339 = vpack.c.b16 %v939, %v931
    %v1340 = vpack.c.b16 %v948, %v940
    %v1341 = vpack.c.b16 %v949, %v941
    %v1342 = vpack.c.b16 %v950, %v942
    %v1343 = vpack.c.b16 %v951, %v943
    %v1344 = vpack.c.b16 %v952, %v944
    %v1345 = vpack.c.b16 %v953, %v945
    %v1346 = vpack.c.b16 %v954, %v946
    %v1347 = vpack.c.b16 %v955, %v947
    %v1348 = vpack.c.b16 %v964, %v956
    %v1349 = vpack.c.b16 %v965, %v957
    %v1350 = vpack.c.b16 %v966, %v958
    %v1351 = vpack.c.b16 %v967, %v959
    %v1352 = vpack.c.b16 %v968, %v960
    %v1353 = vpack.c.b16 %v969, %v961
    %v1354 = vpack.c.b16 %v970, %v962
    %v1355 = vpack.c.b16 %v971, %v963
    %v1356 = vpack.c.b16 %v980, %v972
    %v1357 = vpack.c.b16 %v981, %v973
    %v1358 = vpack.c.b16 %v982, %v974
    %v1359 = vpack.c.b16 %v983, %v975
    %v1360 = vpack.c.b16 %v984, %v976
    %v1361 = vpack.c.b16 %v985, %v977
    %v1362 = vpack.c.b16 %v986, %v978
    %v1363 = vpack.c.b16 %v987, %v979
    %v1364 = vpack.c.b16 %v996, %v988
    %v1365 = vpack.c.b16 %v997, %v989
    %v1366 = vpack.c.b16 %v998, %v990
    %v1367 = vpack.c.b16 %v999, %v991
    %v1368 = vpack.c.b16 %v1000, %v992
    %v1369 = vpack.c.b16 %v1001, %v993
    %v1370 = vpack.c.b16 %v1002, %v994
    %v1371 = vpack.c.b16 %v1003, %v995
    %v1372 = vpack.c.b16 %v1012, %v1004
    %v1373 = vpack.c.b16 %v1013, %v1005
    %v1374 = vpack.c.b16 %v1014, %v1006
    %v1375 = vpack.c.b16 %v1015, %v1007
    %v1376 = vpack.c.b16 %v1016, %v1008
    %v1377 = vpack.c.b16 %v1017, %v1009
    %v1378 = vpack.c.b16 %v1018, %v1010
    %v1379 = vpack.c.b16 %v1019, %v1011
    %v1380 = vpack.c.b16 %v1028, %v1020
    %v1381 = vpack.c.b16 %v1029, %v1021
    %v1382 = vpack.c.b16 %v1030, %v1022
    %v1383 = vpack.c.b16 %v1031, %v1023
    %v1384 = vpack.c.b16 %v1032, %v1024
    %v1385 = vpack.c.b16 %v1033, %v1025
    %v1386 = vpack.c.b16 %v1034, %v1026
    %v1387 = vpack.c.b16 %v1035, %v1027
    %v1388 = vpack.c.b16 %v1044, %v1036
    %v1389 = vpack.c.b16 %v1045, %v1037
    %v1390 = vpack.c.b16 %v1046, %v1038
    %v1391 = vpack.c.b16 %v1047, %v1039
    %v1392 = vpack.c.b16 %v1048, %v1040
    %v1393 = vpack.c.b16 %v1049, %v1041
    %v1394 = vpack.c.b16 %v1050, %v1042
    %v1395 = vpack.c.b16 %v1051, %v1043
    %v1396 = vpack.c.b16 %v1060, %v1052
    %v1397 = vpack.c.b16 %v1061, %v1053
    %v1398 = vpack.c.b16 %v1062, %v1054
    %v1399 = vpack.c.b16 %v1063, %v1055
    %v1400 = vpack.c.b16 %v1064, %v1056
    %v1401 = vpack.c.b16 %v1065, %v1057
    %v1402 = vpack.c.b16 %v1066, %v1058
    %v1403 = vpack.c.b16 %v1067, %v1059
    %v1404 = vpack.c.b16 %v1076, %v1068
    %v1405 = vpack.c.b16 %v1077, %v1069
    %v1406 = vpack.c.b16 %v1078, %v1070
    %v1407 = vpack.c.b16 %v1079, %v1071
    %v1408 = vpack.c.b16 %v1080, %v1072
    %v1409 = vpack.c.b16 %v1081, %v1073
    %v1410 = vpack.c.b16 %v1082, %v1074
    %v1411 = vpack.c.b16 %v1083, %v1075
    %v1412 = vpack.c.b16 %v1092, %v1084
    %v1413 = vpack.c.b16 %v1093, %v1085
    %v1414 = vpack.c.b16 %v1094, %v1086
    %v1415 = vpack.c.b16 %v1095, %v1087
    %v1416 = vpack.c.b16 %v1096, %v1088
    %v1417 = vpack.c.b16 %v1097, %v1089
    %v1418 = vpack.c.b16 %v1098, %v1090
    %v1419 = vpack.c.b16 %v1099, %v1091
    %v1420 = vpack.c.b16 %v1108, %v1100
    %v1421 = vpack.c.b16 %v1109, %v1101
    %v1422 = vpack.c.b16 %v1110, %v1102
    %v1423 = vpack.c.b16 %v1111, %v1103
    %v1424 = vpack.c.b16 %v1112, %v1104
    %v1425 = vpack.c.b16 %v1113, %v1105
    %v1426 = vpack.c.b16 %v1114, %v1106
    %v1427 = vpack.c.b16 %v1115, %v1107
    %v1428 = vpack.c.b16 %v1124, %v1116
    %v1429 = vpack.c.b16 %v1125, %v1117
    %v1430 = vpack.c.b16 %v1126, %v1118
    %v1431 = vpack.c.b16 %v1127, %v1119
    %v1432 = vpack.c.b16 %v1128, %v1120
    %v1433 = vpack.c.b16 %v1129, %v1121
    %v1434 = vpack.c.b16 %v1130, %v1122
    %v1435 = vpack.c.b16 %v1131, %v1123
    %v1436 = vpack.c.b16 %v1140, %v1132
    %v1437 = vpack.c.b16 %v1141, %v1133
    %v1438 = vpack.c.b16 %v1142, %v1134
    %v1439 = vpack.c.b16 %v1143, %v1135
    %v1440 = vpack.c.b16 %v1144, %v1136
    %v1441 = vpack.c.b16 %v1145, %v1137
    %v1442 = vpack.c.b16 %v1146, %v1138
    %v1443 = vpack.c.b16 %v1147, %v1139
    %v1444 = vpack.c.b16 %v1156, %v1148
    %v1445 = vpack.c.b16 %v1157, %v1149
    %v1446 = vpack.c.b16 %v1158, %v1150
    %v1447 = vpack.c.b16 %v1159, %v1151
    %v1448 = vpack.c.b16 %v1160, %v1152
    %v1449 = vpack.c.b16 %v1161, %v1153
    %v1450 = vpack.c.b16 %v1162, %v1154
    %v1451 = vpack.c.b16 %v1163, %v1155
    %v1452 = vpack.c.b16 %v1172, %v1164
    %v1453 = vpack.c.b16 %v1173, %v1165
    %v1454 = vpack.c.b16 %v1174, %v1166
    %v1455 = vpack.c.b16 %v1175, %v1167
    %v1456 = vpack.c.b16 %v1176, %v1168
    %v1457 = vpack.c.b16 %v1177, %v1169
    %v1458 = vpack.c.b16 %v1178, %v1170
    %v1459 = vpack.c.b16 %v1179, %v1171
    %v1460 = vpack.c.b16 %v1188, %v1180
    %v1461 = vpack.c.b16 %v1189, %v1181
    %v1462 = vpack.c.b16 %v1190, %v1182
    %v1463 = vpack.c.b16 %v1191, %v1183
    %v1464 = vpack.c.b16 %v1192, %v1184
    %v1465 = vpack.c.b16 %v1193, %v1185
    %v1466 = vpack.c.b16 %v1194, %v1186
    %v1467 = vpack.c.b16 %v1195, %v1187
    %v1468 = vpack.c.b16 %v1204, %v1196
    %v1469 = vpack.c.b16 %v1205, %v1197
    %v1470 = vpack.c.b16 %v1206, %v1198
    %v1471 = vpack.c.b16 %v1207, %v1199
    %v1472 = vpack.c.b16 %v1208, %v1200
    %v1473 = vpack.c.b16 %v1209, %v1201
    %v1474 = vpack.c.b16 %v1210, %v1202
    %v1475 = vpack.c.b16 %v1211, %v1203
    %v1476 = vpack.c.b16 %v1220, %v1212
    %v1477 = vpack.c.b16 %v1221, %v1213
    %v1478 = vpack.c.b16 %v1222, %v1214
    %v1479 = vpack.c.b16 %v1223, %v1215
    %v1480 = vpack.c.b16 %v1224, %v1216
    %v1481 = vpack.c.b16 %v1225, %v1217
    %v1482 = vpack.c.b16 %v1226, %v1218
    %v1483 = vpack.c.b16 %v1227, %v1219
    %1740 = vmatprep.subr.bf16.mxu0 %v1229
    %1741 = vmatpush1.bf16.msra.mxu0 %v1228
    %1742 = vmatprep.subr.bf16.mxu0 %v1237
    %1743 = vmatpush1.bf16.msra.mxu0 %v1236
    %1744 = vmatprep.subr.bf16.mxu0 %v1245
    %1745 = vmatpush1.bf16.msra.mxu0 %v1244
    %1746 = vmatprep.subr.bf16.mxu0 %v1253
    %1747 = vmatpush1.bf16.msra.mxu0 %v1252
    %1748 = vmatprep.subr.bf16.mxu0 %v1261
    %1749 = vmatpush1.bf16.msra.mxu0 %v1260
    %1750 = vmatprep.subr.bf16.mxu0 %v1269
    %1751 = vmatpush1.bf16.msra.mxu0 %v1268
    %1752 = vmatprep.subr.bf16.mxu0 %v1277
    %1753 = vmatpush1.bf16.msra.mxu0 %v1276
    %1754 = vmatprep.subr.bf16.mxu0 %v1285
    %1755 = vmatpush1.bf16.msra.mxu0 %v1284
    %1756 = vmatprep.subr.bf16.mxu0 %v1293
    %1757 = vmatpush1.bf16.msra.mxu0 %v1292
    %1758 = vmatprep.subr.bf16.mxu0 %v1301
    %1759 = vmatpush1.bf16.msra.mxu0 %v1300
    %1760 = vmatprep.subr.bf16.mxu0 %v1309
    %1761 = vmatpush1.bf16.msra.mxu0 %v1308
    %1762 = vmatprep.subr.bf16.mxu0 %v1317
    %1763 = vmatpush1.bf16.msra.mxu0 %v1316
    %1764 = vmatprep.subr.bf16.mxu0 %v1325
    %1765 = vmatpush1.bf16.msra.mxu0 %v1324
    %1766 = vmatprep.subr.bf16.mxu0 %v1333
    %1767 = vmatpush1.bf16.msra.mxu0 %v1332
    %1768 = vmatprep.subr.bf16.mxu0 %v1341
    %1769 = vmatpush1.bf16.msra.mxu0 %v1340
    %1770 = vmatprep.subr.bf16.mxu0 %v1349
    %1771 = vmatpush1.bf16.msra.mxu0 %v1348
    %1772 = vmatprep.mubr.bf16.mxu0 %v453
    %1773 = vmatmul.mubr.bf16.gmra.mrb[0].mxu0 %v452
    %v1774 = vpop.f32.mrb[0].mxu0
    %v1775 = vadd.f32 %v409, %v1774
    %v1776 = vpop.f32.mrb[0].mxu0
    %v1777 = vadd.f32 %v413, %v1776
    %v1778 = vpop.f32.mrb[0].mxu0
    %v1779 = vpop.f32.mrb[0].mxu0
    %1780 = vdwg.mxu0
    %1781 = vmatprep.subr.bf16.mxu0 %v1357
    %1782 = vmatpush1.bf16.msra.mxu0 %v1356
    %1783 = vmatprep.subr.bf16.mxu0 %v1365
    %1784 = vmatpush1.bf16.msra.mxu0 %v1364
    %1785 = vmatprep.subr.bf16.mxu0 %v1373
    %1786 = vmatpush1.bf16.msra.mxu0 %v1372
    %1787 = vmatprep.subr.bf16.mxu0 %v1381
    %1788 = vmatpush1.bf16.msra.mxu0 %v1380
    %1789 = vmatprep.subr.bf16.mxu0 %v1389
    %1790 = vmatpush1.bf16.msra.mxu0 %v1388
    %1791 = vmatprep.subr.bf16.mxu0 %v1397
    %1792 = vmatpush1.bf16.msra.mxu0 %v1396
    %1793 = vmatprep.subr.bf16.mxu0 %v1405
    %1794 = vmatpush1.bf16.msra.mxu0 %v1404
    %1795 = vmatprep.subr.bf16.mxu0 %v1413
    %1796 = vmatpush1.bf16.msra.mxu0 %v1412
    %1797 = vmatprep.subr.bf16.mxu0 %v1421
    %1798 = vmatpush1.bf16.msra.mxu0 %v1420
    %1799 = vmatprep.subr.bf16.mxu0 %v1429
    %1800 = vmatpush1.bf16.msra.mxu0 %v1428
    %1801 = vmatprep.subr.bf16.mxu0 %v1437
    %1802 = vmatpush1.bf16.msra.mxu0 %v1436
    %1803 = vmatprep.subr.bf16.mxu0 %v1445
    %1804 = vmatpush1.bf16.msra.mxu0 %v1444
    %1805 = vmatprep.subr.bf16.mxu0 %v1453
    %1806 = vmatpush1.bf16.msra.mxu0 %v1452
    %1807 = vmatprep.subr.bf16.mxu0 %v1461
    %1808 = vmatpush1.bf16.msra.mxu0 %v1460
    %1809 = vmatprep.subr.bf16.mxu0 %v1469
    %1810 = vmatpush1.bf16.msra.mxu0 %v1468
    %1811 = vmatprep.subr.bf16.mxu0 %v1477
    %1812 = vmatpush1.bf16.msra.mxu0 %v1476
    %1813 = vmatprep.mubr.bf16.mxu0 %v455
    %1814 = vmatmul.mubr.bf16.gmra.mrb[0].mxu0 %v454
    %v1815 = vpop.f32.mrb[0].mxu0
    %v1816 = vadd.f32 %v1775, %v1815
    %v1817 = vpop.f32.mrb[0].mxu0
    %v1818 = vadd.f32 %v1777, %v1817
    %v1819 = vpop.f32.mrb[0].mxu0
    %v1820 = vpop.f32.mrb[0].mxu0
    %1821 = vdwg.mxu0
    %1822 = vmatprep.subr.bf16.mxu0 %v1231
    %1823 = vmatpush1.bf16.msra.mxu0 %v1230
    %1824 = vmatprep.subr.bf16.mxu0 %v1239
    %1825 = vmatpush1.bf16.msra.mxu0 %v1238
    %1826 = vmatprep.subr.bf16.mxu0 %v1247
    %1827 = vmatpush1.bf16.msra.mxu0 %v1246
    %1828 = vmatprep.subr.bf16.mxu0 %v1255
    %1829 = vmatpush1.bf16.msra.mxu0 %v1254
    %1830 = vmatprep.subr.bf16.mxu0 %v1263
    %1831 = vmatpush1.bf16.msra.mxu0 %v1262
    %1832 = vmatprep.subr.bf16.mxu0 %v1271
    %1833 = vmatpush1.bf16.msra.mxu0 %v1270
    %1834 = vmatprep.subr.bf16.mxu0 %v1279
    %1835 = vmatpush1.bf16.msra.mxu0 %v1278
    %1836 = vmatprep.subr.bf16.mxu0 %v1287
    %1837 = vmatpush1.bf16.msra.mxu0 %v1286
    %1838 = vmatprep.subr.bf16.mxu0 %v1295
    %1839 = vmatpush1.bf16.msra.mxu0 %v1294
    %1840 = vmatprep.subr.bf16.mxu0 %v1303
    %1841 = vmatpush1.bf16.msra.mxu0 %v1302
    %1842 = vmatprep.subr.bf16.mxu0 %v1311
    %1843 = vmatpush1.bf16.msra.mxu0 %v1310
    %1844 = vmatprep.subr.bf16.mxu0 %v1319
    %1845 = vmatpush1.bf16.msra.mxu0 %v1318
    %1846 = vmatprep.subr.bf16.mxu0 %v1327
    %1847 = vmatpush1.bf16.msra.mxu0 %v1326
    %1848 = vmatprep.subr.bf16.mxu0 %v1335
    %1849 = vmatpush1.bf16.msra.mxu0 %v1334
    %1850 = vmatprep.subr.bf16.mxu0 %v1343
    %1851 = vmatpush1.bf16.msra.mxu0 %v1342
    %1852 = vmatprep.subr.bf16.mxu0 %v1351
    %1853 = vmatpush1.bf16.msra.mxu0 %v1350
    %1854 = vmatprep.mubr.bf16.mxu0 %v453
    %1855 = vmatmul.mubr.bf16.gmra.mrb[0].mxu0 %v452
    %v1856 = vpop.f32.mrb[0].mxu0
    %v1857 = vadd.f32 %v417, %v1856
    %v1858 = vpop.f32.mrb[0].mxu0
    %v1859 = vadd.f32 %v421, %v1858
    %v1860 = vpop.f32.mrb[0].mxu0
    %v1861 = vpop.f32.mrb[0].mxu0
    %1862 = vdwg.mxu0
    %1863 = vmatprep.subr.bf16.mxu0 %v1359
    %1864 = vmatpush1.bf16.msra.mxu0 %v1358
    %1865 = vmatprep.subr.bf16.mxu0 %v1367
    %1866 = vmatpush1.bf16.msra.mxu0 %v1366
    %1867 = vmatprep.subr.bf16.mxu0 %v1375
    %1868 = vmatpush1.bf16.msra.mxu0 %v1374
    %1869 = vmatprep.subr.bf16.mxu0 %v1383
    %1870 = vmatpush1.bf16.msra.mxu0 %v1382
    %1871 = vmatprep.subr.bf16.mxu0 %v1391
    %1872 = vmatpush1.bf16.msra.mxu0 %v1390
    %1873 = vmatprep.subr.bf16.mxu0 %v1399
    %1874 = vmatpush1.bf16.msra.mxu0 %v1398
    %1875 = vmatprep.subr.bf16.mxu0 %v1407
    %1876 = vmatpush1.bf16.msra.mxu0 %v1406
    %1877 = vmatprep.subr.bf16.mxu0 %v1415
    %1878 = vmatpush1.bf16.msra.mxu0 %v1414
    %1879 = vmatprep.subr.bf16.mxu0 %v1423
    %1880 = vmatpush1.bf16.msra.mxu0 %v1422
    %1881 = vmatprep.subr.bf16.mxu0 %v1431
    %1882 = vmatpush1.bf16.msra.mxu0 %v1430
    %1883 = vmatprep.subr.bf16.mxu0 %v1439
    %1884 = vmatpush1.bf16.msra.mxu0 %v1438
    %1885 = vmatprep.subr.bf16.mxu0 %v1447
    %1886 = vmatpush1.bf16.msra.mxu0 %v1446
    %1887 = vmatprep.subr.bf16.mxu0 %v1455
    %1888 = vmatpush1.bf16.msra.mxu0 %v1454
    %1889 = vmatprep.subr.bf16.mxu0 %v1463
    %1890 = vmatpush1.bf16.msra.mxu0 %v1462
    %1891 = vmatprep.subr.bf16.mxu0 %v1471
    %1892 = vmatpush1.bf16.msra.mxu0 %v1470
    %1893 = vmatprep.subr.bf16.mxu0 %v1479
    %1894 = vmatpush1.bf16.msra.mxu0 %v1478
    %1895 = vmatprep.mubr.bf16.mxu0 %v455
    %1896 = vmatmul.mubr.bf16.gmra.mrb[0].mxu0 %v454
    %v1897 = vpop.f32.mrb[0].mxu0
    %v1898 = vadd.f32 %v1857, %v1897
    %v1899 = vpop.f32.mrb[0].mxu0
    %v1900 = vadd.f32 %v1859, %v1899
    %v1901 = vpop.f32.mrb[0].mxu0
    %v1902 = vpop.f32.mrb[0].mxu0
    %1903 = vdwg.mxu0
    %1904 = vmatprep.subr.bf16.mxu0 %v1233
    %1905 = vmatpush1.bf16.msra.mxu0 %v1232
    %1906 = vmatprep.subr.bf16.mxu0 %v1241
    %1907 = vmatpush1.bf16.msra.mxu0 %v1240
    %1908 = vmatprep.subr.bf16.mxu0 %v1249
    %1909 = vmatpush1.bf16.msra.mxu0 %v1248
    %1910 = vmatprep.subr.bf16.mxu0 %v1257
    %1911 = vmatpush1.bf16.msra.mxu0 %v1256
    %1912 = vmatprep.subr.bf16.mxu0 %v1265
    %1913 = vmatpush1.bf16.msra.mxu0 %v1264
    %1914 = vmatprep.subr.bf16.mxu0 %v1273
    %1915 = vmatpush1.bf16.msra.mxu0 %v1272
    %1916 = vmatprep.subr.bf16.mxu0 %v1281
    %1917 = vmatpush1.bf16.msra.mxu0 %v1280
    %1918 = vmatprep.subr.bf16.mxu0 %v1289
    %1919 = vmatpush1.bf16.msra.mxu0 %v1288
    %1920 = vmatprep.subr.bf16.mxu0 %v1297
    %1921 = vmatpush1.bf16.msra.mxu0 %v1296
    %1922 = vmatprep.subr.bf16.mxu0 %v1305
    %1923 = vmatpush1.bf16.msra.mxu0 %v1304
    %1924 = vmatprep.subr.bf16.mxu0 %v1313
    %1925 = vmatpush1.bf16.msra.mxu0 %v1312
    %1926 = vmatprep.subr.bf16.mxu0 %v1321
    %1927 = vmatpush1.bf16.msra.mxu0 %v1320
    %1928 = vmatprep.subr.bf16.mxu0 %v1329
    %1929 = vmatpush1.bf16.msra.mxu0 %v1328
    %1930 = vmatprep.subr.bf16.mxu0 %v1337
    %1931 = vmatpush1.bf16.msra.mxu0 %v1336
    %1932 = vmatprep.subr.bf16.mxu0 %v1345
    %1933 = vmatpush1.bf16.msra.mxu0 %v1344
    %1934 = vmatprep.subr.bf16.mxu0 %v1353
    %1935 = vmatpush1.bf16.msra.mxu0 %v1352
    %1936 = vmatprep.mubr.bf16.mxu0 %v453
    %1937 = vmatmul.mubr.bf16.gmra.mrb[0].mxu0 %v452
    %v1938 = vpop.f32.mrb[0].mxu0
    %v1939 = vadd.f32 %v425, %v1938
    %v1940 = vpop.f32.mrb[0].mxu0
    %v1941 = vadd.f32 %v429, %v1940
    %v1942 = vpop.f32.mrb[0].mxu0
    %v1943 = vpop.f32.mrb[0].mxu0
    %1944 = vdwg.mxu0
    %1945 = vmatprep.subr.bf16.mxu0 %v1361
    %1946 = vmatpush1.bf16.msra.mxu0 %v1360
    %1947 = vmatprep.subr.bf16.mxu0 %v1369
    %1948 = vmatpush1.bf16.msra.mxu0 %v1368
    %1949 = vmatprep.subr.bf16.mxu0 %v1377
    %1950 = vmatpush1.bf16.msra.mxu0 %v1376
    %1951 = vmatprep.subr.bf16.mxu0 %v1385
    %1952 = vmatpush1.bf16.msra.mxu0 %v1384
    %1953 = vmatprep.subr.bf16.mxu0 %v1393
    %1954 = vmatpush1.bf16.msra.mxu0 %v1392
    %1955 = vmatprep.subr.bf16.mxu0 %v1401
    %1956 = vmatpush1.bf16.msra.mxu0 %v1400
    %1957 = vmatprep.subr.bf16.mxu0 %v1409
    %1958 = vmatpush1.bf16.msra.mxu0 %v1408
    %1959 = vmatprep.subr.bf16.mxu0 %v1417
    %1960 = vmatpush1.bf16.msra.mxu0 %v1416
    %1961 = vmatprep.subr.bf16.mxu0 %v1425
    %1962 = vmatpush1.bf16.msra.mxu0 %v1424
    %1963 = vmatprep.subr.bf16.mxu0 %v1433
    %1964 = vmatpush1.bf16.msra.mxu0 %v1432
    %1965 = vmatprep.subr.bf16.mxu0 %v1441
    %1966 = vmatpush1.bf16.msra.mxu0 %v1440
    %1967 = vmatprep.subr.bf16.mxu0 %v1449
    %1968 = vmatpush1.bf16.msra.mxu0 %v1448
    %1969 = vmatprep.subr.bf16.mxu0 %v1457
    %1970 = vmatpush1.bf16.msra.mxu0 %v1456
    %1971 = vmatprep.subr.bf16.mxu0 %v1465
    %1972 = vmatpush1.bf16.msra.mxu0 %v1464
    %1973 = vmatprep.subr.bf16.mxu0 %v1473
    %1974 = vmatpush1.bf16.msra.mxu0 %v1472
    %1975 = vmatprep.subr.bf16.mxu0 %v1481
    %1976 = vmatpush1.bf16.msra.mxu0 %v1480
    %1977 = vmatprep.mubr.bf16.mxu0 %v455
    %1978 = vmatmul.mubr.bf16.gmra.mrb[0].mxu0 %v454
    %v1979 = vpop.f32.mrb[0].mxu0
    %v1980 = vadd.f32 %v1939, %v1979
    %v1981 = vpop.f32.mrb[0].mxu0
    %v1982 = vadd.f32 %v1941, %v1981
    %v1983 = vpop.f32.mrb[0].mxu0
    %v1984 = vpop.f32.mrb[0].mxu0
    %1985 = vdwg.mxu0
    %1986 = vmatprep.subr.bf16.mxu0 %v1235
    %1987 = vmatpush1.bf16.msra.mxu0 %v1234
    %1988 = vmatprep.subr.bf16.mxu0 %v1243
    %1989 = vmatpush1.bf16.msra.mxu0 %v1242
    %1990 = vmatprep.subr.bf16.mxu0 %v1251
    %1991 = vmatpush1.bf16.msra.mxu0 %v1250
    %1992 = vmatprep.subr.bf16.mxu0 %v1259
    %1993 = vmatpush1.bf16.msra.mxu0 %v1258
    %1994 = vmatprep.subr.bf16.mxu0 %v1267
    %1995 = vmatpush1.bf16.msra.mxu0 %v1266
    %1996 = vmatprep.subr.bf16.mxu0 %v1275
    %1997 = vmatpush1.bf16.msra.mxu0 %v1274
    %1998 = vmatprep.subr.bf16.mxu0 %v1283
    %1999 = vmatpush1.bf16.msra.mxu0 %v1282
    %2000 = vmatprep.subr.bf16.mxu0 %v1291
    %2001 = vmatpush1.bf16.msra.mxu0 %v1290
    %2002 = vmatprep.subr.bf16.mxu0 %v1299
    %2003 = vmatpush1.bf16.msra.mxu0 %v1298
    %2004 = vmatprep.subr.bf16.mxu0 %v1307
    %2005 = vmatpush1.bf16.msra.mxu0 %v1306
    %2006 = vmatprep.subr.bf16.mxu0 %v1315
    %2007 = vmatpush1.bf16.msra.mxu0 %v1314
    %2008 = vmatprep.subr.bf16.mxu0 %v1323
    %2009 = vmatpush1.bf16.msra.mxu0 %v1322
    %2010 = vmatprep.subr.bf16.mxu0 %v1331
    %2011 = vmatpush1.bf16.msra.mxu0 %v1330
    %2012 = vmatprep.subr.bf16.mxu0 %v1339
    %2013 = vmatpush1.bf16.msra.mxu0 %v1338
    %2014 = vmatprep.subr.bf16.mxu0 %v1347
    %2015 = vmatpush1.bf16.msra.mxu0 %v1346
    %2016 = vmatprep.subr.bf16.mxu0 %v1355
    %2017 = vmatpush1.bf16.msra.mxu0 %v1354
    %2018 = vmatprep.mubr.bf16.mxu0 %v453
    %2019 = vmatmul.mubr.bf16.gmra.mrb[0].mxu0 %v452
    %v2020 = vpop.f32.mrb[0].mxu0
    %v2021 = vadd.f32 %v433, %v2020
    %v2022 = vpop.f32.mrb[0].mxu0
    %v2023 = vadd.f32 %v437, %v2022
    %v2024 = vpop.f32.mrb[0].mxu0
    %v2025 = vpop.f32.mrb[0].mxu0
    %2026 = vdwg.mxu0
    %2027 = vmatprep.subr.bf16.mxu0 %v1363
    %2028 = vmatpush1.bf16.msra.mxu0 %v1362
    %2029 = vmatprep.subr.bf16.mxu0 %v1371
    %2030 = vmatpush1.bf16.msra.mxu0 %v1370
    %2031 = vmatprep.subr.bf16.mxu0 %v1379
    %2032 = vmatpush1.bf16.msra.mxu0 %v1378
    %2033 = vmatprep.subr.bf16.mxu0 %v1387
    %2034 = vmatpush1.bf16.msra.mxu0 %v1386
    %2035 = vmatprep.subr.bf16.mxu0 %v1395
    %2036 = vmatpush1.bf16.msra.mxu0 %v1394
    %2037 = vmatprep.subr.bf16.mxu0 %v1403
    %2038 = vmatpush1.bf16.msra.mxu0 %v1402
    %2039 = vmatprep.subr.bf16.mxu0 %v1411
    %2040 = vmatpush1.bf16.msra.mxu0 %v1410
    %2041 = vmatprep.subr.bf16.mxu0 %v1419
    %2042 = vmatpush1.bf16.msra.mxu0 %v1418
    %2043 = vmatprep.subr.bf16.mxu0 %v1427
    %2044 = vmatpush1.bf16.msra.mxu0 %v1426
    %2045 = vmatprep.subr.bf16.mxu0 %v1435
    %2046 = vmatpush1.bf16.msra.mxu0 %v1434
    %2047 = vmatprep.subr.bf16.mxu0 %v1443
    %2048 = vmatpush1.bf16.msra.mxu0 %v1442
    %2049 = vmatprep.subr.bf16.mxu0 %v1451
    %2050 = vmatpush1.bf16.msra.mxu0 %v1450
    %2051 = vmatprep.subr.bf16.mxu0 %v1459
    %2052 = vmatpush1.bf16.msra.mxu0 %v1458
    %2053 = vmatprep.subr.bf16.mxu0 %v1467
    %2054 = vmatpush1.bf16.msra.mxu0 %v1466
    %2055 = vmatprep.subr.bf16.mxu0 %v1475
    %2056 = vmatpush1.bf16.msra.mxu0 %v1474
    %2057 = vmatprep.subr.bf16.mxu0 %v1483
    %2058 = vmatpush1.bf16.msra.mxu0 %v1482
    %2059 = vmatprep.mubr.bf16.mxu0 %v455
    %2060 = vmatmul.mubr.bf16.gmra.mrb[0].mxu0 %v454
    %v2061 = vpop.f32.mrb[0].mxu0
    %v2062 = vadd.f32 %v2021, %v2061
    %v2063 = vpop.f32.mrb[0].mxu0
    %v2064 = vadd.f32 %v2023, %v2063
    %v2065 = vpop.f32.mrb[0].mxu0
    %v2066 = vpop.f32.mrb[0].mxu0
    %2067 = vdwg.mxu0
    %v2068 = vmax.f32 %v1816, 0.0
    %v2069 = vmax.f32 %v1818, 0.0
    %v2070 = vmax.f32 %v1898, 0.0
    %v2071 = vmax.f32 %v1900, 0.0
    %v2072 = vmax.f32 %v1980, 0.0
    %v2073 = vmax.f32 %v1982, 0.0
    %v2074 = vmax.f32 %v2062, 0.0
    %v2075 = vmax.f32 %v2064, 0.0
    %v2076 = vpack.c.bf16 %v2068, %v2068
    %v2077 = vpack.c.bf16 %v2069, %v2069
    %v2078 = vpack.c.bf16 %v2070, %v2070
    %v2079 = vpack.c.bf16 %v2071, %v2071
    %v2080 = vpack.c.bf16 %v2072, %v2072
    %v2081 = vpack.c.bf16 %v2073, %v2073
    %v2082 = vpack.c.bf16 %v2074, %v2074
    %v2083 = vpack.c.bf16 %v2075, %v2075
    %v2084 = vld [vmem:[#allocation5] sm:$0xff]
    %v2085 = vld [vmem:[#allocation5 + $0x8] sm:$0xff]
    %v2086 = vld [vmem:[#allocation5 + $0x10] sm:$0xff]
    %v2087 = vld [vmem:[#allocation5 + $0x18] sm:$0xff]
    %v2088 = vld [vmem:[#allocation5 + $0x20] sm:$0xff]
    %v2089 = vld [vmem:[#allocation5 + $0x28] sm:$0xff]
    %v2090 = vld [vmem:[#allocation5 + $0x30] sm:$0xff]
    %v2091 = vld [vmem:[#allocation5 + $0x38] sm:$0xff]
    %v2092 = vld [vmem:[#allocation5 + $0x40] sm:$0xff]
    %v2093 = vld [vmem:[#allocation5 + $0x48] sm:$0xff]
    %v2094 = vld [vmem:[#allocation5 + $0x50] sm:$0xff]
    %v2095 = vld [vmem:[#allocation5 + $0x58] sm:$0xff]
    %v2096 = vld [vmem:[#allocation5 + $0x60] sm:$0xff]
    %v2097 = vld [vmem:[#allocation5 + $0x68] sm:$0xff]
    %v2098 = vld [vmem:[#allocation5 + $0x70] sm:$0xff]
    %v2099 = vld [vmem:[#allocation5 + $0x78] sm:$0xff]
    %v2100 = vld [vmem:[#allocation5 + $0x80] sm:$0xff]
    %v2101 = vld [vmem:[#allocation5 + $0x88] sm:$0xff]
    %v2102 = vld [vmem:[#allocation5 + $0x90] sm:$0xff]
    %v2103 = vld [vmem:[#allocation5 + $0x98] sm:$0xff]
    %v2104 = vld [vmem:[#allocation5 + $0xa0] sm:$0xff]
    %v2105 = vld [vmem:[#allocation5 + $0xa8] sm:$0xff]
    %v2106 = vld [vmem:[#allocation5 + $0xb0] sm:$0xff]
    %v2107 = vld [vmem:[#allocation5 + $0xb8] sm:$0xff]
    %v2108 = vld [vmem:[#allocation5 + $0xc0] sm:$0xff]
    %v2109 = vld [vmem:[#allocation5 + $0xc8] sm:$0xff]
    %v2110 = vld [vmem:[#allocation5 + $0xd0] sm:$0xff]
    %v2111 = vld [vmem:[#allocation5 + $0xd8] sm:$0xff]
    %v2112 = vld [vmem:[#allocation5 + $0xe0] sm:$0xff]
    %v2113 = vld [vmem:[#allocation5 + $0xe8] sm:$0xff]
    %v2114 = vld [vmem:[#allocation5 + $0xf0] sm:$0xff]
    %v2115 = vld [vmem:[#allocation5 + $0xf8] sm:$0xff]
    %v2116 = vld [vmem:[#allocation5 + $0x100] sm:$0xff]
    %v2117 = vld [vmem:[#allocation5 + $0x108] sm:$0xff]
    %v2118 = vld [vmem:[#allocation5 + $0x110] sm:$0xff]
    %v2119 = vld [vmem:[#allocation5 + $0x118] sm:$0xff]
    %v2120 = vld [vmem:[#allocation5 + $0x120] sm:$0xff]
    %v2121 = vld [vmem:[#allocation5 + $0x128] sm:$0xff]
    %v2122 = vld [vmem:[#allocation5 + $0x130] sm:$0xff]
    %v2123 = vld [vmem:[#allocation5 + $0x138] sm:$0xff]
    %v2124 = vld [vmem:[#allocation5 + $0x140] sm:$0xff]
    %v2125 = vld [vmem:[#allocation5 + $0x148] sm:$0xff]
    %v2126 = vld [vmem:[#allocation5 + $0x150] sm:$0xff]
    %v2127 = vld [vmem:[#allocation5 + $0x158] sm:$0xff]
    %v2128 = vld [vmem:[#allocation5 + $0x160] sm:$0xff]
    %v2129 = vld [vmem:[#allocation5 + $0x168] sm:$0xff]
    %v2130 = vld [vmem:[#allocation5 + $0x170] sm:$0xff]
    %v2131 = vld [vmem:[#allocation5 + $0x178] sm:$0xff]
    %v2132 = vld [vmem:[#allocation5 + $0x180] sm:$0xff]
    %v2133 = vld [vmem:[#allocation5 + $0x188] sm:$0xff]
    %v2134 = vld [vmem:[#allocation5 + $0x190] sm:$0xff]
    %v2135 = vld [vmem:[#allocation5 + $0x198] sm:$0xff]
    %v2136 = vld [vmem:[#allocation5 + $0x1a0] sm:$0xff]
    %v2137 = vld [vmem:[#allocation5 + $0x1a8] sm:$0xff]
    %v2138 = vld [vmem:[#allocation5 + $0x1b0] sm:$0xff]
    %v2139 = vld [vmem:[#allocation5 + $0x1b8] sm:$0xff]
    %v2140 = vld [vmem:[#allocation5 + $0x1c0] sm:$0xff]
    %v2141 = vld [vmem:[#allocation5 + $0x1c8] sm:$0xff]
    %v2142 = vld [vmem:[#allocation5 + $0x1d0] sm:$0xff]
    %v2143 = vld [vmem:[#allocation5 + $0x1d8] sm:$0xff]
    %v2144 = vld [vmem:[#allocation5 + $0x1e0] sm:$0xff]
    %v2145 = vld [vmem:[#allocation5 + $0x1e8] sm:$0xff]
    %v2146 = vld [vmem:[#allocation5 + $0x1f0] sm:$0xff]
    %v2147 = vld [vmem:[#allocation5 + $0x1f8] sm:$0xff]
    %v2148 = vld [vmem:[#allocation5 + $0x200] sm:$0xff]
    %v2149 = vld [vmem:[#allocation5 + $0x208] sm:$0xff]
    %v2150 = vld [vmem:[#allocation5 + $0x210] sm:$0xff]
    %v2151 = vld [vmem:[#allocation5 + $0x218] sm:$0xff]
    %v2152 = vld [vmem:[#allocation5 + $0x220] sm:$0xff]
    %v2153 = vld [vmem:[#allocation5 + $0x228] sm:$0xff]
    %v2154 = vld [vmem:[#allocation5 + $0x230] sm:$0xff]
    %v2155 = vld [vmem:[#allocation5 + $0x238] sm:$0xff]
    %v2156 = vld [vmem:[#allocation5 + $0x240] sm:$0xff]
    %v2157 = vld [vmem:[#allocation5 + $0x248] sm:$0xff]
    %v2158 = vld [vmem:[#allocation5 + $0x250] sm:$0xff]
    %v2159 = vld [vmem:[#allocation5 + $0x258] sm:$0xff]
    %v2160 = vld [vmem:[#allocation5 + $0x260] sm:$0xff]
    %v2161 = vld [vmem:[#allocation5 + $0x268] sm:$0xff]
    %v2162 = vld [vmem:[#allocation5 + $0x270] sm:$0xff]
    %v2163 = vld [vmem:[#allocation5 + $0x278] sm:$0xff]
    %v2164 = vld [vmem:[#allocation5 + $0x280] sm:$0xff]
    %v2165 = vld [vmem:[#allocation5 + $0x288] sm:$0xff]
    %v2166 = vld [vmem:[#allocation5 + $0x290] sm:$0xff]
    %v2167 = vld [vmem:[#allocation5 + $0x298] sm:$0xff]
    %v2168 = vld [vmem:[#allocation5 + $0x2a0] sm:$0xff]
    %v2169 = vld [vmem:[#allocation5 + $0x2a8] sm:$0xff]
    %v2170 = vld [vmem:[#allocation5 + $0x2b0] sm:$0xff]
    %v2171 = vld [vmem:[#allocation5 + $0x2b8] sm:$0xff]
    %v2172 = vld [vmem:[#allocation5 + $0x2c0] sm:$0xff]
    %v2173 = vld [vmem:[#allocation5 + $0x2c8] sm:$0xff]
    %v2174 = vld [vmem:[#allocation5 + $0x2d0] sm:$0xff]
    %v2175 = vld [vmem:[#allocation5 + $0x2d8] sm:$0xff]
    %v2176 = vld [vmem:[#allocation5 + $0x2e0] sm:$0xff]
    %v2177 = vld [vmem:[#allocation5 + $0x2e8] sm:$0xff]
    %v2178 = vld [vmem:[#allocation5 + $0x2f0] sm:$0xff]
    %v2179 = vld [vmem:[#allocation5 + $0x2f8] sm:$0xff]
    %v2180 = vld [vmem:[#allocation5 + $0x300] sm:$0xff]
    %v2181 = vld [vmem:[#allocation5 + $0x308] sm:$0xff]
    %v2182 = vld [vmem:[#allocation5 + $0x310] sm:$0xff]
    %v2183 = vld [vmem:[#allocation5 + $0x318] sm:$0xff]
    %v2184 = vld [vmem:[#allocation5 + $0x320] sm:$0xff]
    %v2185 = vld [vmem:[#allocation5 + $0x328] sm:$0xff]
    %v2186 = vld [vmem:[#allocation5 + $0x330] sm:$0xff]
    %v2187 = vld [vmem:[#allocation5 + $0x338] sm:$0xff]
    %v2188 = vld [vmem:[#allocation5 + $0x340] sm:$0xff]
    %v2189 = vld [vmem:[#allocation5 + $0x348] sm:$0xff]
    %v2190 = vld [vmem:[#allocation5 + $0x350] sm:$0xff]
    %v2191 = vld [vmem:[#allocation5 + $0x358] sm:$0xff]
    %v2192 = vld [vmem:[#allocation5 + $0x360] sm:$0xff]
    %v2193 = vld [vmem:[#allocation5 + $0x368] sm:$0xff]
    %v2194 = vld [vmem:[#allocation5 + $0x370] sm:$0xff]
    %v2195 = vld [vmem:[#allocation5 + $0x378] sm:$0xff]
    %v2196 = vld [vmem:[#allocation5 + $0x380] sm:$0xff]
    %v2197 = vld [vmem:[#allocation5 + $0x388] sm:$0xff]
    %v2198 = vld [vmem:[#allocation5 + $0x390] sm:$0xff]
    %v2199 = vld [vmem:[#allocation5 + $0x398] sm:$0xff]
    %v2200 = vld [vmem:[#allocation5 + $0x3a0] sm:$0xff]
    %v2201 = vld [vmem:[#allocation5 + $0x3a8] sm:$0xff]
    %v2202 = vld [vmem:[#allocation5 + $0x3b0] sm:$0xff]
    %v2203 = vld [vmem:[#allocation5 + $0x3b8] sm:$0xff]
    %v2204 = vld [vmem:[#allocation5 + $0x3c0] sm:$0xff]
    %v2205 = vld [vmem:[#allocation5 + $0x3c8] sm:$0xff]
    %v2206 = vld [vmem:[#allocation5 + $0x3d0] sm:$0xff]
    %v2207 = vld [vmem:[#allocation5 + $0x3d8] sm:$0xff]
    %v2208 = vld [vmem:[#allocation5 + $0x3e0] sm:$0xff]
    %v2209 = vld [vmem:[#allocation5 + $0x3e8] sm:$0xff]
    %v2210 = vld [vmem:[#allocation5 + $0x3f0] sm:$0xff]
    %v2211 = vld [vmem:[#allocation5 + $0x3f8] sm:$0xff]
    %v2212 = vld [vmem:[#allocation5 + $0x400] sm:$0xff]
    %v2213 = vld [vmem:[#allocation5 + $0x408] sm:$0xff]
    %v2214 = vld [vmem:[#allocation5 + $0x410] sm:$0xff]
    %v2215 = vld [vmem:[#allocation5 + $0x418] sm:$0xff]
    %v2216 = vld [vmem:[#allocation5 + $0x420] sm:$0xff]
    %v2217 = vld [vmem:[#allocation5 + $0x428] sm:$0xff]
    %v2218 = vld [vmem:[#allocation5 + $0x430] sm:$0xff]
    %v2219 = vld [vmem:[#allocation5 + $0x438] sm:$0xff]
    %v2220 = vld [vmem:[#allocation5 + $0x440] sm:$0xff]
    %v2221 = vld [vmem:[#allocation5 + $0x448] sm:$0xff]
    %v2222 = vld [vmem:[#allocation5 + $0x450] sm:$0xff]
    %v2223 = vld [vmem:[#allocation5 + $0x458] sm:$0xff]
    %v2224 = vld [vmem:[#allocation5 + $0x460] sm:$0xff]
    %v2225 = vld [vmem:[#allocation5 + $0x468] sm:$0xff]
    %v2226 = vld [vmem:[#allocation5 + $0x470] sm:$0xff]
    %v2227 = vld [vmem:[#allocation5 + $0x478] sm:$0xff]
    %v2228 = vld [vmem:[#allocation5 + $0x480] sm:$0xff]
    %v2229 = vld [vmem:[#allocation5 + $0x488] sm:$0xff]
    %v2230 = vld [vmem:[#allocation5 + $0x490] sm:$0xff]
    %v2231 = vld [vmem:[#allocation5 + $0x498] sm:$0xff]
    %v2232 = vld [vmem:[#allocation5 + $0x4a0] sm:$0xff]
    %v2233 = vld [vmem:[#allocation5 + $0x4a8] sm:$0xff]
    %v2234 = vld [vmem:[#allocation5 + $0x4b0] sm:$0xff]
    %v2235 = vld [vmem:[#allocation5 + $0x4b8] sm:$0xff]
    %v2236 = vld [vmem:[#allocation5 + $0x4c0] sm:$0xff]
    %v2237 = vld [vmem:[#allocation5 + $0x4c8] sm:$0xff]
    %v2238 = vld [vmem:[#allocation5 + $0x4d0] sm:$0xff]
    %v2239 = vld [vmem:[#allocation5 + $0x4d8] sm:$0xff]
    %v2240 = vld [vmem:[#allocation5 + $0x4e0] sm:$0xff]
    %v2241 = vld [vmem:[#allocation5 + $0x4e8] sm:$0xff]
    %v2242 = vld [vmem:[#allocation5 + $0x4f0] sm:$0xff]
    %v2243 = vld [vmem:[#allocation5 + $0x4f8] sm:$0xff]
    %v2244 = vld [vmem:[#allocation5 + $0x500] sm:$0xff]
    %v2245 = vld [vmem:[#allocation5 + $0x508] sm:$0xff]
    %v2246 = vld [vmem:[#allocation5 + $0x510] sm:$0xff]
    %v2247 = vld [vmem:[#allocation5 + $0x518] sm:$0xff]
    %v2248 = vld [vmem:[#allocation5 + $0x520] sm:$0xff]
    %v2249 = vld [vmem:[#allocation5 + $0x528] sm:$0xff]
    %v2250 = vld [vmem:[#allocation5 + $0x530] sm:$0xff]
    %v2251 = vld [vmem:[#allocation5 + $0x538] sm:$0xff]
    %v2252 = vld [vmem:[#allocation5 + $0x540] sm:$0xff]
    %v2253 = vld [vmem:[#allocation5 + $0x548] sm:$0xff]
    %v2254 = vld [vmem:[#allocation5 + $0x550] sm:$0xff]
    %v2255 = vld [vmem:[#allocation5 + $0x558] sm:$0xff]
    %v2256 = vld [vmem:[#allocation5 + $0x560] sm:$0xff]
    %v2257 = vld [vmem:[#allocation5 + $0x568] sm:$0xff]
    %v2258 = vld [vmem:[#allocation5 + $0x570] sm:$0xff]
    %v2259 = vld [vmem:[#allocation5 + $0x578] sm:$0xff]
    %v2260 = vld [vmem:[#allocation5 + $0x580] sm:$0xff]
    %v2261 = vld [vmem:[#allocation5 + $0x588] sm:$0xff]
    %v2262 = vld [vmem:[#allocation5 + $0x590] sm:$0xff]
    %v2263 = vld [vmem:[#allocation5 + $0x598] sm:$0xff]
    %v2264 = vld [vmem:[#allocation5 + $0x5a0] sm:$0xff]
    %v2265 = vld [vmem:[#allocation5 + $0x5a8] sm:$0xff]
    %v2266 = vld [vmem:[#allocation5 + $0x5b0] sm:$0xff]
    %v2267 = vld [vmem:[#allocation5 + $0x5b8] sm:$0xff]
    %v2268 = vld [vmem:[#allocation5 + $0x5c0] sm:$0xff]
    %v2269 = vld [vmem:[#allocation5 + $0x5c8] sm:$0xff]
    %v2270 = vld [vmem:[#allocation5 + $0x5d0] sm:$0xff]
    %v2271 = vld [vmem:[#allocation5 + $0x5d8] sm:$0xff]
    %v2272 = vld [vmem:[#allocation5 + $0x5e0] sm:$0xff]
    %v2273 = vld [vmem:[#allocation5 + $0x5e8] sm:$0xff]
    %v2274 = vld [vmem:[#allocation5 + $0x5f0] sm:$0xff]
    %v2275 = vld [vmem:[#allocation5 + $0x5f8] sm:$0xff]
    %v2276 = vld [vmem:[#allocation5 + $0x600] sm:$0xff]
    %v2277 = vld [vmem:[#allocation5 + $0x608] sm:$0xff]
    %v2278 = vld [vmem:[#allocation5 + $0x610] sm:$0xff]
    %v2279 = vld [vmem:[#allocation5 + $0x618] sm:$0xff]
    %v2280 = vld [vmem:[#allocation5 + $0x620] sm:$0xff]
    %v2281 = vld [vmem:[#allocation5 + $0x628] sm:$0xff]
    %v2282 = vld [vmem:[#allocation5 + $0x630] sm:$0xff]
    %v2283 = vld [vmem:[#allocation5 + $0x638] sm:$0xff]
    %v2284 = vld [vmem:[#allocation5 + $0x640] sm:$0xff]
    %v2285 = vld [vmem:[#allocation5 + $0x648] sm:$0xff]
    %v2286 = vld [vmem:[#allocation5 + $0x650] sm:$0xff]
    %v2287 = vld [vmem:[#allocation5 + $0x658] sm:$0xff]
    %v2288 = vld [vmem:[#allocation5 + $0x660] sm:$0xff]
    %v2289 = vld [vmem:[#allocation5 + $0x668] sm:$0xff]
    %v2290 = vld [vmem:[#allocation5 + $0x670] sm:$0xff]
    %v2291 = vld [vmem:[#allocation5 + $0x678] sm:$0xff]
    %v2292 = vld [vmem:[#allocation5 + $0x680] sm:$0xff]
    %v2293 = vld [vmem:[#allocation5 + $0x688] sm:$0xff]
    %v2294 = vld [vmem:[#allocation5 + $0x690] sm:$0xff]
    %v2295 = vld [vmem:[#allocation5 + $0x698] sm:$0xff]
    %v2296 = vld [vmem:[#allocation5 + $0x6a0] sm:$0xff]
    %v2297 = vld [vmem:[#allocation5 + $0x6a8] sm:$0xff]
    %v2298 = vld [vmem:[#allocation5 + $0x6b0] sm:$0xff]
    %v2299 = vld [vmem:[#allocation5 + $0x6b8] sm:$0xff]
    %v2300 = vld [vmem:[#allocation5 + $0x6c0] sm:$0xff]
    %v2301 = vld [vmem:[#allocation5 + $0x6c8] sm:$0xff]
    %v2302 = vld [vmem:[#allocation5 + $0x6d0] sm:$0xff]
    %v2303 = vld [vmem:[#allocation5 + $0x6d8] sm:$0xff]
    %v2304 = vld [vmem:[#allocation5 + $0x6e0] sm:$0xff]
    %v2305 = vld [vmem:[#allocation5 + $0x6e8] sm:$0xff]
    %v2306 = vld [vmem:[#allocation5 + $0x6f0] sm:$0xff]
    %v2307 = vld [vmem:[#allocation5 + $0x6f8] sm:$0xff]
    %v2308 = vld [vmem:[#allocation5 + $0x700] sm:$0xff]
    %v2309 = vld [vmem:[#allocation5 + $0x708] sm:$0xff]
    %v2310 = vld [vmem:[#allocation5 + $0x710] sm:$0xff]
    %v2311 = vld [vmem:[#allocation5 + $0x718] sm:$0xff]
    %v2312 = vld [vmem:[#allocation5 + $0x720] sm:$0xff]
    %v2313 = vld [vmem:[#allocation5 + $0x728] sm:$0xff]
    %v2314 = vld [vmem:[#allocation5 + $0x730] sm:$0xff]
    %v2315 = vld [vmem:[#allocation5 + $0x738] sm:$0xff]
    %v2316 = vld [vmem:[#allocation5 + $0x740] sm:$0xff]
    %v2317 = vld [vmem:[#allocation5 + $0x748] sm:$0xff]
    %v2318 = vld [vmem:[#allocation5 + $0x750] sm:$0xff]
    %v2319 = vld [vmem:[#allocation5 + $0x758] sm:$0xff]
    %v2320 = vld [vmem:[#allocation5 + $0x760] sm:$0xff]
    %v2321 = vld [vmem:[#allocation5 + $0x768] sm:$0xff]
    %v2322 = vld [vmem:[#allocation5 + $0x770] sm:$0xff]
    %v2323 = vld [vmem:[#allocation5 + $0x778] sm:$0xff]
    %v2324 = vld [vmem:[#allocation5 + $0x780] sm:$0xff]
    %v2325 = vld [vmem:[#allocation5 + $0x788] sm:$0xff]
    %v2326 = vld [vmem:[#allocation5 + $0x790] sm:$0xff]
    %v2327 = vld [vmem:[#allocation5 + $0x798] sm:$0xff]
    %v2328 = vld [vmem:[#allocation5 + $0x7a0] sm:$0xff]
    %v2329 = vld [vmem:[#allocation5 + $0x7a8] sm:$0xff]
    %v2330 = vld [vmem:[#allocation5 + $0x7b0] sm:$0xff]
    %v2331 = vld [vmem:[#allocation5 + $0x7b8] sm:$0xff]
    %v2332 = vld [vmem:[#allocation5 + $0x7c0] sm:$0xff]
    %v2333 = vld [vmem:[#allocation5 + $0x7c8] sm:$0xff]
    %v2334 = vld [vmem:[#allocation5 + $0x7d0] sm:$0xff]
    %v2335 = vld [vmem:[#allocation5 + $0x7d8] sm:$0xff]
    %v2336 = vld [vmem:[#allocation5 + $0x7e0] sm:$0xff]
    %v2337 = vld [vmem:[#allocation5 + $0x7e8] sm:$0xff]
    %v2338 = vld [vmem:[#allocation5 + $0x7f0] sm:$0xff]
    %v2339 = vld [vmem:[#allocation5 + $0x7f8] sm:$0xff]
    %v2340 = vld [vmem:[%s5] sm:$0xf]
    %v2342 = vlaneseq
    %v2343 = vshrl.u32 %v2342, 7
    %v2344 = vsub.s32 0, %v2343
    %v2345 = vrot.slane %v2340, %v2344
    %v2346 = vlaneseq
    %v2347 = vshrl.u32 %v2346, 7
    %v2348 = vsub.s32 1, %v2347
    %v2349 = vrot.slane %v2340, %v2348
    %v2350 = vlaneseq
    %v2351 = vshrl.u32 %v2350, 7
    %v2352 = vsub.s32 2, %v2351
    %v2353 = vrot.slane %v2340, %v2352
    %v2354 = vlaneseq
    %v2355 = vshrl.u32 %v2354, 7
    %v2356 = vsub.s32 3, %v2355
    %v2357 = vrot.slane %v2340, %v2356
    %v2618 = vunpack.c.l.b16 %v2084
    %v2619 = vunpack.c.h.b16 %v2084
    %v2620 = vunpack.c.l.b16 %v2085
    %v2621 = vunpack.c.h.b16 %v2085
    %v2622 = vunpack.c.l.b16 %v2086
    %v2623 = vunpack.c.h.b16 %v2086
    %v2624 = vunpack.c.l.b16 %v2087
    %v2625 = vunpack.c.h.b16 %v2087
    %v2626 = vunpack.c.l.b16 %v2088
    %v2627 = vunpack.c.h.b16 %v2088
    %v2628 = vunpack.c.l.b16 %v2089
    %v2629 = vunpack.c.h.b16 %v2089
    %v2630 = vunpack.c.l.b16 %v2090
    %v2631 = vunpack.c.h.b16 %v2090
    %v2632 = vunpack.c.l.b16 %v2091
    %v2633 = vunpack.c.h.b16 %v2091
    %v2634 = vunpack.c.l.b16 %v2092
    %v2635 = vunpack.c.h.b16 %v2092
    %v2636 = vunpack.c.l.b16 %v2093
    %v2637 = vunpack.c.h.b16 %v2093
    %v2638 = vunpack.c.l.b16 %v2094
    %v2639 = vunpack.c.h.b16 %v2094
    %v2640 = vunpack.c.l.b16 %v2095
    %v2641 = vunpack.c.h.b16 %v2095
    %v2642 = vunpack.c.l.b16 %v2096
    %v2643 = vunpack.c.h.b16 %v2096
    %v2644 = vunpack.c.l.b16 %v2097
    %v2645 = vunpack.c.h.b16 %v2097
    %v2646 = vunpack.c.l.b16 %v2098
    %v2647 = vunpack.c.h.b16 %v2098
    %v2648 = vunpack.c.l.b16 %v2099
    %v2649 = vunpack.c.h.b16 %v2099
    %v2650 = vunpack.c.l.b16 %v2100
    %v2651 = vunpack.c.h.b16 %v2100
    %v2652 = vunpack.c.l.b16 %v2101
    %v2653 = vunpack.c.h.b16 %v2101
    %v2654 = vunpack.c.l.b16 %v2102
    %v2655 = vunpack.c.h.b16 %v2102
    %v2656 = vunpack.c.l.b16 %v2103
    %v2657 = vunpack.c.h.b16 %v2103
    %v2658 = vunpack.c.l.b16 %v2104
    %v2659 = vunpack.c.h.b16 %v2104
    %v2660 = vunpack.c.l.b16 %v2105
    %v2661 = vunpack.c.h.b16 %v2105
    %v2662 = vunpack.c.l.b16 %v2106
    %v2663 = vunpack.c.h.b16 %v2106
    %v2664 = vunpack.c.l.b16 %v2107
    %v2665 = vunpack.c.h.b16 %v2107
    %v2666 = vunpack.c.l.b16 %v2108
    %v2667 = vunpack.c.h.b16 %v2108
    %v2668 = vunpack.c.l.b16 %v2109
    %v2669 = vunpack.c.h.b16 %v2109
    %v2670 = vunpack.c.l.b16 %v2110
    %v2671 = vunpack.c.h.b16 %v2110
    %v2672 = vunpack.c.l.b16 %v2111
    %v2673 = vunpack.c.h.b16 %v2111
    %v2674 = vunpack.c.l.b16 %v2112
    %v2675 = vunpack.c.h.b16 %v2112
    %v2676 = vunpack.c.l.b16 %v2113
    %v2677 = vunpack.c.h.b16 %v2113
    %v2678 = vunpack.c.l.b16 %v2114
    %v2679 = vunpack.c.h.b16 %v2114
    %v2680 = vunpack.c.l.b16 %v2115
    %v2681 = vunpack.c.h.b16 %v2115
    %v2682 = vunpack.c.l.b16 %v2116
    %v2683 = vunpack.c.h.b16 %v2116
    %v2684 = vunpack.c.l.b16 %v2117
    %v2685 = vunpack.c.h.b16 %v2117
    %v2686 = vunpack.c.l.b16 %v2118
    %v2687 = vunpack.c.h.b16 %v2118
    %v2688 = vunpack.c.l.b16 %v2119
    %v2689 = vunpack.c.h.b16 %v2119
    %v2690 = vunpack.c.l.b16 %v2120
    %v2691 = vunpack.c.h.b16 %v2120
    %v2692 = vunpack.c.l.b16 %v2121
    %v2693 = vunpack.c.h.b16 %v2121
    %v2694 = vunpack.c.l.b16 %v2122
    %v2695 = vunpack.c.h.b16 %v2122
    %v2696 = vunpack.c.l.b16 %v2123
    %v2697 = vunpack.c.h.b16 %v2123
    %v2698 = vunpack.c.l.b16 %v2124
    %v2699 = vunpack.c.h.b16 %v2124
    %v2700 = vunpack.c.l.b16 %v2125
    %v2701 = vunpack.c.h.b16 %v2125
    %v2702 = vunpack.c.l.b16 %v2126
    %v2703 = vunpack.c.h.b16 %v2126
    %v2704 = vunpack.c.l.b16 %v2127
    %v2705 = vunpack.c.h.b16 %v2127
    %v2706 = vunpack.c.l.b16 %v2128
    %v2707 = vunpack.c.h.b16 %v2128
    %v2708 = vunpack.c.l.b16 %v2129
    %v2709 = vunpack.c.h.b16 %v2129
    %v2710 = vunpack.c.l.b16 %v2130
    %v2711 = vunpack.c.h.b16 %v2130
    %v2712 = vunpack.c.l.b16 %v2131
    %v2713 = vunpack.c.h.b16 %v2131
    %v2714 = vunpack.c.l.b16 %v2132
    %v2715 = vunpack.c.h.b16 %v2132
    %v2716 = vunpack.c.l.b16 %v2133
    %v2717 = vunpack.c.h.b16 %v2133
    %v2718 = vunpack.c.l.b16 %v2134
    %v2719 = vunpack.c.h.b16 %v2134
    %v2720 = vunpack.c.l.b16 %v2135
    %v2721 = vunpack.c.h.b16 %v2135
    %v2722 = vunpack.c.l.b16 %v2136
    %v2723 = vunpack.c.h.b16 %v2136
    %v2724 = vunpack.c.l.b16 %v2137
    %v2725 = vunpack.c.h.b16 %v2137
    %v2726 = vunpack.c.l.b16 %v2138
    %v2727 = vunpack.c.h.b16 %v2138
    %v2728 = vunpack.c.l.b16 %v2139
    %v2729 = vunpack.c.h.b16 %v2139
    %v2730 = vunpack.c.l.b16 %v2140
    %v2731 = vunpack.c.h.b16 %v2140
    %v2732 = vunpack.c.l.b16 %v2141
    %v2733 = vunpack.c.h.b16 %v2141
    %v2734 = vunpack.c.l.b16 %v2142
    %v2735 = vunpack.c.h.b16 %v2142
    %v2736 = vunpack.c.l.b16 %v2143
    %v2737 = vunpack.c.h.b16 %v2143
    %v2738 = vunpack.c.l.b16 %v2144
    %v2739 = vunpack.c.h.b16 %v2144
    %v2740 = vunpack.c.l.b16 %v2145
    %v2741 = vunpack.c.h.b16 %v2145
    %v2742 = vunpack.c.l.b16 %v2146
    %v2743 = vunpack.c.h.b16 %v2146
    %v2744 = vunpack.c.l.b16 %v2147
    %v2745 = vunpack.c.h.b16 %v2147
    %v2746 = vunpack.c.l.b16 %v2148
    %v2747 = vunpack.c.h.b16 %v2148
    %v2748 = vunpack.c.l.b16 %v2149
    %v2749 = vunpack.c.h.b16 %v2149
    %v2750 = vunpack.c.l.b16 %v2150
    %v2751 = vunpack.c.h.b16 %v2150
    %v2752 = vunpack.c.l.b16 %v2151
    %v2753 = vunpack.c.h.b16 %v2151
    %v2754 = vunpack.c.l.b16 %v2152
    %v2755 = vunpack.c.h.b16 %v2152
    %v2756 = vunpack.c.l.b16 %v2153
    %v2757 = vunpack.c.h.b16 %v2153
    %v2758 = vunpack.c.l.b16 %v2154
    %v2759 = vunpack.c.h.b16 %v2154
    %v2760 = vunpack.c.l.b16 %v2155
    %v2761 = vunpack.c.h.b16 %v2155
    %v2762 = vunpack.c.l.b16 %v2156
    %v2763 = vunpack.c.h.b16 %v2156
    %v2764 = vunpack.c.l.b16 %v2157
    %v2765 = vunpack.c.h.b16 %v2157
    %v2766 = vunpack.c.l.b16 %v2158
    %v2767 = vunpack.c.h.b16 %v2158
    %v2768 = vunpack.c.l.b16 %v2159
    %v2769 = vunpack.c.h.b16 %v2159
    %v2770 = vunpack.c.l.b16 %v2160
    %v2771 = vunpack.c.h.b16 %v2160
    %v2772 = vunpack.c.l.b16 %v2161
    %v2773 = vunpack.c.h.b16 %v2161
    %v2774 = vunpack.c.l.b16 %v2162
    %v2775 = vunpack.c.h.b16 %v2162
    %v2776 = vunpack.c.l.b16 %v2163
    %v2777 = vunpack.c.h.b16 %v2163
    %v2778 = vunpack.c.l.b16 %v2164
    %v2779 = vunpack.c.h.b16 %v2164
    %v2780 = vunpack.c.l.b16 %v2165
    %v2781 = vunpack.c.h.b16 %v2165
    %v2782 = vunpack.c.l.b16 %v2166
    %v2783 = vunpack.c.h.b16 %v2166
    %v2784 = vunpack.c.l.b16 %v2167
    %v2785 = vunpack.c.h.b16 %v2167
    %v2786 = vunpack.c.l.b16 %v2168
    %v2787 = vunpack.c.h.b16 %v2168
    %v2788 = vunpack.c.l.b16 %v2169
    %v2789 = vunpack.c.h.b16 %v2169
    %v2790 = vunpack.c.l.b16 %v2170
    %v2791 = vunpack.c.h.b16 %v2170
    %v2792 = vunpack.c.l.b16 %v2171
    %v2793 = vunpack.c.h.b16 %v2171
    %v2794 = vunpack.c.l.b16 %v2172
    %v2795 = vunpack.c.h.b16 %v2172
    %v2796 = vunpack.c.l.b16 %v2173
    %v2797 = vunpack.c.h.b16 %v2173
    %v2798 = vunpack.c.l.b16 %v2174
    %v2799 = vunpack.c.h.b16 %v2174
    %v2800 = vunpack.c.l.b16 %v2175
    %v2801 = vunpack.c.h.b16 %v2175
    %v2802 = vunpack.c.l.b16 %v2176
    %v2803 = vunpack.c.h.b16 %v2176
    %v2804 = vunpack.c.l.b16 %v2177
    %v2805 = vunpack.c.h.b16 %v2177
    %v2806 = vunpack.c.l.b16 %v2178
    %v2807 = vunpack.c.h.b16 %v2178
    %v2808 = vunpack.c.l.b16 %v2179
    %v2809 = vunpack.c.h.b16 %v2179
    %v2810 = vunpack.c.l.b16 %v2180
    %v2811 = vunpack.c.h.b16 %v2180
    %v2812 = vunpack.c.l.b16 %v2181
    %v2813 = vunpack.c.h.b16 %v2181
    %v2814 = vunpack.c.l.b16 %v2182
    %v2815 = vunpack.c.h.b16 %v2182
    %v2816 = vunpack.c.l.b16 %v2183
    %v2817 = vunpack.c.h.b16 %v2183
    %v2818 = vunpack.c.l.b16 %v2184
    %v2819 = vunpack.c.h.b16 %v2184
    %v2820 = vunpack.c.l.b16 %v2185
    %v2821 = vunpack.c.h.b16 %v2185
    %v2822 = vunpack.c.l.b16 %v2186
    %v2823 = vunpack.c.h.b16 %v2186
    %v2824 = vunpack.c.l.b16 %v2187
    %v2825 = vunpack.c.h.b16 %v2187
    %v2826 = vunpack.c.l.b16 %v2188
    %v2827 = vunpack.c.h.b16 %v2188
    %v2828 = vunpack.c.l.b16 %v2189
    %v2829 = vunpack.c.h.b16 %v2189
    %v2830 = vunpack.c.l.b16 %v2190
    %v2831 = vunpack.c.h.b16 %v2190
    %v2832 = vunpack.c.l.b16 %v2191
    %v2833 = vunpack.c.h.b16 %v2191
    %v2834 = vunpack.c.l.b16 %v2192
    %v2835 = vunpack.c.h.b16 %v2192
    %v2836 = vunpack.c.l.b16 %v2193
    %v2837 = vunpack.c.h.b16 %v2193
    %v2838 = vunpack.c.l.b16 %v2194
    %v2839 = vunpack.c.h.b16 %v2194
    %v2840 = vunpack.c.l.b16 %v2195
    %v2841 = vunpack.c.h.b16 %v2195
    %v2842 = vunpack.c.l.b16 %v2196
    %v2843 = vunpack.c.h.b16 %v2196
    %v2844 = vunpack.c.l.b16 %v2197
    %v2845 = vunpack.c.h.b16 %v2197
    %v2846 = vunpack.c.l.b16 %v2198
    %v2847 = vunpack.c.h.b16 %v2198
    %v2848 = vunpack.c.l.b16 %v2199
    %v2849 = vunpack.c.h.b16 %v2199
    %v2850 = vunpack.c.l.b16 %v2200
    %v2851 = vunpack.c.h.b16 %v2200
    %v2852 = vunpack.c.l.b16 %v2201
    %v2853 = vunpack.c.h.b16 %v2201
    %v2854 = vunpack.c.l.b16 %v2202
    %v2855 = vunpack.c.h.b16 %v2202
    %v2856 = vunpack.c.l.b16 %v2203
    %v2857 = vunpack.c.h.b16 %v2203
    %v2858 = vunpack.c.l.b16 %v2204
    %v2859 = vunpack.c.h.b16 %v2204
    %v2860 = vunpack.c.l.b16 %v2205
    %v2861 = vunpack.c.h.b16 %v2205
    %v2862 = vunpack.c.l.b16 %v2206
    %v2863 = vunpack.c.h.b16 %v2206
    %v2864 = vunpack.c.l.b16 %v2207
    %v2865 = vunpack.c.h.b16 %v2207
    %v2866 = vunpack.c.l.b16 %v2208
    %v2867 = vunpack.c.h.b16 %v2208
    %v2868 = vunpack.c.l.b16 %v2209
    %v2869 = vunpack.c.h.b16 %v2209
    %v2870 = vunpack.c.l.b16 %v2210
    %v2871 = vunpack.c.h.b16 %v2210
    %v2872 = vunpack.c.l.b16 %v2211
    %v2873 = vunpack.c.h.b16 %v2211
    %v2874 = vunpack.c.l.b16 %v2212
    %v2875 = vunpack.c.h.b16 %v2212
    %v2876 = vunpack.c.l.b16 %v2213
    %v2877 = vunpack.c.h.b16 %v2213
    %v2878 = vunpack.c.l.b16 %v2214
    %v2879 = vunpack.c.h.b16 %v2214
    %v2880 = vunpack.c.l.b16 %v2215
    %v2881 = vunpack.c.h.b16 %v2215
    %v2882 = vunpack.c.l.b16 %v2216
    %v2883 = vunpack.c.h.b16 %v2216
    %v2884 = vunpack.c.l.b16 %v2217
    %v2885 = vunpack.c.h.b16 %v2217
    %v2886 = vunpack.c.l.b16 %v2218
    %v2887 = vunpack.c.h.b16 %v2218
    %v2888 = vunpack.c.l.b16 %v2219
    %v2889 = vunpack.c.h.b16 %v2219
    %v2890 = vunpack.c.l.b16 %v2220
    %v2891 = vunpack.c.h.b16 %v2220
    %v2892 = vunpack.c.l.b16 %v2221
    %v2893 = vunpack.c.h.b16 %v2221
    %v2894 = vunpack.c.l.b16 %v2222
    %v2895 = vunpack.c.h.b16 %v2222
    %v2896 = vunpack.c.l.b16 %v2223
    %v2897 = vunpack.c.h.b16 %v2223
    %v2898 = vunpack.c.l.b16 %v2224
    %v2899 = vunpack.c.h.b16 %v2224
    %v2900 = vunpack.c.l.b16 %v2225
    %v2901 = vunpack.c.h.b16 %v2225
    %v2902 = vunpack.c.l.b16 %v2226
    %v2903 = vunpack.c.h.b16 %v2226
    %v2904 = vunpack.c.l.b16 %v2227
    %v2905 = vunpack.c.h.b16 %v2227
    %v2906 = vunpack.c.l.b16 %v2228
    %v2907 = vunpack.c.h.b16 %v2228
    %v2908 = vunpack.c.l.b16 %v2229
    %v2909 = vunpack.c.h.b16 %v2229
    %v2910 = vunpack.c.l.b16 %v2230
    %v2911 = vunpack.c.h.b16 %v2230
    %v2912 = vunpack.c.l.b16 %v2231
    %v2913 = vunpack.c.h.b16 %v2231
    %v2914 = vunpack.c.l.b16 %v2232
    %v2915 = vunpack.c.h.b16 %v2232
    %v2916 = vunpack.c.l.b16 %v2233
    %v2917 = vunpack.c.h.b16 %v2233
    %v2918 = vunpack.c.l.b16 %v2234
    %v2919 = vunpack.c.h.b16 %v2234
    %v2920 = vunpack.c.l.b16 %v2235
    %v2921 = vunpack.c.h.b16 %v2235
    %v2922 = vunpack.c.l.b16 %v2236
    %v2923 = vunpack.c.h.b16 %v2236
    %v2924 = vunpack.c.l.b16 %v2237
    %v2925 = vunpack.c.h.b16 %v2237
    %v2926 = vunpack.c.l.b16 %v2238
    %v2927 = vunpack.c.h.b16 %v2238
    %v2928 = vunpack.c.l.b16 %v2239
    %v2929 = vunpack.c.h.b16 %v2239
    %v2930 = vunpack.c.l.b16 %v2240
    %v2931 = vunpack.c.h.b16 %v2240
    %v2932 = vunpack.c.l.b16 %v2241
    %v2933 = vunpack.c.h.b16 %v2241
    %v2934 = vunpack.c.l.b16 %v2242
    %v2935 = vunpack.c.h.b16 %v2242
    %v2936 = vunpack.c.l.b16 %v2243
    %v2937 = vunpack.c.h.b16 %v2243
    %v2938 = vunpack.c.l.b16 %v2244
    %v2939 = vunpack.c.h.b16 %v2244
    %v2940 = vunpack.c.l.b16 %v2245
    %v2941 = vunpack.c.h.b16 %v2245
    %v2942 = vunpack.c.l.b16 %v2246
    %v2943 = vunpack.c.h.b16 %v2246
    %v2944 = vunpack.c.l.b16 %v2247
    %v2945 = vunpack.c.h.b16 %v2247
    %v2946 = vunpack.c.l.b16 %v2248
    %v2947 = vunpack.c.h.b16 %v2248
    %v2948 = vunpack.c.l.b16 %v2249
    %v2949 = vunpack.c.h.b16 %v2249
    %v2950 = vunpack.c.l.b16 %v2250
    %v2951 = vunpack.c.h.b16 %v2250
    %v2952 = vunpack.c.l.b16 %v2251
    %v2953 = vunpack.c.h.b16 %v2251
    %v2954 = vunpack.c.l.b16 %v2252
    %v2955 = vunpack.c.h.b16 %v2252
    %v2956 = vunpack.c.l.b16 %v2253
    %v2957 = vunpack.c.h.b16 %v2253
    %v2958 = vunpack.c.l.b16 %v2254
    %v2959 = vunpack.c.h.b16 %v2254
    %v2960 = vunpack.c.l.b16 %v2255
    %v2961 = vunpack.c.h.b16 %v2255
    %v2962 = vunpack.c.l.b16 %v2256
    %v2963 = vunpack.c.h.b16 %v2256
    %v2964 = vunpack.c.l.b16 %v2257
    %v2965 = vunpack.c.h.b16 %v2257
    %v2966 = vunpack.c.l.b16 %v2258
    %v2967 = vunpack.c.h.b16 %v2258
    %v2968 = vunpack.c.l.b16 %v2259
    %v2969 = vunpack.c.h.b16 %v2259
    %v2970 = vunpack.c.l.b16 %v2260
    %v2971 = vunpack.c.h.b16 %v2260
    %v2972 = vunpack.c.l.b16 %v2261
    %v2973 = vunpack.c.h.b16 %v2261
    %v2974 = vunpack.c.l.b16 %v2262
    %v2975 = vunpack.c.h.b16 %v2262
    %v2976 = vunpack.c.l.b16 %v2263
    %v2977 = vunpack.c.h.b16 %v2263
    %v2978 = vunpack.c.l.b16 %v2264
    %v2979 = vunpack.c.h.b16 %v2264
    %v2980 = vunpack.c.l.b16 %v2265
    %v2981 = vunpack.c.h.b16 %v2265
    %v2982 = vunpack.c.l.b16 %v2266
    %v2983 = vunpack.c.h.b16 %v2266
    %v2984 = vunpack.c.l.b16 %v2267
    %v2985 = vunpack.c.h.b16 %v2267
    %v2986 = vunpack.c.l.b16 %v2268
    %v2987 = vunpack.c.h.b16 %v2268
    %v2988 = vunpack.c.l.b16 %v2269
    %v2989 = vunpack.c.h.b16 %v2269
    %v2990 = vunpack.c.l.b16 %v2270
    %v2991 = vunpack.c.h.b16 %v2270
    %v2992 = vunpack.c.l.b16 %v2271
    %v2993 = vunpack.c.h.b16 %v2271
    %v2994 = vunpack.c.l.b16 %v2272
    %v2995 = vunpack.c.h.b16 %v2272
    %v2996 = vunpack.c.l.b16 %v2273
    %v2997 = vunpack.c.h.b16 %v2273
    %v2998 = vunpack.c.l.b16 %v2274
    %v2999 = vunpack.c.h.b16 %v2274
    %v3000 = vunpack.c.l.b16 %v2275
    %v3001 = vunpack.c.h.b16 %v2275
    %v3002 = vunpack.c.l.b16 %v2276
    %v3003 = vunpack.c.h.b16 %v2276
    %v3004 = vunpack.c.l.b16 %v2277
    %v3005 = vunpack.c.h.b16 %v2277
    %v3006 = vunpack.c.l.b16 %v2278
    %v3007 = vunpack.c.h.b16 %v2278
    %v3008 = vunpack.c.l.b16 %v2279
    %v3009 = vunpack.c.h.b16 %v2279
    %v3010 = vunpack.c.l.b16 %v2280
    %v3011 = vunpack.c.h.b16 %v2280
    %v3012 = vunpack.c.l.b16 %v2281
    %v3013 = vunpack.c.h.b16 %v2281
    %v3014 = vunpack.c.l.b16 %v2282
    %v3015 = vunpack.c.h.b16 %v2282
    %v3016 = vunpack.c.l.b16 %v2283
    %v3017 = vunpack.c.h.b16 %v2283
    %v3018 = vunpack.c.l.b16 %v2284
    %v3019 = vunpack.c.h.b16 %v2284
    %v3020 = vunpack.c.l.b16 %v2285
    %v3021 = vunpack.c.h.b16 %v2285
    %v3022 = vunpack.c.l.b16 %v2286
    %v3023 = vunpack.c.h.b16 %v2286
    %v3024 = vunpack.c.l.b16 %v2287
    %v3025 = vunpack.c.h.b16 %v2287
    %v3026 = vunpack.c.l.b16 %v2288
    %v3027 = vunpack.c.h.b16 %v2288
    %v3028 = vunpack.c.l.b16 %v2289
    %v3029 = vunpack.c.h.b16 %v2289
    %v3030 = vunpack.c.l.b16 %v2290
    %v3031 = vunpack.c.h.b16 %v2290
    %v3032 = vunpack.c.l.b16 %v2291
    %v3033 = vunpack.c.h.b16 %v2291
    %v3034 = vunpack.c.l.b16 %v2292
    %v3035 = vunpack.c.h.b16 %v2292
    %v3036 = vunpack.c.l.b16 %v2293
    %v3037 = vunpack.c.h.b16 %v2293
    %v3038 = vunpack.c.l.b16 %v2294
    %v3039 = vunpack.c.h.b16 %v2294
    %v3040 = vunpack.c.l.b16 %v2295
    %v3041 = vunpack.c.h.b16 %v2295
    %v3042 = vunpack.c.l.b16 %v2296
    %v3043 = vunpack.c.h.b16 %v2296
    %v3044 = vunpack.c.l.b16 %v2297
    %v3045 = vunpack.c.h.b16 %v2297
    %v3046 = vunpack.c.l.b16 %v2298
    %v3047 = vunpack.c.h.b16 %v2298
    %v3048 = vunpack.c.l.b16 %v2299
    %v3049 = vunpack.c.h.b16 %v2299
    %v3050 = vunpack.c.l.b16 %v2300
    %v3051 = vunpack.c.h.b16 %v2300
    %v3052 = vunpack.c.l.b16 %v2301
    %v3053 = vunpack.c.h.b16 %v2301
    %v3054 = vunpack.c.l.b16 %v2302
    %v3055 = vunpack.c.h.b16 %v2302
    %v3056 = vunpack.c.l.b16 %v2303
    %v3057 = vunpack.c.h.b16 %v2303
    %v3058 = vunpack.c.l.b16 %v2304
    %v3059 = vunpack.c.h.b16 %v2304
    %v3060 = vunpack.c.l.b16 %v2305
    %v3061 = vunpack.c.h.b16 %v2305
    %v3062 = vunpack.c.l.b16 %v2306
    %v3063 = vunpack.c.h.b16 %v2306
    %v3064 = vunpack.c.l.b16 %v2307
    %v3065 = vunpack.c.h.b16 %v2307
    %v3066 = vunpack.c.l.b16 %v2308
    %v3067 = vunpack.c.h.b16 %v2308
    %v3068 = vunpack.c.l.b16 %v2309
    %v3069 = vunpack.c.h.b16 %v2309
    %v3070 = vunpack.c.l.b16 %v2310
    %v3071 = vunpack.c.h.b16 %v2310
    %v3072 = vunpack.c.l.b16 %v2311
    %v3073 = vunpack.c.h.b16 %v2311
    %v3074 = vunpack.c.l.b16 %v2312
    %v3075 = vunpack.c.h.b16 %v2312
    %v3076 = vunpack.c.l.b16 %v2313
    %v3077 = vunpack.c.h.b16 %v2313
    %v3078 = vunpack.c.l.b16 %v2314
    %v3079 = vunpack.c.h.b16 %v2314
    %v3080 = vunpack.c.l.b16 %v2315
    %v3081 = vunpack.c.h.b16 %v2315
    %v3082 = vunpack.c.l.b16 %v2316
    %v3083 = vunpack.c.h.b16 %v2316
    %v3084 = vunpack.c.l.b16 %v2317
    %v3085 = vunpack.c.h.b16 %v2317
    %v3086 = vunpack.c.l.b16 %v2318
    %v3087 = vunpack.c.h.b16 %v2318
    %v3088 = vunpack.c.l.b16 %v2319
    %v3089 = vunpack.c.h.b16 %v2319
    %v3090 = vunpack.c.l.b16 %v2320
    %v3091 = vunpack.c.h.b16 %v2320
    %v3092 = vunpack.c.l.b16 %v2321
    %v3093 = vunpack.c.h.b16 %v2321
    %v3094 = vunpack.c.l.b16 %v2322
    %v3095 = vunpack.c.h.b16 %v2322
    %v3096 = vunpack.c.l.b16 %v2323
    %v3097 = vunpack.c.h.b16 %v2323
    %v3098 = vunpack.c.l.b16 %v2324
    %v3099 = vunpack.c.h.b16 %v2324
    %v3100 = vunpack.c.l.b16 %v2325
    %v3101 = vunpack.c.h.b16 %v2325
    %v3102 = vunpack.c.l.b16 %v2326
    %v3103 = vunpack.c.h.b16 %v2326
    %v3104 = vunpack.c.l.b16 %v2327
    %v3105 = vunpack.c.h.b16 %v2327
    %v3106 = vunpack.c.l.b16 %v2328
    %v3107 = vunpack.c.h.b16 %v2328
    %v3108 = vunpack.c.l.b16 %v2329
    %v3109 = vunpack.c.h.b16 %v2329
    %v3110 = vunpack.c.l.b16 %v2330
    %v3111 = vunpack.c.h.b16 %v2330
    %v3112 = vunpack.c.l.b16 %v2331
    %v3113 = vunpack.c.h.b16 %v2331
    %v3114 = vunpack.c.l.b16 %v2332
    %v3115 = vunpack.c.h.b16 %v2332
    %v3116 = vunpack.c.l.b16 %v2333
    %v3117 = vunpack.c.h.b16 %v2333
    %v3118 = vunpack.c.l.b16 %v2334
    %v3119 = vunpack.c.h.b16 %v2334
    %v3120 = vunpack.c.l.b16 %v2335
    %v3121 = vunpack.c.h.b16 %v2335
    %v3122 = vunpack.c.l.b16 %v2336
    %v3123 = vunpack.c.h.b16 %v2336
    %v3124 = vunpack.c.l.b16 %v2337
    %v3125 = vunpack.c.h.b16 %v2337
    %v3126 = vunpack.c.l.b16 %v2338
    %v3127 = vunpack.c.h.b16 %v2338
    %v3128 = vunpack.c.l.b16 %v2339
    %v3129 = vunpack.c.h.b16 %v2339
    %v3130 = vpack.c.b16 %v2622, %v2618
    %v3131 = vpack.c.b16 %v2623, %v2619
    %v3132 = vpack.c.b16 %v2624, %v2620
    %v3133 = vpack.c.b16 %v2625, %v2621
    %v3134 = vpack.c.b16 %v2630, %v2626
    %v3135 = vpack.c.b16 %v2631, %v2627
    %v3136 = vpack.c.b16 %v2632, %v2628
    %v3137 = vpack.c.b16 %v2633, %v2629
    %v3138 = vpack.c.b16 %v2638, %v2634
    %v3139 = vpack.c.b16 %v2639, %v2635
    %v3140 = vpack.c.b16 %v2640, %v2636
    %v3141 = vpack.c.b16 %v2641, %v2637
    %v3142 = vpack.c.b16 %v2646, %v2642
    %v3143 = vpack.c.b16 %v2647, %v2643
    %v3144 = vpack.c.b16 %v2648, %v2644
    %v3145 = vpack.c.b16 %v2649, %v2645
    %v3146 = vpack.c.b16 %v2654, %v2650
    %v3147 = vpack.c.b16 %v2655, %v2651
    %v3148 = vpack.c.b16 %v2656, %v2652
    %v3149 = vpack.c.b16 %v2657, %v2653
    %v3150 = vpack.c.b16 %v2662, %v2658
    %v3151 = vpack.c.b16 %v2663, %v2659
    %v3152 = vpack.c.b16 %v2664, %v2660
    %v3153 = vpack.c.b16 %v2665, %v2661
    %v3154 = vpack.c.b16 %v2670, %v2666
    %v3155 = vpack.c.b16 %v2671, %v2667
    %v3156 = vpack.c.b16 %v2672, %v2668
    %v3157 = vpack.c.b16 %v2673, %v2669
    %v3158 = vpack.c.b16 %v2678, %v2674
    %v3159 = vpack.c.b16 %v2679, %v2675
    %v3160 = vpack.c.b16 %v2680, %v2676
    %v3161 = vpack.c.b16 %v2681, %v2677
    %v3162 = vpack.c.b16 %v2686, %v2682
    %v3163 = vpack.c.b16 %v2687, %v2683
    %v3164 = vpack.c.b16 %v2688, %v2684
    %v3165 = vpack.c.b16 %v2689, %v2685
    %v3166 = vpack.c.b16 %v2694, %v2690
    %v3167 = vpack.c.b16 %v2695, %v2691
    %v3168 = vpack.c.b16 %v2696, %v2692
    %v3169 = vpack.c.b16 %v2697, %v2693
    %v3170 = vpack.c.b16 %v2702, %v2698
    %v3171 = vpack.c.b16 %v2703, %v2699
    %v3172 = vpack.c.b16 %v2704, %v2700
    %v3173 = vpack.c.b16 %v2705, %v2701
    %v3174 = vpack.c.b16 %v2710, %v2706
    %v3175 = vpack.c.b16 %v2711, %v2707
    %v3176 = vpack.c.b16 %v2712, %v2708
    %v3177 = vpack.c.b16 %v2713, %v2709
    %v3178 = vpack.c.b16 %v2718, %v2714
    %v3179 = vpack.c.b16 %v2719, %v2715
    %v3180 = vpack.c.b16 %v2720, %v2716
    %v3181 = vpack.c.b16 %v2721, %v2717
    %v3182 = vpack.c.b16 %v2726, %v2722
    %v3183 = vpack.c.b16 %v2727, %v2723
    %v3184 = vpack.c.b16 %v2728, %v2724
    %v3185 = vpack.c.b16 %v2729, %v2725
    %v3186 = vpack.c.b16 %v2734, %v2730
    %v3187 = vpack.c.b16 %v2735, %v2731
    %v3188 = vpack.c.b16 %v2736, %v2732
    %v3189 = vpack.c.b16 %v2737, %v2733
    %v3190 = vpack.c.b16 %v2742, %v2738
    %v3191 = vpack.c.b16 %v2743, %v2739
    %v3192 = vpack.c.b16 %v2744, %v2740
    %v3193 = vpack.c.b16 %v2745, %v2741
    %v3194 = vpack.c.b16 %v2750, %v2746
    %v3195 = vpack.c.b16 %v2751, %v2747
    %v3196 = vpack.c.b16 %v2752, %v2748
    %v3197 = vpack.c.b16 %v2753, %v2749
    %v3198 = vpack.c.b16 %v2758, %v2754
    %v3199 = vpack.c.b16 %v2759, %v2755
    %v3200 = vpack.c.b16 %v2760, %v2756
    %v3201 = vpack.c.b16 %v2761, %v2757
    %v3202 = vpack.c.b16 %v2766, %v2762
    %v3203 = vpack.c.b16 %v2767, %v2763
    %v3204 = vpack.c.b16 %v2768, %v2764
    %v3205 = vpack.c.b16 %v2769, %v2765
    %v3206 = vpack.c.b16 %v2774, %v2770
    %v3207 = vpack.c.b16 %v2775, %v2771
    %v3208 = vpack.c.b16 %v2776, %v2772
    %v3209 = vpack.c.b16 %v2777, %v2773
    %v3210 = vpack.c.b16 %v2782, %v2778
    %v3211 = vpack.c.b16 %v2783, %v2779
    %v3212 = vpack.c.b16 %v2784, %v2780
    %v3213 = vpack.c.b16 %v2785, %v2781
    %v3214 = vpack.c.b16 %v2790, %v2786
    %v3215 = vpack.c.b16 %v2791, %v2787
    %v3216 = vpack.c.b16 %v2792, %v2788
    %v3217 = vpack.c.b16 %v2793, %v2789
    %v3218 = vpack.c.b16 %v2798, %v2794
    %v3219 = vpack.c.b16 %v2799, %v2795
    %v3220 = vpack.c.b16 %v2800, %v2796
    %v3221 = vpack.c.b16 %v2801, %v2797
    %v3222 = vpack.c.b16 %v2806, %v2802
    %v3223 = vpack.c.b16 %v2807, %v2803
    %v3224 = vpack.c.b16 %v2808, %v2804
    %v3225 = vpack.c.b16 %v2809, %v2805
    %v3226 = vpack.c.b16 %v2814, %v2810
    %v3227 = vpack.c.b16 %v2815, %v2811
    %v3228 = vpack.c.b16 %v2816, %v2812
    %v3229 = vpack.c.b16 %v2817, %v2813
    %v3230 = vpack.c.b16 %v2822, %v2818
    %v3231 = vpack.c.b16 %v2823, %v2819
    %v3232 = vpack.c.b16 %v2824, %v2820
    %v3233 = vpack.c.b16 %v2825, %v2821
    %v3234 = vpack.c.b16 %v2830, %v2826
    %v3235 = vpack.c.b16 %v2831, %v2827
    %v3236 = vpack.c.b16 %v2832, %v2828
    %v3237 = vpack.c.b16 %v2833, %v2829
    %v3238 = vpack.c.b16 %v2838, %v2834
    %v3239 = vpack.c.b16 %v2839, %v2835
    %v3240 = vpack.c.b16 %v2840, %v2836
    %v3241 = vpack.c.b16 %v2841, %v2837
    %v3242 = vpack.c.b16 %v2846, %v2842
    %v3243 = vpack.c.b16 %v2847, %v2843
    %v3244 = vpack.c.b16 %v2848, %v2844
    %v3245 = vpack.c.b16 %v2849, %v2845
    %v3246 = vpack.c.b16 %v2854, %v2850
    %v3247 = vpack.c.b16 %v2855, %v2851
    %v3248 = vpack.c.b16 %v2856, %v2852
    %v3249 = vpack.c.b16 %v2857, %v2853
    %v3250 = vpack.c.b16 %v2862, %v2858
    %v3251 = vpack.c.b16 %v2863, %v2859
    %v3252 = vpack.c.b16 %v2864, %v2860
    %v3253 = vpack.c.b16 %v2865, %v2861
    %v3254 = vpack.c.b16 %v2870, %v2866
    %v3255 = vpack.c.b16 %v2871, %v2867
    %v3256 = vpack.c.b16 %v2872, %v2868
    %v3257 = vpack.c.b16 %v2873, %v2869
    %v3258 = vpack.c.b16 %v2878, %v2874
    %v3259 = vpack.c.b16 %v2879, %v2875
    %v3260 = vpack.c.b16 %v2880, %v2876
    %v3261 = vpack.c.b16 %v2881, %v2877
    %v3262 = vpack.c.b16 %v2886, %v2882
    %v3263 = vpack.c.b16 %v2887, %v2883
    %v3264 = vpack.c.b16 %v2888, %v2884
    %v3265 = vpack.c.b16 %v2889, %v2885
    %v3266 = vpack.c.b16 %v2894, %v2890
    %v3267 = vpack.c.b16 %v2895, %v2891
    %v3268 = vpack.c.b16 %v2896, %v2892
    %v3269 = vpack.c.b16 %v2897, %v2893
    %v3270 = vpack.c.b16 %v2902, %v2898
    %v3271 = vpack.c.b16 %v2903, %v2899
    %v3272 = vpack.c.b16 %v2904, %v2900
    %v3273 = vpack.c.b16 %v2905, %v2901
    %v3274 = vpack.c.b16 %v2910, %v2906
    %v3275 = vpack.c.b16 %v2911, %v2907
    %v3276 = vpack.c.b16 %v2912, %v2908
    %v3277 = vpack.c.b16 %v2913, %v2909
    %v3278 = vpack.c.b16 %v2918, %v2914
    %v3279 = vpack.c.b16 %v2919, %v2915
    %v3280 = vpack.c.b16 %v2920, %v2916
    %v3281 = vpack.c.b16 %v2921, %v2917
    %v3282 = vpack.c.b16 %v2926, %v2922
    %v3283 = vpack.c.b16 %v2927, %v2923
    %v3284 = vpack.c.b16 %v2928, %v2924
    %v3285 = vpack.c.b16 %v2929, %v2925
    %v3286 = vpack.c.b16 %v2934, %v2930
    %v3287 = vpack.c.b16 %v2935, %v2931
    %v3288 = vpack.c.b16 %v2936, %v2932
    %v3289 = vpack.c.b16 %v2937, %v2933
    %v3290 = vpack.c.b16 %v2942, %v2938
    %v3291 = vpack.c.b16 %v2943, %v2939
    %v3292 = vpack.c.b16 %v2944, %v2940
    %v3293 = vpack.c.b16 %v2945, %v2941
    %v3294 = vpack.c.b16 %v2950, %v2946
    %v3295 = vpack.c.b16 %v2951, %v2947
    %v3296 = vpack.c.b16 %v2952, %v2948
    %v3297 = vpack.c.b16 %v2953, %v2949
    %v3298 = vpack.c.b16 %v2958, %v2954
    %v3299 = vpack.c.b16 %v2959, %v2955
    %v3300 = vpack.c.b16 %v2960, %v2956
    %v3301 = vpack.c.b16 %v2961, %v2957
    %v3302 = vpack.c.b16 %v2966, %v2962
    %v3303 = vpack.c.b16 %v2967, %v2963
    %v3304 = vpack.c.b16 %v2968, %v2964
    %v3305 = vpack.c.b16 %v2969, %v2965
    %v3306 = vpack.c.b16 %v2974, %v2970
    %v3307 = vpack.c.b16 %v2975, %v2971
    %v3308 = vpack.c.b16 %v2976, %v2972
    %v3309 = vpack.c.b16 %v2977, %v2973
    %v3310 = vpack.c.b16 %v2982, %v2978
    %v3311 = vpack.c.b16 %v2983, %v2979
    %v3312 = vpack.c.b16 %v2984, %v2980
    %v3313 = vpack.c.b16 %v2985, %v2981
    %v3314 = vpack.c.b16 %v2990, %v2986
    %v3315 = vpack.c.b16 %v2991, %v2987
    %v3316 = vpack.c.b16 %v2992, %v2988
    %v3317 = vpack.c.b16 %v2993, %v2989
    %v3318 = vpack.c.b16 %v2998, %v2994
    %v3319 = vpack.c.b16 %v2999, %v2995
    %v3320 = vpack.c.b16 %v3000, %v2996
    %v3321 = vpack.c.b16 %v3001, %v2997
    %v3322 = vpack.c.b16 %v3006, %v3002
    %v3323 = vpack.c.b16 %v3007, %v3003
    %v3324 = vpack.c.b16 %v3008, %v3004
    %v3325 = vpack.c.b16 %v3009, %v3005
    %v3326 = vpack.c.b16 %v3014, %v3010
    %v3327 = vpack.c.b16 %v3015, %v3011
    %v3328 = vpack.c.b16 %v3016, %v3012
    %v3329 = vpack.c.b16 %v3017, %v3013
    %v3330 = vpack.c.b16 %v3022, %v3018
    %v3331 = vpack.c.b16 %v3023, %v3019
    %v3332 = vpack.c.b16 %v3024, %v3020
    %v3333 = vpack.c.b16 %v3025, %v3021
    %v3334 = vpack.c.b16 %v3030, %v3026
    %v3335 = vpack.c.b16 %v3031, %v3027
    %v3336 = vpack.c.b16 %v3032, %v3028
    %v3337 = vpack.c.b16 %v3033, %v3029
    %v3338 = vpack.c.b16 %v3038, %v3034
    %v3339 = vpack.c.b16 %v3039, %v3035
    %v3340 = vpack.c.b16 %v3040, %v3036
    %v3341 = vpack.c.b16 %v3041, %v3037
    %v3342 = vpack.c.b16 %v3046, %v3042
    %v3343 = vpack.c.b16 %v3047, %v3043
    %v3344 = vpack.c.b16 %v3048, %v3044
    %v3345 = vpack.c.b16 %v3049, %v3045
    %v3346 = vpack.c.b16 %v3054, %v3050
    %v3347 = vpack.c.b16 %v3055, %v3051
    %v3348 = vpack.c.b16 %v3056, %v3052
    %v3349 = vpack.c.b16 %v3057, %v3053
    %v3350 = vpack.c.b16 %v3062, %v3058
    %v3351 = vpack.c.b16 %v3063, %v3059
    %v3352 = vpack.c.b16 %v3064, %v3060
    %v3353 = vpack.c.b16 %v3065, %v3061
    %v3354 = vpack.c.b16 %v3070, %v3066
    %v3355 = vpack.c.b16 %v3071, %v3067
    %v3356 = vpack.c.b16 %v3072, %v3068
    %v3357 = vpack.c.b16 %v3073, %v3069
    %v3358 = vpack.c.b16 %v3078, %v3074
    %v3359 = vpack.c.b16 %v3079, %v3075
    %v3360 = vpack.c.b16 %v3080, %v3076
    %v3361 = vpack.c.b16 %v3081, %v3077
    %v3362 = vpack.c.b16 %v3086, %v3082
    %v3363 = vpack.c.b16 %v3087, %v3083
    %v3364 = vpack.c.b16 %v3088, %v3084
    %v3365 = vpack.c.b16 %v3089, %v3085
    %v3366 = vpack.c.b16 %v3094, %v3090
    %v3367 = vpack.c.b16 %v3095, %v3091
    %v3368 = vpack.c.b16 %v3096, %v3092
    %v3369 = vpack.c.b16 %v3097, %v3093
    %v3370 = vpack.c.b16 %v3102, %v3098
    %v3371 = vpack.c.b16 %v3103, %v3099
    %v3372 = vpack.c.b16 %v3104, %v3100
    %v3373 = vpack.c.b16 %v3105, %v3101
    %v3374 = vpack.c.b16 %v3110, %v3106
    %v3375 = vpack.c.b16 %v3111, %v3107
    %v3376 = vpack.c.b16 %v3112, %v3108
    %v3377 = vpack.c.b16 %v3113, %v3109
    %v3378 = vpack.c.b16 %v3118, %v3114
    %v3379 = vpack.c.b16 %v3119, %v3115
    %v3380 = vpack.c.b16 %v3120, %v3116
    %v3381 = vpack.c.b16 %v3121, %v3117
    %v3382 = vpack.c.b16 %v3126, %v3122
    %v3383 = vpack.c.b16 %v3127, %v3123
    %v3384 = vpack.c.b16 %v3128, %v3124
    %v3385 = vpack.c.b16 %v3129, %v3125
    %3642 = vmatprep.subr.bf16.mxu0 %v3131
    %3643 = vmatpush1.bf16.msra.mxu0 %v3130
    %3644 = vmatprep.subr.bf16.mxu0 %v3135
    %3645 = vmatpush1.bf16.msra.mxu0 %v3134
    %3646 = vmatprep.subr.bf16.mxu0 %v3139
    %3647 = vmatpush1.bf16.msra.mxu0 %v3138
    %3648 = vmatprep.subr.bf16.mxu0 %v3143
    %3649 = vmatpush1.bf16.msra.mxu0 %v3142
    %3650 = vmatprep.subr.bf16.mxu0 %v3147
    %3651 = vmatpush1.bf16.msra.mxu0 %v3146
    %3652 = vmatprep.subr.bf16.mxu0 %v3151
    %3653 = vmatpush1.bf16.msra.mxu0 %v3150
    %3654 = vmatprep.subr.bf16.mxu0 %v3155
    %3655 = vmatpush1.bf16.msra.mxu0 %v3154
    %3656 = vmatprep.subr.bf16.mxu0 %v3159
    %3657 = vmatpush1.bf16.msra.mxu0 %v3158
    %3658 = vmatprep.subr.bf16.mxu0 %v3163
    %3659 = vmatpush1.bf16.msra.mxu0 %v3162
    %3660 = vmatprep.subr.bf16.mxu0 %v3167
    %3661 = vmatpush1.bf16.msra.mxu0 %v3166
    %3662 = vmatprep.subr.bf16.mxu0 %v3171
    %3663 = vmatpush1.bf16.msra.mxu0 %v3170
    %3664 = vmatprep.subr.bf16.mxu0 %v3175
    %3665 = vmatpush1.bf16.msra.mxu0 %v3174
    %3666 = vmatprep.subr.bf16.mxu0 %v3179
    %3667 = vmatpush1.bf16.msra.mxu0 %v3178
    %3668 = vmatprep.subr.bf16.mxu0 %v3183
    %3669 = vmatpush1.bf16.msra.mxu0 %v3182
    %3670 = vmatprep.subr.bf16.mxu0 %v3187
    %3671 = vmatpush1.bf16.msra.mxu0 %v3186
    %3672 = vmatprep.subr.bf16.mxu0 %v3191
    %3673 = vmatpush1.bf16.msra.mxu0 %v3190
    %3674 = vmatprep.mubr.bf16.mxu0 %v2077
    %3675 = vmatmul.mubr.bf16.gmra.mrb[0].mxu0 %v2076
    %v3676 = vpop.f32.mrb[0].mxu0
    %v3677 = vadd.f32 %v2345, %v3676
    %v3678 = vpop.f32.mrb[0].mxu0
    %v3679 = vadd.f32 %v2349, %v3678
    %v3680 = vpop.f32.mrb[0].mxu0
    %v3681 = vpop.f32.mrb[0].mxu0
    %3682 = vdwg.mxu0
    %3683 = vmatprep.subr.bf16.mxu0 %v3195
    %3684 = vmatpush1.bf16.msra.mxu0 %v3194
    %3685 = vmatprep.subr.bf16.mxu0 %v3199
    %3686 = vmatpush1.bf16.msra.mxu0 %v3198
    %3687 = vmatprep.subr.bf16.mxu0 %v3203
    %3688 = vmatpush1.bf16.msra.mxu0 %v3202
    %3689 = vmatprep.subr.bf16.mxu0 %v3207
    %3690 = vmatpush1.bf16.msra.mxu0 %v3206
    %3691 = vmatprep.subr.bf16.mxu0 %v3211
    %3692 = vmatpush1.bf16.msra.mxu0 %v3210
    %3693 = vmatprep.subr.bf16.mxu0 %v3215
    %3694 = vmatpush1.bf16.msra.mxu0 %v3214
    %3695 = vmatprep.subr.bf16.mxu0 %v3219
    %3696 = vmatpush1.bf16.msra.mxu0 %v3218
    %3697 = vmatprep.subr.bf16.mxu0 %v3223
    %3698 = vmatpush1.bf16.msra.mxu0 %v3222
    %3699 = vmatprep.subr.bf16.mxu0 %v3227
    %3700 = vmatpush1.bf16.msra.mxu0 %v3226
    %3701 = vmatprep.subr.bf16.mxu0 %v3231
    %3702 = vmatpush1.bf16.msra.mxu0 %v3230
    %3703 = vmatprep.subr.bf16.mxu0 %v3235
    %3704 = vmatpush1.bf16.msra.mxu0 %v3234
    %3705 = vmatprep.subr.bf16.mxu0 %v3239
    %3706 = vmatpush1.bf16.msra.mxu0 %v3238
    %3707 = vmatprep.subr.bf16.mxu0 %v3243
    %3708 = vmatpush1.bf16.msra.mxu0 %v3242
    %3709 = vmatprep.subr.bf16.mxu0 %v3247
    %3710 = vmatpush1.bf16.msra.mxu0 %v3246
    %3711 = vmatprep.subr.bf16.mxu0 %v3251
    %3712 = vmatpush1.bf16.msra.mxu0 %v3250
    %3713 = vmatprep.subr.bf16.mxu0 %v3255
    %3714 = vmatpush1.bf16.msra.mxu0 %v3254
    %3715 = vmatprep.mubr.bf16.mxu0 %v2079
    %3716 = vmatmul.mubr.bf16.gmra.mrb[0].mxu0 %v2078
    %v3717 = vpop.f32.mrb[0].mxu0
    %v3718 = vadd.f32 %v3677, %v3717
    %v3719 = vpop.f32.mrb[0].mxu0
    %v3720 = vadd.f32 %v3679, %v3719
    %v3721 = vpop.f32.mrb[0].mxu0
    %v3722 = vpop.f32.mrb[0].mxu0
    %3723 = vdwg.mxu0
    %3724 = vmatprep.subr.bf16.mxu0 %v3259
    %3725 = vmatpush1.bf16.msra.mxu0 %v3258
    %3726 = vmatprep.subr.bf16.mxu0 %v3263
    %3727 = vmatpush1.bf16.msra.mxu0 %v3262
    %3728 = vmatprep.subr.bf16.mxu0 %v3267
    %3729 = vmatpush1.bf16.msra.mxu0 %v3266
    %3730 = vmatprep.subr.bf16.mxu0 %v3271
    %3731 = vmatpush1.bf16.msra.mxu0 %v3270
    %3732 = vmatprep.subr.bf16.mxu0 %v3275
    %3733 = vmatpush1.bf16.msra.mxu0 %v3274
    %3734 = vmatprep.subr.bf16.mxu0 %v3279
    %3735 = vmatpush1.bf16.msra.mxu0 %v3278
    %3736 = vmatprep.subr.bf16.mxu0 %v3283
    %3737 = vmatpush1.bf16.msra.mxu0 %v3282
    %3738 = vmatprep.subr.bf16.mxu0 %v3287
    %3739 = vmatpush1.bf16.msra.mxu0 %v3286
    %3740 = vmatprep.subr.bf16.mxu0 %v3291
    %3741 = vmatpush1.bf16.msra.mxu0 %v3290
    %3742 = vmatprep.subr.bf16.mxu0 %v3295
    %3743 = vmatpush1.bf16.msra.mxu0 %v3294
    %3744 = vmatprep.subr.bf16.mxu0 %v3299
    %3745 = vmatpush1.bf16.msra.mxu0 %v3298
    %3746 = vmatprep.subr.bf16.mxu0 %v3303
    %3747 = vmatpush1.bf16.msra.mxu0 %v3302
    %3748 = vmatprep.subr.bf16.mxu0 %v3307
    %3749 = vmatpush1.bf16.msra.mxu0 %v3306
    %3750 = vmatprep.subr.bf16.mxu0 %v3311
    %3751 = vmatpush1.bf16.msra.mxu0 %v3310
    %3752 = vmatprep.subr.bf16.mxu0 %v3315
    %3753 = vmatpush1.bf16.msra.mxu0 %v3314
    %3754 = vmatprep.subr.bf16.mxu0 %v3319
    %3755 = vmatpush1.bf16.msra.mxu0 %v3318
    %3756 = vmatprep.mubr.bf16.mxu0 %v2081
    %3757 = vmatmul.mubr.bf16.gmra.mrb[0].mxu0 %v2080
    %v3758 = vpop.f32.mrb[0].mxu0
    %v3759 = vadd.f32 %v3718, %v3758
    %v3760 = vpop.f32.mrb[0].mxu0
    %v3761 = vadd.f32 %v3720, %v3760
    %v3762 = vpop.f32.mrb[0].mxu0
    %v3763 = vpop.f32.mrb[0].mxu0
    %3764 = vdwg.mxu0
    %3765 = vmatprep.subr.bf16.mxu0 %v3323
    %3766 = vmatpush1.bf16.msra.mxu0 %v3322
    %3767 = vmatprep.subr.bf16.mxu0 %v3327
    %3768 = vmatpush1.bf16.msra.mxu0 %v3326
    %3769 = vmatprep.subr.bf16.mxu0 %v3331
    %3770 = vmatpush1.bf16.msra.mxu0 %v3330
    %3771 = vmatprep.subr.bf16.mxu0 %v3335
    %3772 = vmatpush1.bf16.msra.mxu0 %v3334
    %3773 = vmatprep.subr.bf16.mxu0 %v3339
    %3774 = vmatpush1.bf16.msra.mxu0 %v3338
    %3775 = vmatprep.subr.bf16.mxu0 %v3343
    %3776 = vmatpush1.bf16.msra.mxu0 %v3342
    %3777 = vmatprep.subr.bf16.mxu0 %v3347
    %3778 = vmatpush1.bf16.msra.mxu0 %v3346
    %3779 = vmatprep.subr.bf16.mxu0 %v3351
    %3780 = vmatpush1.bf16.msra.mxu0 %v3350
    %3781 = vmatprep.subr.bf16.mxu0 %v3355
    %3782 = vmatpush1.bf16.msra.mxu0 %v3354
    %3783 = vmatprep.subr.bf16.mxu0 %v3359
    %3784 = vmatpush1.bf16.msra.mxu0 %v3358
    %3785 = vmatprep.subr.bf16.mxu0 %v3363
    %3786 = vmatpush1.bf16.msra.mxu0 %v3362
    %3787 = vmatprep.subr.bf16.mxu0 %v3367
    %3788 = vmatpush1.bf16.msra.mxu0 %v3366
    %3789 = vmatprep.subr.bf16.mxu0 %v3371
    %3790 = vmatpush1.bf16.msra.mxu0 %v3370
    %3791 = vmatprep.subr.bf16.mxu0 %v3375
    %3792 = vmatpush1.bf16.msra.mxu0 %v3374
    %3793 = vmatprep.subr.bf16.mxu0 %v3379
    %3794 = vmatpush1.bf16.msra.mxu0 %v3378
    %3795 = vmatprep.subr.bf16.mxu0 %v3383
    %3796 = vmatpush1.bf16.msra.mxu0 %v3382
    %3797 = vmatprep.mubr.bf16.mxu0 %v2083
    %3798 = vmatmul.mubr.bf16.gmra.mrb[0].mxu0 %v2082
    %v3799 = vpop.f32.mrb[0].mxu0
    %v3800 = vadd.f32 %v3759, %v3799
    %v3801 = vpop.f32.mrb[0].mxu0
    %v3802 = vadd.f32 %v3761, %v3801
    %v3803 = vpop.f32.mrb[0].mxu0
    %v3804 = vpop.f32.mrb[0].mxu0
    %3805 = vdwg.mxu0
    %3806 = vmatprep.subr.bf16.mxu0 %v3133
    %3807 = vmatpush1.bf16.msra.mxu0 %v3132
    %3808 = vmatprep.subr.bf16.mxu0 %v3137
    %3809 = vmatpush1.bf16.msra.mxu0 %v3136
    %3810 = vmatprep.subr.bf16.mxu0 %v3141
    %3811 = vmatpush1.bf16.msra.mxu0 %v3140
    %3812 = vmatprep.subr.bf16.mxu0 %v3145
    %3813 = vmatpush1.bf16.msra.mxu0 %v3144
    %3814 = vmatprep.subr.bf16.mxu0 %v3149
    %3815 = vmatpush1.bf16.msra.mxu0 %v3148
    %3816 = vmatprep.subr.bf16.mxu0 %v3153
    %3817 = vmatpush1.bf16.msra.mxu0 %v3152
    %3818 = vmatprep.subr.bf16.mxu0 %v3157
    %3819 = vmatpush1.bf16.msra.mxu0 %v3156
    %3820 = vmatprep.subr.bf16.mxu0 %v3161
    %3821 = vmatpush1.bf16.msra.mxu0 %v3160
    %3822 = vmatprep.subr.bf16.mxu0 %v3165
    %3823 = vmatpush1.bf16.msra.mxu0 %v3164
    %3824 = vmatprep.subr.bf16.mxu0 %v3169
    %3825 = vmatpush1.bf16.msra.mxu0 %v3168
    %3826 = vmatprep.subr.bf16.mxu0 %v3173
    %3827 = vmatpush1.bf16.msra.mxu0 %v3172
    %3828 = vmatprep.subr.bf16.mxu0 %v3177
    %3829 = vmatpush1.bf16.msra.mxu0 %v3176
    %3830 = vmatprep.subr.bf16.mxu0 %v3181
    %3831 = vmatpush1.bf16.msra.mxu0 %v3180
    %3832 = vmatprep.subr.bf16.mxu0 %v3185
    %3833 = vmatpush1.bf16.msra.mxu0 %v3184
    %3834 = vmatprep.subr.bf16.mxu0 %v3189
    %3835 = vmatpush1.bf16.msra.mxu0 %v3188
    %3836 = vmatprep.subr.bf16.mxu0 %v3193
    %3837 = vmatpush1.bf16.msra.mxu0 %v3192
    %3838 = vmatprep.mubr.bf16.mxu0 %v2077
    %3839 = vmatmul.mubr.bf16.gmra.mrb[0].mxu0 %v2076
    %v3840 = vpop.f32.mrb[0].mxu0
    %v3841 = vadd.f32 %v2353, %v3840
    %v3842 = vpop.f32.mrb[0].mxu0
    %v3843 = vadd.f32 %v2357, %v3842
    %v3844 = vpop.f32.mrb[0].mxu0
    %v3845 = vpop.f32.mrb[0].mxu0
    %3846 = vdwg.mxu0
    %3847 = vmatprep.subr.bf16.mxu0 %v3197
    %3848 = vmatpush1.bf16.msra.mxu0 %v3196
    %3849 = vmatprep.subr.bf16.mxu0 %v3201
    %3850 = vmatpush1.bf16.msra.mxu0 %v3200
    %3851 = vmatprep.subr.bf16.mxu0 %v3205
    %3852 = vmatpush1.bf16.msra.mxu0 %v3204
    %3853 = vmatprep.subr.bf16.mxu0 %v3209
    %3854 = vmatpush1.bf16.msra.mxu0 %v3208
    %3855 = vmatprep.subr.bf16.mxu0 %v3213
    %3856 = vmatpush1.bf16.msra.mxu0 %v3212
    %3857 = vmatprep.subr.bf16.mxu0 %v3217
    %3858 = vmatpush1.bf16.msra.mxu0 %v3216
    %3859 = vmatprep.subr.bf16.mxu0 %v3221
    %3860 = vmatpush1.bf16.msra.mxu0 %v3220
    %3861 = vmatprep.subr.bf16.mxu0 %v3225
    %3862 = vmatpush1.bf16.msra.mxu0 %v3224
    %3863 = vmatprep.subr.bf16.mxu0 %v3229
    %3864 = vmatpush1.bf16.msra.mxu0 %v3228
    %3865 = vmatprep.subr.bf16.mxu0 %v3233
    %3866 = vmatpush1.bf16.msra.mxu0 %v3232
    %3867 = vmatprep.subr.bf16.mxu0 %v3237
    %3868 = vmatpush1.bf16.msra.mxu0 %v3236
    %3869 = vmatprep.subr.bf16.mxu0 %v3241
    %3870 = vmatpush1.bf16.msra.mxu0 %v3240
    %3871 = vmatprep.subr.bf16.mxu0 %v3245
    %3872 = vmatpush1.bf16.msra.mxu0 %v3244
    %3873 = vmatprep.subr.bf16.mxu0 %v3249
    %3874 = vmatpush1.bf16.msra.mxu0 %v3248
    %3875 = vmatprep.subr.bf16.mxu0 %v3253
    %3876 = vmatpush1.bf16.msra.mxu0 %v3252
    %3877 = vmatprep.subr.bf16.mxu0 %v3257
    %3878 = vmatpush1.bf16.msra.mxu0 %v3256
    %3879 = vmatprep.mubr.bf16.mxu0 %v2079
    %3880 = vmatmul.mubr.bf16.gmra.mrb[0].mxu0 %v2078
    %v3881 = vpop.f32.mrb[0].mxu0
    %v3882 = vadd.f32 %v3841, %v3881
    %v3883 = vpop.f32.mrb[0].mxu0
    %v3884 = vadd.f32 %v3843, %v3883
    %v3885 = vpop.f32.mrb[0].mxu0
    %v3886 = vpop.f32.mrb[0].mxu0
    %3887 = vdwg.mxu0
    %3888 = vmatprep.subr.bf16.mxu0 %v3261
    %3889 = vmatpush1.bf16.msra.mxu0 %v3260
    %3890 = vmatprep.subr.bf16.mxu0 %v3265
    %3891 = vmatpush1.bf16.msra.mxu0 %v3264
    %3892 = vmatprep.subr.bf16.mxu0 %v3269
    %3893 = vmatpush1.bf16.msra.mxu0 %v3268
    %3894 = vmatprep.subr.bf16.mxu0 %v3273
    %3895 = vmatpush1.bf16.msra.mxu0 %v3272
    %3896 = vmatprep.subr.bf16.mxu0 %v3277
    %3897 = vmatpush1.bf16.msra.mxu0 %v3276
    %3898 = vmatprep.subr.bf16.mxu0 %v3281
    %3899 = vmatpush1.bf16.msra.mxu0 %v3280
    %3900 = vmatprep.subr.bf16.mxu0 %v3285
    %3901 = vmatpush1.bf16.msra.mxu0 %v3284
    %3902 = vmatprep.subr.bf16.mxu0 %v3289
    %3903 = vmatpush1.bf16.msra.mxu0 %v3288
    %3904 = vmatprep.subr.bf16.mxu0 %v3293
    %3905 = vmatpush1.bf16.msra.mxu0 %v3292
    %3906 = vmatprep.subr.bf16.mxu0 %v3297
    %3907 = vmatpush1.bf16.msra.mxu0 %v3296
    %3908 = vmatprep.subr.bf16.mxu0 %v3301
    %3909 = vmatpush1.bf16.msra.mxu0 %v3300
    %3910 = vmatprep.subr.bf16.mxu0 %v3305
    %3911 = vmatpush1.bf16.msra.mxu0 %v3304
    %3912 = vmatprep.subr.bf16.mxu0 %v3309
    %3913 = vmatpush1.bf16.msra.mxu0 %v3308
    %3914 = vmatprep.subr.bf16.mxu0 %v3313
    %3915 = vmatpush1.bf16.msra.mxu0 %v3312
    %3916 = vmatprep.subr.bf16.mxu0 %v3317
    %3917 = vmatpush1.bf16.msra.mxu0 %v3316
    %3918 = vmatprep.subr.bf16.mxu0 %v3321
    %3919 = vmatpush1.bf16.msra.mxu0 %v3320
    %3920 = vmatprep.mubr.bf16.mxu0 %v2081
    %3921 = vmatmul.mubr.bf16.gmra.mrb[0].mxu0 %v2080
    %v3922 = vpop.f32.mrb[0].mxu0
    %v3923 = vadd.f32 %v3882, %v3922
    %v3924 = vpop.f32.mrb[0].mxu0
    %v3925 = vadd.f32 %v3884, %v3924
    %v3926 = vpop.f32.mrb[0].mxu0
    %v3927 = vpop.f32.mrb[0].mxu0
    %3928 = vdwg.mxu0
    %3929 = vmatprep.subr.bf16.mxu0 %v3325
    %3930 = vmatpush1.bf16.msra.mxu0 %v3324
    %3931 = vmatprep.subr.bf16.mxu0 %v3329
    %3932 = vmatpush1.bf16.msra.mxu0 %v3328
    %3933 = vmatprep.subr.bf16.mxu0 %v3333
    %3934 = vmatpush1.bf16.msra.mxu0 %v3332
    %3935 = vmatprep.subr.bf16.mxu0 %v3337
    %3936 = vmatpush1.bf16.msra.mxu0 %v3336
    %3937 = vmatprep.subr.bf16.mxu0 %v3341
    %3938 = vmatpush1.bf16.msra.mxu0 %v3340
    %3939 = vmatprep.subr.bf16.mxu0 %v3345
    %3940 = vmatpush1.bf16.msra.mxu0 %v3344
    %3941 = vmatprep.subr.bf16.mxu0 %v3349
    %3942 = vmatpush1.bf16.msra.mxu0 %v3348
    %3943 = vmatprep.subr.bf16.mxu0 %v3353
    %3944 = vmatpush1.bf16.msra.mxu0 %v3352
    %3945 = vmatprep.subr.bf16.mxu0 %v3357
    %3946 = vmatpush1.bf16.msra.mxu0 %v3356
    %3947 = vmatprep.subr.bf16.mxu0 %v3361
    %3948 = vmatpush1.bf16.msra.mxu0 %v3360
    %3949 = vmatprep.subr.bf16.mxu0 %v3365
    %3950 = vmatpush1.bf16.msra.mxu0 %v3364
    %3951 = vmatprep.subr.bf16.mxu0 %v3369
    %3952 = vmatpush1.bf16.msra.mxu0 %v3368
    %3953 = vmatprep.subr.bf16.mxu0 %v3373
    %3954 = vmatpush1.bf16.msra.mxu0 %v3372
    %3955 = vmatprep.subr.bf16.mxu0 %v3377
    %3956 = vmatpush1.bf16.msra.mxu0 %v3376
    %3957 = vmatprep.subr.bf16.mxu0 %v3381
    %3958 = vmatpush1.bf16.msra.mxu0 %v3380
    %3959 = vmatprep.subr.bf16.mxu0 %v3385
    %3960 = vmatpush1.bf16.msra.mxu0 %v3384
    %3961 = vmatprep.mubr.bf16.mxu0 %v2083
    %3962 = vmatmul.mubr.bf16.gmra.mrb[0].mxu0 %v2082
    %v3963 = vpop.f32.mrb[0].mxu0
    %v3964 = vadd.f32 %v3923, %v3963
    %v3965 = vpop.f32.mrb[0].mxu0
    %v3966 = vadd.f32 %v3925, %v3965
    %v3967 = vpop.f32.mrb[0].mxu0
    %v3968 = vpop.f32.mrb[0].mxu0
    %3969 = vdwg.mxu0
    %v3970 = vmax.f32 %v3800, 0.0
    %v3971 = vmax.f32 %v3802, 0.0
    %v3972 = vmax.f32 %v3964, 0.0
    %v3973 = vmax.f32 %v3966, 0.0
    %v3974 = vpack.c.bf16 %v3970, %v3970
    %v3975 = vpack.c.bf16 %v3971, %v3971
    %v3976 = vpack.c.bf16 %v3972, %v3972
    %v3977 = vpack.c.bf16 %v3973, %v3973
    %v3978 = vld [vmem:[#allocation7] sm:$0xff]
    %v3979 = vld [vmem:[#allocation7 + $0x8] sm:$0xff]
    %v3980 = vld [vmem:[#allocation7 + $0x10] sm:$0xff]
    %v3981 = vld [vmem:[#allocation7 + $0x18] sm:$0xff]
    %v3982 = vld [vmem:[#allocation7 + $0x20] sm:$0xff]
    %v3983 = vld [vmem:[#allocation7 + $0x28] sm:$0xff]
    %v3984 = vld [vmem:[#allocation7 + $0x30] sm:$0xff]
    %v3985 = vld [vmem:[#allocation7 + $0x38] sm:$0xff]
    %v3986 = vld [vmem:[#allocation7 + $0x40] sm:$0xff]
    %v3987 = vld [vmem:[#allocation7 + $0x48] sm:$0xff]
    %v3988 = vld [vmem:[#allocation7 + $0x50] sm:$0xff]
    %v3989 = vld [vmem:[#allocation7 + $0x58] sm:$0xff]
    %v3990 = vld [vmem:[#allocation7 + $0x60] sm:$0xff]
    %v3991 = vld [vmem:[#allocation7 + $0x68] sm:$0xff]
    %v3992 = vld [vmem:[#allocation7 + $0x70] sm:$0xff]
    %v3993 = vld [vmem:[#allocation7 + $0x78] sm:$0xff]
    %v3994 = vld [vmem:[#allocation7 + $0x80] sm:$0xff]
    %v3995 = vld [vmem:[#allocation7 + $0x88] sm:$0xff]
    %v3996 = vld [vmem:[#allocation7 + $0x90] sm:$0xff]
    %v3997 = vld [vmem:[#allocation7 + $0x98] sm:$0xff]
    %v3998 = vld [vmem:[#allocation7 + $0xa0] sm:$0xff]
    %v3999 = vld [vmem:[#allocation7 + $0xa8] sm:$0xff]
    %v4000 = vld [vmem:[#allocation7 + $0xb0] sm:$0xff]
    %v4001 = vld [vmem:[#allocation7 + $0xb8] sm:$0xff]
    %v4002 = vld [vmem:[#allocation7 + $0xc0] sm:$0xff]
    %v4003 = vld [vmem:[#allocation7 + $0xc8] sm:$0xff]
    %v4004 = vld [vmem:[#allocation7 + $0xd0] sm:$0xff]
    %v4005 = vld [vmem:[#allocation7 + $0xd8] sm:$0xff]
    %v4006 = vld [vmem:[#allocation7 + $0xe0] sm:$0xff]
    %v4007 = vld [vmem:[#allocation7 + $0xe8] sm:$0xff]
    %v4008 = vld [vmem:[#allocation7 + $0xf0] sm:$0xff]
    %v4009 = vld [vmem:[#allocation7 + $0xf8] sm:$0xff]
    %v4010 = vld [vmem:[#allocation7 + $0x100] sm:$0xff]
    %v4011 = vld [vmem:[#allocation7 + $0x108] sm:$0xff]
    %v4012 = vld [vmem:[#allocation7 + $0x110] sm:$0xff]
    %v4013 = vld [vmem:[#allocation7 + $0x118] sm:$0xff]
    %v4014 = vld [vmem:[#allocation7 + $0x120] sm:$0xff]
    %v4015 = vld [vmem:[#allocation7 + $0x128] sm:$0xff]
    %v4016 = vld [vmem:[#allocation7 + $0x130] sm:$0xff]
    %v4017 = vld [vmem:[#allocation7 + $0x138] sm:$0xff]
    %v4018 = vld [vmem:[#allocation7 + $0x140] sm:$0xff]
    %v4019 = vld [vmem:[#allocation7 + $0x148] sm:$0xff]
    %v4020 = vld [vmem:[#allocation7 + $0x150] sm:$0xff]
    %v4021 = vld [vmem:[#allocation7 + $0x158] sm:$0xff]
    %v4022 = vld [vmem:[#allocation7 + $0x160] sm:$0xff]
    %v4023 = vld [vmem:[#allocation7 + $0x168] sm:$0xff]
    %v4024 = vld [vmem:[#allocation7 + $0x170] sm:$0xff]
    %v4025 = vld [vmem:[#allocation7 + $0x178] sm:$0xff]
    %v4026 = vld [vmem:[#allocation7 + $0x180] sm:$0xff]
    %v4027 = vld [vmem:[#allocation7 + $0x188] sm:$0xff]
    %v4028 = vld [vmem:[#allocation7 + $0x190] sm:$0xff]
    %v4029 = vld [vmem:[#allocation7 + $0x198] sm:$0xff]
    %v4030 = vld [vmem:[#allocation7 + $0x1a0] sm:$0xff]
    %v4031 = vld [vmem:[#allocation7 + $0x1a8] sm:$0xff]
    %v4032 = vld [vmem:[#allocation7 + $0x1b0] sm:$0xff]
    %v4033 = vld [vmem:[#allocation7 + $0x1b8] sm:$0xff]
    %v4034 = vld [vmem:[#allocation7 + $0x1c0] sm:$0xff]
    %v4035 = vld [vmem:[#allocation7 + $0x1c8] sm:$0xff]
    %v4036 = vld [vmem:[#allocation7 + $0x1d0] sm:$0xff]
    %v4037 = vld [vmem:[#allocation7 + $0x1d8] sm:$0xff]
    %v4038 = vld [vmem:[#allocation7 + $0x1e0] sm:$0xff]
    %v4039 = vld [vmem:[#allocation7 + $0x1e8] sm:$0xff]
    %v4040 = vld [vmem:[#allocation7 + $0x1f0] sm:$0xff]
    %v4041 = vld [vmem:[#allocation7 + $0x1f8] sm:$0xff]
    %v4042 = vld [vmem:[%s7] sm:$0x3]
    %v4044 = vlaneseq
    %v4045 = vshrl.u32 %v4044, 7
    %v4046 = vsub.s32 0, %v4045
    %v4047 = vrot.slane %v4042, %v4046
    %v4048 = vlaneseq
    %v4049 = vshrl.u32 %v4048, 7
    %v4050 = vsub.s32 1, %v4049
    %v4051 = vrot.slane %v4042, %v4050
    %v4118 = vunpack.c.l.b16 %v3978
    %v4119 = vunpack.c.h.b16 %v3978
    %v4120 = vunpack.c.l.b16 %v3979
    %v4121 = vunpack.c.h.b16 %v3979
    %v4122 = vunpack.c.l.b16 %v3980
    %v4123 = vunpack.c.h.b16 %v3980
    %v4124 = vunpack.c.l.b16 %v3981
    %v4125 = vunpack.c.h.b16 %v3981
    %v4126 = vunpack.c.l.b16 %v3982
    %v4127 = vunpack.c.h.b16 %v3982
    %v4128 = vunpack.c.l.b16 %v3983
    %v4129 = vunpack.c.h.b16 %v3983
    %v4130 = vunpack.c.l.b16 %v3984
    %v4131 = vunpack.c.h.b16 %v3984
    %v4132 = vunpack.c.l.b16 %v3985
    %v4133 = vunpack.c.h.b16 %v3985
    %v4134 = vunpack.c.l.b16 %v3986
    %v4135 = vunpack.c.h.b16 %v3986
    %v4136 = vunpack.c.l.b16 %v3987
    %v4137 = vunpack.c.h.b16 %v3987
    %v4138 = vunpack.c.l.b16 %v3988
    %v4139 = vunpack.c.h.b16 %v3988
    %v4140 = vunpack.c.l.b16 %v3989
    %v4141 = vunpack.c.h.b16 %v3989
    %v4142 = vunpack.c.l.b16 %v3990
    %v4143 = vunpack.c.h.b16 %v3990
    %v4144 = vunpack.c.l.b16 %v3991
    %v4145 = vunpack.c.h.b16 %v3991
    %v4146 = vunpack.c.l.b16 %v3992
    %v4147 = vunpack.c.h.b16 %v3992
    %v4148 = vunpack.c.l.b16 %v3993
    %v4149 = vunpack.c.h.b16 %v3993
    %v4150 = vunpack.c.l.b16 %v3994
    %v4151 = vunpack.c.h.b16 %v3994
    %v4152 = vunpack.c.l.b16 %v3995
    %v4153 = vunpack.c.h.b16 %v3995
    %v4154 = vunpack.c.l.b16 %v3996
    %v4155 = vunpack.c.h.b16 %v3996
    %v4156 = vunpack.c.l.b16 %v3997
    %v4157 = vunpack.c.h.b16 %v3997
    %v4158 = vunpack.c.l.b16 %v3998
    %v4159 = vunpack.c.h.b16 %v3998
    %v4160 = vunpack.c.l.b16 %v3999
    %v4161 = vunpack.c.h.b16 %v3999
    %v4162 = vunpack.c.l.b16 %v4000
    %v4163 = vunpack.c.h.b16 %v4000
    %v4164 = vunpack.c.l.b16 %v4001
    %v4165 = vunpack.c.h.b16 %v4001
    %v4166 = vunpack.c.l.b16 %v4002
    %v4167 = vunpack.c.h.b16 %v4002
    %v4168 = vunpack.c.l.b16 %v4003
    %v4169 = vunpack.c.h.b16 %v4003
    %v4170 = vunpack.c.l.b16 %v4004
    %v4171 = vunpack.c.h.b16 %v4004
    %v4172 = vunpack.c.l.b16 %v4005
    %v4173 = vunpack.c.h.b16 %v4005
    %v4174 = vunpack.c.l.b16 %v4006
    %v4175 = vunpack.c.h.b16 %v4006
    %v4176 = vunpack.c.l.b16 %v4007
    %v4177 = vunpack.c.h.b16 %v4007
    %v4178 = vunpack.c.l.b16 %v4008
    %v4179 = vunpack.c.h.b16 %v4008
    %v4180 = vunpack.c.l.b16 %v4009
    %v4181 = vunpack.c.h.b16 %v4009
    %v4182 = vunpack.c.l.b16 %v4010
    %v4183 = vunpack.c.h.b16 %v4010
    %v4184 = vunpack.c.l.b16 %v4011
    %v4185 = vunpack.c.h.b16 %v4011
    %v4186 = vunpack.c.l.b16 %v4012
    %v4187 = vunpack.c.h.b16 %v4012
    %v4188 = vunpack.c.l.b16 %v4013
    %v4189 = vunpack.c.h.b16 %v4013
    %v4190 = vunpack.c.l.b16 %v4014
    %v4191 = vunpack.c.h.b16 %v4014
    %v4192 = vunpack.c.l.b16 %v4015
    %v4193 = vunpack.c.h.b16 %v4015
    %v4194 = vunpack.c.l.b16 %v4016
    %v4195 = vunpack.c.h.b16 %v4016
    %v4196 = vunpack.c.l.b16 %v4017
    %v4197 = vunpack.c.h.b16 %v4017
    %v4198 = vunpack.c.l.b16 %v4018
    %v4199 = vunpack.c.h.b16 %v4018
    %v4200 = vunpack.c.l.b16 %v4019
    %v4201 = vunpack.c.h.b16 %v4019
    %v4202 = vunpack.c.l.b16 %v4020
    %v4203 = vunpack.c.h.b16 %v4020
    %v4204 = vunpack.c.l.b16 %v4021
    %v4205 = vunpack.c.h.b16 %v4021
    %v4206 = vunpack.c.l.b16 %v4022
    %v4207 = vunpack.c.h.b16 %v4022
    %v4208 = vunpack.c.l.b16 %v4023
    %v4209 = vunpack.c.h.b16 %v4023
    %v4210 = vunpack.c.l.b16 %v4024
    %v4211 = vunpack.c.h.b16 %v4024
    %v4212 = vunpack.c.l.b16 %v4025
    %v4213 = vunpack.c.h.b16 %v4025
    %v4214 = vunpack.c.l.b16 %v4026
    %v4215 = vunpack.c.h.b16 %v4026
    %v4216 = vunpack.c.l.b16 %v4027
    %v4217 = vunpack.c.h.b16 %v4027
    %v4218 = vunpack.c.l.b16 %v4028
    %v4219 = vunpack.c.h.b16 %v4028
    %v4220 = vunpack.c.l.b16 %v4029
    %v4221 = vunpack.c.h.b16 %v4029
    %v4222 = vunpack.c.l.b16 %v4030
    %v4223 = vunpack.c.h.b16 %v4030
    %v4224 = vunpack.c.l.b16 %v4031
    %v4225 = vunpack.c.h.b16 %v4031
    %v4226 = vunpack.c.l.b16 %v4032
    %v4227 = vunpack.c.h.b16 %v4032
    %v4228 = vunpack.c.l.b16 %v4033
    %v4229 = vunpack.c.h.b16 %v4033
    %v4230 = vunpack.c.l.b16 %v4034
    %v4231 = vunpack.c.h.b16 %v4034
    %v4232 = vunpack.c.l.b16 %v4035
    %v4233 = vunpack.c.h.b16 %v4035
    %v4234 = vunpack.c.l.b16 %v4036
    %v4235 = vunpack.c.h.b16 %v4036
    %v4236 = vunpack.c.l.b16 %v4037
    %v4237 = vunpack.c.h.b16 %v4037
    %v4238 = vunpack.c.l.b16 %v4038
    %v4239 = vunpack.c.h.b16 %v4038
    %v4240 = vunpack.c.l.b16 %v4039
    %v4241 = vunpack.c.h.b16 %v4039
    %v4242 = vunpack.c.l.b16 %v4040
    %v4243 = vunpack.c.h.b16 %v4040
    %v4244 = vunpack.c.l.b16 %v4041
    %v4245 = vunpack.c.h.b16 %v4041
    %v4246 = vpack.c.b16 %v4120, %v4118
    %v4247 = vpack.c.b16 %v4121, %v4119
    %v4248 = vpack.c.b16 %v4124, %v4122
    %v4249 = vpack.c.b16 %v4125, %v4123
    %v4250 = vpack.c.b16 %v4128, %v4126
    %v4251 = vpack.c.b16 %v4129, %v4127
    %v4252 = vpack.c.b16 %v4132, %v4130
    %v4253 = vpack.c.b16 %v4133, %v4131
    %v4254 = vpack.c.b16 %v4136, %v4134
    %v4255 = vpack.c.b16 %v4137, %v4135
    %v4256 = vpack.c.b16 %v4140, %v4138
    %v4257 = vpack.c.b16 %v4141, %v4139
    %v4258 = vpack.c.b16 %v4144, %v4142
    %v4259 = vpack.c.b16 %v4145, %v4143
    %v4260 = vpack.c.b16 %v4148, %v4146
    %v4261 = vpack.c.b16 %v4149, %v4147
    %v4262 = vpack.c.b16 %v4152, %v4150
    %v4263 = vpack.c.b16 %v4153, %v4151
    %v4264 = vpack.c.b16 %v4156, %v4154
    %v4265 = vpack.c.b16 %v4157, %v4155
    %v4266 = vpack.c.b16 %v4160, %v4158
    %v4267 = vpack.c.b16 %v4161, %v4159
    %v4268 = vpack.c.b16 %v4164, %v4162
    %v4269 = vpack.c.b16 %v4165, %v4163
    %v4270 = vpack.c.b16 %v4168, %v4166
    %v4271 = vpack.c.b16 %v4169, %v4167
    %v4272 = vpack.c.b16 %v4172, %v4170
    %v4273 = vpack.c.b16 %v4173, %v4171
    %v4274 = vpack.c.b16 %v4176, %v4174
    %v4275 = vpack.c.b16 %v4177, %v4175
    %v4276 = vpack.c.b16 %v4180, %v4178
    %v4277 = vpack.c.b16 %v4181, %v4179
    %v4278 = vpack.c.b16 %v4184, %v4182
    %v4279 = vpack.c.b16 %v4185, %v4183
    %v4280 = vpack.c.b16 %v4188, %v4186
    %v4281 = vpack.c.b16 %v4189, %v4187
    %v4282 = vpack.c.b16 %v4192, %v4190
    %v4283 = vpack.c.b16 %v4193, %v4191
    %v4284 = vpack.c.b16 %v4196, %v4194
    %v4285 = vpack.c.b16 %v4197, %v4195
    %v4286 = vpack.c.b16 %v4200, %v4198
    %v4287 = vpack.c.b16 %v4201, %v4199
    %v4288 = vpack.c.b16 %v4204, %v4202
    %v4289 = vpack.c.b16 %v4205, %v4203
    %v4290 = vpack.c.b16 %v4208, %v4206
    %v4291 = vpack.c.b16 %v4209, %v4207
    %v4292 = vpack.c.b16 %v4212, %v4210
    %v4293 = vpack.c.b16 %v4213, %v4211
    %v4294 = vpack.c.b16 %v4216, %v4214
    %v4295 = vpack.c.b16 %v4217, %v4215
    %v4296 = vpack.c.b16 %v4220, %v4218
    %v4297 = vpack.c.b16 %v4221, %v4219
    %v4298 = vpack.c.b16 %v4224, %v4222
    %v4299 = vpack.c.b16 %v4225, %v4223
    %v4300 = vpack.c.b16 %v4228, %v4226
    %v4301 = vpack.c.b16 %v4229, %v4227
    %v4302 = vpack.c.b16 %v4232, %v4230
    %v4303 = vpack.c.b16 %v4233, %v4231
    %v4304 = vpack.c.b16 %v4236, %v4234
    %v4305 = vpack.c.b16 %v4237, %v4235
    %v4306 = vpack.c.b16 %v4240, %v4238
    %v4307 = vpack.c.b16 %v4241, %v4239
    %v4308 = vpack.c.b16 %v4244, %v4242
    %v4309 = vpack.c.b16 %v4245, %v4243
    %4374 = vmatprep.subr.bf16.mxu0 %v4247
    %4375 = vmatpush1.bf16.msra.mxu0 %v4246
    %4376 = vmatprep.subr.bf16.mxu0 %v4249
    %4377 = vmatpush1.bf16.msra.mxu0 %v4248
    %4378 = vmatprep.subr.bf16.mxu0 %v4251
    %4379 = vmatpush1.bf16.msra.mxu0 %v4250
    %4380 = vmatprep.subr.bf16.mxu0 %v4253
    %4381 = vmatpush1.bf16.msra.mxu0 %v4252
    %4382 = vmatprep.subr.bf16.mxu0 %v4255
    %4383 = vmatpush1.bf16.msra.mxu0 %v4254
    %4384 = vmatprep.subr.bf16.mxu0 %v4257
    %4385 = vmatpush1.bf16.msra.mxu0 %v4256
    %4386 = vmatprep.subr.bf16.mxu0 %v4259
    %4387 = vmatpush1.bf16.msra.mxu0 %v4258
    %4388 = vmatprep.subr.bf16.mxu0 %v4261
    %4389 = vmatpush1.bf16.msra.mxu0 %v4260
    %4390 = vmatprep.subr.bf16.mxu0 %v4263
    %4391 = vmatpush1.bf16.msra.mxu0 %v4262
    %4392 = vmatprep.subr.bf16.mxu0 %v4265
    %4393 = vmatpush1.bf16.msra.mxu0 %v4264
    %4394 = vmatprep.subr.bf16.mxu0 %v4267
    %4395 = vmatpush1.bf16.msra.mxu0 %v4266
    %4396 = vmatprep.subr.bf16.mxu0 %v4269
    %4397 = vmatpush1.bf16.msra.mxu0 %v4268
    %4398 = vmatprep.subr.bf16.mxu0 %v4271
    %4399 = vmatpush1.bf16.msra.mxu0 %v4270
    %4400 = vmatprep.subr.bf16.mxu0 %v4273
    %4401 = vmatpush1.bf16.msra.mxu0 %v4272
    %4402 = vmatprep.subr.bf16.mxu0 %v4275
    %4403 = vmatpush1.bf16.msra.mxu0 %v4274
    %4404 = vmatprep.subr.bf16.mxu0 %v4277
    %4405 = vmatpush1.bf16.msra.mxu0 %v4276
    %4406 = vmatprep.mubr.bf16.mxu0 %v3975
    %4407 = vmatmul.mubr.bf16.gmra.mrb[0].mxu0 %v3974
    %v4408 = vpop.f32.mrb[0].mxu0
    %v4409 = vadd.f32 %v4047, %v4408
    %v4410 = vpop.f32.mrb[0].mxu0
    %v4411 = vadd.f32 %v4051, %v4410
    %v4412 = vpop.f32.mrb[0].mxu0
    %v4413 = vpop.f32.mrb[0].mxu0
    %4414 = vdwg.mxu0
    %4415 = vmatprep.subr.bf16.mxu0 %v4279
    %4416 = vmatpush1.bf16.msra.mxu0 %v4278
    %4417 = vmatprep.subr.bf16.mxu0 %v4281
    %4418 = vmatpush1.bf16.msra.mxu0 %v4280
    %4419 = vmatprep.subr.bf16.mxu0 %v4283
    %4420 = vmatpush1.bf16.msra.mxu0 %v4282
    %4421 = vmatprep.subr.bf16.mxu0 %v4285
    %4422 = vmatpush1.bf16.msra.mxu0 %v4284
    %4423 = vmatprep.subr.bf16.mxu0 %v4287
    %4424 = vmatpush1.bf16.msra.mxu0 %v4286
    %4425 = vmatprep.subr.bf16.mxu0 %v4289
    %4426 = vmatpush1.bf16.msra.mxu0 %v4288
    %4427 = vmatprep.subr.bf16.mxu0 %v4291
    %4428 = vmatpush1.bf16.msra.mxu0 %v4290
    %4429 = vmatprep.subr.bf16.mxu0 %v4293
    %4430 = vmatpush1.bf16.msra.mxu0 %v4292
    %4431 = vmatprep.subr.bf16.mxu0 %v4295
    %4432 = vmatpush1.bf16.msra.mxu0 %v4294
    %4433 = vmatprep.subr.bf16.mxu0 %v4297
    %4434 = vmatpush1.bf16.msra.mxu0 %v4296
    %4435 = vmatprep.subr.bf16.mxu0 %v4299
    %4436 = vmatpush1.bf16.msra.mxu0 %v4298
    %4437 = vmatprep.subr.bf16.mxu0 %v4301
    %4438 = vmatpush1.bf16.msra.mxu0 %v4300
    %4439 = vmatprep.subr.bf16.mxu0 %v4303
    %4440 = vmatpush1.bf16.msra.mxu0 %v4302
    %4441 = vmatprep.subr.bf16.mxu0 %v4305
    %4442 = vmatpush1.bf16.msra.mxu0 %v4304
    %4443 = vmatprep.subr.bf16.mxu0 %v4307
    %4444 = vmatpush1.bf16.msra.mxu0 %v4306
    %4445 = vmatprep.subr.bf16.mxu0 %v4309
    %4446 = vmatpush1.bf16.msra.mxu0 %v4308
    %4447 = vmatprep.mubr.bf16.mxu0 %v3977
    %4448 = vmatmul.mubr.bf16.gmra.mrb[0].mxu0 %v3976
    %v4449 = vpop.f32.mrb[0].mxu0
    %v4450 = vadd.f32 %v4409, %v4449
    %v4451 = vpop.f32.mrb[0].mxu0
    %v4452 = vadd.f32 %v4411, %v4451
    %v4453 = vpop.f32.mrb[0].mxu0
    %v4454 = vpop.f32.mrb[0].mxu0
    %4455 = vdwg.mxu0
    %v4456 = vmax.f32 %v4450, 0.0
    %v4457 = vmax.f32 %v4452, 0.0
    %v4458 = vpack.c.bf16 %v4456, %v4456
    %v4459 = vpack.c.bf16 %v4457, %v4457
    %v4460 = vld [vmem:[%s8] sm:$0xf]
    %v4461 = vld [vmem:[%s8 + $0x4] sm:$0xf]
    %v4462 = vld [vmem:[%s8 + $0x8] sm:$0xf]
    %v4463 = vld [vmem:[%s8 + $0xc] sm:$0xf]
    %v4464 = vld [vmem:[%s8 + $0x10] sm:$0xf]
    %v4465 = vld [vmem:[%s8 + $0x14] sm:$0xf]
    %v4466 = vld [vmem:[%s8 + $0x18] sm:$0xf]
    %v4467 = vld [vmem:[%s8 + $0x1c] sm:$0xf]
    %v4468 = vld [vmem:[%s8 + $0x20] sm:$0xf]
    %v4469 = vld [vmem:[%s8 + $0x24] sm:$0xf]
    %v4470 = vld [vmem:[%s8 + $0x28] sm:$0xf]
    %v4471 = vld [vmem:[%s8 + $0x2c] sm:$0xf]
    %v4472 = vld [vmem:[%s8 + $0x30] sm:$0xf]
    %v4473 = vld [vmem:[%s8 + $0x34] sm:$0xf]
    %v4474 = vld [vmem:[%s8 + $0x38] sm:$0xf]
    %v4475 = vld [vmem:[%s8 + $0x3c] sm:$0xf]
    %v4476 = vld [vmem:[%s8 + $0x40] sm:$0xf]
    %v4477 = vld [vmem:[%s8 + $0x44] sm:$0xf]
    %v4478 = vld [vmem:[%s8 + $0x48] sm:$0xf]
    %v4479 = vld [vmem:[%s8 + $0x4c] sm:$0xf]
    %v4480 = vld [vmem:[%s8 + $0x50] sm:$0xf]
    %v4481 = vld [vmem:[%s8 + $0x54] sm:$0xf]
    %v4482 = vld [vmem:[%s8 + $0x58] sm:$0xf]
    %v4483 = vld [vmem:[%s8 + $0x5c] sm:$0xf]
    %v4484 = vld [vmem:[%s8 + $0x60] sm:$0xf]
    %v4485 = vld [vmem:[%s8 + $0x64] sm:$0xf]
    %v4486 = vld [vmem:[%s8 + $0x68] sm:$0xf]
    %v4487 = vld [vmem:[%s8 + $0x6c] sm:$0xf]
    %v4488 = vld [vmem:[%s8 + $0x70] sm:$0xf]
    %v4489 = vld [vmem:[%s8 + $0x74] sm:$0xf]
    %v4490 = vld [vmem:[%s8 + $0x78] sm:$0xf]
    %v4491 = vld [vmem:[%s8 + $0x7c] sm:$0xf]
    %v4492 = vld [vmem:[%s9] sm:$0x1]
    %v4494 = vlaneseq
    %v4495 = vshrl.u32 %v4494, 7
    %v4496 = vsub.s32 0, %v4495
    %v4497 = vrot.slane %v4492, %v4496
    %v4531 = vunpack.c.l.b16 %v4460
    %v4532 = vunpack.c.l.b16 %v4461
    %v4533 = vunpack.c.l.b16 %v4462
    %v4534 = vunpack.c.l.b16 %v4463
    %v4535 = vunpack.c.l.b16 %v4464
    %v4536 = vunpack.c.l.b16 %v4465
    %v4537 = vunpack.c.l.b16 %v4466
    %v4538 = vunpack.c.l.b16 %v4467
    %v4539 = vunpack.c.l.b16 %v4468
    %v4540 = vunpack.c.l.b16 %v4469
    %v4541 = vunpack.c.l.b16 %v4470
    %v4542 = vunpack.c.l.b16 %v4471
    %v4543 = vunpack.c.l.b16 %v4472
    %v4544 = vunpack.c.l.b16 %v4473
    %v4545 = vunpack.c.l.b16 %v4474
    %v4546 = vunpack.c.l.b16 %v4475
    %v4547 = vunpack.c.l.b16 %v4476
    %v4548 = vunpack.c.l.b16 %v4477
    %v4549 = vunpack.c.l.b16 %v4478
    %v4550 = vunpack.c.l.b16 %v4479
    %v4551 = vunpack.c.l.b16 %v4480
    %v4552 = vunpack.c.l.b16 %v4481
    %v4553 = vunpack.c.l.b16 %v4482
    %v4554 = vunpack.c.l.b16 %v4483
    %v4555 = vunpack.c.l.b16 %v4484
    %v4556 = vunpack.c.l.b16 %v4485
    %v4557 = vunpack.c.l.b16 %v4486
    %v4558 = vunpack.c.l.b16 %v4487
    %v4559 = vunpack.c.l.b16 %v4488
    %v4560 = vunpack.c.l.b16 %v4489
    %v4561 = vunpack.c.l.b16 %v4490
    %v4562 = vunpack.c.l.b16 %v4491
    %v4563 = vpack.c.b16 %v4532, %v4531
    %v4564 = vpack.c.b16 %v4534, %v4533
    %v4565 = vpack.c.b16 %v4536, %v4535
    %v4566 = vpack.c.b16 %v4538, %v4537
    %v4567 = vpack.c.b16 %v4540, %v4539
    %v4568 = vpack.c.b16 %v4542, %v4541
    %v4569 = vpack.c.b16 %v4544, %v4543
    %v4570 = vpack.c.b16 %v4546, %v4545
    %v4571 = vpack.c.b16 %v4548, %v4547
    %v4572 = vpack.c.b16 %v4550, %v4549
    %v4573 = vpack.c.b16 %v4552, %v4551
    %v4574 = vpack.c.b16 %v4554, %v4553
    %v4575 = vpack.c.b16 %v4556, %v4555
    %v4576 = vpack.c.b16 %v4558, %v4557
    %v4577 = vpack.c.b16 %v4560, %v4559
    %v4578 = vpack.c.b16 %v4562, %v4561
    %4595 = vmatprep.subr.bf16.mxu0 0
    %4596 = vmatpush1.bf16.msra.mxu0 %v4563
    %4597 = vmatprep.subr.bf16.mxu0 0
    %4598 = vmatpush1.bf16.msra.mxu0 %v4564
    %4599 = vmatprep.subr.bf16.mxu0 0
    %4600 = vmatpush1.bf16.msra.mxu0 %v4565
    %4601 = vmatprep.subr.bf16.mxu0 0
    %4602 = vmatpush1.bf16.msra.mxu0 %v4566
    %4603 = vmatprep.subr.bf16.mxu0 0
    %4604 = vmatpush1.bf16.msra.mxu0 %v4567
    %4605 = vmatprep.subr.bf16.mxu0 0
    %4606 = vmatpush1.bf16.msra.mxu0 %v4568
    %4607 = vmatprep.subr.bf16.mxu0 0
    %4608 = vmatpush1.bf16.msra.mxu0 %v4569
    %4609 = vmatprep.subr.bf16.mxu0 0
    %4610 = vmatpush1.bf16.msra.mxu0 %v4570
    %4611 = vmatprep.subr.bf16.mxu0 0
    %4612 = vmatpush1.bf16.msra.mxu0 %v4571
    %4613 = vmatprep.subr.bf16.mxu0 0
    %4614 = vmatpush1.bf16.msra.mxu0 %v4572
    %4615 = vmatprep.subr.bf16.mxu0 0
    %4616 = vmatpush1.bf16.msra.mxu0 %v4573
    %4617 = vmatprep.subr.bf16.mxu0 0
    %4618 = vmatpush1.bf16.msra.mxu0 %v4574
    %4619 = vmatprep.subr.bf16.mxu0 0
    %4620 = vmatpush1.bf16.msra.mxu0 %v4575
    %4621 = vmatprep.subr.bf16.mxu0 0
    %4622 = vmatpush1.bf16.msra.mxu0 %v4576
    %4623 = vmatprep.subr.bf16.mxu0 0
    %4624 = vmatpush1.bf16.msra.mxu0 %v4577
    %4625 = vmatprep.subr.bf16.mxu0 0
    %4626 = vmatpush1.bf16.msra.mxu0 %v4578
    %4627 = vmatprep.mubr.bf16.mxu0 %v4459
    %4628 = vmatmul.mubr.bf16.gmra.mrb[0].mxu0 %v4458
    %v4629 = vpop.f32.mrb[0].mxu0
    %v4630 = vadd.f32 %v4497, %v4629
    %v4631 = vpop.f32.mrb[0].mxu0
    %v4632 = vpop.f32.mrb[0].mxu0
    %v4633 = vpop.f32.mrb[0].mxu0
    %4634 = vdwg.mxu0
    %v4635 = vld [vmem:[%s1] sm:$0xff]
    %v4636 = vmul.f32 %v4630, 0.5
    %v4637 = vmul.f32 %v4636, 1.442695
    %v4638 = vpow.pop %v4637
    %4640 = vrot.lane.b32.xlu0 %v4635, 32
    %v4641 = vpop.permute.xlu0 %4640
    %v4643 = vmul.f32 %v4638, %v4641
    %4645 = vrot.lane.b32.xlu0 %v4643, 96
    %v4646 = vpop.permute.xlu0 %4645
    %v4648 = vadd.f32 %v4630, %v4646
    %v4649 = vpack.c.bf16 %v4648, %v4648
    %v4650 = vld [vmem:[%s10] sm:$0xff]
    %v4651 = vld [vmem:[%s10 + $0x8] sm:$0xff]
    %v4652 = vld [vmem:[%s10 + $0x10] sm:$0xff]
    %v4653 = vld [vmem:[%s10 + $0x18] sm:$0xff]
    %v4654 = vld [vmem:[%s11] sm:$0x3]
    %v4656 = vlaneseq
    %v4657 = vshrl.u32 %v4656, 7
    %v4658 = vsub.s32 0, %v4657
    %v4659 = vrot.slane %v4654, %v4658
    %v4660 = vlaneseq
    %v4661 = vshrl.u32 %v4660, 7
    %v4662 = vsub.s32 1, %v4661
    %v4663 = vrot.slane %v4654, %v4662
    %v4670 = vunpack.c.l.b16 %v4650
    %v4671 = vunpack.c.h.b16 %v4650
    %v4672 = vunpack.c.l.b16 %v4651
    %v4673 = vunpack.c.h.b16 %v4651
    %v4674 = vunpack.c.l.b16 %v4652
    %v4675 = vunpack.c.h.b16 %v4652
    %v4676 = vunpack.c.l.b16 %v4653
    %v4677 = vunpack.c.h.b16 %v4653
    %v4678 = vpack.c.b16 %v4672, %v4670
    %v4679 = vpack.c.b16 %v4673, %v4671
    %v4680 = vpack.c.b16 %v4676, %v4674
    %v4681 = vpack.c.b16 %v4677, %v4675
    %vm4686 = vcmask 261120
    %v4688 = vsel %vm4686, %v4649, 0
    %4690 = vmatprep.subr.bf16.mxu0 %v4679
    %4691 = vmatpush1.bf16.msra.mxu0 %v4678
    %4692 = vmatprep.subr.bf16.mxu0 %v4681
    %4693 = vmatpush1.bf16.msra.mxu0 %v4680
    %4694 = vmatprep.subr.bf16.mxu0 0
    %4695 = vmatpush1.bf16.msra.mxu0 0
    %4696 = vmatprep.subr.bf16.mxu0 0
    %4697 = vmatpush1.bf16.msra.mxu0 0
    %4698 = vmatprep.subr.bf16.mxu0 0
    %4699 = vmatpush1.bf16.msra.mxu0 0
    %4700 = vmatprep.subr.bf16.mxu0 0
    %4701 = vmatpush1.bf16.msra.mxu0 0
    %4702 = vmatprep.subr.bf16.mxu0 0
    %4703 = vmatpush1.bf16.msra.mxu0 0
    %4704 = vmatprep.subr.bf16.mxu0 0
    %4705 = vmatpush1.bf16.msra.mxu0 0
    %4706 = vmatprep.subr.bf16.mxu0 0
    %4707 = vmatpush1.bf16.msra.mxu0 0
    %4708 = vmatprep.subr.bf16.mxu0 0
    %4709 = vmatpush1.bf16.msra.mxu0 0
    %4710 = vmatprep.subr.bf16.mxu0 0
    %4711 = vmatpush1.bf16.msra.mxu0 0
    %4712 = vmatprep.subr.bf16.mxu0 0
    %4713 = vmatpush1.bf16.msra.mxu0 0
    %4714 = vmatprep.subr.bf16.mxu0 0
    %4715 = vmatpush1.bf16.msra.mxu0 0
    %4716 = vmatprep.subr.bf16.mxu0 0
    %4717 = vmatpush1.bf16.msra.mxu0 0
    %4718 = vmatprep.subr.bf16.mxu0 0
    %4719 = vmatpush1.bf16.msra.mxu0 0
    %4720 = vmatprep.subr.bf16.mxu0 0
    %4721 = vmatpush1.bf16.msra.mxu0 0
    %4722 = vmatprep.mubr.bf16.mxu0 0
    %4723 = vmatmul.mubr.bf16.gmra.mrb[0].mxu0 %v4688
    %v4724 = vpop.f32.mrb[0].mxu0
    %v4725 = vadd.f32 %v4659, %v4724
    %v4726 = vpop.f32.mrb[0].mxu0
    %v4727 = vadd.f32 %v4663, %v4726
    %v4728 = vpop.f32.mrb[0].mxu0
    %v4729 = vpop.f32.mrb[0].mxu0
    %4730 = vdwg.mxu0
    %v4731 = vmax.f32 %v4725, 0.0
    %v4732 = vmax.f32 %v4727, 0.0
    %v4733 = vpack.c.bf16 %v4731, %v4731
    %v4734 = vpack.c.bf16 %v4732, %v4732
    %v4735 = vld [vmem:[#allocation8] sm:$0xff]
    %v4736 = vld [vmem:[#allocation8 + $0x8] sm:$0xff]
    %v4737 = vld [vmem:[#allocation8 + $0x10] sm:$0xff]
    %v4738 = vld [vmem:[#allocation8 + $0x18] sm:$0xff]
    %v4739 = vld [vmem:[#allocation8 + $0x20] sm:$0xff]
    %v4740 = vld [vmem:[#allocation8 + $0x28] sm:$0xff]
    %v4741 = vld [vmem:[#allocation8 + $0x30] sm:$0xff]
    %v4742 = vld [vmem:[#allocation8 + $0x38] sm:$0xff]
    %v4743 = vld [vmem:[#allocation8 + $0x40] sm:$0xff]
    %v4744 = vld [vmem:[#allocation8 + $0x48] sm:$0xff]
    %v4745 = vld [vmem:[#allocation8 + $0x50] sm:$0xff]
    %v4746 = vld [vmem:[#allocation8 + $0x58] sm:$0xff]
    %v4747 = vld [vmem:[#allocation8 + $0x60] sm:$0xff]
    %v4748 = vld [vmem:[#allocation8 + $0x68] sm:$0xff]
    %v4749 = vld [vmem:[#allocation8 + $0x70] sm:$0xff]
    %v4750 = vld [vmem:[#allocation8 + $0x78] sm:$0xff]
    %v4751 = vld [vmem:[#allocation8 + $0x80] sm:$0xff]
    %v4752 = vld [vmem:[#allocation8 + $0x88] sm:$0xff]
    %v4753 = vld [vmem:[#allocation8 + $0x90] sm:$0xff]
    %v4754 = vld [vmem:[#allocation8 + $0x98] sm:$0xff]
    %v4755 = vld [vmem:[#allocation8 + $0xa0] sm:$0xff]
    %v4756 = vld [vmem:[#allocation8 + $0xa8] sm:$0xff]
    %v4757 = vld [vmem:[#allocation8 + $0xb0] sm:$0xff]
    %v4758 = vld [vmem:[#allocation8 + $0xb8] sm:$0xff]
    %v4759 = vld [vmem:[#allocation8 + $0xc0] sm:$0xff]
    %v4760 = vld [vmem:[#allocation8 + $0xc8] sm:$0xff]
    %v4761 = vld [vmem:[#allocation8 + $0xd0] sm:$0xff]
    %v4762 = vld [vmem:[#allocation8 + $0xd8] sm:$0xff]
    %v4763 = vld [vmem:[#allocation8 + $0xe0] sm:$0xff]
    %v4764 = vld [vmem:[#allocation8 + $0xe8] sm:$0xff]
    %v4765 = vld [vmem:[#allocation8 + $0xf0] sm:$0xff]
    %v4766 = vld [vmem:[#allocation8 + $0xf8] sm:$0xff]
    %v4767 = vld [vmem:[#allocation8 + $0x100] sm:$0xff]
    %v4768 = vld [vmem:[#allocation8 + $0x108] sm:$0xff]
    %v4769 = vld [vmem:[#allocation8 + $0x110] sm:$0xff]
    %v4770 = vld [vmem:[#allocation8 + $0x118] sm:$0xff]
    %v4771 = vld [vmem:[#allocation8 + $0x120] sm:$0xff]
    %v4772 = vld [vmem:[#allocation8 + $0x128] sm:$0xff]
    %v4773 = vld [vmem:[#allocation8 + $0x130] sm:$0xff]
    %v4774 = vld [vmem:[#allocation8 + $0x138] sm:$0xff]
    %v4775 = vld [vmem:[#allocation8 + $0x140] sm:$0xff]
    %v4776 = vld [vmem:[#allocation8 + $0x148] sm:$0xff]
    %v4777 = vld [vmem:[#allocation8 + $0x150] sm:$0xff]
    %v4778 = vld [vmem:[#allocation8 + $0x158] sm:$0xff]
    %v4779 = vld [vmem:[#allocation8 + $0x160] sm:$0xff]
    %v4780 = vld [vmem:[#allocation8 + $0x168] sm:$0xff]
    %v4781 = vld [vmem:[#allocation8 + $0x170] sm:$0xff]
    %v4782 = vld [vmem:[#allocation8 + $0x178] sm:$0xff]
    %v4783 = vld [vmem:[#allocation8 + $0x180] sm:$0xff]
    %v4784 = vld [vmem:[#allocation8 + $0x188] sm:$0xff]
    %v4785 = vld [vmem:[#allocation8 + $0x190] sm:$0xff]
    %v4786 = vld [vmem:[#allocation8 + $0x198] sm:$0xff]
    %v4787 = vld [vmem:[#allocation8 + $0x1a0] sm:$0xff]
    %v4788 = vld [vmem:[#allocation8 + $0x1a8] sm:$0xff]
    %v4789 = vld [vmem:[#allocation8 + $0x1b0] sm:$0xff]
    %v4790 = vld [vmem:[#allocation8 + $0x1b8] sm:$0xff]
    %v4791 = vld [vmem:[#allocation8 + $0x1c0] sm:$0xff]
    %v4792 = vld [vmem:[#allocation8 + $0x1c8] sm:$0xff]
    %v4793 = vld [vmem:[#allocation8 + $0x1d0] sm:$0xff]
    %v4794 = vld [vmem:[#allocation8 + $0x1d8] sm:$0xff]
    %v4795 = vld [vmem:[#allocation8 + $0x1e0] sm:$0xff]
    %v4796 = vld [vmem:[#allocation8 + $0x1e8] sm:$0xff]
    %v4797 = vld [vmem:[#allocation8 + $0x1f0] sm:$0xff]
    %v4798 = vld [vmem:[#allocation8 + $0x1f8] sm:$0xff]
    %v4799 = vld [vmem:[%s13] sm:$0xf]
    %v4801 = vlaneseq
    %v4802 = vshrl.u32 %v4801, 7
    %v4803 = vsub.s32 0, %v4802
    %v4804 = vrot.slane %v4799, %v4803
    %v4805 = vlaneseq
    %v4806 = vshrl.u32 %v4805, 7
    %v4807 = vsub.s32 1, %v4806
    %v4808 = vrot.slane %v4799, %v4807
    %v4809 = vlaneseq
    %v4810 = vshrl.u32 %v4809, 7
    %v4811 = vsub.s32 2, %v4810
    %v4812 = vrot.slane %v4799, %v4811
    %v4813 = vlaneseq
    %v4814 = vshrl.u32 %v4813, 7
    %v4815 = vsub.s32 3, %v4814
    %v4816 = vrot.slane %v4799, %v4815
    %v4885 = vunpack.c.l.b16 %v4735
    %v4886 = vunpack.c.h.b16 %v4735
    %v4887 = vunpack.c.l.b16 %v4736
    %v4888 = vunpack.c.h.b16 %v4736
    %v4889 = vunpack.c.l.b16 %v4737
    %v4890 = vunpack.c.h.b16 %v4737
    %v4891 = vunpack.c.l.b16 %v4738
    %v4892 = vunpack.c.h.b16 %v4738
    %v4893 = vunpack.c.l.b16 %v4739
    %v4894 = vunpack.c.h.b16 %v4739
    %v4895 = vunpack.c.l.b16 %v4740
    %v4896 = vunpack.c.h.b16 %v4740
    %v4897 = vunpack.c.l.b16 %v4741
    %v4898 = vunpack.c.h.b16 %v4741
    %v4899 = vunpack.c.l.b16 %v4742
    %v4900 = vunpack.c.h.b16 %v4742
    %v4901 = vunpack.c.l.b16 %v4743
    %v4902 = vunpack.c.h.b16 %v4743
    %v4903 = vunpack.c.l.b16 %v4744
    %v4904 = vunpack.c.h.b16 %v4744
    %v4905 = vunpack.c.l.b16 %v4745
    %v4906 = vunpack.c.h.b16 %v4745
    %v4907 = vunpack.c.l.b16 %v4746
    %v4908 = vunpack.c.h.b16 %v4746
    %v4909 = vunpack.c.l.b16 %v4747
    %v4910 = vunpack.c.h.b16 %v4747
    %v4911 = vunpack.c.l.b16 %v4748
    %v4912 = vunpack.c.h.b16 %v4748
    %v4913 = vunpack.c.l.b16 %v4749
    %v4914 = vunpack.c.h.b16 %v4749
    %v4915 = vunpack.c.l.b16 %v4750
    %v4916 = vunpack.c.h.b16 %v4750
    %v4917 = vunpack.c.l.b16 %v4751
    %v4918 = vunpack.c.h.b16 %v4751
    %v4919 = vunpack.c.l.b16 %v4752
    %v4920 = vunpack.c.h.b16 %v4752
    %v4921 = vunpack.c.l.b16 %v4753
    %v4922 = vunpack.c.h.b16 %v4753
    %v4923 = vunpack.c.l.b16 %v4754
    %v4924 = vunpack.c.h.b16 %v4754
    %v4925 = vunpack.c.l.b16 %v4755
    %v4926 = vunpack.c.h.b16 %v4755
    %v4927 = vunpack.c.l.b16 %v4756
    %v4928 = vunpack.c.h.b16 %v4756
    %v4929 = vunpack.c.l.b16 %v4757
    %v4930 = vunpack.c.h.b16 %v4757
    %v4931 = vunpack.c.l.b16 %v4758
    %v4932 = vunpack.c.h.b16 %v4758
    %v4933 = vunpack.c.l.b16 %v4759
    %v4934 = vunpack.c.h.b16 %v4759
    %v4935 = vunpack.c.l.b16 %v4760
    %v4936 = vunpack.c.h.b16 %v4760
    %v4937 = vunpack.c.l.b16 %v4761
    %v4938 = vunpack.c.h.b16 %v4761
    %v4939 = vunpack.c.l.b16 %v4762
    %v4940 = vunpack.c.h.b16 %v4762
    %v4941 = vunpack.c.l.b16 %v4763
    %v4942 = vunpack.c.h.b16 %v4763
    %v4943 = vunpack.c.l.b16 %v4764
    %v4944 = vunpack.c.h.b16 %v4764
    %v4945 = vunpack.c.l.b16 %v4765
    %v4946 = vunpack.c.h.b16 %v4765
    %v4947 = vunpack.c.l.b16 %v4766
    %v4948 = vunpack.c.h.b16 %v4766
    %v4949 = vunpack.c.l.b16 %v4767
    %v4950 = vunpack.c.h.b16 %v4767
    %v4951 = vunpack.c.l.b16 %v4768
    %v4952 = vunpack.c.h.b16 %v4768
    %v4953 = vunpack.c.l.b16 %v4769
    %v4954 = vunpack.c.h.b16 %v4769
    %v4955 = vunpack.c.l.b16 %v4770
    %v4956 = vunpack.c.h.b16 %v4770
    %v4957 = vunpack.c.l.b16 %v4771
    %v4958 = vunpack.c.h.b16 %v4771
    %v4959 = vunpack.c.l.b16 %v4772
    %v4960 = vunpack.c.h.b16 %v4772
    %v4961 = vunpack.c.l.b16 %v4773
    %v4962 = vunpack.c.h.b16 %v4773
    %v4963 = vunpack.c.l.b16 %v4774
    %v4964 = vunpack.c.h.b16 %v4774
    %v4965 = vunpack.c.l.b16 %v4775
    %v4966 = vunpack.c.h.b16 %v4775
    %v4967 = vunpack.c.l.b16 %v4776
    %v4968 = vunpack.c.h.b16 %v4776
    %v4969 = vunpack.c.l.b16 %v4777
    %v4970 = vunpack.c.h.b16 %v4777
    %v4971 = vunpack.c.l.b16 %v4778
    %v4972 = vunpack.c.h.b16 %v4778
    %v4973 = vunpack.c.l.b16 %v4779
    %v4974 = vunpack.c.h.b16 %v4779
    %v4975 = vunpack.c.l.b16 %v4780
    %v4976 = vunpack.c.h.b16 %v4780
    %v4977 = vunpack.c.l.b16 %v4781
    %v4978 = vunpack.c.h.b16 %v4781
    %v4979 = vunpack.c.l.b16 %v4782
    %v4980 = vunpack.c.h.b16 %v4782
    %v4981 = vunpack.c.l.b16 %v4783
    %v4982 = vunpack.c.h.b16 %v4783
    %v4983 = vunpack.c.l.b16 %v4784
    %v4984 = vunpack.c.h.b16 %v4784
    %v4985 = vunpack.c.l.b16 %v4785
    %v4986 = vunpack.c.h.b16 %v4785
    %v4987 = vunpack.c.l.b16 %v4786
    %v4988 = vunpack.c.h.b16 %v4786
    %v4989 = vunpack.c.l.b16 %v4787
    %v4990 = vunpack.c.h.b16 %v4787
    %v4991 = vunpack.c.l.b16 %v4788
    %v4992 = vunpack.c.h.b16 %v4788
    %v4993 = vunpack.c.l.b16 %v4789
    %v4994 = vunpack.c.h.b16 %v4789
    %v4995 = vunpack.c.l.b16 %v4790
    %v4996 = vunpack.c.h.b16 %v4790
    %v4997 = vunpack.c.l.b16 %v4791
    %v4998 = vunpack.c.h.b16 %v4791
    %v4999 = vunpack.c.l.b16 %v4792
    %v5000 = vunpack.c.h.b16 %v4792
    %v5001 = vunpack.c.l.b16 %v4793
    %v5002 = vunpack.c.h.b16 %v4793
    %v5003 = vunpack.c.l.b16 %v4794
    %v5004 = vunpack.c.h.b16 %v4794
    %v5005 = vunpack.c.l.b16 %v4795
    %v5006 = vunpack.c.h.b16 %v4795
    %v5007 = vunpack.c.l.b16 %v4796
    %v5008 = vunpack.c.h.b16 %v4796
    %v5009 = vunpack.c.l.b16 %v4797
    %v5010 = vunpack.c.h.b16 %v4797
    %v5011 = vunpack.c.l.b16 %v4798
    %v5012 = vunpack.c.h.b16 %v4798
    %v5013 = vpack.c.b16 %v4889, %v4885
    %v5014 = vpack.c.b16 %v4890, %v4886
    %v5015 = vpack.c.b16 %v4891, %v4887
    %v5016 = vpack.c.b16 %v4892, %v4888
    %v5017 = vpack.c.b16 %v4897, %v4893
    %v5018 = vpack.c.b16 %v4898, %v4894
    %v5019 = vpack.c.b16 %v4899, %v4895
    %v5020 = vpack.c.b16 %v4900, %v4896
    %v5021 = vpack.c.b16 %v4905, %v4901
    %v5022 = vpack.c.b16 %v4906, %v4902
    %v5023 = vpack.c.b16 %v4907, %v4903
    %v5024 = vpack.c.b16 %v4908, %v4904
    %v5025 = vpack.c.b16 %v4913, %v4909
    %v5026 = vpack.c.b16 %v4914, %v4910
    %v5027 = vpack.c.b16 %v4915, %v4911
    %v5028 = vpack.c.b16 %v4916, %v4912
    %v5029 = vpack.c.b16 %v4921, %v4917
    %v5030 = vpack.c.b16 %v4922, %v4918
    %v5031 = vpack.c.b16 %v4923, %v4919
    %v5032 = vpack.c.b16 %v4924, %v4920
    %v5033 = vpack.c.b16 %v4929, %v4925
    %v5034 = vpack.c.b16 %v4930, %v4926
    %v5035 = vpack.c.b16 %v4931, %v4927
    %v5036 = vpack.c.b16 %v4932, %v4928
    %v5037 = vpack.c.b16 %v4937, %v4933
    %v5038 = vpack.c.b16 %v4938, %v4934
    %v5039 = vpack.c.b16 %v4939, %v4935
    %v5040 = vpack.c.b16 %v4940, %v4936
    %v5041 = vpack.c.b16 %v4945, %v4941
    %v5042 = vpack.c.b16 %v4946, %v4942
    %v5043 = vpack.c.b16 %v4947, %v4943
    %v5044 = vpack.c.b16 %v4948, %v4944
    %v5045 = vpack.c.b16 %v4953, %v4949
    %v5046 = vpack.c.b16 %v4954, %v4950
    %v5047 = vpack.c.b16 %v4955, %v4951
    %v5048 = vpack.c.b16 %v4956, %v4952
    %v5049 = vpack.c.b16 %v4961, %v4957
    %v5050 = vpack.c.b16 %v4962, %v4958
    %v5051 = vpack.c.b16 %v4963, %v4959
    %v5052 = vpack.c.b16 %v4964, %v4960
    %v5053 = vpack.c.b16 %v4969, %v4965
    %v5054 = vpack.c.b16 %v4970, %v4966
    %v5055 = vpack.c.b16 %v4971, %v4967
    %v5056 = vpack.c.b16 %v4972, %v4968
    %v5057 = vpack.c.b16 %v4977, %v4973
    %v5058 = vpack.c.b16 %v4978, %v4974
    %v5059 = vpack.c.b16 %v4979, %v4975
    %v5060 = vpack.c.b16 %v4980, %v4976
    %v5061 = vpack.c.b16 %v4985, %v4981
    %v5062 = vpack.c.b16 %v4986, %v4982
    %v5063 = vpack.c.b16 %v4987, %v4983
    %v5064 = vpack.c.b16 %v4988, %v4984
    %v5065 = vpack.c.b16 %v4993, %v4989
    %v5066 = vpack.c.b16 %v4994, %v4990
    %v5067 = vpack.c.b16 %v4995, %v4991
    %v5068 = vpack.c.b16 %v4996, %v4992
    %v5069 = vpack.c.b16 %v5001, %v4997
    %v5070 = vpack.c.b16 %v5002, %v4998
    %v5071 = vpack.c.b16 %v5003, %v4999
    %v5072 = vpack.c.b16 %v5004, %v5000
    %v5073 = vpack.c.b16 %v5009, %v5005
    %v5074 = vpack.c.b16 %v5010, %v5006
    %v5075 = vpack.c.b16 %v5011, %v5007
    %v5076 = vpack.c.b16 %v5012, %v5008
    %5141 = vmatprep.subr.bf16.mxu0 %v5014
    %5142 = vmatpush1.bf16.msra.mxu0 %v5013
    %5143 = vmatprep.subr.bf16.mxu0 %v5018
    %5144 = vmatpush1.bf16.msra.mxu0 %v5017
    %5145 = vmatprep.subr.bf16.mxu0 %v5022
    %5146 = vmatpush1.bf16.msra.mxu0 %v5021
    %5147 = vmatprep.subr.bf16.mxu0 %v5026
    %5148 = vmatpush1.bf16.msra.mxu0 %v5025
    %5149 = vmatprep.subr.bf16.mxu0 %v5030
    %5150 = vmatpush1.bf16.msra.mxu0 %v5029
    %5151 = vmatprep.subr.bf16.mxu0 %v5034
    %5152 = vmatpush1.bf16.msra.mxu0 %v5033
    %5153 = vmatprep.subr.bf16.mxu0 %v5038
    %5154 = vmatpush1.bf16.msra.mxu0 %v5037
    %5155 = vmatprep.subr.bf16.mxu0 %v5042
    %5156 = vmatpush1.bf16.msra.mxu0 %v5041
    %5157 = vmatprep.subr.bf16.mxu0 %v5046
    %5158 = vmatpush1.bf16.msra.mxu0 %v5045
    %5159 = vmatprep.subr.bf16.mxu0 %v5050
    %5160 = vmatpush1.bf16.msra.mxu0 %v5049
    %5161 = vmatprep.subr.bf16.mxu0 %v5054
    %5162 = vmatpush1.bf16.msra.mxu0 %v5053
    %5163 = vmatprep.subr.bf16.mxu0 %v5058
    %5164 = vmatpush1.bf16.msra.mxu0 %v5057
    %5165 = vmatprep.subr.bf16.mxu0 %v5062
    %5166 = vmatpush1.bf16.msra.mxu0 %v5061
    %5167 = vmatprep.subr.bf16.mxu0 %v5066
    %5168 = vmatpush1.bf16.msra.mxu0 %v5065
    %5169 = vmatprep.subr.bf16.mxu0 %v5070
    %5170 = vmatpush1.bf16.msra.mxu0 %v5069
    %5171 = vmatprep.subr.bf16.mxu0 %v5074
    %5172 = vmatpush1.bf16.msra.mxu0 %v5073
    %5173 = vmatprep.mubr.bf16.mxu0 %v4734
    %5174 = vmatmul.mubr.bf16.gmra.mrb[0].mxu0 %v4733
    %v5175 = vpop.f32.mrb[0].mxu0
    %v5176 = vadd.f32 %v4804, %v5175
    %v5177 = vpop.f32.mrb[0].mxu0
    %v5178 = vadd.f32 %v4808, %v5177
    %v5179 = vpop.f32.mrb[0].mxu0
    %v5180 = vpop.f32.mrb[0].mxu0
    %5181 = vdwg.mxu0
    %5182 = vmatprep.subr.bf16.mxu0 %v5016
    %5183 = vmatpush1.bf16.msra.mxu0 %v5015
    %5184 = vmatprep.subr.bf16.mxu0 %v5020
    %5185 = vmatpush1.bf16.msra.mxu0 %v5019
    %5186 = vmatprep.subr.bf16.mxu0 %v5024
    %5187 = vmatpush1.bf16.msra.mxu0 %v5023
    %5188 = vmatprep.subr.bf16.mxu0 %v5028
    %5189 = vmatpush1.bf16.msra.mxu0 %v5027
    %5190 = vmatprep.subr.bf16.mxu0 %v5032
    %5191 = vmatpush1.bf16.msra.mxu0 %v5031
    %5192 = vmatprep.subr.bf16.mxu0 %v5036
    %5193 = vmatpush1.bf16.msra.mxu0 %v5035
    %5194 = vmatprep.subr.bf16.mxu0 %v5040
    %5195 = vmatpush1.bf16.msra.mxu0 %v5039
    %5196 = vmatprep.subr.bf16.mxu0 %v5044
    %5197 = vmatpush1.bf16.msra.mxu0 %v5043
    %5198 = vmatprep.subr.bf16.mxu0 %v5048
    %5199 = vmatpush1.bf16.msra.mxu0 %v5047
    %5200 = vmatprep.subr.bf16.mxu0 %v5052
    %5201 = vmatpush1.bf16.msra.mxu0 %v5051
    %5202 = vmatprep.subr.bf16.mxu0 %v5056
    %5203 = vmatpush1.bf16.msra.mxu0 %v5055
    %5204 = vmatprep.subr.bf16.mxu0 %v5060
    %5205 = vmatpush1.bf16.msra.mxu0 %v5059
    %5206 = vmatprep.subr.bf16.mxu0 %v5064
    %5207 = vmatpush1.bf16.msra.mxu0 %v5063
    %5208 = vmatprep.subr.bf16.mxu0 %v5068
    %5209 = vmatpush1.bf16.msra.mxu0 %v5067
    %5210 = vmatprep.subr.bf16.mxu0 %v5072
    %5211 = vmatpush1.bf16.msra.mxu0 %v5071
    %5212 = vmatprep.subr.bf16.mxu0 %v5076
    %5213 = vmatpush1.bf16.msra.mxu0 %v5075
    %5214 = vmatprep.mubr.bf16.mxu0 %v4734
    %5215 = vmatmul.mubr.bf16.gmra.mrb[0].mxu0 %v4733
    %v5216 = vpop.f32.mrb[0].mxu0
    %v5217 = vadd.f32 %v4812, %v5216
    %v5218 = vpop.f32.mrb[0].mxu0
    %v5219 = vadd.f32 %v4816, %v5218
    %v5220 = vpop.f32.mrb[0].mxu0
    %v5221 = vpop.f32.mrb[0].mxu0
    %5222 = vdwg.mxu0
    %v5223 = vmax.f32 %v5176, 0.0
    %v5224 = vmax.f32 %v5178, 0.0
    %v5225 = vmax.f32 %v5217, 0.0
    %v5226 = vmax.f32 %v5219, 0.0
    %v5227 = vpack.c.bf16 %v5223, %v5223
    %v5228 = vpack.c.bf16 %v5224, %v5224
    %v5229 = vpack.c.bf16 %v5225, %v5225
    %v5230 = vpack.c.bf16 %v5226, %v5226
    %v5231 = vld [vmem:[#allocation10] sm:$0xff]
    %v5232 = vld [vmem:[#allocation10 + $0x8] sm:$0xff]
    %v5233 = vld [vmem:[#allocation10 + $0x10] sm:$0xff]
    %v5234 = vld [vmem:[#allocation10 + $0x18] sm:$0xff]
    %v5235 = vld [vmem:[#allocation10 + $0x20] sm:$0xff]
    %v5236 = vld [vmem:[#allocation10 + $0x28] sm:$0xff]
    %v5237 = vld [vmem:[#allocation10 + $0x30] sm:$0xff]
    %v5238 = vld [vmem:[#allocation10 + $0x38] sm:$0xff]
    %v5239 = vld [vmem:[#allocation10 + $0x40] sm:$0xff]
    %v5240 = vld [vmem:[#allocation10 + $0x48] sm:$0xff]
    %v5241 = vld [vmem:[#allocation10 + $0x50] sm:$0xff]
    %v5242 = vld [vmem:[#allocation10 + $0x58] sm:$0xff]
    %v5243 = vld [vmem:[#allocation10 + $0x60] sm:$0xff]
    %v5244 = vld [vmem:[#allocation10 + $0x68] sm:$0xff]
    %v5245 = vld [vmem:[#allocation10 + $0x70] sm:$0xff]
    %v5246 = vld [vmem:[#allocation10 + $0x78] sm:$0xff]
    %v5247 = vld [vmem:[#allocation10 + $0x80] sm:$0xff]
    %v5248 = vld [vmem:[#allocation10 + $0x88] sm:$0xff]
    %v5249 = vld [vmem:[#allocation10 + $0x90] sm:$0xff]
    %v5250 = vld [vmem:[#allocation10 + $0x98] sm:$0xff]
    %v5251 = vld [vmem:[#allocation10 + $0xa0] sm:$0xff]
    %v5252 = vld [vmem:[#allocation10 + $0xa8] sm:$0xff]
    %v5253 = vld [vmem:[#allocation10 + $0xb0] sm:$0xff]
    %v5254 = vld [vmem:[#allocation10 + $0xb8] sm:$0xff]
    %v5255 = vld [vmem:[#allocation10 + $0xc0] sm:$0xff]
    %v5256 = vld [vmem:[#allocation10 + $0xc8] sm:$0xff]
    %v5257 = vld [vmem:[#allocation10 + $0xd0] sm:$0xff]
    %v5258 = vld [vmem:[#allocation10 + $0xd8] sm:$0xff]
    %v5259 = vld [vmem:[#allocation10 + $0xe0] sm:$0xff]
    %v5260 = vld [vmem:[#allocation10 + $0xe8] sm:$0xff]
    %v5261 = vld [vmem:[#allocation10 + $0xf0] sm:$0xff]
    %v5262 = vld [vmem:[#allocation10 + $0xf8] sm:$0xff]
    %v5263 = vld [vmem:[#allocation10 + $0x100] sm:$0xff]
    %v5264 = vld [vmem:[#allocation10 + $0x108] sm:$0xff]
    %v5265 = vld [vmem:[#allocation10 + $0x110] sm:$0xff]
    %v5266 = vld [vmem:[#allocation10 + $0x118] sm:$0xff]
    %v5267 = vld [vmem:[#allocation10 + $0x120] sm:$0xff]
    %v5268 = vld [vmem:[#allocation10 + $0x128] sm:$0xff]
    %v5269 = vld [vmem:[#allocation10 + $0x130] sm:$0xff]
    %v5270 = vld [vmem:[#allocation10 + $0x138] sm:$0xff]
    %v5271 = vld [vmem:[#allocation10 + $0x140] sm:$0xff]
    %v5272 = vld [vmem:[#allocation10 + $0x148] sm:$0xff]
    %v5273 = vld [vmem:[#allocation10 + $0x150] sm:$0xff]
    %v5274 = vld [vmem:[#allocation10 + $0x158] sm:$0xff]
    %v5275 = vld [vmem:[#allocation10 + $0x160] sm:$0xff]
    %v5276 = vld [vmem:[#allocation10 + $0x168] sm:$0xff]
    %v5277 = vld [vmem:[#allocation10 + $0x170] sm:$0xff]
    %v5278 = vld [vmem:[#allocation10 + $0x178] sm:$0xff]
    %v5279 = vld [vmem:[#allocation10 + $0x180] sm:$0xff]
    %v5280 = vld [vmem:[#allocation10 + $0x188] sm:$0xff]
    %v5281 = vld [vmem:[#allocation10 + $0x190] sm:$0xff]
    %v5282 = vld [vmem:[#allocation10 + $0x198] sm:$0xff]
    %v5283 = vld [vmem:[#allocation10 + $0x1a0] sm:$0xff]
    %v5284 = vld [vmem:[#allocation10 + $0x1a8] sm:$0xff]
    %v5285 = vld [vmem:[#allocation10 + $0x1b0] sm:$0xff]
    %v5286 = vld [vmem:[#allocation10 + $0x1b8] sm:$0xff]
    %v5287 = vld [vmem:[#allocation10 + $0x1c0] sm:$0xff]
    %v5288 = vld [vmem:[#allocation10 + $0x1c8] sm:$0xff]
    %v5289 = vld [vmem:[#allocation10 + $0x1d0] sm:$0xff]
    %v5290 = vld [vmem:[#allocation10 + $0x1d8] sm:$0xff]
    %v5291 = vld [vmem:[#allocation10 + $0x1e0] sm:$0xff]
    %v5292 = vld [vmem:[#allocation10 + $0x1e8] sm:$0xff]
    %v5293 = vld [vmem:[#allocation10 + $0x1f0] sm:$0xff]
    %v5294 = vld [vmem:[#allocation10 + $0x1f8] sm:$0xff]
    %v5295 = vld [vmem:[#allocation10 + $0x200] sm:$0xff]
    %v5296 = vld [vmem:[#allocation10 + $0x208] sm:$0xff]
    %v5297 = vld [vmem:[#allocation10 + $0x210] sm:$0xff]
    %v5298 = vld [vmem:[#allocation10 + $0x218] sm:$0xff]
    %v5299 = vld [vmem:[#allocation10 + $0x220] sm:$0xff]
    %v5300 = vld [vmem:[#allocation10 + $0x228] sm:$0xff]
    %v5301 = vld [vmem:[#allocation10 + $0x230] sm:$0xff]
    %v5302 = vld [vmem:[#allocation10 + $0x238] sm:$0xff]
    %v5303 = vld [vmem:[#allocation10 + $0x240] sm:$0xff]
    %v5304 = vld [vmem:[#allocation10 + $0x248] sm:$0xff]
    %v5305 = vld [vmem:[#allocation10 + $0x250] sm:$0xff]
    %v5306 = vld [vmem:[#allocation10 + $0x258] sm:$0xff]
    %v5307 = vld [vmem:[#allocation10 + $0x260] sm:$0xff]
    %v5308 = vld [vmem:[#allocation10 + $0x268] sm:$0xff]
    %v5309 = vld [vmem:[#allocation10 + $0x270] sm:$0xff]
    %v5310 = vld [vmem:[#allocation10 + $0x278] sm:$0xff]
    %v5311 = vld [vmem:[#allocation10 + $0x280] sm:$0xff]
    %v5312 = vld [vmem:[#allocation10 + $0x288] sm:$0xff]
    %v5313 = vld [vmem:[#allocation10 + $0x290] sm:$0xff]
    %v5314 = vld [vmem:[#allocation10 + $0x298] sm:$0xff]
    %v5315 = vld [vmem:[#allocation10 + $0x2a0] sm:$0xff]
    %v5316 = vld [vmem:[#allocation10 + $0x2a8] sm:$0xff]
    %v5317 = vld [vmem:[#allocation10 + $0x2b0] sm:$0xff]
    %v5318 = vld [vmem:[#allocation10 + $0x2b8] sm:$0xff]
    %v5319 = vld [vmem:[#allocation10 + $0x2c0] sm:$0xff]
    %v5320 = vld [vmem:[#allocation10 + $0x2c8] sm:$0xff]
    %v5321 = vld [vmem:[#allocation10 + $0x2d0] sm:$0xff]
    %v5322 = vld [vmem:[#allocation10 + $0x2d8] sm:$0xff]
    %v5323 = vld [vmem:[#allocation10 + $0x2e0] sm:$0xff]
    %v5324 = vld [vmem:[#allocation10 + $0x2e8] sm:$0xff]
    %v5325 = vld [vmem:[#allocation10 + $0x2f0] sm:$0xff]
    %v5326 = vld [vmem:[#allocation10 + $0x2f8] sm:$0xff]
    %v5327 = vld [vmem:[#allocation10 + $0x300] sm:$0xff]
    %v5328 = vld [vmem:[#allocation10 + $0x308] sm:$0xff]
    %v5329 = vld [vmem:[#allocation10 + $0x310] sm:$0xff]
    %v5330 = vld [vmem:[#allocation10 + $0x318] sm:$0xff]
    %v5331 = vld [vmem:[#allocation10 + $0x320] sm:$0xff]
    %v5332 = vld [vmem:[#allocation10 + $0x328] sm:$0xff]
    %v5333 = vld [vmem:[#allocation10 + $0x330] sm:$0xff]
    %v5334 = vld [vmem:[#allocation10 + $0x338] sm:$0xff]
    %v5335 = vld [vmem:[#allocation10 + $0x340] sm:$0xff]
    %v5336 = vld [vmem:[#allocation10 + $0x348] sm:$0xff]
    %v5337 = vld [vmem:[#allocation10 + $0x350] sm:$0xff]
    %v5338 = vld [vmem:[#allocation10 + $0x358] sm:$0xff]
    %v5339 = vld [vmem:[#allocation10 + $0x360] sm:$0xff]
    %v5340 = vld [vmem:[#allocation10 + $0x368] sm:$0xff]
    %v5341 = vld [vmem:[#allocation10 + $0x370] sm:$0xff]
    %v5342 = vld [vmem:[#allocation10 + $0x378] sm:$0xff]
    %v5343 = vld [vmem:[#allocation10 + $0x380] sm:$0xff]
    %v5344 = vld [vmem:[#allocation10 + $0x388] sm:$0xff]
    %v5345 = vld [vmem:[#allocation10 + $0x390] sm:$0xff]
    %v5346 = vld [vmem:[#allocation10 + $0x398] sm:$0xff]
    %v5347 = vld [vmem:[#allocation10 + $0x3a0] sm:$0xff]
    %v5348 = vld [vmem:[#allocation10 + $0x3a8] sm:$0xff]
    %v5349 = vld [vmem:[#allocation10 + $0x3b0] sm:$0xff]
    %v5350 = vld [vmem:[#allocation10 + $0x3b8] sm:$0xff]
    %v5351 = vld [vmem:[#allocation10 + $0x3c0] sm:$0xff]
    %v5352 = vld [vmem:[#allocation10 + $0x3c8] sm:$0xff]
    %v5353 = vld [vmem:[#allocation10 + $0x3d0] sm:$0xff]
    %v5354 = vld [vmem:[#allocation10 + $0x3d8] sm:$0xff]
    %v5355 = vld [vmem:[#allocation10 + $0x3e0] sm:$0xff]
    %v5356 = vld [vmem:[#allocation10 + $0x3e8] sm:$0xff]
    %v5357 = vld [vmem:[#allocation10 + $0x3f0] sm:$0xff]
    %v5358 = vld [vmem:[#allocation10 + $0x3f8] sm:$0xff]
    %v5359 = vld [vmem:[#allocation10 + $0x400] sm:$0xff]
    %v5360 = vld [vmem:[#allocation10 + $0x408] sm:$0xff]
    %v5361 = vld [vmem:[#allocation10 + $0x410] sm:$0xff]
    %v5362 = vld [vmem:[#allocation10 + $0x418] sm:$0xff]
    %v5363 = vld [vmem:[#allocation10 + $0x420] sm:$0xff]
    %v5364 = vld [vmem:[#allocation10 + $0x428] sm:$0xff]
    %v5365 = vld [vmem:[#allocation10 + $0x430] sm:$0xff]
    %v5366 = vld [vmem:[#allocation10 + $0x438] sm:$0xff]
    %v5367 = vld [vmem:[#allocation10 + $0x440] sm:$0xff]
    %v5368 = vld [vmem:[#allocation10 + $0x448] sm:$0xff]
    %v5369 = vld [vmem:[#allocation10 + $0x450] sm:$0xff]
    %v5370 = vld [vmem:[#allocation10 + $0x458] sm:$0xff]
    %v5371 = vld [vmem:[#allocation10 + $0x460] sm:$0xff]
    %v5372 = vld [vmem:[#allocation10 + $0x468] sm:$0xff]
    %v5373 = vld [vmem:[#allocation10 + $0x470] sm:$0xff]
    %v5374 = vld [vmem:[#allocation10 + $0x478] sm:$0xff]
    %v5375 = vld [vmem:[#allocation10 + $0x480] sm:$0xff]
    %v5376 = vld [vmem:[#allocation10 + $0x488] sm:$0xff]
    %v5377 = vld [vmem:[#allocation10 + $0x490] sm:$0xff]
    %v5378 = vld [vmem:[#allocation10 + $0x498] sm:$0xff]
    %v5379 = vld [vmem:[#allocation10 + $0x4a0] sm:$0xff]
    %v5380 = vld [vmem:[#allocation10 + $0x4a8] sm:$0xff]
    %v5381 = vld [vmem:[#allocation10 + $0x4b0] sm:$0xff]
    %v5382 = vld [vmem:[#allocation10 + $0x4b8] sm:$0xff]
    %v5383 = vld [vmem:[#allocation10 + $0x4c0] sm:$0xff]
    %v5384 = vld [vmem:[#allocation10 + $0x4c8] sm:$0xff]
    %v5385 = vld [vmem:[#allocation10 + $0x4d0] sm:$0xff]
    %v5386 = vld [vmem:[#allocation10 + $0x4d8] sm:$0xff]
    %v5387 = vld [vmem:[#allocation10 + $0x4e0] sm:$0xff]
    %v5388 = vld [vmem:[#allocation10 + $0x4e8] sm:$0xff]
    %v5389 = vld [vmem:[#allocation10 + $0x4f0] sm:$0xff]
    %v5390 = vld [vmem:[#allocation10 + $0x4f8] sm:$0xff]
    %v5391 = vld [vmem:[#allocation10 + $0x500] sm:$0xff]
    %v5392 = vld [vmem:[#allocation10 + $0x508] sm:$0xff]
    %v5393 = vld [vmem:[#allocation10 + $0x510] sm:$0xff]
    %v5394 = vld [vmem:[#allocation10 + $0x518] sm:$0xff]
    %v5395 = vld [vmem:[#allocation10 + $0x520] sm:$0xff]
    %v5396 = vld [vmem:[#allocation10 + $0x528] sm:$0xff]
    %v5397 = vld [vmem:[#allocation10 + $0x530] sm:$0xff]
    %v5398 = vld [vmem:[#allocation10 + $0x538] sm:$0xff]
    %v5399 = vld [vmem:[#allocation10 + $0x540] sm:$0xff]
    %v5400 = vld [vmem:[#allocation10 + $0x548] sm:$0xff]
    %v5401 = vld [vmem:[#allocation10 + $0x550] sm:$0xff]
    %v5402 = vld [vmem:[#allocation10 + $0x558] sm:$0xff]
    %v5403 = vld [vmem:[#allocation10 + $0x560] sm:$0xff]
    %v5404 = vld [vmem:[#allocation10 + $0x568] sm:$0xff]
    %v5405 = vld [vmem:[#allocation10 + $0x570] sm:$0xff]
    %v5406 = vld [vmem:[#allocation10 + $0x578] sm:$0xff]
    %v5407 = vld [vmem:[#allocation10 + $0x580] sm:$0xff]
    %v5408 = vld [vmem:[#allocation10 + $0x588] sm:$0xff]
    %v5409 = vld [vmem:[#allocation10 + $0x590] sm:$0xff]
    %v5410 = vld [vmem:[#allocation10 + $0x598] sm:$0xff]
    %v5411 = vld [vmem:[#allocation10 + $0x5a0] sm:$0xff]
    %v5412 = vld [vmem:[#allocation10 + $0x5a8] sm:$0xff]
    %v5413 = vld [vmem:[#allocation10 + $0x5b0] sm:$0xff]
    %v5414 = vld [vmem:[#allocation10 + $0x5b8] sm:$0xff]
    %v5415 = vld [vmem:[#allocation10 + $0x5c0] sm:$0xff]
    %v5416 = vld [vmem:[#allocation10 + $0x5c8] sm:$0xff]
    %v5417 = vld [vmem:[#allocation10 + $0x5d0] sm:$0xff]
    %v5418 = vld [vmem:[#allocation10 + $0x5d8] sm:$0xff]
    %v5419 = vld [vmem:[#allocation10 + $0x5e0] sm:$0xff]
    %v5420 = vld [vmem:[#allocation10 + $0x5e8] sm:$0xff]
    %v5421 = vld [vmem:[#allocation10 + $0x5f0] sm:$0xff]
    %v5422 = vld [vmem:[#allocation10 + $0x5f8] sm:$0xff]
    %v5423 = vld [vmem:[#allocation10 + $0x600] sm:$0xff]
    %v5424 = vld [vmem:[#allocation10 + $0x608] sm:$0xff]
    %v5425 = vld [vmem:[#allocation10 + $0x610] sm:$0xff]
    %v5426 = vld [vmem:[#allocation10 + $0x618] sm:$0xff]
    %v5427 = vld [vmem:[#allocation10 + $0x620] sm:$0xff]
    %v5428 = vld [vmem:[#allocation10 + $0x628] sm:$0xff]
    %v5429 = vld [vmem:[#allocation10 + $0x630] sm:$0xff]
    %v5430 = vld [vmem:[#allocation10 + $0x638] sm:$0xff]
    %v5431 = vld [vmem:[#allocation10 + $0x640] sm:$0xff]
    %v5432 = vld [vmem:[#allocation10 + $0x648] sm:$0xff]
    %v5433 = vld [vmem:[#allocation10 + $0x650] sm:$0xff]
    %v5434 = vld [vmem:[#allocation10 + $0x658] sm:$0xff]
    %v5435 = vld [vmem:[#allocation10 + $0x660] sm:$0xff]
    %v5436 = vld [vmem:[#allocation10 + $0x668] sm:$0xff]
    %v5437 = vld [vmem:[#allocation10 + $0x670] sm:$0xff]
    %v5438 = vld [vmem:[#allocation10 + $0x678] sm:$0xff]
    %v5439 = vld [vmem:[#allocation10 + $0x680] sm:$0xff]
    %v5440 = vld [vmem:[#allocation10 + $0x688] sm:$0xff]
    %v5441 = vld [vmem:[#allocation10 + $0x690] sm:$0xff]
    %v5442 = vld [vmem:[#allocation10 + $0x698] sm:$0xff]
    %v5443 = vld [vmem:[#allocation10 + $0x6a0] sm:$0xff]
    %v5444 = vld [vmem:[#allocation10 + $0x6a8] sm:$0xff]
    %v5445 = vld [vmem:[#allocation10 + $0x6b0] sm:$0xff]
    %v5446 = vld [vmem:[#allocation10 + $0x6b8] sm:$0xff]
    %v5447 = vld [vmem:[#allocation10 + $0x6c0] sm:$0xff]
    %v5448 = vld [vmem:[#allocation10 + $0x6c8] sm:$0xff]
    %v5449 = vld [vmem:[#allocation10 + $0x6d0] sm:$0xff]
    %v5450 = vld [vmem:[#allocation10 + $0x6d8] sm:$0xff]
    %v5451 = vld [vmem:[#allocation10 + $0x6e0] sm:$0xff]
    %v5452 = vld [vmem:[#allocation10 + $0x6e8] sm:$0xff]
    %v5453 = vld [vmem:[#allocation10 + $0x6f0] sm:$0xff]
    %v5454 = vld [vmem:[#allocation10 + $0x6f8] sm:$0xff]
    %v5455 = vld [vmem:[#allocation10 + $0x700] sm:$0xff]
    %v5456 = vld [vmem:[#allocation10 + $0x708] sm:$0xff]
    %v5457 = vld [vmem:[#allocation10 + $0x710] sm:$0xff]
    %v5458 = vld [vmem:[#allocation10 + $0x718] sm:$0xff]
    %v5459 = vld [vmem:[#allocation10 + $0x720] sm:$0xff]
    %v5460 = vld [vmem:[#allocation10 + $0x728] sm:$0xff]
    %v5461 = vld [vmem:[#allocation10 + $0x730] sm:$0xff]
    %v5462 = vld [vmem:[#allocation10 + $0x738] sm:$0xff]
    %v5463 = vld [vmem:[#allocation10 + $0x740] sm:$0xff]
    %v5464 = vld [vmem:[#allocation10 + $0x748] sm:$0xff]
    %v5465 = vld [vmem:[#allocation10 + $0x750] sm:$0xff]
    %v5466 = vld [vmem:[#allocation10 + $0x758] sm:$0xff]
    %v5467 = vld [vmem:[#allocation10 + $0x760] sm:$0xff]
    %v5468 = vld [vmem:[#allocation10 + $0x768] sm:$0xff]
    %v5469 = vld [vmem:[#allocation10 + $0x770] sm:$0xff]
    %v5470 = vld [vmem:[#allocation10 + $0x778] sm:$0xff]
    %v5471 = vld [vmem:[#allocation10 + $0x780] sm:$0xff]
    %v5472 = vld [vmem:[#allocation10 + $0x788] sm:$0xff]
    %v5473 = vld [vmem:[#allocation10 + $0x790] sm:$0xff]
    %v5474 = vld [vmem:[#allocation10 + $0x798] sm:$0xff]
    %v5475 = vld [vmem:[#allocation10 + $0x7a0] sm:$0xff]
    %v5476 = vld [vmem:[#allocation10 + $0x7a8] sm:$0xff]
    %v5477 = vld [vmem:[#allocation10 + $0x7b0] sm:$0xff]
    %v5478 = vld [vmem:[#allocation10 + $0x7b8] sm:$0xff]
    %v5479 = vld [vmem:[#allocation10 + $0x7c0] sm:$0xff]
    %v5480 = vld [vmem:[#allocation10 + $0x7c8] sm:$0xff]
    %v5481 = vld [vmem:[#allocation10 + $0x7d0] sm:$0xff]
    %v5482 = vld [vmem:[#allocation10 + $0x7d8] sm:$0xff]
    %v5483 = vld [vmem:[#allocation10 + $0x7e0] sm:$0xff]
    %v5484 = vld [vmem:[#allocation10 + $0x7e8] sm:$0xff]
    %v5485 = vld [vmem:[#allocation10 + $0x7f0] sm:$0xff]
    %v5486 = vld [vmem:[#allocation10 + $0x7f8] sm:$0xff]
    %v5487 = vld [vmem:[%s15] sm:$0xff]
    %v5489 = vlaneseq
    %v5490 = vshrl.u32 %v5489, 7
    %v5491 = vsub.s32 0, %v5490
    %v5492 = vrot.slane %v5487, %v5491
    %v5493 = vlaneseq
    %v5494 = vshrl.u32 %v5493, 7
    %v5495 = vsub.s32 1, %v5494
    %v5496 = vrot.slane %v5487, %v5495
    %v5497 = vlaneseq
    %v5498 = vshrl.u32 %v5497, 7
    %v5499 = vsub.s32 2, %v5498
    %v5500 = vrot.slane %v5487, %v5499
    %v5501 = vlaneseq
    %v5502 = vshrl.u32 %v5501, 7
    %v5503 = vsub.s32 3, %v5502
    %v5504 = vrot.slane %v5487, %v5503
    %v5505 = vlaneseq
    %v5506 = vshrl.u32 %v5505, 7
    %v5507 = vsub.s32 4, %v5506
    %v5508 = vrot.slane %v5487, %v5507
    %v5509 = vlaneseq
    %v5510 = vshrl.u32 %v5509, 7
    %v5511 = vsub.s32 5, %v5510
    %v5512 = vrot.slane %v5487, %v5511
    %v5513 = vlaneseq
    %v5514 = vshrl.u32 %v5513, 7
    %v5515 = vsub.s32 6, %v5514
    %v5516 = vrot.slane %v5487, %v5515
    %v5517 = vlaneseq
    %v5518 = vshrl.u32 %v5517, 7
    %v5519 = vsub.s32 7, %v5518
    %v5520 = vrot.slane %v5487, %v5519
    %v5785 = vunpack.c.l.b16 %v5231
    %v5786 = vunpack.c.h.b16 %v5231
    %v5787 = vunpack.c.l.b16 %v5232
    %v5788 = vunpack.c.h.b16 %v5232
    %v5789 = vunpack.c.l.b16 %v5233
    %v5790 = vunpack.c.h.b16 %v5233
    %v5791 = vunpack.c.l.b16 %v5234
    %v5792 = vunpack.c.h.b16 %v5234
    %v5793 = vunpack.c.l.b16 %v5235
    %v5794 = vunpack.c.h.b16 %v5235
    %v5795 = vunpack.c.l.b16 %v5236
    %v5796 = vunpack.c.h.b16 %v5236
    %v5797 = vunpack.c.l.b16 %v5237
    %v5798 = vunpack.c.h.b16 %v5237
    %v5799 = vunpack.c.l.b16 %v5238
    %v5800 = vunpack.c.h.b16 %v5238
    %v5801 = vunpack.c.l.b16 %v5239
    %v5802 = vunpack.c.h.b16 %v5239
    %v5803 = vunpack.c.l.b16 %v5240
    %v5804 = vunpack.c.h.b16 %v5240
    %v5805 = vunpack.c.l.b16 %v5241
    %v5806 = vunpack.c.h.b16 %v5241
    %v5807 = vunpack.c.l.b16 %v5242
    %v5808 = vunpack.c.h.b16 %v5242
    %v5809 = vunpack.c.l.b16 %v5243
    %v5810 = vunpack.c.h.b16 %v5243
    %v5811 = vunpack.c.l.b16 %v5244
    %v5812 = vunpack.c.h.b16 %v5244
    %v5813 = vunpack.c.l.b16 %v5245
    %v5814 = vunpack.c.h.b16 %v5245
    %v5815 = vunpack.c.l.b16 %v5246
    %v5816 = vunpack.c.h.b16 %v5246
    %v5817 = vunpack.c.l.b16 %v5247
    %v5818 = vunpack.c.h.b16 %v5247
    %v5819 = vunpack.c.l.b16 %v5248
    %v5820 = vunpack.c.h.b16 %v5248
    %v5821 = vunpack.c.l.b16 %v5249
    %v5822 = vunpack.c.h.b16 %v5249
    %v5823 = vunpack.c.l.b16 %v5250
    %v5824 = vunpack.c.h.b16 %v5250
    %v5825 = vunpack.c.l.b16 %v5251
    %v5826 = vunpack.c.h.b16 %v5251
    %v5827 = vunpack.c.l.b16 %v5252
    %v5828 = vunpack.c.h.b16 %v5252
    %v5829 = vunpack.c.l.b16 %v5253
    %v5830 = vunpack.c.h.b16 %v5253
    %v5831 = vunpack.c.l.b16 %v5254
    %v5832 = vunpack.c.h.b16 %v5254
    %v5833 = vunpack.c.l.b16 %v5255
    %v5834 = vunpack.c.h.b16 %v5255
    %v5835 = vunpack.c.l.b16 %v5256
    %v5836 = vunpack.c.h.b16 %v5256
    %v5837 = vunpack.c.l.b16 %v5257
    %v5838 = vunpack.c.h.b16 %v5257
    %v5839 = vunpack.c.l.b16 %v5258
    %v5840 = vunpack.c.h.b16 %v5258
    %v5841 = vunpack.c.l.b16 %v5259
    %v5842 = vunpack.c.h.b16 %v5259
    %v5843 = vunpack.c.l.b16 %v5260
    %v5844 = vunpack.c.h.b16 %v5260
    %v5845 = vunpack.c.l.b16 %v5261
    %v5846 = vunpack.c.h.b16 %v5261
    %v5847 = vunpack.c.l.b16 %v5262
    %v5848 = vunpack.c.h.b16 %v5262
    %v5849 = vunpack.c.l.b16 %v5263
    %v5850 = vunpack.c.h.b16 %v5263
    %v5851 = vunpack.c.l.b16 %v5264
    %v5852 = vunpack.c.h.b16 %v5264
    %v5853 = vunpack.c.l.b16 %v5265
    %v5854 = vunpack.c.h.b16 %v5265
    %v5855 = vunpack.c.l.b16 %v5266
    %v5856 = vunpack.c.h.b16 %v5266
    %v5857 = vunpack.c.l.b16 %v5267
    %v5858 = vunpack.c.h.b16 %v5267
    %v5859 = vunpack.c.l.b16 %v5268
    %v5860 = vunpack.c.h.b16 %v5268
    %v5861 = vunpack.c.l.b16 %v5269
    %v5862 = vunpack.c.h.b16 %v5269
    %v5863 = vunpack.c.l.b16 %v5270
    %v5864 = vunpack.c.h.b16 %v5270
    %v5865 = vunpack.c.l.b16 %v5271
    %v5866 = vunpack.c.h.b16 %v5271
    %v5867 = vunpack.c.l.b16 %v5272
    %v5868 = vunpack.c.h.b16 %v5272
    %v5869 = vunpack.c.l.b16 %v5273
    %v5870 = vunpack.c.h.b16 %v5273
    %v5871 = vunpack.c.l.b16 %v5274
    %v5872 = vunpack.c.h.b16 %v5274
    %v5873 = vunpack.c.l.b16 %v5275
    %v5874 = vunpack.c.h.b16 %v5275
    %v5875 = vunpack.c.l.b16 %v5276
    %v5876 = vunpack.c.h.b16 %v5276
    %v5877 = vunpack.c.l.b16 %v5277
    %v5878 = vunpack.c.h.b16 %v5277
    %v5879 = vunpack.c.l.b16 %v5278
    %v5880 = vunpack.c.h.b16 %v5278
    %v5881 = vunpack.c.l.b16 %v5279
    %v5882 = vunpack.c.h.b16 %v5279
    %v5883 = vunpack.c.l.b16 %v5280
    %v5884 = vunpack.c.h.b16 %v5280
    %v5885 = vunpack.c.l.b16 %v5281
    %v5886 = vunpack.c.h.b16 %v5281
    %v5887 = vunpack.c.l.b16 %v5282
    %v5888 = vunpack.c.h.b16 %v5282
    %v5889 = vunpack.c.l.b16 %v5283
    %v5890 = vunpack.c.h.b16 %v5283
    %v5891 = vunpack.c.l.b16 %v5284
    %v5892 = vunpack.c.h.b16 %v5284
    %v5893 = vunpack.c.l.b16 %v5285
    %v5894 = vunpack.c.h.b16 %v5285
    %v5895 = vunpack.c.l.b16 %v5286
    %v5896 = vunpack.c.h.b16 %v5286
    %v5897 = vunpack.c.l.b16 %v5287
    %v5898 = vunpack.c.h.b16 %v5287
    %v5899 = vunpack.c.l.b16 %v5288
    %v5900 = vunpack.c.h.b16 %v5288
    %v5901 = vunpack.c.l.b16 %v5289
    %v5902 = vunpack.c.h.b16 %v5289
    %v5903 = vunpack.c.l.b16 %v5290
    %v5904 = vunpack.c.h.b16 %v5290
    %v5905 = vunpack.c.l.b16 %v5291
    %v5906 = vunpack.c.h.b16 %v5291
    %v5907 = vunpack.c.l.b16 %v5292
    %v5908 = vunpack.c.h.b16 %v5292
    %v5909 = vunpack.c.l.b16 %v5293
    %v5910 = vunpack.c.h.b16 %v5293
    %v5911 = vunpack.c.l.b16 %v5294
    %v5912 = vunpack.c.h.b16 %v5294
    %v5913 = vunpack.c.l.b16 %v5295
    %v5914 = vunpack.c.h.b16 %v5295
    %v5915 = vunpack.c.l.b16 %v5296
    %v5916 = vunpack.c.h.b16 %v5296
    %v5917 = vunpack.c.l.b16 %v5297
    %v5918 = vunpack.c.h.b16 %v5297
    %v5919 = vunpack.c.l.b16 %v5298
    %v5920 = vunpack.c.h.b16 %v5298
    %v5921 = vunpack.c.l.b16 %v5299
    %v5922 = vunpack.c.h.b16 %v5299
    %v5923 = vunpack.c.l.b16 %v5300
    %v5924 = vunpack.c.h.b16 %v5300
    %v5925 = vunpack.c.l.b16 %v5301
    %v5926 = vunpack.c.h.b16 %v5301
    %v5927 = vunpack.c.l.b16 %v5302
    %v5928 = vunpack.c.h.b16 %v5302
    %v5929 = vunpack.c.l.b16 %v5303
    %v5930 = vunpack.c.h.b16 %v5303
    %v5931 = vunpack.c.l.b16 %v5304
    %v5932 = vunpack.c.h.b16 %v5304
    %v5933 = vunpack.c.l.b16 %v5305
    %v5934 = vunpack.c.h.b16 %v5305
    %v5935 = vunpack.c.l.b16 %v5306
    %v5936 = vunpack.c.h.b16 %v5306
    %v5937 = vunpack.c.l.b16 %v5307
    %v5938 = vunpack.c.h.b16 %v5307
    %v5939 = vunpack.c.l.b16 %v5308
    %v5940 = vunpack.c.h.b16 %v5308
    %v5941 = vunpack.c.l.b16 %v5309
    %v5942 = vunpack.c.h.b16 %v5309
    %v5943 = vunpack.c.l.b16 %v5310
    %v5944 = vunpack.c.h.b16 %v5310
    %v5945 = vunpack.c.l.b16 %v5311
    %v5946 = vunpack.c.h.b16 %v5311
    %v5947 = vunpack.c.l.b16 %v5312
    %v5948 = vunpack.c.h.b16 %v5312
    %v5949 = vunpack.c.l.b16 %v5313
    %v5950 = vunpack.c.h.b16 %v5313
    %v5951 = vunpack.c.l.b16 %v5314
    %v5952 = vunpack.c.h.b16 %v5314
    %v5953 = vunpack.c.l.b16 %v5315
    %v5954 = vunpack.c.h.b16 %v5315
    %v5955 = vunpack.c.l.b16 %v5316
    %v5956 = vunpack.c.h.b16 %v5316
    %v5957 = vunpack.c.l.b16 %v5317
    %v5958 = vunpack.c.h.b16 %v5317
    %v5959 = vunpack.c.l.b16 %v5318
    %v5960 = vunpack.c.h.b16 %v5318
    %v5961 = vunpack.c.l.b16 %v5319
    %v5962 = vunpack.c.h.b16 %v5319
    %v5963 = vunpack.c.l.b16 %v5320
    %v5964 = vunpack.c.h.b16 %v5320
    %v5965 = vunpack.c.l.b16 %v5321
    %v5966 = vunpack.c.h.b16 %v5321
    %v5967 = vunpack.c.l.b16 %v5322
    %v5968 = vunpack.c.h.b16 %v5322
    %v5969 = vunpack.c.l.b16 %v5323
    %v5970 = vunpack.c.h.b16 %v5323
    %v5971 = vunpack.c.l.b16 %v5324
    %v5972 = vunpack.c.h.b16 %v5324
    %v5973 = vunpack.c.l.b16 %v5325
    %v5974 = vunpack.c.h.b16 %v5325
    %v5975 = vunpack.c.l.b16 %v5326
    %v5976 = vunpack.c.h.b16 %v5326
    %v5977 = vunpack.c.l.b16 %v5327
    %v5978 = vunpack.c.h.b16 %v5327
    %v5979 = vunpack.c.l.b16 %v5328
    %v5980 = vunpack.c.h.b16 %v5328
    %v5981 = vunpack.c.l.b16 %v5329
    %v5982 = vunpack.c.h.b16 %v5329
    %v5983 = vunpack.c.l.b16 %v5330
    %v5984 = vunpack.c.h.b16 %v5330
    %v5985 = vunpack.c.l.b16 %v5331
    %v5986 = vunpack.c.h.b16 %v5331
    %v5987 = vunpack.c.l.b16 %v5332
    %v5988 = vunpack.c.h.b16 %v5332
    %v5989 = vunpack.c.l.b16 %v5333
    %v5990 = vunpack.c.h.b16 %v5333
    %v5991 = vunpack.c.l.b16 %v5334
    %v5992 = vunpack.c.h.b16 %v5334
    %v5993 = vunpack.c.l.b16 %v5335
    %v5994 = vunpack.c.h.b16 %v5335
    %v5995 = vunpack.c.l.b16 %v5336
    %v5996 = vunpack.c.h.b16 %v5336
    %v5997 = vunpack.c.l.b16 %v5337
    %v5998 = vunpack.c.h.b16 %v5337
    %v5999 = vunpack.c.l.b16 %v5338
    %v6000 = vunpack.c.h.b16 %v5338
    %v6001 = vunpack.c.l.b16 %v5339
    %v6002 = vunpack.c.h.b16 %v5339
    %v6003 = vunpack.c.l.b16 %v5340
    %v6004 = vunpack.c.h.b16 %v5340
    %v6005 = vunpack.c.l.b16 %v5341
    %v6006 = vunpack.c.h.b16 %v5341
    %v6007 = vunpack.c.l.b16 %v5342
    %v6008 = vunpack.c.h.b16 %v5342
    %v6009 = vunpack.c.l.b16 %v5343
    %v6010 = vunpack.c.h.b16 %v5343
    %v6011 = vunpack.c.l.b16 %v5344
    %v6012 = vunpack.c.h.b16 %v5344
    %v6013 = vunpack.c.l.b16 %v5345
    %v6014 = vunpack.c.h.b16 %v5345
    %v6015 = vunpack.c.l.b16 %v5346
    %v6016 = vunpack.c.h.b16 %v5346
    %v6017 = vunpack.c.l.b16 %v5347
    %v6018 = vunpack.c.h.b16 %v5347
    %v6019 = vunpack.c.l.b16 %v5348
    %v6020 = vunpack.c.h.b16 %v5348
    %v6021 = vunpack.c.l.b16 %v5349
    %v6022 = vunpack.c.h.b16 %v5349
    %v6023 = vunpack.c.l.b16 %v5350
    %v6024 = vunpack.c.h.b16 %v5350
    %v6025 = vunpack.c.l.b16 %v5351
    %v6026 = vunpack.c.h.b16 %v5351
    %v6027 = vunpack.c.l.b16 %v5352
    %v6028 = vunpack.c.h.b16 %v5352
    %v6029 = vunpack.c.l.b16 %v5353
    %v6030 = vunpack.c.h.b16 %v5353
    %v6031 = vunpack.c.l.b16 %v5354
    %v6032 = vunpack.c.h.b16 %v5354
    %v6033 = vunpack.c.l.b16 %v5355
    %v6034 = vunpack.c.h.b16 %v5355
    %v6035 = vunpack.c.l.b16 %v5356
    %v6036 = vunpack.c.h.b16 %v5356
    %v6037 = vunpack.c.l.b16 %v5357
    %v6038 = vunpack.c.h.b16 %v5357
    %v6039 = vunpack.c.l.b16 %v5358
    %v6040 = vunpack.c.h.b16 %v5358
    %v6041 = vunpack.c.l.b16 %v5359
    %v6042 = vunpack.c.h.b16 %v5359
    %v6043 = vunpack.c.l.b16 %v5360
    %v6044 = vunpack.c.h.b16 %v5360
    %v6045 = vunpack.c.l.b16 %v5361
    %v6046 = vunpack.c.h.b16 %v5361
    %v6047 = vunpack.c.l.b16 %v5362
    %v6048 = vunpack.c.h.b16 %v5362
    %v6049 = vunpack.c.l.b16 %v5363
    %v6050 = vunpack.c.h.b16 %v5363
    %v6051 = vunpack.c.l.b16 %v5364
    %v6052 = vunpack.c.h.b16 %v5364
    %v6053 = vunpack.c.l.b16 %v5365
    %v6054 = vunpack.c.h.b16 %v5365
    %v6055 = vunpack.c.l.b16 %v5366
    %v6056 = vunpack.c.h.b16 %v5366
    %v6057 = vunpack.c.l.b16 %v5367
    %v6058 = vunpack.c.h.b16 %v5367
    %v6059 = vunpack.c.l.b16 %v5368
    %v6060 = vunpack.c.h.b16 %v5368
    %v6061 = vunpack.c.l.b16 %v5369
    %v6062 = vunpack.c.h.b16 %v5369
    %v6063 = vunpack.c.l.b16 %v5370
    %v6064 = vunpack.c.h.b16 %v5370
    %v6065 = vunpack.c.l.b16 %v5371
    %v6066 = vunpack.c.h.b16 %v5371
    %v6067 = vunpack.c.l.b16 %v5372
    %v6068 = vunpack.c.h.b16 %v5372
    %v6069 = vunpack.c.l.b16 %v5373
    %v6070 = vunpack.c.h.b16 %v5373
    %v6071 = vunpack.c.l.b16 %v5374
    %v6072 = vunpack.c.h.b16 %v5374
    %v6073 = vunpack.c.l.b16 %v5375
    %v6074 = vunpack.c.h.b16 %v5375
    %v6075 = vunpack.c.l.b16 %v5376
    %v6076 = vunpack.c.h.b16 %v5376
    %v6077 = vunpack.c.l.b16 %v5377
    %v6078 = vunpack.c.h.b16 %v5377
    %v6079 = vunpack.c.l.b16 %v5378
    %v6080 = vunpack.c.h.b16 %v5378
    %v6081 = vunpack.c.l.b16 %v5379
    %v6082 = vunpack.c.h.b16 %v5379
    %v6083 = vunpack.c.l.b16 %v5380
    %v6084 = vunpack.c.h.b16 %v5380
    %v6085 = vunpack.c.l.b16 %v5381
    %v6086 = vunpack.c.h.b16 %v5381
    %v6087 = vunpack.c.l.b16 %v5382
    %v6088 = vunpack.c.h.b16 %v5382
    %v6089 = vunpack.c.l.b16 %v5383
    %v6090 = vunpack.c.h.b16 %v5383
    %v6091 = vunpack.c.l.b16 %v5384
    %v6092 = vunpack.c.h.b16 %v5384
    %v6093 = vunpack.c.l.b16 %v5385
    %v6094 = vunpack.c.h.b16 %v5385
    %v6095 = vunpack.c.l.b16 %v5386
    %v6096 = vunpack.c.h.b16 %v5386
    %v6097 = vunpack.c.l.b16 %v5387
    %v6098 = vunpack.c.h.b16 %v5387
    %v6099 = vunpack.c.l.b16 %v5388
    %v6100 = vunpack.c.h.b16 %v5388
    %v6101 = vunpack.c.l.b16 %v5389
    %v6102 = vunpack.c.h.b16 %v5389
    %v6103 = vunpack.c.l.b16 %v5390
    %v6104 = vunpack.c.h.b16 %v5390
    %v6105 = vunpack.c.l.b16 %v5391
    %v6106 = vunpack.c.h.b16 %v5391
    %v6107 = vunpack.c.l.b16 %v5392
    %v6108 = vunpack.c.h.b16 %v5392
    %v6109 = vunpack.c.l.b16 %v5393
    %v6110 = vunpack.c.h.b16 %v5393
    %v6111 = vunpack.c.l.b16 %v5394
    %v6112 = vunpack.c.h.b16 %v5394
    %v6113 = vunpack.c.l.b16 %v5395
    %v6114 = vunpack.c.h.b16 %v5395
    %v6115 = vunpack.c.l.b16 %v5396
    %v6116 = vunpack.c.h.b16 %v5396
    %v6117 = vunpack.c.l.b16 %v5397
    %v6118 = vunpack.c.h.b16 %v5397
    %v6119 = vunpack.c.l.b16 %v5398
    %v6120 = vunpack.c.h.b16 %v5398
    %v6121 = vunpack.c.l.b16 %v5399
    %v6122 = vunpack.c.h.b16 %v5399
    %v6123 = vunpack.c.l.b16 %v5400
    %v6124 = vunpack.c.h.b16 %v5400
    %v6125 = vunpack.c.l.b16 %v5401
    %v6126 = vunpack.c.h.b16 %v5401
    %v6127 = vunpack.c.l.b16 %v5402
    %v6128 = vunpack.c.h.b16 %v5402
    %v6129 = vunpack.c.l.b16 %v5403
    %v6130 = vunpack.c.h.b16 %v5403
    %v6131 = vunpack.c.l.b16 %v5404
    %v6132 = vunpack.c.h.b16 %v5404
    %v6133 = vunpack.c.l.b16 %v5405
    %v6134 = vunpack.c.h.b16 %v5405
    %v6135 = vunpack.c.l.b16 %v5406
    %v6136 = vunpack.c.h.b16 %v5406
    %v6137 = vunpack.c.l.b16 %v5407
    %v6138 = vunpack.c.h.b16 %v5407
    %v6139 = vunpack.c.l.b16 %v5408
    %v6140 = vunpack.c.h.b16 %v5408
    %v6141 = vunpack.c.l.b16 %v5409
    %v6142 = vunpack.c.h.b16 %v5409
    %v6143 = vunpack.c.l.b16 %v5410
    %v6144 = vunpack.c.h.b16 %v5410
    %v6145 = vunpack.c.l.b16 %v5411
    %v6146 = vunpack.c.h.b16 %v5411
    %v6147 = vunpack.c.l.b16 %v5412
    %v6148 = vunpack.c.h.b16 %v5412
    %v6149 = vunpack.c.l.b16 %v5413
    %v6150 = vunpack.c.h.b16 %v5413
    %v6151 = vunpack.c.l.b16 %v5414
    %v6152 = vunpack.c.h.b16 %v5414
    %v6153 = vunpack.c.l.b16 %v5415
    %v6154 = vunpack.c.h.b16 %v5415
    %v6155 = vunpack.c.l.b16 %v5416
    %v6156 = vunpack.c.h.b16 %v5416
    %v6157 = vunpack.c.l.b16 %v5417
    %v6158 = vunpack.c.h.b16 %v5417
    %v6159 = vunpack.c.l.b16 %v5418
    %v6160 = vunpack.c.h.b16 %v5418
    %v6161 = vunpack.c.l.b16 %v5419
    %v6162 = vunpack.c.h.b16 %v5419
    %v6163 = vunpack.c.l.b16 %v5420
    %v6164 = vunpack.c.h.b16 %v5420
    %v6165 = vunpack.c.l.b16 %v5421
    %v6166 = vunpack.c.h.b16 %v5421
    %v6167 = vunpack.c.l.b16 %v5422
    %v6168 = vunpack.c.h.b16 %v5422
    %v6169 = vunpack.c.l.b16 %v5423
    %v6170 = vunpack.c.h.b16 %v5423
    %v6171 = vunpack.c.l.b16 %v5424
    %v6172 = vunpack.c.h.b16 %v5424
    %v6173 = vunpack.c.l.b16 %v5425
    %v6174 = vunpack.c.h.b16 %v5425
    %v6175 = vunpack.c.l.b16 %v5426
    %v6176 = vunpack.c.h.b16 %v5426
    %v6177 = vunpack.c.l.b16 %v5427
    %v6178 = vunpack.c.h.b16 %v5427
    %v6179 = vunpack.c.l.b16 %v5428
    %v6180 = vunpack.c.h.b16 %v5428
    %v6181 = vunpack.c.l.b16 %v5429
    %v6182 = vunpack.c.h.b16 %v5429
    %v6183 = vunpack.c.l.b16 %v5430
    %v6184 = vunpack.c.h.b16 %v5430
    %v6185 = vunpack.c.l.b16 %v5431
    %v6186 = vunpack.c.h.b16 %v5431
    %v6187 = vunpack.c.l.b16 %v5432
    %v6188 = vunpack.c.h.b16 %v5432
    %v6189 = vunpack.c.l.b16 %v5433
    %v6190 = vunpack.c.h.b16 %v5433
    %v6191 = vunpack.c.l.b16 %v5434
    %v6192 = vunpack.c.h.b16 %v5434
    %v6193 = vunpack.c.l.b16 %v5435
    %v6194 = vunpack.c.h.b16 %v5435
    %v6195 = vunpack.c.l.b16 %v5436
    %v6196 = vunpack.c.h.b16 %v5436
    %v6197 = vunpack.c.l.b16 %v5437
    %v6198 = vunpack.c.h.b16 %v5437
    %v6199 = vunpack.c.l.b16 %v5438
    %v6200 = vunpack.c.h.b16 %v5438
    %v6201 = vunpack.c.l.b16 %v5439
    %v6202 = vunpack.c.h.b16 %v5439
    %v6203 = vunpack.c.l.b16 %v5440
    %v6204 = vunpack.c.h.b16 %v5440
    %v6205 = vunpack.c.l.b16 %v5441
    %v6206 = vunpack.c.h.b16 %v5441
    %v6207 = vunpack.c.l.b16 %v5442
    %v6208 = vunpack.c.h.b16 %v5442
    %v6209 = vunpack.c.l.b16 %v5443
    %v6210 = vunpack.c.h.b16 %v5443
    %v6211 = vunpack.c.l.b16 %v5444
    %v6212 = vunpack.c.h.b16 %v5444
    %v6213 = vunpack.c.l.b16 %v5445
    %v6214 = vunpack.c.h.b16 %v5445
    %v6215 = vunpack.c.l.b16 %v5446
    %v6216 = vunpack.c.h.b16 %v5446
    %v6217 = vunpack.c.l.b16 %v5447
    %v6218 = vunpack.c.h.b16 %v5447
    %v6219 = vunpack.c.l.b16 %v5448
    %v6220 = vunpack.c.h.b16 %v5448
    %v6221 = vunpack.c.l.b16 %v5449
    %v6222 = vunpack.c.h.b16 %v5449
    %v6223 = vunpack.c.l.b16 %v5450
    %v6224 = vunpack.c.h.b16 %v5450
    %v6225 = vunpack.c.l.b16 %v5451
    %v6226 = vunpack.c.h.b16 %v5451
    %v6227 = vunpack.c.l.b16 %v5452
    %v6228 = vunpack.c.h.b16 %v5452
    %v6229 = vunpack.c.l.b16 %v5453
    %v6230 = vunpack.c.h.b16 %v5453
    %v6231 = vunpack.c.l.b16 %v5454
    %v6232 = vunpack.c.h.b16 %v5454
    %v6233 = vunpack.c.l.b16 %v5455
    %v6234 = vunpack.c.h.b16 %v5455
    %v6235 = vunpack.c.l.b16 %v5456
    %v6236 = vunpack.c.h.b16 %v5456
    %v6237 = vunpack.c.l.b16 %v5457
    %v6238 = vunpack.c.h.b16 %v5457
    %v6239 = vunpack.c.l.b16 %v5458
    %v6240 = vunpack.c.h.b16 %v5458
    %v6241 = vunpack.c.l.b16 %v5459
    %v6242 = vunpack.c.h.b16 %v5459
    %v6243 = vunpack.c.l.b16 %v5460
    %v6244 = vunpack.c.h.b16 %v5460
    %v6245 = vunpack.c.l.b16 %v5461
    %v6246 = vunpack.c.h.b16 %v5461
    %v6247 = vunpack.c.l.b16 %v5462
    %v6248 = vunpack.c.h.b16 %v5462
    %v6249 = vunpack.c.l.b16 %v5463
    %v6250 = vunpack.c.h.b16 %v5463
    %v6251 = vunpack.c.l.b16 %v5464
    %v6252 = vunpack.c.h.b16 %v5464
    %v6253 = vunpack.c.l.b16 %v5465
    %v6254 = vunpack.c.h.b16 %v5465
    %v6255 = vunpack.c.l.b16 %v5466
    %v6256 = vunpack.c.h.b16 %v5466
    %v6257 = vunpack.c.l.b16 %v5467
    %v6258 = vunpack.c.h.b16 %v5467
    %v6259 = vunpack.c.l.b16 %v5468
    %v6260 = vunpack.c.h.b16 %v5468
    %v6261 = vunpack.c.l.b16 %v5469
    %v6262 = vunpack.c.h.b16 %v5469
    %v6263 = vunpack.c.l.b16 %v5470
    %v6264 = vunpack.c.h.b16 %v5470
    %v6265 = vunpack.c.l.b16 %v5471
    %v6266 = vunpack.c.h.b16 %v5471
    %v6267 = vunpack.c.l.b16 %v5472
    %v6268 = vunpack.c.h.b16 %v5472
    %v6269 = vunpack.c.l.b16 %v5473
    %v6270 = vunpack.c.h.b16 %v5473
    %v6271 = vunpack.c.l.b16 %v5474
    %v6272 = vunpack.c.h.b16 %v5474
    %v6273 = vunpack.c.l.b16 %v5475
    %v6274 = vunpack.c.h.b16 %v5475
    %v6275 = vunpack.c.l.b16 %v5476
    %v6276 = vunpack.c.h.b16 %v5476
    %v6277 = vunpack.c.l.b16 %v5477
    %v6278 = vunpack.c.h.b16 %v5477
    %v6279 = vunpack.c.l.b16 %v5478
    %v6280 = vunpack.c.h.b16 %v5478
    %v6281 = vunpack.c.l.b16 %v5479
    %v6282 = vunpack.c.h.b16 %v5479
    %v6283 = vunpack.c.l.b16 %v5480
    %v6284 = vunpack.c.h.b16 %v5480
    %v6285 = vunpack.c.l.b16 %v5481
    %v6286 = vunpack.c.h.b16 %v5481
    %v6287 = vunpack.c.l.b16 %v5482
    %v6288 = vunpack.c.h.b16 %v5482
    %v6289 = vunpack.c.l.b16 %v5483
    %v6290 = vunpack.c.h.b16 %v5483
    %v6291 = vunpack.c.l.b16 %v5484
    %v6292 = vunpack.c.h.b16 %v5484
    %v6293 = vunpack.c.l.b16 %v5485
    %v6294 = vunpack.c.h.b16 %v5485
    %v6295 = vunpack.c.l.b16 %v5486
    %v6296 = vunpack.c.h.b16 %v5486
    %v6297 = vpack.c.b16 %v5793, %v5785
    %v6298 = vpack.c.b16 %v5794, %v5786
    %v6299 = vpack.c.b16 %v5795, %v5787
    %v6300 = vpack.c.b16 %v5796, %v5788
    %v6301 = vpack.c.b16 %v5797, %v5789
    %v6302 = vpack.c.b16 %v5798, %v5790
    %v6303 = vpack.c.b16 %v5799, %v5791
    %v6304 = vpack.c.b16 %v5800, %v5792
    %v6305 = vpack.c.b16 %v5809, %v5801
    %v6306 = vpack.c.b16 %v5810, %v5802
    %v6307 = vpack.c.b16 %v5811, %v5803
    %v6308 = vpack.c.b16 %v5812, %v5804
    %v6309 = vpack.c.b16 %v5813, %v5805
    %v6310 = vpack.c.b16 %v5814, %v5806
    %v6311 = vpack.c.b16 %v5815, %v5807
    %v6312 = vpack.c.b16 %v5816, %v5808
    %v6313 = vpack.c.b16 %v5825, %v5817
    %v6314 = vpack.c.b16 %v5826, %v5818
    %v6315 = vpack.c.b16 %v5827, %v5819
    %v6316 = vpack.c.b16 %v5828, %v5820
    %v6317 = vpack.c.b16 %v5829, %v5821
    %v6318 = vpack.c.b16 %v5830, %v5822
    %v6319 = vpack.c.b16 %v5831, %v5823
    %v6320 = vpack.c.b16 %v5832, %v5824
    %v6321 = vpack.c.b16 %v5841, %v5833
    %v6322 = vpack.c.b16 %v5842, %v5834
    %v6323 = vpack.c.b16 %v5843, %v5835
    %v6324 = vpack.c.b16 %v5844, %v5836
    %v6325 = vpack.c.b16 %v5845, %v5837
    %v6326 = vpack.c.b16 %v5846, %v5838
    %v6327 = vpack.c.b16 %v5847, %v5839
    %v6328 = vpack.c.b16 %v5848, %v5840
    %v6329 = vpack.c.b16 %v5857, %v5849
    %v6330 = vpack.c.b16 %v5858, %v5850
    %v6331 = vpack.c.b16 %v5859, %v5851
    %v6332 = vpack.c.b16 %v5860, %v5852
    %v6333 = vpack.c.b16 %v5861, %v5853
    %v6334 = vpack.c.b16 %v5862, %v5854
    %v6335 = vpack.c.b16 %v5863, %v5855
    %v6336 = vpack.c.b16 %v5864, %v5856
    %v6337 = vpack.c.b16 %v5873, %v5865
    %v6338 = vpack.c.b16 %v5874, %v5866
    %v6339 = vpack.c.b16 %v5875, %v5867
    %v6340 = vpack.c.b16 %v5876, %v5868
    %v6341 = vpack.c.b16 %v5877, %v5869
    %v6342 = vpack.c.b16 %v5878, %v5870
    %v6343 = vpack.c.b16 %v5879, %v5871
    %v6344 = vpack.c.b16 %v5880, %v5872
    %v6345 = vpack.c.b16 %v5889, %v5881
    %v6346 = vpack.c.b16 %v5890, %v5882
    %v6347 = vpack.c.b16 %v5891, %v5883
    %v6348 = vpack.c.b16 %v5892, %v5884
    %v6349 = vpack.c.b16 %v5893, %v5885
    %v6350 = vpack.c.b16 %v5894, %v5886
    %v6351 = vpack.c.b16 %v5895, %v5887
    %v6352 = vpack.c.b16 %v5896, %v5888
    %v6353 = vpack.c.b16 %v5905, %v5897
    %v6354 = vpack.c.b16 %v5906, %v5898
    %v6355 = vpack.c.b16 %v5907, %v5899
    %v6356 = vpack.c.b16 %v5908, %v5900
    %v6357 = vpack.c.b16 %v5909, %v5901
    %v6358 = vpack.c.b16 %v5910, %v5902
    %v6359 = vpack.c.b16 %v5911, %v5903
    %v6360 = vpack.c.b16 %v5912, %v5904
    %v6361 = vpack.c.b16 %v5921, %v5913
    %v6362 = vpack.c.b16 %v5922, %v5914
    %v6363 = vpack.c.b16 %v5923, %v5915
    %v6364 = vpack.c.b16 %v5924, %v5916
    %v6365 = vpack.c.b16 %v5925, %v5917
    %v6366 = vpack.c.b16 %v5926, %v5918
    %v6367 = vpack.c.b16 %v5927, %v5919
    %v6368 = vpack.c.b16 %v5928, %v5920
    %v6369 = vpack.c.b16 %v5937, %v5929
    %v6370 = vpack.c.b16 %v5938, %v5930
    %v6371 = vpack.c.b16 %v5939, %v5931
    %v6372 = vpack.c.b16 %v5940, %v5932
    %v6373 = vpack.c.b16 %v5941, %v5933
    %v6374 = vpack.c.b16 %v5942, %v5934
    %v6375 = vpack.c.b16 %v5943, %v5935
    %v6376 = vpack.c.b16 %v5944, %v5936
    %v6377 = vpack.c.b16 %v5953, %v5945
    %v6378 = vpack.c.b16 %v5954, %v5946
    %v6379 = vpack.c.b16 %v5955, %v5947
    %v6380 = vpack.c.b16 %v5956, %v5948
    %v6381 = vpack.c.b16 %v5957, %v5949
    %v6382 = vpack.c.b16 %v5958, %v5950
    %v6383 = vpack.c.b16 %v5959, %v5951
    %v6384 = vpack.c.b16 %v5960, %v5952
    %v6385 = vpack.c.b16 %v5969, %v5961
    %v6386 = vpack.c.b16 %v5970, %v5962
    %v6387 = vpack.c.b16 %v5971, %v5963
    %v6388 = vpack.c.b16 %v5972, %v5964
    %v6389 = vpack.c.b16 %v5973, %v5965
    %v6390 = vpack.c.b16 %v5974, %v5966
    %v6391 = vpack.c.b16 %v5975, %v5967
    %v6392 = vpack.c.b16 %v5976, %v5968
    %v6393 = vpack.c.b16 %v5985, %v5977
    %v6394 = vpack.c.b16 %v5986, %v5978
    %v6395 = vpack.c.b16 %v5987, %v5979
    %v6396 = vpack.c.b16 %v5988, %v5980
    %v6397 = vpack.c.b16 %v5989, %v5981
    %v6398 = vpack.c.b16 %v5990, %v5982
    %v6399 = vpack.c.b16 %v5991, %v5983
    %v6400 = vpack.c.b16 %v5992, %v5984
    %v6401 = vpack.c.b16 %v6001, %v5993
    %v6402 = vpack.c.b16 %v6002, %v5994
    %v6403 = vpack.c.b16 %v6003, %v5995
    %v6404 = vpack.c.b16 %v6004, %v5996
    %v6405 = vpack.c.b16 %v6005, %v5997
    %v6406 = vpack.c.b16 %v6006, %v5998
    %v6407 = vpack.c.b16 %v6007, %v5999
    %v6408 = vpack.c.b16 %v6008, %v6000
    %v6409 = vpack.c.b16 %v6017, %v6009
    %v6410 = vpack.c.b16 %v6018, %v6010
    %v6411 = vpack.c.b16 %v6019, %v6011
    %v6412 = vpack.c.b16 %v6020, %v6012
    %v6413 = vpack.c.b16 %v6021, %v6013
    %v6414 = vpack.c.b16 %v6022, %v6014
    %v6415 = vpack.c.b16 %v6023, %v6015
    %v6416 = vpack.c.b16 %v6024, %v6016
    %v6417 = vpack.c.b16 %v6033, %v6025
    %v6418 = vpack.c.b16 %v6034, %v6026
    %v6419 = vpack.c.b16 %v6035, %v6027
    %v6420 = vpack.c.b16 %v6036, %v6028
    %v6421 = vpack.c.b16 %v6037, %v6029
    %v6422 = vpack.c.b16 %v6038, %v6030
    %v6423 = vpack.c.b16 %v6039, %v6031
    %v6424 = vpack.c.b16 %v6040, %v6032
    %v6425 = vpack.c.b16 %v6049, %v6041
    %v6426 = vpack.c.b16 %v6050, %v6042
    %v6427 = vpack.c.b16 %v6051, %v6043
    %v6428 = vpack.c.b16 %v6052, %v6044
    %v6429 = vpack.c.b16 %v6053, %v6045
    %v6430 = vpack.c.b16 %v6054, %v6046
    %v6431 = vpack.c.b16 %v6055, %v6047
    %v6432 = vpack.c.b16 %v6056, %v6048
    %v6433 = vpack.c.b16 %v6065, %v6057
    %v6434 = vpack.c.b16 %v6066, %v6058
    %v6435 = vpack.c.b16 %v6067, %v6059
    %v6436 = vpack.c.b16 %v6068, %v6060
    %v6437 = vpack.c.b16 %v6069, %v6061
    %v6438 = vpack.c.b16 %v6070, %v6062
    %v6439 = vpack.c.b16 %v6071, %v6063
    %v6440 = vpack.c.b16 %v6072, %v6064
    %v6441 = vpack.c.b16 %v6081, %v6073
    %v6442 = vpack.c.b16 %v6082, %v6074
    %v6443 = vpack.c.b16 %v6083, %v6075
    %v6444 = vpack.c.b16 %v6084, %v6076
    %v6445 = vpack.c.b16 %v6085, %v6077
    %v6446 = vpack.c.b16 %v6086, %v6078
    %v6447 = vpack.c.b16 %v6087, %v6079
    %v6448 = vpack.c.b16 %v6088, %v6080
    %v6449 = vpack.c.b16 %v6097, %v6089
    %v6450 = vpack.c.b16 %v6098, %v6090
    %v6451 = vpack.c.b16 %v6099, %v6091
    %v6452 = vpack.c.b16 %v6100, %v6092
    %v6453 = vpack.c.b16 %v6101, %v6093
    %v6454 = vpack.c.b16 %v6102, %v6094
    %v6455 = vpack.c.b16 %v6103, %v6095
    %v6456 = vpack.c.b16 %v6104, %v6096
    %v6457 = vpack.c.b16 %v6113, %v6105
    %v6458 = vpack.c.b16 %v6114, %v6106
    %v6459 = vpack.c.b16 %v6115, %v6107
    %v6460 = vpack.c.b16 %v6116, %v6108
    %v6461 = vpack.c.b16 %v6117, %v6109
    %v6462 = vpack.c.b16 %v6118, %v6110
    %v6463 = vpack.c.b16 %v6119, %v6111
    %v6464 = vpack.c.b16 %v6120, %v6112
    %v6465 = vpack.c.b16 %v6129, %v6121
    %v6466 = vpack.c.b16 %v6130, %v6122
    %v6467 = vpack.c.b16 %v6131, %v6123
    %v6468 = vpack.c.b16 %v6132, %v6124
    %v6469 = vpack.c.b16 %v6133, %v6125
    %v6470 = vpack.c.b16 %v6134, %v6126
    %v6471 = vpack.c.b16 %v6135, %v6127
    %v6472 = vpack.c.b16 %v6136, %v6128
    %v6473 = vpack.c.b16 %v6145, %v6137
    %v6474 = vpack.c.b16 %v6146, %v6138
    %v6475 = vpack.c.b16 %v6147, %v6139
    %v6476 = vpack.c.b16 %v6148, %v6140
    %v6477 = vpack.c.b16 %v6149, %v6141
    %v6478 = vpack.c.b16 %v6150, %v6142
    %v6479 = vpack.c.b16 %v6151, %v6143
    %v6480 = vpack.c.b16 %v6152, %v6144
    %v6481 = vpack.c.b16 %v6161, %v6153
    %v6482 = vpack.c.b16 %v6162, %v6154
    %v6483 = vpack.c.b16 %v6163, %v6155
    %v6484 = vpack.c.b16 %v6164, %v6156
    %v6485 = vpack.c.b16 %v6165, %v6157
    %v6486 = vpack.c.b16 %v6166, %v6158
    %v6487 = vpack.c.b16 %v6167, %v6159
    %v6488 = vpack.c.b16 %v6168, %v6160
    %v6489 = vpack.c.b16 %v6177, %v6169
    %v6490 = vpack.c.b16 %v6178, %v6170
    %v6491 = vpack.c.b16 %v6179, %v6171
    %v6492 = vpack.c.b16 %v6180, %v6172
    %v6493 = vpack.c.b16 %v6181, %v6173
    %v6494 = vpack.c.b16 %v6182, %v6174
    %v6495 = vpack.c.b16 %v6183, %v6175
    %v6496 = vpack.c.b16 %v6184, %v6176
    %v6497 = vpack.c.b16 %v6193, %v6185
    %v6498 = vpack.c.b16 %v6194, %v6186
    %v6499 = vpack.c.b16 %v6195, %v6187
    %v6500 = vpack.c.b16 %v6196, %v6188
    %v6501 = vpack.c.b16 %v6197, %v6189
    %v6502 = vpack.c.b16 %v6198, %v6190
    %v6503 = vpack.c.b16 %v6199, %v6191
    %v6504 = vpack.c.b16 %v6200, %v6192
    %v6505 = vpack.c.b16 %v6209, %v6201
    %v6506 = vpack.c.b16 %v6210, %v6202
    %v6507 = vpack.c.b16 %v6211, %v6203
    %v6508 = vpack.c.b16 %v6212, %v6204
    %v6509 = vpack.c.b16 %v6213, %v6205
    %v6510 = vpack.c.b16 %v6214, %v6206
    %v6511 = vpack.c.b16 %v6215, %v6207
    %v6512 = vpack.c.b16 %v6216, %v6208
    %v6513 = vpack.c.b16 %v6225, %v6217
    %v6514 = vpack.c.b16 %v6226, %v6218
    %v6515 = vpack.c.b16 %v6227, %v6219
    %v6516 = vpack.c.b16 %v6228, %v6220
    %v6517 = vpack.c.b16 %v6229, %v6221
    %v6518 = vpack.c.b16 %v6230, %v6222
    %v6519 = vpack.c.b16 %v6231, %v6223
    %v6520 = vpack.c.b16 %v6232, %v6224
    %v6521 = vpack.c.b16 %v6241, %v6233
    %v6522 = vpack.c.b16 %v6242, %v6234
    %v6523 = vpack.c.b16 %v6243, %v6235
    %v6524 = vpack.c.b16 %v6244, %v6236
    %v6525 = vpack.c.b16 %v6245, %v6237
    %v6526 = vpack.c.b16 %v6246, %v6238
    %v6527 = vpack.c.b16 %v6247, %v6239
    %v6528 = vpack.c.b16 %v6248, %v6240
    %v6529 = vpack.c.b16 %v6257, %v6249
    %v6530 = vpack.c.b16 %v6258, %v6250
    %v6531 = vpack.c.b16 %v6259, %v6251
    %v6532 = vpack.c.b16 %v6260, %v6252
    %v6533 = vpack.c.b16 %v6261, %v6253
    %v6534 = vpack.c.b16 %v6262, %v6254
    %v6535 = vpack.c.b16 %v6263, %v6255
    %v6536 = vpack.c.b16 %v6264, %v6256
    %v6537 = vpack.c.b16 %v6273, %v6265
    %v6538 = vpack.c.b16 %v6274, %v6266
    %v6539 = vpack.c.b16 %v6275, %v6267
    %v6540 = vpack.c.b16 %v6276, %v6268
    %v6541 = vpack.c.b16 %v6277, %v6269
    %v6542 = vpack.c.b16 %v6278, %v6270
    %v6543 = vpack.c.b16 %v6279, %v6271
    %v6544 = vpack.c.b16 %v6280, %v6272
    %v6545 = vpack.c.b16 %v6289, %v6281
    %v6546 = vpack.c.b16 %v6290, %v6282
    %v6547 = vpack.c.b16 %v6291, %v6283
    %v6548 = vpack.c.b16 %v6292, %v6284
    %v6549 = vpack.c.b16 %v6293, %v6285
    %v6550 = vpack.c.b16 %v6294, %v6286
    %v6551 = vpack.c.b16 %v6295, %v6287
    %v6552 = vpack.c.b16 %v6296, %v6288
    %6809 = vmatprep.subr.bf16.mxu0 %v6298
    %6810 = vmatpush1.bf16.msra.mxu0 %v6297
    %6811 = vmatprep.subr.bf16.mxu0 %v6306
    %6812 = vmatpush1.bf16.msra.mxu0 %v6305
    %6813 = vmatprep.subr.bf16.mxu0 %v6314
    %6814 = vmatpush1.bf16.msra.mxu0 %v6313
    %6815 = vmatprep.subr.bf16.mxu0 %v6322
    %6816 = vmatpush1.bf16.msra.mxu0 %v6321
    %6817 = vmatprep.subr.bf16.mxu0 %v6330
    %6818 = vmatpush1.bf16.msra.mxu0 %v6329
    %6819 = vmatprep.subr.bf16.mxu0 %v6338
    %6820 = vmatpush1.bf16.msra.mxu0 %v6337
    %6821 = vmatprep.subr.bf16.mxu0 %v6346
    %6822 = vmatpush1.bf16.msra.mxu0 %v6345
    %6823 = vmatprep.subr.bf16.mxu0 %v6354
    %6824 = vmatpush1.bf16.msra.mxu0 %v6353
    %6825 = vmatprep.subr.bf16.mxu0 %v6362
    %6826 = vmatpush1.bf16.msra.mxu0 %v6361
    %6827 = vmatprep.subr.bf16.mxu0 %v6370
    %6828 = vmatpush1.bf16.msra.mxu0 %v6369
    %6829 = vmatprep.subr.bf16.mxu0 %v6378
    %6830 = vmatpush1.bf16.msra.mxu0 %v6377
    %6831 = vmatprep.subr.bf16.mxu0 %v6386
    %6832 = vmatpush1.bf16.msra.mxu0 %v6385
    %6833 = vmatprep.subr.bf16.mxu0 %v6394
    %6834 = vmatpush1.bf16.msra.mxu0 %v6393
    %6835 = vmatprep.subr.bf16.mxu0 %v6402
    %6836 = vmatpush1.bf16.msra.mxu0 %v6401
    %6837 = vmatprep.subr.bf16.mxu0 %v6410
    %6838 = vmatpush1.bf16.msra.mxu0 %v6409
    %6839 = vmatprep.subr.bf16.mxu0 %v6418
    %6840 = vmatpush1.bf16.msra.mxu0 %v6417
    %6841 = vmatprep.mubr.bf16.mxu0 %v5228
    %6842 = vmatmul.mubr.bf16.gmra.mrb[0].mxu0 %v5227
    %v6843 = vpop.f32.mrb[0].mxu0
    %v6844 = vadd.f32 %v5492, %v6843
    %v6845 = vpop.f32.mrb[0].mxu0
    %v6846 = vadd.f32 %v5496, %v6845
    %v6847 = vpop.f32.mrb[0].mxu0
    %v6848 = vpop.f32.mrb[0].mxu0
    %6849 = vdwg.mxu0
    %6850 = vmatprep.subr.bf16.mxu0 %v6426
    %6851 = vmatpush1.bf16.msra.mxu0 %v6425
    %6852 = vmatprep.subr.bf16.mxu0 %v6434
    %6853 = vmatpush1.bf16.msra.mxu0 %v6433
    %6854 = vmatprep.subr.bf16.mxu0 %v6442
    %6855 = vmatpush1.bf16.msra.mxu0 %v6441
    %6856 = vmatprep.subr.bf16.mxu0 %v6450
    %6857 = vmatpush1.bf16.msra.mxu0 %v6449
    %6858 = vmatprep.subr.bf16.mxu0 %v6458
    %6859 = vmatpush1.bf16.msra.mxu0 %v6457
    %6860 = vmatprep.subr.bf16.mxu0 %v6466
    %6861 = vmatpush1.bf16.msra.mxu0 %v6465
    %6862 = vmatprep.subr.bf16.mxu0 %v6474
    %6863 = vmatpush1.bf16.msra.mxu0 %v6473
    %6864 = vmatprep.subr.bf16.mxu0 %v6482
    %6865 = vmatpush1.bf16.msra.mxu0 %v6481
    %6866 = vmatprep.subr.bf16.mxu0 %v6490
    %6867 = vmatpush1.bf16.msra.mxu0 %v6489
    %6868 = vmatprep.subr.bf16.mxu0 %v6498
    %6869 = vmatpush1.bf16.msra.mxu0 %v6497
    %6870 = vmatprep.subr.bf16.mxu0 %v6506
    %6871 = vmatpush1.bf16.msra.mxu0 %v6505
    %6872 = vmatprep.subr.bf16.mxu0 %v6514
    %6873 = vmatpush1.bf16.msra.mxu0 %v6513
    %6874 = vmatprep.subr.bf16.mxu0 %v6522
    %6875 = vmatpush1.bf16.msra.mxu0 %v6521
    %6876 = vmatprep.subr.bf16.mxu0 %v6530
    %6877 = vmatpush1.bf16.msra.mxu0 %v6529
    %6878 = vmatprep.subr.bf16.mxu0 %v6538
    %6879 = vmatpush1.bf16.msra.mxu0 %v6537
    %6880 = vmatprep.subr.bf16.mxu0 %v6546
    %6881 = vmatpush1.bf16.msra.mxu0 %v6545
    %6882 = vmatprep.mubr.bf16.mxu0 %v5230
    %6883 = vmatmul.mubr.bf16.gmra.mrb[0].mxu0 %v5229
    %v6884 = vpop.f32.mrb[0].mxu0
    %v6885 = vadd.f32 %v6844, %v6884
    %v6886 = vpop.f32.mrb[0].mxu0
    %v6887 = vadd.f32 %v6846, %v6886
    %v6888 = vpop.f32.mrb[0].mxu0
    %v6889 = vpop.f32.mrb[0].mxu0
    %6890 = vdwg.mxu0
    %6891 = vmatprep.subr.bf16.mxu0 %v6300
    %6892 = vmatpush1.bf16.msra.mxu0 %v6299
    %6893 = vmatprep.subr.bf16.mxu0 %v6308
    %6894 = vmatpush1.bf16.msra.mxu0 %v6307
    %6895 = vmatprep.subr.bf16.mxu0 %v6316
    %6896 = vmatpush1.bf16.msra.mxu0 %v6315
    %6897 = vmatprep.subr.bf16.mxu0 %v6324
    %6898 = vmatpush1.bf16.msra.mxu0 %v6323
    %6899 = vmatprep.subr.bf16.mxu0 %v6332
    %6900 = vmatpush1.bf16.msra.mxu0 %v6331
    %6901 = vmatprep.subr.bf16.mxu0 %v6340
    %6902 = vmatpush1.bf16.msra.mxu0 %v6339
    %6903 = vmatprep.subr.bf16.mxu0 %v6348
    %6904 = vmatpush1.bf16.msra.mxu0 %v6347
    %6905 = vmatprep.subr.bf16.mxu0 %v6356
    %6906 = vmatpush1.bf16.msra.mxu0 %v6355
    %6907 = vmatprep.subr.bf16.mxu0 %v6364
    %6908 = vmatpush1.bf16.msra.mxu0 %v6363
    %6909 = vmatprep.subr.bf16.mxu0 %v6372
    %6910 = vmatpush1.bf16.msra.mxu0 %v6371
    %6911 = vmatprep.subr.bf16.mxu0 %v6380
    %6912 = vmatpush1.bf16.msra.mxu0 %v6379
    %6913 = vmatprep.subr.bf16.mxu0 %v6388
    %6914 = vmatpush1.bf16.msra.mxu0 %v6387
    %6915 = vmatprep.subr.bf16.mxu0 %v6396
    %6916 = vmatpush1.bf16.msra.mxu0 %v6395
    %6917 = vmatprep.subr.bf16.mxu0 %v6404
    %6918 = vmatpush1.bf16.msra.mxu0 %v6403
    %6919 = vmatprep.subr.bf16.mxu0 %v6412
    %6920 = vmatpush1.bf16.msra.mxu0 %v6411
    %6921 = vmatprep.subr.bf16.mxu0 %v6420
    %6922 = vmatpush1.bf16.msra.mxu0 %v6419
    %6923 = vmatprep.mubr.bf16.mxu0 %v5228
    %6924 = vmatmul.mubr.bf16.gmra.mrb[0].mxu0 %v5227
    %v6925 = vpop.f32.mrb[0].mxu0
    %v6926 = vadd.f32 %v5500, %v6925
    %v6927 = vpop.f32.mrb[0].mxu0
    %v6928 = vadd.f32 %v5504, %v6927
    %v6929 = vpop.f32.mrb[0].mxu0
    %v6930 = vpop.f32.mrb[0].mxu0
    %6931 = vdwg.mxu0
    %6932 = vmatprep.subr.bf16.mxu0 %v6428
    %6933 = vmatpush1.bf16.msra.mxu0 %v6427
    %6934 = vmatprep.subr.bf16.mxu0 %v6436
    %6935 = vmatpush1.bf16.msra.mxu0 %v6435
    %6936 = vmatprep.subr.bf16.mxu0 %v6444
    %6937 = vmatpush1.bf16.msra.mxu0 %v6443
    %6938 = vmatprep.subr.bf16.mxu0 %v6452
    %6939 = vmatpush1.bf16.msra.mxu0 %v6451
    %6940 = vmatprep.subr.bf16.mxu0 %v6460
    %6941 = vmatpush1.bf16.msra.mxu0 %v6459
    %6942 = vmatprep.subr.bf16.mxu0 %v6468
    %6943 = vmatpush1.bf16.msra.mxu0 %v6467
    %6944 = vmatprep.subr.bf16.mxu0 %v6476
    %6945 = vmatpush1.bf16.msra.mxu0 %v6475
    %6946 = vmatprep.subr.bf16.mxu0 %v6484
    %6947 = vmatpush1.bf16.msra.mxu0 %v6483
    %6948 = vmatprep.subr.bf16.mxu0 %v6492
    %6949 = vmatpush1.bf16.msra.mxu0 %v6491
    %6950 = vmatprep.subr.bf16.mxu0 %v6500
    %6951 = vmatpush1.bf16.msra.mxu0 %v6499
    %6952 = vmatprep.subr.bf16.mxu0 %v6508
    %6953 = vmatpush1.bf16.msra.mxu0 %v6507
    %6954 = vmatprep.subr.bf16.mxu0 %v6516
    %6955 = vmatpush1.bf16.msra.mxu0 %v6515
    %6956 = vmatprep.subr.bf16.mxu0 %v6524
    %6957 = vmatpush1.bf16.msra.mxu0 %v6523
    %6958 = vmatprep.subr.bf16.mxu0 %v6532
    %6959 = vmatpush1.bf16.msra.mxu0 %v6531
    %6960 = vmatprep.subr.bf16.mxu0 %v6540
    %6961 = vmatpush1.bf16.msra.mxu0 %v6539
    %6962 = vmatprep.subr.bf16.mxu0 %v6548
    %6963 = vmatpush1.bf16.msra.mxu0 %v6547
    %6964 = vmatprep.mubr.bf16.mxu0 %v5230
    %6965 = vmatmul.mubr.bf16.gmra.mrb[0].mxu0 %v5229
    %v6966 = vpop.f32.mrb[0].mxu0
    %v6967 = vadd.f32 %v6926, %v6966
    %v6968 = vpop.f32.mrb[0].mxu0
    %v6969 = vadd.f32 %v6928, %v6968
    %v6970 = vpop.f32.mrb[0].mxu0
    %v6971 = vpop.f32.mrb[0].mxu0
    %6972 = vdwg.mxu0
    %6973 = vmatprep.subr.bf16.mxu0 %v6302
    %6974 = vmatpush1.bf16.msra.mxu0 %v6301
    %6975 = vmatprep.subr.bf16.mxu0 %v6310
    %6976 = vmatpush1.bf16.msra.mxu0 %v6309
    %6977 = vmatprep.subr.bf16.mxu0 %v6318
    %6978 = vmatpush1.bf16.msra.mxu0 %v6317
    %6979 = vmatprep.subr.bf16.mxu0 %v6326
    %6980 = vmatpush1.bf16.msra.mxu0 %v6325
    %6981 = vmatprep.subr.bf16.mxu0 %v6334
    %6982 = vmatpush1.bf16.msra.mxu0 %v6333
    %6983 = vmatprep.subr.bf16.mxu0 %v6342
    %6984 = vmatpush1.bf16.msra.mxu0 %v6341
    %6985 = vmatprep.subr.bf16.mxu0 %v6350
    %6986 = vmatpush1.bf16.msra.mxu0 %v6349
    %6987 = vmatprep.subr.bf16.mxu0 %v6358
    %6988 = vmatpush1.bf16.msra.mxu0 %v6357
    %6989 = vmatprep.subr.bf16.mxu0 %v6366
    %6990 = vmatpush1.bf16.msra.mxu0 %v6365
    %6991 = vmatprep.subr.bf16.mxu0 %v6374
    %6992 = vmatpush1.bf16.msra.mxu0 %v6373
    %6993 = vmatprep.subr.bf16.mxu0 %v6382
    %6994 = vmatpush1.bf16.msra.mxu0 %v6381
    %6995 = vmatprep.subr.bf16.mxu0 %v6390
    %6996 = vmatpush1.bf16.msra.mxu0 %v6389
    %6997 = vmatprep.subr.bf16.mxu0 %v6398
    %6998 = vmatpush1.bf16.msra.mxu0 %v6397
    %6999 = vmatprep.subr.bf16.mxu0 %v6406
    %7000 = vmatpush1.bf16.msra.mxu0 %v6405
    %7001 = vmatprep.subr.bf16.mxu0 %v6414
    %7002 = vmatpush1.bf16.msra.mxu0 %v6413
    %7003 = vmatprep.subr.bf16.mxu0 %v6422
    %7004 = vmatpush1.bf16.msra.mxu0 %v6421
    %7005 = vmatprep.mubr.bf16.mxu0 %v5228
    %7006 = vmatmul.mubr.bf16.gmra.mrb[0].mxu0 %v5227
    %v7007 = vpop.f32.mrb[0].mxu0
    %v7008 = vadd.f32 %v5508, %v7007
    %v7009 = vpop.f32.mrb[0].mxu0
    %v7010 = vadd.f32 %v5512, %v7009
    %v7011 = vpop.f32.mrb[0].mxu0
    %v7012 = vpop.f32.mrb[0].mxu0
    %7013 = vdwg.mxu0
    %7014 = vmatprep.subr.bf16.mxu0 %v6430
    %7015 = vmatpush1.bf16.msra.mxu0 %v6429
    %7016 = vmatprep.subr.bf16.mxu0 %v6438
    %7017 = vmatpush1.bf16.msra.mxu0 %v6437
    %7018 = vmatprep.subr.bf16.mxu0 %v6446
    %7019 = vmatpush1.bf16.msra.mxu0 %v6445
    %7020 = vmatprep.subr.bf16.mxu0 %v6454
    %7021 = vmatpush1.bf16.msra.mxu0 %v6453
    %7022 = vmatprep.subr.bf16.mxu0 %v6462
    %7023 = vmatpush1.bf16.msra.mxu0 %v6461
    %7024 = vmatprep.subr.bf16.mxu0 %v6470
    %7025 = vmatpush1.bf16.msra.mxu0 %v6469
    %7026 = vmatprep.subr.bf16.mxu0 %v6478
    %7027 = vmatpush1.bf16.msra.mxu0 %v6477
    %7028 = vmatprep.subr.bf16.mxu0 %v6486
    %7029 = vmatpush1.bf16.msra.mxu0 %v6485
    %7030 = vmatprep.subr.bf16.mxu0 %v6494
    %7031 = vmatpush1.bf16.msra.mxu0 %v6493
    %7032 = vmatprep.subr.bf16.mxu0 %v6502
    %7033 = vmatpush1.bf16.msra.mxu0 %v6501
    %7034 = vmatprep.subr.bf16.mxu0 %v6510
    %7035 = vmatpush1.bf16.msra.mxu0 %v6509
    %7036 = vmatprep.subr.bf16.mxu0 %v6518
    %7037 = vmatpush1.bf16.msra.mxu0 %v6517
    %7038 = vmatprep.subr.bf16.mxu0 %v6526
    %7039 = vmatpush1.bf16.msra.mxu0 %v6525
    %7040 = vmatprep.subr.bf16.mxu0 %v6534
    %7041 = vmatpush1.bf16.msra.mxu0 %v6533
    %7042 = vmatprep.subr.bf16.mxu0 %v6542
    %7043 = vmatpush1.bf16.msra.mxu0 %v6541
    %7044 = vmatprep.subr.bf16.mxu0 %v6550
    %7045 = vmatpush1.bf16.msra.mxu0 %v6549
    %7046 = vmatprep.mubr.bf16.mxu0 %v5230
    %7047 = vmatmul.mubr.bf16.gmra.mrb[0].mxu0 %v5229
    %v7048 = vpop.f32.mrb[0].mxu0
    %v7049 = vadd.f32 %v7008, %v7048
    %v7050 = vpop.f32.mrb[0].mxu0
    %v7051 = vadd.f32 %v7010, %v7050
    %v7052 = vpop.f32.mrb[0].mxu0
    %v7053 = vpop.f32.mrb[0].mxu0
    %7054 = vdwg.mxu0
    %7055 = vmatprep.subr.bf16.mxu0 %v6304
    %7056 = vmatpush1.bf16.msra.mxu0 %v6303
    %7057 = vmatprep.subr.bf16.mxu0 %v6312
    %7058 = vmatpush1.bf16.msra.mxu0 %v6311
    %7059 = vmatprep.subr.bf16.mxu0 %v6320
    %7060 = vmatpush1.bf16.msra.mxu0 %v6319
    %7061 = vmatprep.subr.bf16.mxu0 %v6328
    %7062 = vmatpush1.bf16.msra.mxu0 %v6327
    %7063 = vmatprep.subr.bf16.mxu0 %v6336
    %7064 = vmatpush1.bf16.msra.mxu0 %v6335
    %7065 = vmatprep.subr.bf16.mxu0 %v6344
    %7066 = vmatpush1.bf16.msra.mxu0 %v6343
    %7067 = vmatprep.subr.bf16.mxu0 %v6352
    %7068 = vmatpush1.bf16.msra.mxu0 %v6351
    %7069 = vmatprep.subr.bf16.mxu0 %v6360
    %7070 = vmatpush1.bf16.msra.mxu0 %v6359
    %7071 = vmatprep.subr.bf16.mxu0 %v6368
    %7072 = vmatpush1.bf16.msra.mxu0 %v6367
    %7073 = vmatprep.subr.bf16.mxu0 %v6376
    %7074 = vmatpush1.bf16.msra.mxu0 %v6375
    %7075 = vmatprep.subr.bf16.mxu0 %v6384
    %7076 = vmatpush1.bf16.msra.mxu0 %v6383
    %7077 = vmatprep.subr.bf16.mxu0 %v6392
    %7078 = vmatpush1.bf16.msra.mxu0 %v6391
    %7079 = vmatprep.subr.bf16.mxu0 %v6400
    %7080 = vmatpush1.bf16.msra.mxu0 %v6399
    %7081 = vmatprep.subr.bf16.mxu0 %v6408
    %7082 = vmatpush1.bf16.msra.mxu0 %v6407
    %7083 = vmatprep.subr.bf16.mxu0 %v6416
    %7084 = vmatpush1.bf16.msra.mxu0 %v6415
    %7085 = vmatprep.subr.bf16.mxu0 %v6424
    %7086 = vmatpush1.bf16.msra.mxu0 %v6423
    %7087 = vmatprep.mubr.bf16.mxu0 %v5228
    %7088 = vmatmul.mubr.bf16.gmra.mrb[0].mxu0 %v5227
    %v7089 = vpop.f32.mrb[0].mxu0
    %v7090 = vadd.f32 %v5516, %v7089
    %v7091 = vpop.f32.mrb[0].mxu0
    %v7092 = vadd.f32 %v5520, %v7091
    %v7093 = vpop.f32.mrb[0].mxu0
    %v7094 = vpop.f32.mrb[0].mxu0
    %7095 = vdwg.mxu0
    %7096 = vmatprep.subr.bf16.mxu0 %v6432
    %7097 = vmatpush1.bf16.msra.mxu0 %v6431
    %7098 = vmatprep.subr.bf16.mxu0 %v6440
    %7099 = vmatpush1.bf16.msra.mxu0 %v6439
    %7100 = vmatprep.subr.bf16.mxu0 %v6448
    %7101 = vmatpush1.bf16.msra.mxu0 %v6447
    %7102 = vmatprep.subr.bf16.mxu0 %v6456
    %7103 = vmatpush1.bf16.msra.mxu0 %v6455
    %7104 = vmatprep.subr.bf16.mxu0 %v6464
    %7105 = vmatpush1.bf16.msra.mxu0 %v6463
    %7106 = vmatprep.subr.bf16.mxu0 %v6472
    %7107 = vmatpush1.bf16.msra.mxu0 %v6471
    %7108 = vmatprep.subr.bf16.mxu0 %v6480
    %7109 = vmatpush1.bf16.msra.mxu0 %v6479
    %7110 = vmatprep.subr.bf16.mxu0 %v6488
    %7111 = vmatpush1.bf16.msra.mxu0 %v6487
    %7112 = vmatprep.subr.bf16.mxu0 %v6496
    %7113 = vmatpush1.bf16.msra.mxu0 %v6495
    %7114 = vmatprep.subr.bf16.mxu0 %v6504
    %7115 = vmatpush1.bf16.msra.mxu0 %v6503
    %7116 = vmatprep.subr.bf16.mxu0 %v6512
    %7117 = vmatpush1.bf16.msra.mxu0 %v6511
    %7118 = vmatprep.subr.bf16.mxu0 %v6520
    %7119 = vmatpush1.bf16.msra.mxu0 %v6519
    %7120 = vmatprep.subr.bf16.mxu0 %v6528
    %7121 = vmatpush1.bf16.msra.mxu0 %v6527
    %7122 = vmatprep.subr.bf16.mxu0 %v6536
    %7123 = vmatpush1.bf16.msra.mxu0 %v6535
    %7124 = vmatprep.subr.bf16.mxu0 %v6544
    %7125 = vmatpush1.bf16.msra.mxu0 %v6543
    %7126 = vmatprep.subr.bf16.mxu0 %v6552
    %7127 = vmatpush1.bf16.msra.mxu0 %v6551
    %7128 = vmatprep.mubr.bf16.mxu0 %v5230
    %7129 = vmatmul.mubr.bf16.gmra.mrb[0].mxu0 %v5229
    %v7130 = vpop.f32.mrb[0].mxu0
    %v7131 = vadd.f32 %v7090, %v7130
    %v7132 = vpop.f32.mrb[0].mxu0
    %v7133 = vadd.f32 %v7092, %v7132
    %v7134 = vpop.f32.mrb[0].mxu0
    %v7135 = vpop.f32.mrb[0].mxu0
    %7136 = vdwg.mxu0
    %v7137 = vmax.f32 %v6885, 0.0
    %v7138 = vmax.f32 %v6887, 0.0
    %v7139 = vmax.f32 %v6967, 0.0
    %v7140 = vmax.f32 %v6969, 0.0
    %v7141 = vmax.f32 %v7049, 0.0
    %v7142 = vmax.f32 %v7051, 0.0
    %v7143 = vmax.f32 %v7131, 0.0
    %v7144 = vmax.f32 %v7133, 0.0
    %v7145 = vpack.c.bf16 %v7137, %v7137
    %v7146 = vpack.c.bf16 %v7138, %v7138
    %v7147 = vpack.c.bf16 %v7139, %v7139
    %v7148 = vpack.c.bf16 %v7140, %v7140
    %v7149 = vpack.c.bf16 %v7141, %v7141
    %v7150 = vpack.c.bf16 %v7142, %v7142
    %v7151 = vpack.c.bf16 %v7143, %v7143
    %v7152 = vpack.c.bf16 %v7144, %v7144
    %v7153 = vld [vmem:[#allocation11] sm:$0xff]
    %v7154 = vld [vmem:[#allocation11 + $0x8] sm:$0xff]
    %v7155 = vld [vmem:[#allocation11 + $0x10] sm:$0xff]
    %v7156 = vld [vmem:[#allocation11 + $0x18] sm:$0xff]
    %v7157 = vld [vmem:[#allocation11 + $0x20] sm:$0xff]
    %v7158 = vld [vmem:[#allocation11 + $0x28] sm:$0xff]
    %v7159 = vld [vmem:[#allocation11 + $0x30] sm:$0xff]
    %v7160 = vld [vmem:[#allocation11 + $0x38] sm:$0xff]
    %v7161 = vld [vmem:[#allocation11 + $0x40] sm:$0xff]
    %v7162 = vld [vmem:[#allocation11 + $0x48] sm:$0xff]
    %v7163 = vld [vmem:[#allocation11 + $0x50] sm:$0xff]
    %v7164 = vld [vmem:[#allocation11 + $0x58] sm:$0xff]
    %v7165 = vld [vmem:[#allocation11 + $0x60] sm:$0xff]
    %v7166 = vld [vmem:[#allocation11 + $0x68] sm:$0xff]
    %v7167 = vld [vmem:[#allocation11 + $0x70] sm:$0xff]
    %v7168 = vld [vmem:[#allocation11 + $0x78] sm:$0xff]
    %v7169 = vld [vmem:[#allocation11 + $0x80] sm:$0xff]
    %v7170 = vld [vmem:[#allocation11 + $0x88] sm:$0xff]
    %v7171 = vld [vmem:[#allocation11 + $0x90] sm:$0xff]
    %v7172 = vld [vmem:[#allocation11 + $0x98] sm:$0xff]
    %v7173 = vld [vmem:[#allocation11 + $0xa0] sm:$0xff]
    %v7174 = vld [vmem:[#allocation11 + $0xa8] sm:$0xff]
    %v7175 = vld [vmem:[#allocation11 + $0xb0] sm:$0xff]
    %v7176 = vld [vmem:[#allocation11 + $0xb8] sm:$0xff]
    %v7177 = vld [vmem:[#allocation11 + $0xc0] sm:$0xff]
    %v7178 = vld [vmem:[#allocation11 + $0xc8] sm:$0xff]
    %v7179 = vld [vmem:[#allocation11 + $0xd0] sm:$0xff]
    %v7180 = vld [vmem:[#allocation11 + $0xd8] sm:$0xff]
    %v7181 = vld [vmem:[#allocation11 + $0xe0] sm:$0xff]
    %v7182 = vld [vmem:[#allocation11 + $0xe8] sm:$0xff]
    %v7183 = vld [vmem:[#allocation11 + $0xf0] sm:$0xff]
    %v7184 = vld [vmem:[#allocation11 + $0xf8] sm:$0xff]
    %v7185 = vld [vmem:[#allocation11 + $0x100] sm:$0xff]
    %v7186 = vld [vmem:[#allocation11 + $0x108] sm:$0xff]
    %v7187 = vld [vmem:[#allocation11 + $0x110] sm:$0xff]
    %v7188 = vld [vmem:[#allocation11 + $0x118] sm:$0xff]
    %v7189 = vld [vmem:[#allocation11 + $0x120] sm:$0xff]
    %v7190 = vld [vmem:[#allocation11 + $0x128] sm:$0xff]
    %v7191 = vld [vmem:[#allocation11 + $0x130] sm:$0xff]
    %v7192 = vld [vmem:[#allocation11 + $0x138] sm:$0xff]
    %v7193 = vld [vmem:[#allocation11 + $0x140] sm:$0xff]
    %v7194 = vld [vmem:[#allocation11 + $0x148] sm:$0xff]
    %v7195 = vld [vmem:[#allocation11 + $0x150] sm:$0xff]
    %v7196 = vld [vmem:[#allocation11 + $0x158] sm:$0xff]
    %v7197 = vld [vmem:[#allocation11 + $0x160] sm:$0xff]
    %v7198 = vld [vmem:[#allocation11 + $0x168] sm:$0xff]
    %v7199 = vld [vmem:[#allocation11 + $0x170] sm:$0xff]
    %v7200 = vld [vmem:[#allocation11 + $0x178] sm:$0xff]
    %v7201 = vld [vmem:[#allocation11 + $0x180] sm:$0xff]
    %v7202 = vld [vmem:[#allocation11 + $0x188] sm:$0xff]
    %v7203 = vld [vmem:[#allocation11 + $0x190] sm:$0xff]
    %v7204 = vld [vmem:[#allocation11 + $0x198] sm:$0xff]
    %v7205 = vld [vmem:[#allocation11 + $0x1a0] sm:$0xff]
    %v7206 = vld [vmem:[#allocation11 + $0x1a8] sm:$0xff]
    %v7207 = vld [vmem:[#allocation11 + $0x1b0] sm:$0xff]
    %v7208 = vld [vmem:[#allocation11 + $0x1b8] sm:$0xff]
    %v7209 = vld [vmem:[#allocation11 + $0x1c0] sm:$0xff]
    %v7210 = vld [vmem:[#allocation11 + $0x1c8] sm:$0xff]
    %v7211 = vld [vmem:[#allocation11 + $0x1d0] sm:$0xff]
    %v7212 = vld [vmem:[#allocation11 + $0x1d8] sm:$0xff]
    %v7213 = vld [vmem:[#allocation11 + $0x1e0] sm:$0xff]
    %v7214 = vld [vmem:[#allocation11 + $0x1e8] sm:$0xff]
    %v7215 = vld [vmem:[#allocation11 + $0x1f0] sm:$0xff]
    %v7216 = vld [vmem:[#allocation11 + $0x1f8] sm:$0xff]
    %v7217 = vld [vmem:[#allocation11 + $0x200] sm:$0xff]
    %v7218 = vld [vmem:[#allocation11 + $0x208] sm:$0xff]
    %v7219 = vld [vmem:[#allocation11 + $0x210] sm:$0xff]
    %v7220 = vld [vmem:[#allocation11 + $0x218] sm:$0xff]
    %v7221 = vld [vmem:[#allocation11 + $0x220] sm:$0xff]
    %v7222 = vld [vmem:[#allocation11 + $0x228] sm:$0xff]
    %v7223 = vld [vmem:[#allocation11 + $0x230] sm:$0xff]
    %v7224 = vld [vmem:[#allocation11 + $0x238] sm:$0xff]
    %v7225 = vld [vmem:[#allocation11 + $0x240] sm:$0xff]
    %v7226 = vld [vmem:[#allocation11 + $0x248] sm:$0xff]
    %v7227 = vld [vmem:[#allocation11 + $0x250] sm:$0xff]
    %v7228 = vld [vmem:[#allocation11 + $0x258] sm:$0xff]
    %v7229 = vld [vmem:[#allocation11 + $0x260] sm:$0xff]
    %v7230 = vld [vmem:[#allocation11 + $0x268] sm:$0xff]
    %v7231 = vld [vmem:[#allocation11 + $0x270] sm:$0xff]
    %v7232 = vld [vmem:[#allocation11 + $0x278] sm:$0xff]
    %v7233 = vld [vmem:[#allocation11 + $0x280] sm:$0xff]
    %v7234 = vld [vmem:[#allocation11 + $0x288] sm:$0xff]
    %v7235 = vld [vmem:[#allocation11 + $0x290] sm:$0xff]
    %v7236 = vld [vmem:[#allocation11 + $0x298] sm:$0xff]
    %v7237 = vld [vmem:[#allocation11 + $0x2a0] sm:$0xff]
    %v7238 = vld [vmem:[#allocation11 + $0x2a8] sm:$0xff]
    %v7239 = vld [vmem:[#allocation11 + $0x2b0] sm:$0xff]
    %v7240 = vld [vmem:[#allocation11 + $0x2b8] sm:$0xff]
    %v7241 = vld [vmem:[#allocation11 + $0x2c0] sm:$0xff]
    %v7242 = vld [vmem:[#allocation11 + $0x2c8] sm:$0xff]
    %v7243 = vld [vmem:[#allocation11 + $0x2d0] sm:$0xff]
    %v7244 = vld [vmem:[#allocation11 + $0x2d8] sm:$0xff]
    %v7245 = vld [vmem:[#allocation11 + $0x2e0] sm:$0xff]
    %v7246 = vld [vmem:[#allocation11 + $0x2e8] sm:$0xff]
    %v7247 = vld [vmem:[#allocation11 + $0x2f0] sm:$0xff]
    %v7248 = vld [vmem:[#allocation11 + $0x2f8] sm:$0xff]
    %v7249 = vld [vmem:[#allocation11 + $0x300] sm:$0xff]
    %v7250 = vld [vmem:[#allocation11 + $0x308] sm:$0xff]
    %v7251 = vld [vmem:[#allocation11 + $0x310] sm:$0xff]
    %v7252 = vld [vmem:[#allocation11 + $0x318] sm:$0xff]
    %v7253 = vld [vmem:[#allocation11 + $0x320] sm:$0xff]
    %v7254 = vld [vmem:[#allocation11 + $0x328] sm:$0xff]
    %v7255 = vld [vmem:[#allocation11 + $0x330] sm:$0xff]
    %v7256 = vld [vmem:[#allocation11 + $0x338] sm:$0xff]
    %v7257 = vld [vmem:[#allocation11 + $0x340] sm:$0xff]
    %v7258 = vld [vmem:[#allocation11 + $0x348] sm:$0xff]
    %v7259 = vld [vmem:[#allocation11 + $0x350] sm:$0xff]
    %v7260 = vld [vmem:[#allocation11 + $0x358] sm:$0xff]
    %v7261 = vld [vmem:[#allocation11 + $0x360] sm:$0xff]
    %v7262 = vld [vmem:[#allocation11 + $0x368] sm:$0xff]
    %v7263 = vld [vmem:[#allocation11 + $0x370] sm:$0xff]
    %v7264 = vld [vmem:[#allocation11 + $0x378] sm:$0xff]
    %v7265 = vld [vmem:[#allocation11 + $0x380] sm:$0xff]
    %v7266 = vld [vmem:[#allocation11 + $0x388] sm:$0xff]
    %v7267 = vld [vmem:[#allocation11 + $0x390] sm:$0xff]
    %v7268 = vld [vmem:[#allocation11 + $0x398] sm:$0xff]
    %v7269 = vld [vmem:[#allocation11 + $0x3a0] sm:$0xff]
    %v7270 = vld [vmem:[#allocation11 + $0x3a8] sm:$0xff]
    %v7271 = vld [vmem:[#allocation11 + $0x3b0] sm:$0xff]
    %v7272 = vld [vmem:[#allocation11 + $0x3b8] sm:$0xff]
    %v7273 = vld [vmem:[#allocation11 + $0x3c0] sm:$0xff]
    %v7274 = vld [vmem:[#allocation11 + $0x3c8] sm:$0xff]
    %v7275 = vld [vmem:[#allocation11 + $0x3d0] sm:$0xff]
    %v7276 = vld [vmem:[#allocation11 + $0x3d8] sm:$0xff]
    %v7277 = vld [vmem:[#allocation11 + $0x3e0] sm:$0xff]
    %v7278 = vld [vmem:[#allocation11 + $0x3e8] sm:$0xff]
    %v7279 = vld [vmem:[#allocation11 + $0x3f0] sm:$0xff]
    %v7280 = vld [vmem:[#allocation11 + $0x3f8] sm:$0xff]
    %v7281 = vld [vmem:[#allocation11 + $0x400] sm:$0xff]
    %v7282 = vld [vmem:[#allocation11 + $0x408] sm:$0xff]
    %v7283 = vld [vmem:[#allocation11 + $0x410] sm:$0xff]
    %v7284 = vld [vmem:[#allocation11 + $0x418] sm:$0xff]
    %v7285 = vld [vmem:[#allocation11 + $0x420] sm:$0xff]
    %v7286 = vld [vmem:[#allocation11 + $0x428] sm:$0xff]
    %v7287 = vld [vmem:[#allocation11 + $0x430] sm:$0xff]
    %v7288 = vld [vmem:[#allocation11 + $0x438] sm:$0xff]
    %v7289 = vld [vmem:[#allocation11 + $0x440] sm:$0xff]
    %v7290 = vld [vmem:[#allocation11 + $0x448] sm:$0xff]
    %v7291 = vld [vmem:[#allocation11 + $0x450] sm:$0xff]
    %v7292 = vld [vmem:[#allocation11 + $0x458] sm:$0xff]
    %v7293 = vld [vmem:[#allocation11 + $0x460] sm:$0xff]
    %v7294 = vld [vmem:[#allocation11 + $0x468] sm:$0xff]
    %v7295 = vld [vmem:[#allocation11 + $0x470] sm:$0xff]
    %v7296 = vld [vmem:[#allocation11 + $0x478] sm:$0xff]
    %v7297 = vld [vmem:[#allocation11 + $0x480] sm:$0xff]
    %v7298 = vld [vmem:[#allocation11 + $0x488] sm:$0xff]
    %v7299 = vld [vmem:[#allocation11 + $0x490] sm:$0xff]
    %v7300 = vld [vmem:[#allocation11 + $0x498] sm:$0xff]
    %v7301 = vld [vmem:[#allocation11 + $0x4a0] sm:$0xff]
    %v7302 = vld [vmem:[#allocation11 + $0x4a8] sm:$0xff]
    %v7303 = vld [vmem:[#allocation11 + $0x4b0] sm:$0xff]
    %v7304 = vld [vmem:[#allocation11 + $0x4b8] sm:$0xff]
    %v7305 = vld [vmem:[#allocation11 + $0x4c0] sm:$0xff]
    %v7306 = vld [vmem:[#allocation11 + $0x4c8] sm:$0xff]
    %v7307 = vld [vmem:[#allocation11 + $0x4d0] sm:$0xff]
    %v7308 = vld [vmem:[#allocation11 + $0x4d8] sm:$0xff]
    %v7309 = vld [vmem:[#allocation11 + $0x4e0] sm:$0xff]
    %v7310 = vld [vmem:[#allocation11 + $0x4e8] sm:$0xff]
    %v7311 = vld [vmem:[#allocation11 + $0x4f0] sm:$0xff]
    %v7312 = vld [vmem:[#allocation11 + $0x4f8] sm:$0xff]
    %v7313 = vld [vmem:[#allocation11 + $0x500] sm:$0xff]
    %v7314 = vld [vmem:[#allocation11 + $0x508] sm:$0xff]
    %v7315 = vld [vmem:[#allocation11 + $0x510] sm:$0xff]
    %v7316 = vld [vmem:[#allocation11 + $0x518] sm:$0xff]
    %v7317 = vld [vmem:[#allocation11 + $0x520] sm:$0xff]
    %v7318 = vld [vmem:[#allocation11 + $0x528] sm:$0xff]
    %v7319 = vld [vmem:[#allocation11 + $0x530] sm:$0xff]
    %v7320 = vld [vmem:[#allocation11 + $0x538] sm:$0xff]
    %v7321 = vld [vmem:[#allocation11 + $0x540] sm:$0xff]
    %v7322 = vld [vmem:[#allocation11 + $0x548] sm:$0xff]
    %v7323 = vld [vmem:[#allocation11 + $0x550] sm:$0xff]
    %v7324 = vld [vmem:[#allocation11 + $0x558] sm:$0xff]
    %v7325 = vld [vmem:[#allocation11 + $0x560] sm:$0xff]
    %v7326 = vld [vmem:[#allocation11 + $0x568] sm:$0xff]
    %v7327 = vld [vmem:[#allocation11 + $0x570] sm:$0xff]
    %v7328 = vld [vmem:[#allocation11 + $0x578] sm:$0xff]
    %v7329 = vld [vmem:[#allocation11 + $0x580] sm:$0xff]
    %v7330 = vld [vmem:[#allocation11 + $0x588] sm:$0xff]
    %v7331 = vld [vmem:[#allocation11 + $0x590] sm:$0xff]
    %v7332 = vld [vmem:[#allocation11 + $0x598] sm:$0xff]
    %v7333 = vld [vmem:[#allocation11 + $0x5a0] sm:$0xff]
    %v7334 = vld [vmem:[#allocation11 + $0x5a8] sm:$0xff]
    %v7335 = vld [vmem:[#allocation11 + $0x5b0] sm:$0xff]
    %v7336 = vld [vmem:[#allocation11 + $0x5b8] sm:$0xff]
    %v7337 = vld [vmem:[#allocation11 + $0x5c0] sm:$0xff]
    %v7338 = vld [vmem:[#allocation11 + $0x5c8] sm:$0xff]
    %v7339 = vld [vmem:[#allocation11 + $0x5d0] sm:$0xff]
    %v7340 = vld [vmem:[#allocation11 + $0x5d8] sm:$0xff]
    %v7341 = vld [vmem:[#allocation11 + $0x5e0] sm:$0xff]
    %v7342 = vld [vmem:[#allocation11 + $0x5e8] sm:$0xff]
    %v7343 = vld [vmem:[#allocation11 + $0x5f0] sm:$0xff]
    %v7344 = vld [vmem:[#allocation11 + $0x5f8] sm:$0xff]
    %v7345 = vld [vmem:[#allocation11 + $0x600] sm:$0xff]
    %v7346 = vld [vmem:[#allocation11 + $0x608] sm:$0xff]
    %v7347 = vld [vmem:[#allocation11 + $0x610] sm:$0xff]
    %v7348 = vld [vmem:[#allocation11 + $0x618] sm:$0xff]
    %v7349 = vld [vmem:[#allocation11 + $0x620] sm:$0xff]
    %v7350 = vld [vmem:[#allocation11 + $0x628] sm:$0xff]
    %v7351 = vld [vmem:[#allocation11 + $0x630] sm:$0xff]
    %v7352 = vld [vmem:[#allocation11 + $0x638] sm:$0xff]
    %v7353 = vld [vmem:[#allocation11 + $0x640] sm:$0xff]
    %v7354 = vld [vmem:[#allocation11 + $0x648] sm:$0xff]
    %v7355 = vld [vmem:[#allocation11 + $0x650] sm:$0xff]
    %v7356 = vld [vmem:[#allocation11 + $0x658] sm:$0xff]
    %v7357 = vld [vmem:[#allocation11 + $0x660] sm:$0xff]
    %v7358 = vld [vmem:[#allocation11 + $0x668] sm:$0xff]
    %v7359 = vld [vmem:[#allocation11 + $0x670] sm:$0xff]
    %v7360 = vld [vmem:[#allocation11 + $0x678] sm:$0xff]
    %v7361 = vld [vmem:[#allocation11 + $0x680] sm:$0xff]
    %v7362 = vld [vmem:[#allocation11 + $0x688] sm:$0xff]
    %v7363 = vld [vmem:[#allocation11 + $0x690] sm:$0xff]
    %v7364 = vld [vmem:[#allocation11 + $0x698] sm:$0xff]
    %v7365 = vld [vmem:[#allocation11 + $0x6a0] sm:$0xff]
    %v7366 = vld [vmem:[#allocation11 + $0x6a8] sm:$0xff]
    %v7367 = vld [vmem:[#allocation11 + $0x6b0] sm:$0xff]
    %v7368 = vld [vmem:[#allocation11 + $0x6b8] sm:$0xff]
    %v7369 = vld [vmem:[#allocation11 + $0x6c0] sm:$0xff]
    %v7370 = vld [vmem:[#allocation11 + $0x6c8] sm:$0xff]
    %v7371 = vld [vmem:[#allocation11 + $0x6d0] sm:$0xff]
    %v7372 = vld [vmem:[#allocation11 + $0x6d8] sm:$0xff]
    %v7373 = vld [vmem:[#allocation11 + $0x6e0] sm:$0xff]
    %v7374 = vld [vmem:[#allocation11 + $0x6e8] sm:$0xff]
    %v7375 = vld [vmem:[#allocation11 + $0x6f0] sm:$0xff]
    %v7376 = vld [vmem:[#allocation11 + $0x6f8] sm:$0xff]
    %v7377 = vld [vmem:[#allocation11 + $0x700] sm:$0xff]
    %v7378 = vld [vmem:[#allocation11 + $0x708] sm:$0xff]
    %v7379 = vld [vmem:[#allocation11 + $0x710] sm:$0xff]
    %v7380 = vld [vmem:[#allocation11 + $0x718] sm:$0xff]
    %v7381 = vld [vmem:[#allocation11 + $0x720] sm:$0xff]
    %v7382 = vld [vmem:[#allocation11 + $0x728] sm:$0xff]
    %v7383 = vld [vmem:[#allocation11 + $0x730] sm:$0xff]
    %v7384 = vld [vmem:[#allocation11 + $0x738] sm:$0xff]
    %v7385 = vld [vmem:[#allocation11 + $0x740] sm:$0xff]
    %v7386 = vld [vmem:[#allocation11 + $0x748] sm:$0xff]
    %v7387 = vld [vmem:[#allocation11 + $0x750] sm:$0xff]
    %v7388 = vld [vmem:[#allocation11 + $0x758] sm:$0xff]
    %v7389 = vld [vmem:[#allocation11 + $0x760] sm:$0xff]
    %v7390 = vld [vmem:[#allocation11 + $0x768] sm:$0xff]
    %v7391 = vld [vmem:[#allocation11 + $0x770] sm:$0xff]
    %v7392 = vld [vmem:[#allocation11 + $0x778] sm:$0xff]
    %v7393 = vld [vmem:[#allocation11 + $0x780] sm:$0xff]
    %v7394 = vld [vmem:[#allocation11 + $0x788] sm:$0xff]
    %v7395 = vld [vmem:[#allocation11 + $0x790] sm:$0xff]
    %v7396 = vld [vmem:[#allocation11 + $0x798] sm:$0xff]
    %v7397 = vld [vmem:[#allocation11 + $0x7a0] sm:$0xff]
    %v7398 = vld [vmem:[#allocation11 + $0x7a8] sm:$0xff]
    %v7399 = vld [vmem:[#allocation11 + $0x7b0] sm:$0xff]
    %v7400 = vld [vmem:[#allocation11 + $0x7b8] sm:$0xff]
    %v7401 = vld [vmem:[#allocation11 + $0x7c0] sm:$0xff]
    %v7402 = vld [vmem:[#allocation11 + $0x7c8] sm:$0xff]
    %v7403 = vld [vmem:[#allocation11 + $0x7d0] sm:$0xff]
    %v7404 = vld [vmem:[#allocation11 + $0x7d8] sm:$0xff]
    %v7405 = vld [vmem:[#allocation11 + $0x7e0] sm:$0xff]
    %v7406 = vld [vmem:[#allocation11 + $0x7e8] sm:$0xff]
    %v7407 = vld [vmem:[#allocation11 + $0x7f0] sm:$0xff]
    %v7408 = vld [vmem:[#allocation11 + $0x7f8] sm:$0xff]
    %v7409 = vld [vmem:[%s17] sm:$0xf]
    %v7411 = vlaneseq
    %v7412 = vshrl.u32 %v7411, 7
    %v7413 = vsub.s32 0, %v7412
    %v7414 = vrot.slane %v7409, %v7413
    %v7415 = vlaneseq
    %v7416 = vshrl.u32 %v7415, 7
    %v7417 = vsub.s32 1, %v7416
    %v7418 = vrot.slane %v7409, %v7417
    %v7419 = vlaneseq
    %v7420 = vshrl.u32 %v7419, 7
    %v7421 = vsub.s32 2, %v7420
    %v7422 = vrot.slane %v7409, %v7421
    %v7423 = vlaneseq
    %v7424 = vshrl.u32 %v7423, 7
    %v7425 = vsub.s32 3, %v7424
    %v7426 = vrot.slane %v7409, %v7425
    %v7687 = vunpack.c.l.b16 %v7153
    %v7688 = vunpack.c.h.b16 %v7153
    %v7689 = vunpack.c.l.b16 %v7154
    %v7690 = vunpack.c.h.b16 %v7154
    %v7691 = vunpack.c.l.b16 %v7155
    %v7692 = vunpack.c.h.b16 %v7155
    %v7693 = vunpack.c.l.b16 %v7156
    %v7694 = vunpack.c.h.b16 %v7156
    %v7695 = vunpack.c.l.b16 %v7157
    %v7696 = vunpack.c.h.b16 %v7157
    %v7697 = vunpack.c.l.b16 %v7158
    %v7698 = vunpack.c.h.b16 %v7158
    %v7699 = vunpack.c.l.b16 %v7159
    %v7700 = vunpack.c.h.b16 %v7159
    %v7701 = vunpack.c.l.b16 %v7160
    %v7702 = vunpack.c.h.b16 %v7160
    %v7703 = vunpack.c.l.b16 %v7161
    %v7704 = vunpack.c.h.b16 %v7161
    %v7705 = vunpack.c.l.b16 %v7162
    %v7706 = vunpack.c.h.b16 %v7162
    %v7707 = vunpack.c.l.b16 %v7163
    %v7708 = vunpack.c.h.b16 %v7163
    %v7709 = vunpack.c.l.b16 %v7164
    %v7710 = vunpack.c.h.b16 %v7164
    %v7711 = vunpack.c.l.b16 %v7165
    %v7712 = vunpack.c.h.b16 %v7165
    %v7713 = vunpack.c.l.b16 %v7166
    %v7714 = vunpack.c.h.b16 %v7166
    %v7715 = vunpack.c.l.b16 %v7167
    %v7716 = vunpack.c.h.b16 %v7167
    %v7717 = vunpack.c.l.b16 %v7168
    %v7718 = vunpack.c.h.b16 %v7168
    %v7719 = vunpack.c.l.b16 %v7169
    %v7720 = vunpack.c.h.b16 %v7169
    %v7721 = vunpack.c.l.b16 %v7170
    %v7722 = vunpack.c.h.b16 %v7170
    %v7723 = vunpack.c.l.b16 %v7171
    %v7724 = vunpack.c.h.b16 %v7171
    %v7725 = vunpack.c.l.b16 %v7172
    %v7726 = vunpack.c.h.b16 %v7172
    %v7727 = vunpack.c.l.b16 %v7173
    %v7728 = vunpack.c.h.b16 %v7173
    %v7729 = vunpack.c.l.b16 %v7174
    %v7730 = vunpack.c.h.b16 %v7174
    %v7731 = vunpack.c.l.b16 %v7175
    %v7732 = vunpack.c.h.b16 %v7175
    %v7733 = vunpack.c.l.b16 %v7176
    %v7734 = vunpack.c.h.b16 %v7176
    %v7735 = vunpack.c.l.b16 %v7177
    %v7736 = vunpack.c.h.b16 %v7177
    %v7737 = vunpack.c.l.b16 %v7178
    %v7738 = vunpack.c.h.b16 %v7178
    %v7739 = vunpack.c.l.b16 %v7179
    %v7740 = vunpack.c.h.b16 %v7179
    %v7741 = vunpack.c.l.b16 %v7180
    %v7742 = vunpack.c.h.b16 %v7180
    %v7743 = vunpack.c.l.b16 %v7181
    %v7744 = vunpack.c.h.b16 %v7181
    %v7745 = vunpack.c.l.b16 %v7182
    %v7746 = vunpack.c.h.b16 %v7182
    %v7747 = vunpack.c.l.b16 %v7183
    %v7748 = vunpack.c.h.b16 %v7183
    %v7749 = vunpack.c.l.b16 %v7184
    %v7750 = vunpack.c.h.b16 %v7184
    %v7751 = vunpack.c.l.b16 %v7185
    %v7752 = vunpack.c.h.b16 %v7185
    %v7753 = vunpack.c.l.b16 %v7186
    %v7754 = vunpack.c.h.b16 %v7186
    %v7755 = vunpack.c.l.b16 %v7187
    %v7756 = vunpack.c.h.b16 %v7187
    %v7757 = vunpack.c.l.b16 %v7188
    %v7758 = vunpack.c.h.b16 %v7188
    %v7759 = vunpack.c.l.b16 %v7189
    %v7760 = vunpack.c.h.b16 %v7189
    %v7761 = vunpack.c.l.b16 %v7190
    %v7762 = vunpack.c.h.b16 %v7190
    %v7763 = vunpack.c.l.b16 %v7191
    %v7764 = vunpack.c.h.b16 %v7191
    %v7765 = vunpack.c.l.b16 %v7192
    %v7766 = vunpack.c.h.b16 %v7192
    %v7767 = vunpack.c.l.b16 %v7193
    %v7768 = vunpack.c.h.b16 %v7193
    %v7769 = vunpack.c.l.b16 %v7194
    %v7770 = vunpack.c.h.b16 %v7194
    %v7771 = vunpack.c.l.b16 %v7195
    %v7772 = vunpack.c.h.b16 %v7195
    %v7773 = vunpack.c.l.b16 %v7196
    %v7774 = vunpack.c.h.b16 %v7196
    %v7775 = vunpack.c.l.b16 %v7197
    %v7776 = vunpack.c.h.b16 %v7197
    %v7777 = vunpack.c.l.b16 %v7198
    %v7778 = vunpack.c.h.b16 %v7198
    %v7779 = vunpack.c.l.b16 %v7199
    %v7780 = vunpack.c.h.b16 %v7199
    %v7781 = vunpack.c.l.b16 %v7200
    %v7782 = vunpack.c.h.b16 %v7200
    %v7783 = vunpack.c.l.b16 %v7201
    %v7784 = vunpack.c.h.b16 %v7201
    %v7785 = vunpack.c.l.b16 %v7202
    %v7786 = vunpack.c.h.b16 %v7202
    %v7787 = vunpack.c.l.b16 %v7203
    %v7788 = vunpack.c.h.b16 %v7203
    %v7789 = vunpack.c.l.b16 %v7204
    %v7790 = vunpack.c.h.b16 %v7204
    %v7791 = vunpack.c.l.b16 %v7205
    %v7792 = vunpack.c.h.b16 %v7205
    %v7793 = vunpack.c.l.b16 %v7206
    %v7794 = vunpack.c.h.b16 %v7206
    %v7795 = vunpack.c.l.b16 %v7207
    %v7796 = vunpack.c.h.b16 %v7207
    %v7797 = vunpack.c.l.b16 %v7208
    %v7798 = vunpack.c.h.b16 %v7208
    %v7799 = vunpack.c.l.b16 %v7209
    %v7800 = vunpack.c.h.b16 %v7209
    %v7801 = vunpack.c.l.b16 %v7210
    %v7802 = vunpack.c.h.b16 %v7210
    %v7803 = vunpack.c.l.b16 %v7211
    %v7804 = vunpack.c.h.b16 %v7211
    %v7805 = vunpack.c.l.b16 %v7212
    %v7806 = vunpack.c.h.b16 %v7212
    %v7807 = vunpack.c.l.b16 %v7213
    %v7808 = vunpack.c.h.b16 %v7213
    %v7809 = vunpack.c.l.b16 %v7214
    %v7810 = vunpack.c.h.b16 %v7214
    %v7811 = vunpack.c.l.b16 %v7215
    %v7812 = vunpack.c.h.b16 %v7215
    %v7813 = vunpack.c.l.b16 %v7216
    %v7814 = vunpack.c.h.b16 %v7216
    %v7815 = vunpack.c.l.b16 %v7217
    %v7816 = vunpack.c.h.b16 %v7217
    %v7817 = vunpack.c.l.b16 %v7218
    %v7818 = vunpack.c.h.b16 %v7218
    %v7819 = vunpack.c.l.b16 %v7219
    %v7820 = vunpack.c.h.b16 %v7219
    %v7821 = vunpack.c.l.b16 %v7220
    %v7822 = vunpack.c.h.b16 %v7220
    %v7823 = vunpack.c.l.b16 %v7221
    %v7824 = vunpack.c.h.b16 %v7221
    %v7825 = vunpack.c.l.b16 %v7222
    %v7826 = vunpack.c.h.b16 %v7222
    %v7827 = vunpack.c.l.b16 %v7223
    %v7828 = vunpack.c.h.b16 %v7223
    %v7829 = vunpack.c.l.b16 %v7224
    %v7830 = vunpack.c.h.b16 %v7224
    %v7831 = vunpack.c.l.b16 %v7225
    %v7832 = vunpack.c.h.b16 %v7225
    %v7833 = vunpack.c.l.b16 %v7226
    %v7834 = vunpack.c.h.b16 %v7226
    %v7835 = vunpack.c.l.b16 %v7227
    %v7836 = vunpack.c.h.b16 %v7227
    %v7837 = vunpack.c.l.b16 %v7228
    %v7838 = vunpack.c.h.b16 %v7228
    %v7839 = vunpack.c.l.b16 %v7229
    %v7840 = vunpack.c.h.b16 %v7229
    %v7841 = vunpack.c.l.b16 %v7230
    %v7842 = vunpack.c.h.b16 %v7230
    %v7843 = vunpack.c.l.b16 %v7231
    %v7844 = vunpack.c.h.b16 %v7231
    %v7845 = vunpack.c.l.b16 %v7232
    %v7846 = vunpack.c.h.b16 %v7232
    %v7847 = vunpack.c.l.b16 %v7233
    %v7848 = vunpack.c.h.b16 %v7233
    %v7849 = vunpack.c.l.b16 %v7234
    %v7850 = vunpack.c.h.b16 %v7234
    %v7851 = vunpack.c.l.b16 %v7235
    %v7852 = vunpack.c.h.b16 %v7235
    %v7853 = vunpack.c.l.b16 %v7236
    %v7854 = vunpack.c.h.b16 %v7236
    %v7855 = vunpack.c.l.b16 %v7237
    %v7856 = vunpack.c.h.b16 %v7237
    %v7857 = vunpack.c.l.b16 %v7238
    %v7858 = vunpack.c.h.b16 %v7238
    %v7859 = vunpack.c.l.b16 %v7239
    %v7860 = vunpack.c.h.b16 %v7239
    %v7861 = vunpack.c.l.b16 %v7240
    %v7862 = vunpack.c.h.b16 %v7240
    %v7863 = vunpack.c.l.b16 %v7241
    %v7864 = vunpack.c.h.b16 %v7241
    %v7865 = vunpack.c.l.b16 %v7242
    %v7866 = vunpack.c.h.b16 %v7242
    %v7867 = vunpack.c.l.b16 %v7243
    %v7868 = vunpack.c.h.b16 %v7243
    %v7869 = vunpack.c.l.b16 %v7244
    %v7870 = vunpack.c.h.b16 %v7244
    %v7871 = vunpack.c.l.b16 %v7245
    %v7872 = vunpack.c.h.b16 %v7245
    %v7873 = vunpack.c.l.b16 %v7246
    %v7874 = vunpack.c.h.b16 %v7246
    %v7875 = vunpack.c.l.b16 %v7247
    %v7876 = vunpack.c.h.b16 %v7247
    %v7877 = vunpack.c.l.b16 %v7248
    %v7878 = vunpack.c.h.b16 %v7248
    %v7879 = vunpack.c.l.b16 %v7249
    %v7880 = vunpack.c.h.b16 %v7249
    %v7881 = vunpack.c.l.b16 %v7250
    %v7882 = vunpack.c.h.b16 %v7250
    %v7883 = vunpack.c.l.b16 %v7251
    %v7884 = vunpack.c.h.b16 %v7251
    %v7885 = vunpack.c.l.b16 %v7252
    %v7886 = vunpack.c.h.b16 %v7252
    %v7887 = vunpack.c.l.b16 %v7253
    %v7888 = vunpack.c.h.b16 %v7253
    %v7889 = vunpack.c.l.b16 %v7254
    %v7890 = vunpack.c.h.b16 %v7254
    %v7891 = vunpack.c.l.b16 %v7255
    %v7892 = vunpack.c.h.b16 %v7255
    %v7893 = vunpack.c.l.b16 %v7256
    %v7894 = vunpack.c.h.b16 %v7256
    %v7895 = vunpack.c.l.b16 %v7257
    %v7896 = vunpack.c.h.b16 %v7257
    %v7897 = vunpack.c.l.b16 %v7258
    %v7898 = vunpack.c.h.b16 %v7258
    %v7899 = vunpack.c.l.b16 %v7259
    %v7900 = vunpack.c.h.b16 %v7259
    %v7901 = vunpack.c.l.b16 %v7260
    %v7902 = vunpack.c.h.b16 %v7260
    %v7903 = vunpack.c.l.b16 %v7261
    %v7904 = vunpack.c.h.b16 %v7261
    %v7905 = vunpack.c.l.b16 %v7262
    %v7906 = vunpack.c.h.b16 %v7262
    %v7907 = vunpack.c.l.b16 %v7263
    %v7908 = vunpack.c.h.b16 %v7263
    %v7909 = vunpack.c.l.b16 %v7264
    %v7910 = vunpack.c.h.b16 %v7264
    %v7911 = vunpack.c.l.b16 %v7265
    %v7912 = vunpack.c.h.b16 %v7265
    %v7913 = vunpack.c.l.b16 %v7266
    %v7914 = vunpack.c.h.b16 %v7266
    %v7915 = vunpack.c.l.b16 %v7267
    %v7916 = vunpack.c.h.b16 %v7267
    %v7917 = vunpack.c.l.b16 %v7268
    %v7918 = vunpack.c.h.b16 %v7268
    %v7919 = vunpack.c.l.b16 %v7269
    %v7920 = vunpack.c.h.b16 %v7269
    %v7921 = vunpack.c.l.b16 %v7270
    %v7922 = vunpack.c.h.b16 %v7270
    %v7923 = vunpack.c.l.b16 %v7271
    %v7924 = vunpack.c.h.b16 %v7271
    %v7925 = vunpack.c.l.b16 %v7272
    %v7926 = vunpack.c.h.b16 %v7272
    %v7927 = vunpack.c.l.b16 %v7273
    %v7928 = vunpack.c.h.b16 %v7273
    %v7929 = vunpack.c.l.b16 %v7274
    %v7930 = vunpack.c.h.b16 %v7274
    %v7931 = vunpack.c.l.b16 %v7275
    %v7932 = vunpack.c.h.b16 %v7275
    %v7933 = vunpack.c.l.b16 %v7276
    %v7934 = vunpack.c.h.b16 %v7276
    %v7935 = vunpack.c.l.b16 %v7277
    %v7936 = vunpack.c.h.b16 %v7277
    %v7937 = vunpack.c.l.b16 %v7278
    %v7938 = vunpack.c.h.b16 %v7278
    %v7939 = vunpack.c.l.b16 %v7279
    %v7940 = vunpack.c.h.b16 %v7279
    %v7941 = vunpack.c.l.b16 %v7280
    %v7942 = vunpack.c.h.b16 %v7280
    %v7943 = vunpack.c.l.b16 %v7281
    %v7944 = vunpack.c.h.b16 %v7281
    %v7945 = vunpack.c.l.b16 %v7282
    %v7946 = vunpack.c.h.b16 %v7282
    %v7947 = vunpack.c.l.b16 %v7283
    %v7948 = vunpack.c.h.b16 %v7283
    %v7949 = vunpack.c.l.b16 %v7284
    %v7950 = vunpack.c.h.b16 %v7284
    %v7951 = vunpack.c.l.b16 %v7285
    %v7952 = vunpack.c.h.b16 %v7285
    %v7953 = vunpack.c.l.b16 %v7286
    %v7954 = vunpack.c.h.b16 %v7286
    %v7955 = vunpack.c.l.b16 %v7287
    %v7956 = vunpack.c.h.b16 %v7287
    %v7957 = vunpack.c.l.b16 %v7288
    %v7958 = vunpack.c.h.b16 %v7288
    %v7959 = vunpack.c.l.b16 %v7289
    %v7960 = vunpack.c.h.b16 %v7289
    %v7961 = vunpack.c.l.b16 %v7290
    %v7962 = vunpack.c.h.b16 %v7290
    %v7963 = vunpack.c.l.b16 %v7291
    %v7964 = vunpack.c.h.b16 %v7291
    %v7965 = vunpack.c.l.b16 %v7292
    %v7966 = vunpack.c.h.b16 %v7292
    %v7967 = vunpack.c.l.b16 %v7293
    %v7968 = vunpack.c.h.b16 %v7293
    %v7969 = vunpack.c.l.b16 %v7294
    %v7970 = vunpack.c.h.b16 %v7294
    %v7971 = vunpack.c.l.b16 %v7295
    %v7972 = vunpack.c.h.b16 %v7295
    %v7973 = vunpack.c.l.b16 %v7296
    %v7974 = vunpack.c.h.b16 %v7296
    %v7975 = vunpack.c.l.b16 %v7297
    %v7976 = vunpack.c.h.b16 %v7297
    %v7977 = vunpack.c.l.b16 %v7298
    %v7978 = vunpack.c.h.b16 %v7298
    %v7979 = vunpack.c.l.b16 %v7299
    %v7980 = vunpack.c.h.b16 %v7299
    %v7981 = vunpack.c.l.b16 %v7300
    %v7982 = vunpack.c.h.b16 %v7300
    %v7983 = vunpack.c.l.b16 %v7301
    %v7984 = vunpack.c.h.b16 %v7301
    %v7985 = vunpack.c.l.b16 %v7302
    %v7986 = vunpack.c.h.b16 %v7302
    %v7987 = vunpack.c.l.b16 %v7303
    %v7988 = vunpack.c.h.b16 %v7303
    %v7989 = vunpack.c.l.b16 %v7304
    %v7990 = vunpack.c.h.b16 %v7304
    %v7991 = vunpack.c.l.b16 %v7305
    %v7992 = vunpack.c.h.b16 %v7305
    %v7993 = vunpack.c.l.b16 %v7306
    %v7994 = vunpack.c.h.b16 %v7306
    %v7995 = vunpack.c.l.b16 %v7307
    %v7996 = vunpack.c.h.b16 %v7307
    %v7997 = vunpack.c.l.b16 %v7308
    %v7998 = vunpack.c.h.b16 %v7308
    %v7999 = vunpack.c.l.b16 %v7309
    %v8000 = vunpack.c.h.b16 %v7309
    %v8001 = vunpack.c.l.b16 %v7310
    %v8002 = vunpack.c.h.b16 %v7310
    %v8003 = vunpack.c.l.b16 %v7311
    %v8004 = vunpack.c.h.b16 %v7311
    %v8005 = vunpack.c.l.b16 %v7312
    %v8006 = vunpack.c.h.b16 %v7312
    %v8007 = vunpack.c.l.b16 %v7313
    %v8008 = vunpack.c.h.b16 %v7313
    %v8009 = vunpack.c.l.b16 %v7314
    %v8010 = vunpack.c.h.b16 %v7314
    %v8011 = vunpack.c.l.b16 %v7315
    %v8012 = vunpack.c.h.b16 %v7315
    %v8013 = vunpack.c.l.b16 %v7316
    %v8014 = vunpack.c.h.b16 %v7316
    %v8015 = vunpack.c.l.b16 %v7317
    %v8016 = vunpack.c.h.b16 %v7317
    %v8017 = vunpack.c.l.b16 %v7318
    %v8018 = vunpack.c.h.b16 %v7318
    %v8019 = vunpack.c.l.b16 %v7319
    %v8020 = vunpack.c.h.b16 %v7319
    %v8021 = vunpack.c.l.b16 %v7320
    %v8022 = vunpack.c.h.b16 %v7320
    %v8023 = vunpack.c.l.b16 %v7321
    %v8024 = vunpack.c.h.b16 %v7321
    %v8025 = vunpack.c.l.b16 %v7322
    %v8026 = vunpack.c.h.b16 %v7322
    %v8027 = vunpack.c.l.b16 %v7323
    %v8028 = vunpack.c.h.b16 %v7323
    %v8029 = vunpack.c.l.b16 %v7324
    %v8030 = vunpack.c.h.b16 %v7324
    %v8031 = vunpack.c.l.b16 %v7325
    %v8032 = vunpack.c.h.b16 %v7325
    %v8033 = vunpack.c.l.b16 %v7326
    %v8034 = vunpack.c.h.b16 %v7326
    %v8035 = vunpack.c.l.b16 %v7327
    %v8036 = vunpack.c.h.b16 %v7327
    %v8037 = vunpack.c.l.b16 %v7328
    %v8038 = vunpack.c.h.b16 %v7328
    %v8039 = vunpack.c.l.b16 %v7329
    %v8040 = vunpack.c.h.b16 %v7329
    %v8041 = vunpack.c.l.b16 %v7330
    %v8042 = vunpack.c.h.b16 %v7330
    %v8043 = vunpack.c.l.b16 %v7331
    %v8044 = vunpack.c.h.b16 %v7331
    %v8045 = vunpack.c.l.b16 %v7332
    %v8046 = vunpack.c.h.b16 %v7332
    %v8047 = vunpack.c.l.b16 %v7333
    %v8048 = vunpack.c.h.b16 %v7333
    %v8049 = vunpack.c.l.b16 %v7334
    %v8050 = vunpack.c.h.b16 %v7334
    %v8051 = vunpack.c.l.b16 %v7335
    %v8052 = vunpack.c.h.b16 %v7335
    %v8053 = vunpack.c.l.b16 %v7336
    %v8054 = vunpack.c.h.b16 %v7336
    %v8055 = vunpack.c.l.b16 %v7337
    %v8056 = vunpack.c.h.b16 %v7337
    %v8057 = vunpack.c.l.b16 %v7338
    %v8058 = vunpack.c.h.b16 %v7338
    %v8059 = vunpack.c.l.b16 %v7339
    %v8060 = vunpack.c.h.b16 %v7339
    %v8061 = vunpack.c.l.b16 %v7340
    %v8062 = vunpack.c.h.b16 %v7340
    %v8063 = vunpack.c.l.b16 %v7341
    %v8064 = vunpack.c.h.b16 %v7341
    %v8065 = vunpack.c.l.b16 %v7342
    %v8066 = vunpack.c.h.b16 %v7342
    %v8067 = vunpack.c.l.b16 %v7343
    %v8068 = vunpack.c.h.b16 %v7343
    %v8069 = vunpack.c.l.b16 %v7344
    %v8070 = vunpack.c.h.b16 %v7344
    %v8071 = vunpack.c.l.b16 %v7345
    %v8072 = vunpack.c.h.b16 %v7345
    %v8073 = vunpack.c.l.b16 %v7346
    %v8074 = vunpack.c.h.b16 %v7346
    %v8075 = vunpack.c.l.b16 %v7347
    %v8076 = vunpack.c.h.b16 %v7347
    %v8077 = vunpack.c.l.b16 %v7348
    %v8078 = vunpack.c.h.b16 %v7348
    %v8079 = vunpack.c.l.b16 %v7349
    %v8080 = vunpack.c.h.b16 %v7349
    %v8081 = vunpack.c.l.b16 %v7350
    %v8082 = vunpack.c.h.b16 %v7350
    %v8083 = vunpack.c.l.b16 %v7351
    %v8084 = vunpack.c.h.b16 %v7351
    %v8085 = vunpack.c.l.b16 %v7352
    %v8086 = vunpack.c.h.b16 %v7352
    %v8087 = vunpack.c.l.b16 %v7353
    %v8088 = vunpack.c.h.b16 %v7353
    %v8089 = vunpack.c.l.b16 %v7354
    %v8090 = vunpack.c.h.b16 %v7354
    %v8091 = vunpack.c.l.b16 %v7355
    %v8092 = vunpack.c.h.b16 %v7355
    %v8093 = vunpack.c.l.b16 %v7356
    %v8094 = vunpack.c.h.b16 %v7356
    %v8095 = vunpack.c.l.b16 %v7357
    %v8096 = vunpack.c.h.b16 %v7357
    %v8097 = vunpack.c.l.b16 %v7358
    %v8098 = vunpack.c.h.b16 %v7358
    %v8099 = vunpack.c.l.b16 %v7359
    %v8100 = vunpack.c.h.b16 %v7359
    %v8101 = vunpack.c.l.b16 %v7360
    %v8102 = vunpack.c.h.b16 %v7360
    %v8103 = vunpack.c.l.b16 %v7361
    %v8104 = vunpack.c.h.b16 %v7361
    %v8105 = vunpack.c.l.b16 %v7362
    %v8106 = vunpack.c.h.b16 %v7362
    %v8107 = vunpack.c.l.b16 %v7363
    %v8108 = vunpack.c.h.b16 %v7363
    %v8109 = vunpack.c.l.b16 %v7364
    %v8110 = vunpack.c.h.b16 %v7364
    %v8111 = vunpack.c.l.b16 %v7365
    %v8112 = vunpack.c.h.b16 %v7365
    %v8113 = vunpack.c.l.b16 %v7366
    %v8114 = vunpack.c.h.b16 %v7366
    %v8115 = vunpack.c.l.b16 %v7367
    %v8116 = vunpack.c.h.b16 %v7367
    %v8117 = vunpack.c.l.b16 %v7368
    %v8118 = vunpack.c.h.b16 %v7368
    %v8119 = vunpack.c.l.b16 %v7369
    %v8120 = vunpack.c.h.b16 %v7369
    %v8121 = vunpack.c.l.b16 %v7370
    %v8122 = vunpack.c.h.b16 %v7370
    %v8123 = vunpack.c.l.b16 %v7371
    %v8124 = vunpack.c.h.b16 %v7371
    %v8125 = vunpack.c.l.b16 %v7372
    %v8126 = vunpack.c.h.b16 %v7372
    %v8127 = vunpack.c.l.b16 %v7373
    %v8128 = vunpack.c.h.b16 %v7373
    %v8129 = vunpack.c.l.b16 %v7374
    %v8130 = vunpack.c.h.b16 %v7374
    %v8131 = vunpack.c.l.b16 %v7375
    %v8132 = vunpack.c.h.b16 %v7375
    %v8133 = vunpack.c.l.b16 %v7376
    %v8134 = vunpack.c.h.b16 %v7376
    %v8135 = vunpack.c.l.b16 %v7377
    %v8136 = vunpack.c.h.b16 %v7377
    %v8137 = vunpack.c.l.b16 %v7378
    %v8138 = vunpack.c.h.b16 %v7378
    %v8139 = vunpack.c.l.b16 %v7379
    %v8140 = vunpack.c.h.b16 %v7379
    %v8141 = vunpack.c.l.b16 %v7380
    %v8142 = vunpack.c.h.b16 %v7380
    %v8143 = vunpack.c.l.b16 %v7381
    %v8144 = vunpack.c.h.b16 %v7381
    %v8145 = vunpack.c.l.b16 %v7382
    %v8146 = vunpack.c.h.b16 %v7382
    %v8147 = vunpack.c.l.b16 %v7383
    %v8148 = vunpack.c.h.b16 %v7383
    %v8149 = vunpack.c.l.b16 %v7384
    %v8150 = vunpack.c.h.b16 %v7384
    %v8151 = vunpack.c.l.b16 %v7385
    %v8152 = vunpack.c.h.b16 %v7385
    %v8153 = vunpack.c.l.b16 %v7386
    %v8154 = vunpack.c.h.b16 %v7386
    %v8155 = vunpack.c.l.b16 %v7387
    %v8156 = vunpack.c.h.b16 %v7387
    %v8157 = vunpack.c.l.b16 %v7388
    %v8158 = vunpack.c.h.b16 %v7388
    %v8159 = vunpack.c.l.b16 %v7389
    %v8160 = vunpack.c.h.b16 %v7389
    %v8161 = vunpack.c.l.b16 %v7390
    %v8162 = vunpack.c.h.b16 %v7390
    %v8163 = vunpack.c.l.b16 %v7391
    %v8164 = vunpack.c.h.b16 %v7391
    %v8165 = vunpack.c.l.b16 %v7392
    %v8166 = vunpack.c.h.b16 %v7392
    %v8167 = vunpack.c.l.b16 %v7393
    %v8168 = vunpack.c.h.b16 %v7393
    %v8169 = vunpack.c.l.b16 %v7394
    %v8170 = vunpack.c.h.b16 %v7394
    %v8171 = vunpack.c.l.b16 %v7395
    %v8172 = vunpack.c.h.b16 %v7395
    %v8173 = vunpack.c.l.b16 %v7396
    %v8174 = vunpack.c.h.b16 %v7396
    %v8175 = vunpack.c.l.b16 %v7397
    %v8176 = vunpack.c.h.b16 %v7397
    %v8177 = vunpack.c.l.b16 %v7398
    %v8178 = vunpack.c.h.b16 %v7398
    %v8179 = vunpack.c.l.b16 %v7399
    %v8180 = vunpack.c.h.b16 %v7399
    %v8181 = vunpack.c.l.b16 %v7400
    %v8182 = vunpack.c.h.b16 %v7400
    %v8183 = vunpack.c.l.b16 %v7401
    %v8184 = vunpack.c.h.b16 %v7401
    %v8185 = vunpack.c.l.b16 %v7402
    %v8186 = vunpack.c.h.b16 %v7402
    %v8187 = vunpack.c.l.b16 %v7403
    %v8188 = vunpack.c.h.b16 %v7403
    %v8189 = vunpack.c.l.b16 %v7404
    %v8190 = vunpack.c.h.b16 %v7404
    %v8191 = vunpack.c.l.b16 %v7405
    %v8192 = vunpack.c.h.b16 %v7405
    %v8193 = vunpack.c.l.b16 %v7406
    %v8194 = vunpack.c.h.b16 %v7406
    %v8195 = vunpack.c.l.b16 %v7407
    %v8196 = vunpack.c.h.b16 %v7407
    %v8197 = vunpack.c.l.b16 %v7408
    %v8198 = vunpack.c.h.b16 %v7408
    %v8199 = vpack.c.b16 %v7691, %v7687
    %v8200 = vpack.c.b16 %v7692, %v7688
    %v8201 = vpack.c.b16 %v7693, %v7689
    %v8202 = vpack.c.b16 %v7694, %v7690
    %v8203 = vpack.c.b16 %v7699, %v7695
    %v8204 = vpack.c.b16 %v7700, %v7696
    %v8205 = vpack.c.b16 %v7701, %v7697
    %v8206 = vpack.c.b16 %v7702, %v7698
    %v8207 = vpack.c.b16 %v7707, %v7703
    %v8208 = vpack.c.b16 %v7708, %v7704
    %v8209 = vpack.c.b16 %v7709, %v7705
    %v8210 = vpack.c.b16 %v7710, %v7706
    %v8211 = vpack.c.b16 %v7715, %v7711
    %v8212 = vpack.c.b16 %v7716, %v7712
    %v8213 = vpack.c.b16 %v7717, %v7713
    %v8214 = vpack.c.b16 %v7718, %v7714
    %v8215 = vpack.c.b16 %v7723, %v7719
    %v8216 = vpack.c.b16 %v7724, %v7720
    %v8217 = vpack.c.b16 %v7725, %v7721
    %v8218 = vpack.c.b16 %v7726, %v7722
    %v8219 = vpack.c.b16 %v7731, %v7727
    %v8220 = vpack.c.b16 %v7732, %v7728
    %v8221 = vpack.c.b16 %v7733, %v7729
    %v8222 = vpack.c.b16 %v7734, %v7730
    %v8223 = vpack.c.b16 %v7739, %v7735
    %v8224 = vpack.c.b16 %v7740, %v7736
    %v8225 = vpack.c.b16 %v7741, %v7737
    %v8226 = vpack.c.b16 %v7742, %v7738
    %v8227 = vpack.c.b16 %v7747, %v7743
    %v8228 = vpack.c.b16 %v7748, %v7744
    %v8229 = vpack.c.b16 %v7749, %v7745
    %v8230 = vpack.c.b16 %v7750, %v7746
    %v8231 = vpack.c.b16 %v7755, %v7751
    %v8232 = vpack.c.b16 %v7756, %v7752
    %v8233 = vpack.c.b16 %v7757, %v7753
    %v8234 = vpack.c.b16 %v7758, %v7754
    %v8235 = vpack.c.b16 %v7763, %v7759
    %v8236 = vpack.c.b16 %v7764, %v7760
    %v8237 = vpack.c.b16 %v7765, %v7761
    %v8238 = vpack.c.b16 %v7766, %v7762
    %v8239 = vpack.c.b16 %v7771, %v7767
    %v8240 = vpack.c.b16 %v7772, %v7768
    %v8241 = vpack.c.b16 %v7773, %v7769
    %v8242 = vpack.c.b16 %v7774, %v7770
    %v8243 = vpack.c.b16 %v7779, %v7775
    %v8244 = vpack.c.b16 %v7780, %v7776
    %v8245 = vpack.c.b16 %v7781, %v7777
    %v8246 = vpack.c.b16 %v7782, %v7778
    %v8247 = vpack.c.b16 %v7787, %v7783
    %v8248 = vpack.c.b16 %v7788, %v7784
    %v8249 = vpack.c.b16 %v7789, %v7785
    %v8250 = vpack.c.b16 %v7790, %v7786
    %v8251 = vpack.c.b16 %v7795, %v7791
    %v8252 = vpack.c.b16 %v7796, %v7792
    %v8253 = vpack.c.b16 %v7797, %v7793
    %v8254 = vpack.c.b16 %v7798, %v7794
    %v8255 = vpack.c.b16 %v7803, %v7799
    %v8256 = vpack.c.b16 %v7804, %v7800
    %v8257 = vpack.c.b16 %v7805, %v7801
    %v8258 = vpack.c.b16 %v7806, %v7802
    %v8259 = vpack.c.b16 %v7811, %v7807
    %v8260 = vpack.c.b16 %v7812, %v7808
    %v8261 = vpack.c.b16 %v7813, %v7809
    %v8262 = vpack.c.b16 %v7814, %v7810
    %v8263 = vpack.c.b16 %v7819, %v7815
    %v8264 = vpack.c.b16 %v7820, %v7816
    %v8265 = vpack.c.b16 %v7821, %v7817
    %v8266 = vpack.c.b16 %v7822, %v7818
    %v8267 = vpack.c.b16 %v7827, %v7823
    %v8268 = vpack.c.b16 %v7828, %v7824
    %v8269 = vpack.c.b16 %v7829, %v7825
    %v8270 = vpack.c.b16 %v7830, %v7826
    %v8271 = vpack.c.b16 %v7835, %v7831
    %v8272 = vpack.c.b16 %v7836, %v7832
    %v8273 = vpack.c.b16 %v7837, %v7833
    %v8274 = vpack.c.b16 %v7838, %v7834
    %v8275 = vpack.c.b16 %v7843, %v7839
    %v8276 = vpack.c.b16 %v7844, %v7840
    %v8277 = vpack.c.b16 %v7845, %v7841
    %v8278 = vpack.c.b16 %v7846, %v7842
    %v8279 = vpack.c.b16 %v7851, %v7847
    %v8280 = vpack.c.b16 %v7852, %v7848
    %v8281 = vpack.c.b16 %v7853, %v7849
    %v8282 = vpack.c.b16 %v7854, %v7850
    %v8283 = vpack.c.b16 %v7859, %v7855
    %v8284 = vpack.c.b16 %v7860, %v7856
    %v8285 = vpack.c.b16 %v7861, %v7857
    %v8286 = vpack.c.b16 %v7862, %v7858
    %v8287 = vpack.c.b16 %v7867, %v7863
    %v8288 = vpack.c.b16 %v7868, %v7864
    %v8289 = vpack.c.b16 %v7869, %v7865
    %v8290 = vpack.c.b16 %v7870, %v7866
    %v8291 = vpack.c.b16 %v7875, %v7871
    %v8292 = vpack.c.b16 %v7876, %v7872
    %v8293 = vpack.c.b16 %v7877, %v7873
    %v8294 = vpack.c.b16 %v7878, %v7874
    %v8295 = vpack.c.b16 %v7883, %v7879
    %v8296 = vpack.c.b16 %v7884, %v7880
    %v8297 = vpack.c.b16 %v7885, %v7881
    %v8298 = vpack.c.b16 %v7886, %v7882
    %v8299 = vpack.c.b16 %v7891, %v7887
    %v8300 = vpack.c.b16 %v7892, %v7888
    %v8301 = vpack.c.b16 %v7893, %v7889
    %v8302 = vpack.c.b16 %v7894, %v7890
    %v8303 = vpack.c.b16 %v7899, %v7895
    %v8304 = vpack.c.b16 %v7900, %v7896
    %v8305 = vpack.c.b16 %v7901, %v7897
    %v8306 = vpack.c.b16 %v7902, %v7898
    %v8307 = vpack.c.b16 %v7907, %v7903
    %v8308 = vpack.c.b16 %v7908, %v7904
    %v8309 = vpack.c.b16 %v7909, %v7905
    %v8310 = vpack.c.b16 %v7910, %v7906
    %v8311 = vpack.c.b16 %v7915, %v7911
    %v8312 = vpack.c.b16 %v7916, %v7912
    %v8313 = vpack.c.b16 %v7917, %v7913
    %v8314 = vpack.c.b16 %v7918, %v7914
    %v8315 = vpack.c.b16 %v7923, %v7919
    %v8316 = vpack.c.b16 %v7924, %v7920
    %v8317 = vpack.c.b16 %v7925, %v7921
    %v8318 = vpack.c.b16 %v7926, %v7922
    %v8319 = vpack.c.b16 %v7931, %v7927
    %v8320 = vpack.c.b16 %v7932, %v7928
    %v8321 = vpack.c.b16 %v7933, %v7929
    %v8322 = vpack.c.b16 %v7934, %v7930
    %v8323 = vpack.c.b16 %v7939, %v7935
    %v8324 = vpack.c.b16 %v7940, %v7936
    %v8325 = vpack.c.b16 %v7941, %v7937
    %v8326 = vpack.c.b16 %v7942, %v7938
    %v8327 = vpack.c.b16 %v7947, %v7943
    %v8328 = vpack.c.b16 %v7948, %v7944
    %v8329 = vpack.c.b16 %v7949, %v7945
    %v8330 = vpack.c.b16 %v7950, %v7946
    %v8331 = vpack.c.b16 %v7955, %v7951
    %v8332 = vpack.c.b16 %v7956, %v7952
    %v8333 = vpack.c.b16 %v7957, %v7953
    %v8334 = vpack.c.b16 %v7958, %v7954
    %v8335 = vpack.c.b16 %v7963, %v7959
    %v8336 = vpack.c.b16 %v7964, %v7960
    %v8337 = vpack.c.b16 %v7965, %v7961
    %v8338 = vpack.c.b16 %v7966, %v7962
    %v8339 = vpack.c.b16 %v7971, %v7967
    %v8340 = vpack.c.b16 %v7972, %v7968
    %v8341 = vpack.c.b16 %v7973, %v7969
    %v8342 = vpack.c.b16 %v7974, %v7970
    %v8343 = vpack.c.b16 %v7979, %v7975
    %v8344 = vpack.c.b16 %v7980, %v7976
    %v8345 = vpack.c.b16 %v7981, %v7977
    %v8346 = vpack.c.b16 %v7982, %v7978
    %v8347 = vpack.c.b16 %v7987, %v7983
    %v8348 = vpack.c.b16 %v7988, %v7984
    %v8349 = vpack.c.b16 %v7989, %v7985
    %v8350 = vpack.c.b16 %v7990, %v7986
    %v8351 = vpack.c.b16 %v7995, %v7991
    %v8352 = vpack.c.b16 %v7996, %v7992
    %v8353 = vpack.c.b16 %v7997, %v7993
    %v8354 = vpack.c.b16 %v7998, %v7994
    %v8355 = vpack.c.b16 %v8003, %v7999
    %v8356 = vpack.c.b16 %v8004, %v8000
    %v8357 = vpack.c.b16 %v8005, %v8001
    %v8358 = vpack.c.b16 %v8006, %v8002
    %v8359 = vpack.c.b16 %v8011, %v8007
    %v8360 = vpack.c.b16 %v8012, %v8008
    %v8361 = vpack.c.b16 %v8013, %v8009
    %v8362 = vpack.c.b16 %v8014, %v8010
    %v8363 = vpack.c.b16 %v8019, %v8015
    %v8364 = vpack.c.b16 %v8020, %v8016
    %v8365 = vpack.c.b16 %v8021, %v8017
    %v8366 = vpack.c.b16 %v8022, %v8018
    %v8367 = vpack.c.b16 %v8027, %v8023
    %v8368 = vpack.c.b16 %v8028, %v8024
    %v8369 = vpack.c.b16 %v8029, %v8025
    %v8370 = vpack.c.b16 %v8030, %v8026
    %v8371 = vpack.c.b16 %v8035, %v8031
    %v8372 = vpack.c.b16 %v8036, %v8032
    %v8373 = vpack.c.b16 %v8037, %v8033
    %v8374 = vpack.c.b16 %v8038, %v8034
    %v8375 = vpack.c.b16 %v8043, %v8039
    %v8376 = vpack.c.b16 %v8044, %v8040
    %v8377 = vpack.c.b16 %v8045, %v8041
    %v8378 = vpack.c.b16 %v8046, %v8042
    %v8379 = vpack.c.b16 %v8051, %v8047
    %v8380 = vpack.c.b16 %v8052, %v8048
    %v8381 = vpack.c.b16 %v8053, %v8049
    %v8382 = vpack.c.b16 %v8054, %v8050
    %v8383 = vpack.c.b16 %v8059, %v8055
    %v8384 = vpack.c.b16 %v8060, %v8056
    %v8385 = vpack.c.b16 %v8061, %v8057
    %v8386 = vpack.c.b16 %v8062, %v8058
    %v8387 = vpack.c.b16 %v8067, %v8063
    %v8388 = vpack.c.b16 %v8068, %v8064
    %v8389 = vpack.c.b16 %v8069, %v8065
    %v8390 = vpack.c.b16 %v8070, %v8066
    %v8391 = vpack.c.b16 %v8075, %v8071
    %v8392 = vpack.c.b16 %v8076, %v8072
    %v8393 = vpack.c.b16 %v8077, %v8073
    %v8394 = vpack.c.b16 %v8078, %v8074
    %v8395 = vpack.c.b16 %v8083, %v8079
    %v8396 = vpack.c.b16 %v8084, %v8080
    %v8397 = vpack.c.b16 %v8085, %v8081
    %v8398 = vpack.c.b16 %v8086, %v8082
    %v8399 = vpack.c.b16 %v8091, %v8087
    %v8400 = vpack.c.b16 %v8092, %v8088
    %v8401 = vpack.c.b16 %v8093, %v8089
    %v8402 = vpack.c.b16 %v8094, %v8090
    %v8403 = vpack.c.b16 %v8099, %v8095
    %v8404 = vpack.c.b16 %v8100, %v8096
    %v8405 = vpack.c.b16 %v8101, %v8097
    %v8406 = vpack.c.b16 %v8102, %v8098
    %v8407 = vpack.c.b16 %v8107, %v8103
    %v8408 = vpack.c.b16 %v8108, %v8104
    %v8409 = vpack.c.b16 %v8109, %v8105
    %v8410 = vpack.c.b16 %v8110, %v8106
    %v8411 = vpack.c.b16 %v8115, %v8111
    %v8412 = vpack.c.b16 %v8116, %v8112
    %v8413 = vpack.c.b16 %v8117, %v8113
    %v8414 = vpack.c.b16 %v8118, %v8114
    %v8415 = vpack.c.b16 %v8123, %v8119
    %v8416 = vpack.c.b16 %v8124, %v8120
    %v8417 = vpack.c.b16 %v8125, %v8121
    %v8418 = vpack.c.b16 %v8126, %v8122
    %v8419 = vpack.c.b16 %v8131, %v8127
    %v8420 = vpack.c.b16 %v8132, %v8128
    %v8421 = vpack.c.b16 %v8133, %v8129
    %v8422 = vpack.c.b16 %v8134, %v8130
    %v8423 = vpack.c.b16 %v8139, %v8135
    %v8424 = vpack.c.b16 %v8140, %v8136
    %v8425 = vpack.c.b16 %v8141, %v8137
    %v8426 = vpack.c.b16 %v8142, %v8138
    %v8427 = vpack.c.b16 %v8147, %v8143
    %v8428 = vpack.c.b16 %v8148, %v8144
    %v8429 = vpack.c.b16 %v8149, %v8145
    %v8430 = vpack.c.b16 %v8150, %v8146
    %v8431 = vpack.c.b16 %v8155, %v8151
    %v8432 = vpack.c.b16 %v8156, %v8152
    %v8433 = vpack.c.b16 %v8157, %v8153
    %v8434 = vpack.c.b16 %v8158, %v8154
    %v8435 = vpack.c.b16 %v8163, %v8159
    %v8436 = vpack.c.b16 %v8164, %v8160
    %v8437 = vpack.c.b16 %v8165, %v8161
    %v8438 = vpack.c.b16 %v8166, %v8162
    %v8439 = vpack.c.b16 %v8171, %v8167
    %v8440 = vpack.c.b16 %v8172, %v8168
    %v8441 = vpack.c.b16 %v8173, %v8169
    %v8442 = vpack.c.b16 %v8174, %v8170
    %v8443 = vpack.c.b16 %v8179, %v8175
    %v8444 = vpack.c.b16 %v8180, %v8176
    %v8445 = vpack.c.b16 %v8181, %v8177
    %v8446 = vpack.c.b16 %v8182, %v8178
    %v8447 = vpack.c.b16 %v8187, %v8183
    %v8448 = vpack.c.b16 %v8188, %v8184
    %v8449 = vpack.c.b16 %v8189, %v8185
    %v8450 = vpack.c.b16 %v8190, %v8186
    %v8451 = vpack.c.b16 %v8195, %v8191
    %v8452 = vpack.c.b16 %v8196, %v8192
    %v8453 = vpack.c.b16 %v8197, %v8193
    %v8454 = vpack.c.b16 %v8198, %v8194
    %8711 = vmatprep.subr.bf16.mxu0 %v8200
    %8712 = vmatpush1.bf16.msra.mxu0 %v8199
    %8713 = vmatprep.subr.bf16.mxu0 %v8204
    %8714 = vmatpush1.bf16.msra.mxu0 %v8203
    %8715 = vmatprep.subr.bf16.mxu0 %v8208
    %8716 = vmatpush1.bf16.msra.mxu0 %v8207
    %8717 = vmatprep.subr.bf16.mxu0 %v8212
    %8718 = vmatpush1.bf16.msra.mxu0 %v8211
    %8719 = vmatprep.subr.bf16.mxu0 %v8216
    %8720 = vmatpush1.bf16.msra.mxu0 %v8215
    %8721 = vmatprep.subr.bf16.mxu0 %v8220
    %8722 = vmatpush1.bf16.msra.mxu0 %v8219
    %8723 = vmatprep.subr.bf16.mxu0 %v8224
    %8724 = vmatpush1.bf16.msra.mxu0 %v8223
    %8725 = vmatprep.subr.bf16.mxu0 %v8228
    %8726 = vmatpush1.bf16.msra.mxu0 %v8227
    %8727 = vmatprep.subr.bf16.mxu0 %v8232
    %8728 = vmatpush1.bf16.msra.mxu0 %v8231
    %8729 = vmatprep.subr.bf16.mxu0 %v8236
    %8730 = vmatpush1.bf16.msra.mxu0 %v8235
    %8731 = vmatprep.subr.bf16.mxu0 %v8240
    %8732 = vmatpush1.bf16.msra.mxu0 %v8239
    %8733 = vmatprep.subr.bf16.mxu0 %v8244
    %8734 = vmatpush1.bf16.msra.mxu0 %v8243
    %8735 = vmatprep.subr.bf16.mxu0 %v8248
    %8736 = vmatpush1.bf16.msra.mxu0 %v8247
    %8737 = vmatprep.subr.bf16.mxu0 %v8252
    %8738 = vmatpush1.bf16.msra.mxu0 %v8251
    %8739 = vmatprep.subr.bf16.mxu0 %v8256
    %8740 = vmatpush1.bf16.msra.mxu0 %v8255
    %8741 = vmatprep.subr.bf16.mxu0 %v8260
    %8742 = vmatpush1.bf16.msra.mxu0 %v8259
    %8743 = vmatprep.mubr.bf16.mxu0 %v7146
    %8744 = vmatmul.mubr.bf16.gmra.mrb[0].mxu0 %v7145
    %v8745 = vpop.f32.mrb[0].mxu0
    %v8746 = vadd.f32 %v7414, %v8745
    %v8747 = vpop.f32.mrb[0].mxu0
    %v8748 = vadd.f32 %v7418, %v8747
    %v8749 = vpop.f32.mrb[0].mxu0
    %v8750 = vpop.f32.mrb[0].mxu0
    %8751 = vdwg.mxu0
    %8752 = vmatprep.subr.bf16.mxu0 %v8264
    %8753 = vmatpush1.bf16.msra.mxu0 %v8263
    %8754 = vmatprep.subr.bf16.mxu0 %v8268
    %8755 = vmatpush1.bf16.msra.mxu0 %v8267
    %8756 = vmatprep.subr.bf16.mxu0 %v8272
    %8757 = vmatpush1.bf16.msra.mxu0 %v8271
    %8758 = vmatprep.subr.bf16.mxu0 %v8276
    %8759 = vmatpush1.bf16.msra.mxu0 %v8275
    %8760 = vmatprep.subr.bf16.mxu0 %v8280
    %8761 = vmatpush1.bf16.msra.mxu0 %v8279
    %8762 = vmatprep.subr.bf16.mxu0 %v8284
    %8763 = vmatpush1.bf16.msra.mxu0 %v8283
    %8764 = vmatprep.subr.bf16.mxu0 %v8288
    %8765 = vmatpush1.bf16.msra.mxu0 %v8287
    %8766 = vmatprep.subr.bf16.mxu0 %v8292
    %8767 = vmatpush1.bf16.msra.mxu0 %v8291
    %8768 = vmatprep.subr.bf16.mxu0 %v8296
    %8769 = vmatpush1.bf16.msra.mxu0 %v8295
    %8770 = vmatprep.subr.bf16.mxu0 %v8300
    %8771 = vmatpush1.bf16.msra.mxu0 %v8299
    %8772 = vmatprep.subr.bf16.mxu0 %v8304
    %8773 = vmatpush1.bf16.msra.mxu0 %v8303
    %8774 = vmatprep.subr.bf16.mxu0 %v8308
    %8775 = vmatpush1.bf16.msra.mxu0 %v8307
    %8776 = vmatprep.subr.bf16.mxu0 %v8312
    %8777 = vmatpush1.bf16.msra.mxu0 %v8311
    %8778 = vmatprep.subr.bf16.mxu0 %v8316
    %8779 = vmatpush1.bf16.msra.mxu0 %v8315
    %8780 = vmatprep.subr.bf16.mxu0 %v8320
    %8781 = vmatpush1.bf16.msra.mxu0 %v8319
    %8782 = vmatprep.subr.bf16.mxu0 %v8324
    %8783 = vmatpush1.bf16.msra.mxu0 %v8323
    %8784 = vmatprep.mubr.bf16.mxu0 %v7148
    %8785 = vmatmul.mubr.bf16.gmra.mrb[0].mxu0 %v7147
    %v8786 = vpop.f32.mrb[0].mxu0
    %v8787 = vadd.f32 %v8746, %v8786
    %v8788 = vpop.f32.mrb[0].mxu0
    %v8789 = vadd.f32 %v8748, %v8788
    %v8790 = vpop.f32.mrb[0].mxu0
    %v8791 = vpop.f32.mrb[0].mxu0
    %8792 = vdwg.mxu0
    %8793 = vmatprep.subr.bf16.mxu0 %v8328
    %8794 = vmatpush1.bf16.msra.mxu0 %v8327
    %8795 = vmatprep.subr.bf16.mxu0 %v8332
    %8796 = vmatpush1.bf16.msra.mxu0 %v8331
    %8797 = vmatprep.subr.bf16.mxu0 %v8336
    %8798 = vmatpush1.bf16.msra.mxu0 %v8335
    %8799 = vmatprep.subr.bf16.mxu0 %v8340
    %8800 = vmatpush1.bf16.msra.mxu0 %v8339
    %8801 = vmatprep.subr.bf16.mxu0 %v8344
    %8802 = vmatpush1.bf16.msra.mxu0 %v8343
    %8803 = vmatprep.subr.bf16.mxu0 %v8348
    %8804 = vmatpush1.bf16.msra.mxu0 %v8347
    %8805 = vmatprep.subr.bf16.mxu0 %v8352
    %8806 = vmatpush1.bf16.msra.mxu0 %v8351
    %8807 = vmatprep.subr.bf16.mxu0 %v8356
    %8808 = vmatpush1.bf16.msra.mxu0 %v8355
    %8809 = vmatprep.subr.bf16.mxu0 %v8360
    %8810 = vmatpush1.bf16.msra.mxu0 %v8359
    %8811 = vmatprep.subr.bf16.mxu0 %v8364
    %8812 = vmatpush1.bf16.msra.mxu0 %v8363
    %8813 = vmatprep.subr.bf16.mxu0 %v8368
    %8814 = vmatpush1.bf16.msra.mxu0 %v8367
    %8815 = vmatprep.subr.bf16.mxu0 %v8372
    %8816 = vmatpush1.bf16.msra.mxu0 %v8371
    %8817 = vmatprep.subr.bf16.mxu0 %v8376
    %8818 = vmatpush1.bf16.msra.mxu0 %v8375
    %8819 = vmatprep.subr.bf16.mxu0 %v8380
    %8820 = vmatpush1.bf16.msra.mxu0 %v8379
    %8821 = vmatprep.subr.bf16.mxu0 %v8384
    %8822 = vmatpush1.bf16.msra.mxu0 %v8383
    %8823 = vmatprep.subr.bf16.mxu0 %v8388
    %8824 = vmatpush1.bf16.msra.mxu0 %v8387
    %8825 = vmatprep.mubr.bf16.mxu0 %v7150
    %8826 = vmatmul.mubr.bf16.gmra.mrb[0].mxu0 %v7149
    %v8827 = vpop.f32.mrb[0].mxu0
    %v8828 = vadd.f32 %v8787, %v8827
    %v8829 = vpop.f32.mrb[0].mxu0
    %v8830 = vadd.f32 %v8789, %v8829
    %v8831 = vpop.f32.mrb[0].mxu0
    %v8832 = vpop.f32.mrb[0].mxu0
    %8833 = vdwg.mxu0
    %8834 = vmatprep.subr.bf16.mxu0 %v8392
    %8835 = vmatpush1.bf16.msra.mxu0 %v8391
    %8836 = vmatprep.subr.bf16.mxu0 %v8396
    %8837 = vmatpush1.bf16.msra.mxu0 %v8395
    %8838 = vmatprep.subr.bf16.mxu0 %v8400
    %8839 = vmatpush1.bf16.msra.mxu0 %v8399
    %8840 = vmatprep.subr.bf16.mxu0 %v8404
    %8841 = vmatpush1.bf16.msra.mxu0 %v8403
    %8842 = vmatprep.subr.bf16.mxu0 %v8408
    %8843 = vmatpush1.bf16.msra.mxu0 %v8407
    %8844 = vmatprep.subr.bf16.mxu0 %v8412
    %8845 = vmatpush1.bf16.msra.mxu0 %v8411
    %8846 = vmatprep.subr.bf16.mxu0 %v8416
    %8847 = vmatpush1.bf16.msra.mxu0 %v8415
    %8848 = vmatprep.subr.bf16.mxu0 %v8420
    %8849 = vmatpush1.bf16.msra.mxu0 %v8419
    %8850 = vmatprep.subr.bf16.mxu0 %v8424
    %8851 = vmatpush1.bf16.msra.mxu0 %v8423
    %8852 = vmatprep.subr.bf16.mxu0 %v8428
    %8853 = vmatpush1.bf16.msra.mxu0 %v8427
    %8854 = vmatprep.subr.bf16.mxu0 %v8432
    %8855 = vmatpush1.bf16.msra.mxu0 %v8431
    %8856 = vmatprep.subr.bf16.mxu0 %v8436
    %8857 = vmatpush1.bf16.msra.mxu0 %v8435
    %8858 = vmatprep.subr.bf16.mxu0 %v8440
    %8859 = vmatpush1.bf16.msra.mxu0 %v8439
    %8860 = vmatprep.subr.bf16.mxu0 %v8444
    %8861 = vmatpush1.bf16.msra.mxu0 %v8443
    %8862 = vmatprep.subr.bf16.mxu0 %v8448
    %8863 = vmatpush1.bf16.msra.mxu0 %v8447
    %8864 = vmatprep.subr.bf16.mxu0 %v8452
    %8865 = vmatpush1.bf16.msra.mxu0 %v8451
    %8866 = vmatprep.mubr.bf16.mxu0 %v7152
    %8867 = vmatmul.mubr.bf16.gmra.mrb[0].mxu0 %v7151
    %v8868 = vpop.f32.mrb[0].mxu0
    %v8869 = vadd.f32 %v8828, %v8868
    %v8870 = vpop.f32.mrb[0].mxu0
    %v8871 = vadd.f32 %v8830, %v8870
    %v8872 = vpop.f32.mrb[0].mxu0
    %v8873 = vpop.f32.mrb[0].mxu0
    %8874 = vdwg.mxu0
    %8875 = vmatprep.subr.bf16.mxu0 %v8202
    %8876 = vmatpush1.bf16.msra.mxu0 %v8201
    %8877 = vmatprep.subr.bf16.mxu0 %v8206
    %8878 = vmatpush1.bf16.msra.mxu0 %v8205
    %8879 = vmatprep.subr.bf16.mxu0 %v8210
    %8880 = vmatpush1.bf16.msra.mxu0 %v8209
    %8881 = vmatprep.subr.bf16.mxu0 %v8214
    %8882 = vmatpush1.bf16.msra.mxu0 %v8213
    %8883 = vmatprep.subr.bf16.mxu0 %v8218
    %8884 = vmatpush1.bf16.msra.mxu0 %v8217
    %8885 = vmatprep.subr.bf16.mxu0 %v8222
    %8886 = vmatpush1.bf16.msra.mxu0 %v8221
    %8887 = vmatprep.subr.bf16.mxu0 %v8226
    %8888 = vmatpush1.bf16.msra.mxu0 %v8225
    %8889 = vmatprep.subr.bf16.mxu0 %v8230
    %8890 = vmatpush1.bf16.msra.mxu0 %v8229
    %8891 = vmatprep.subr.bf16.mxu0 %v8234
    %8892 = vmatpush1.bf16.msra.mxu0 %v8233
    %8893 = vmatprep.subr.bf16.mxu0 %v8238
    %8894 = vmatpush1.bf16.msra.mxu0 %v8237
    %8895 = vmatprep.subr.bf16.mxu0 %v8242
    %8896 = vmatpush1.bf16.msra.mxu0 %v8241
    %8897 = vmatprep.subr.bf16.mxu0 %v8246
    %8898 = vmatpush1.bf16.msra.mxu0 %v8245
    %8899 = vmatprep.subr.bf16.mxu0 %v8250
    %8900 = vmatpush1.bf16.msra.mxu0 %v8249
    %8901 = vmatprep.subr.bf16.mxu0 %v8254
    %8902 = vmatpush1.bf16.msra.mxu0 %v8253
    %8903 = vmatprep.subr.bf16.mxu0 %v8258
    %8904 = vmatpush1.bf16.msra.mxu0 %v8257
    %8905 = vmatprep.subr.bf16.mxu0 %v8262
    %8906 = vmatpush1.bf16.msra.mxu0 %v8261
    %8907 = vmatprep.mubr.bf16.mxu0 %v7146
    %8908 = vmatmul.mubr.bf16.gmra.mrb[0].mxu0 %v7145
    %v8909 = vpop.f32.mrb[0].mxu0
    %v8910 = vadd.f32 %v7422, %v8909
    %v8911 = vpop.f32.mrb[0].mxu0
    %v8912 = vadd.f32 %v7426, %v8911
    %v8913 = vpop.f32.mrb[0].mxu0
    %v8914 = vpop.f32.mrb[0].mxu0
    %8915 = vdwg.mxu0
    %8916 = vmatprep.subr.bf16.mxu0 %v8266
    %8917 = vmatpush1.bf16.msra.mxu0 %v8265
    %8918 = vmatprep.subr.bf16.mxu0 %v8270
    %8919 = vmatpush1.bf16.msra.mxu0 %v8269
    %8920 = vmatprep.subr.bf16.mxu0 %v8274
    %8921 = vmatpush1.bf16.msra.mxu0 %v8273
    %8922 = vmatprep.subr.bf16.mxu0 %v8278
    %8923 = vmatpush1.bf16.msra.mxu0 %v8277
    %8924 = vmatprep.subr.bf16.mxu0 %v8282
    %8925 = vmatpush1.bf16.msra.mxu0 %v8281
    %8926 = vmatprep.subr.bf16.mxu0 %v8286
    %8927 = vmatpush1.bf16.msra.mxu0 %v8285
    %8928 = vmatprep.subr.bf16.mxu0 %v8290
    %8929 = vmatpush1.bf16.msra.mxu0 %v8289
    %8930 = vmatprep.subr.bf16.mxu0 %v8294
    %8931 = vmatpush1.bf16.msra.mxu0 %v8293
    %8932 = vmatprep.subr.bf16.mxu0 %v8298
    %8933 = vmatpush1.bf16.msra.mxu0 %v8297
    %8934 = vmatprep.subr.bf16.mxu0 %v8302
    %8935 = vmatpush1.bf16.msra.mxu0 %v8301
    %8936 = vmatprep.subr.bf16.mxu0 %v8306
    %8937 = vmatpush1.bf16.msra.mxu0 %v8305
    %8938 = vmatprep.subr.bf16.mxu0 %v8310
    %8939 = vmatpush1.bf16.msra.mxu0 %v8309
    %8940 = vmatprep.subr.bf16.mxu0 %v8314
    %8941 = vmatpush1.bf16.msra.mxu0 %v8313
    %8942 = vmatprep.subr.bf16.mxu0 %v8318
    %8943 = vmatpush1.bf16.msra.mxu0 %v8317
    %8944 = vmatprep.subr.bf16.mxu0 %v8322
    %8945 = vmatpush1.bf16.msra.mxu0 %v8321
    %8946 = vmatprep.subr.bf16.mxu0 %v8326
    %8947 = vmatpush1.bf16.msra.mxu0 %v8325
    %8948 = vmatprep.mubr.bf16.mxu0 %v7148
    %8949 = vmatmul.mubr.bf16.gmra.mrb[0].mxu0 %v7147
    %v8950 = vpop.f32.mrb[0].mxu0
    %v8951 = vadd.f32 %v8910, %v8950
    %v8952 = vpop.f32.mrb[0].mxu0
    %v8953 = vadd.f32 %v8912, %v8952
    %v8954 = vpop.f32.mrb[0].mxu0
    %v8955 = vpop.f32.mrb[0].mxu0
    %8956 = vdwg.mxu0
    %8957 = vmatprep.subr.bf16.mxu0 %v8330
    %8958 = vmatpush1.bf16.msra.mxu0 %v8329
    %8959 = vmatprep.subr.bf16.mxu0 %v8334
    %8960 = vmatpush1.bf16.msra.mxu0 %v8333
    %8961 = vmatprep.subr.bf16.mxu0 %v8338
    %8962 = vmatpush1.bf16.msra.mxu0 %v8337
    %8963 = vmatprep.subr.bf16.mxu0 %v8342
    %8964 = vmatpush1.bf16.msra.mxu0 %v8341
    %8965 = vmatprep.subr.bf16.mxu0 %v8346
    %8966 = vmatpush1.bf16.msra.mxu0 %v8345
    %8967 = vmatprep.subr.bf16.mxu0 %v8350
    %8968 = vmatpush1.bf16.msra.mxu0 %v8349
    %8969 = vmatprep.subr.bf16.mxu0 %v8354
    %8970 = vmatpush1.bf16.msra.mxu0 %v8353
    %8971 = vmatprep.subr.bf16.mxu0 %v8358
    %8972 = vmatpush1.bf16.msra.mxu0 %v8357
    %8973 = vmatprep.subr.bf16.mxu0 %v8362
    %8974 = vmatpush1.bf16.msra.mxu0 %v8361
    %8975 = vmatprep.subr.bf16.mxu0 %v8366
    %8976 = vmatpush1.bf16.msra.mxu0 %v8365
    %8977 = vmatprep.subr.bf16.mxu0 %v8370
    %8978 = vmatpush1.bf16.msra.mxu0 %v8369
    %8979 = vmatprep.subr.bf16.mxu0 %v8374
    %8980 = vmatpush1.bf16.msra.mxu0 %v8373
    %8981 = vmatprep.subr.bf16.mxu0 %v8378
    %8982 = vmatpush1.bf16.msra.mxu0 %v8377
    %8983 = vmatprep.subr.bf16.mxu0 %v8382
    %8984 = vmatpush1.bf16.msra.mxu0 %v8381
    %8985 = vmatprep.subr.bf16.mxu0 %v8386
    %8986 = vmatpush1.bf16.msra.mxu0 %v8385
    %8987 = vmatprep.subr.bf16.mxu0 %v8390
    %8988 = vmatpush1.bf16.msra.mxu0 %v8389
    %8989 = vmatprep.mubr.bf16.mxu0 %v7150
    %8990 = vmatmul.mubr.bf16.gmra.mrb[0].mxu0 %v7149
    %v8991 = vpop.f32.mrb[0].mxu0
    %v8992 = vadd.f32 %v8951, %v8991
    %v8993 = vpop.f32.mrb[0].mxu0
    %v8994 = vadd.f32 %v8953, %v8993
    %v8995 = vpop.f32.mrb[0].mxu0
    %v8996 = vpop.f32.mrb[0].mxu0
    %8997 = vdwg.mxu0
    %8998 = vmatprep.subr.bf16.mxu0 %v8394
    %8999 = vmatpush1.bf16.msra.mxu0 %v8393
    %9000 = vmatprep.subr.bf16.mxu0 %v8398
    %9001 = vmatpush1.bf16.msra.mxu0 %v8397
    %9002 = vmatprep.subr.bf16.mxu0 %v8402
    %9003 = vmatpush1.bf16.msra.mxu0 %v8401
    %9004 = vmatprep.subr.bf16.mxu0 %v8406
    %9005 = vmatpush1.bf16.msra.mxu0 %v8405
    %9006 = vmatprep.subr.bf16.mxu0 %v8410
    %9007 = vmatpush1.bf16.msra.mxu0 %v8409
    %9008 = vmatprep.subr.bf16.mxu0 %v8414
    %9009 = vmatpush1.bf16.msra.mxu0 %v8413
    %9010 = vmatprep.subr.bf16.mxu0 %v8418
    %9011 = vmatpush1.bf16.msra.mxu0 %v8417
    %9012 = vmatprep.subr.bf16.mxu0 %v8422
    %9013 = vmatpush1.bf16.msra.mxu0 %v8421
    %9014 = vmatprep.subr.bf16.mxu0 %v8426
    %9015 = vmatpush1.bf16.msra.mxu0 %v8425
    %9016 = vmatprep.subr.bf16.mxu0 %v8430
    %9017 = vmatpush1.bf16.msra.mxu0 %v8429
    %9018 = vmatprep.subr.bf16.mxu0 %v8434
    %9019 = vmatpush1.bf16.msra.mxu0 %v8433
    %9020 = vmatprep.subr.bf16.mxu0 %v8438
    %9021 = vmatpush1.bf16.msra.mxu0 %v8437
    %9022 = vmatprep.subr.bf16.mxu0 %v8442
    %9023 = vmatpush1.bf16.msra.mxu0 %v8441
    %9024 = vmatprep.subr.bf16.mxu0 %v8446
    %9025 = vmatpush1.bf16.msra.mxu0 %v8445
    %9026 = vmatprep.subr.bf16.mxu0 %v8450
    %9027 = vmatpush1.bf16.msra.mxu0 %v8449
    %9028 = vmatprep.subr.bf16.mxu0 %v8454
    %9029 = vmatpush1.bf16.msra.mxu0 %v8453
    %9030 = vmatprep.mubr.bf16.mxu0 %v7152
    %9031 = vmatmul.mubr.bf16.gmra.mrb[0].mxu0 %v7151
    %v9032 = vpop.f32.mrb[0].mxu0
    %v9033 = vadd.f32 %v8992, %v9032
    %v9034 = vpop.f32.mrb[0].mxu0
    %v9035 = vadd.f32 %v8994, %v9034
    %v9036 = vpop.f32.mrb[0].mxu0
    %v9037 = vpop.f32.mrb[0].mxu0
    %9038 = vdwg.mxu0
    %v9039 = vmul.f32 %v8869, 0.5
    %v9040 = vmul.f32 %v8871, 0.5
    %v9041 = vmul.f32 %v9033, 0.5
    %v9042 = vmul.f32 %v9035, 0.5
    %v9043 = vtanh.pop %v9039
    %v9044 = vtanh.pop %v9040
    %v9045 = vtanh.pop %v9041
    %v9046 = vtanh.pop %v9042
    %v9047 = vadd.f32 %v9043, 1.0
    %v9048 = vadd.f32 %v9044, 1.0
    %v9049 = vadd.f32 %v9045, 1.0
    %v9050 = vadd.f32 %v9046, 1.0
    %v9051 = vmul.f32 %v9047, 0.5
    %v9052 = vmul.f32 %v9048, 0.5
    %v9053 = vmul.f32 %v9049, 0.5
    %v9054 = vmul.f32 %v9050, 0.5
    %9055 = vst [vmem:[#allocation13] sm:$0xff] %v9051
    %9056 = vst [vmem:[#allocation13 + $0x8] sm:$0xff] %v9052
    %9057 = vst [vmem:[#allocation13 + $0x10] sm:$0xff] %v9053
    %9058 = vst [vmem:[#allocation13 + $0x18] sm:$0xff] %v9054
    %vm9059 = vcmask 523264
    %9060 = vst.msk [vmem:[#allocation14] sm:$0xff] %vm9059, %v4630
    %9062 = vrot.lane.b32.xlu0 %v4648, 64
    %v9063 = vpop.permute.xlu0 %9062
    %vm9065 = vcmask 785920
    %9066 = vst.msk [vmem:[#allocation14] sm:$0xff] %vm9065, %v9063
    %vm9067 = vcmask 1048320
    %9068 = vst.msk [vmem:[#allocation14] sm:$0xff] %vm9067, 0.0
    // Predicated region
    $region98: #{tpu_custom_call.1} parent=1 // pred_check
      _
    $region99: #{tpu_custom_call.1} parent=1 // pred_check_branch
      %9070 = sbr.rel (0) target = $region101
    $region100: #{tpu_custom_call.1} parent=1 // pred_region
      %s9072 = ssub.s32 512, 512
      %9073 = vsyncadd [#allocation4], %s9072
      %s9075 = sshll.u32 [#allocation13], 4
      %s9076 = int_to_ptr.vmem [resolvable:$true] %s9075
      %9078 = dma.vmem_to_hbm [thread:$0]  %s9076, 512, %s18, [#allocation4]
    $region101: #{tpu_custom_call.1} parent=1 // pred_fallthru
      _
    // Predicated region
    $region102: #{tpu_custom_call.1} parent=1 // pred_check
      _
    $region103: #{tpu_custom_call.1} parent=1 // pred_check_branch
      %9080 = sbr.rel (0) target = $region105
    $region104: #{tpu_custom_call.1} parent=1 // pred_region
      %s9082 = ssub.s32 128, 128
      %9083 = vsyncadd [#allocation15], %s9082
      %s9085 = sshll.u32 [#allocation14], 4
      %s9086 = int_to_ptr.vmem [resolvable:$true] %s9085
      %9088 = dma.vmem_to_hbm [thread:$0]  %s9086, 128, %s19, [#allocation15]
    $region105: #{tpu_custom_call.1} parent=1 // pred_fallthru
      _
    // Predicated region
    $region106: #{tpu_custom_call.1} parent=1 // pred_check
      _
    $region107: #{tpu_custom_call.1} parent=1 // pred_check_branch
      %9090 = sbr.rel (0) target = $region109
    $region108: #{tpu_custom_call.1} parent=1 // pred_region
      %9091 = dma.done [#allocation4], 512
    $region109: #{tpu_custom_call.1} parent=1 // pred_fallthru
      _
    // Predicated region
    $region110: #{tpu_custom_call.1} parent=1 // pred_check
      _
    $region111: #{tpu_custom_call.1} parent=1 // pred_check_branch
      %9093 = sbr.rel (0) target = $region113
    $region112: #{tpu_custom_call.1} parent=1 // pred_region
      %9094 = dma.done [#allocation15], 128
    $region113: #{tpu_custom_call.1} parent=1 // pred_fallthru
      _
    %9095 = vsyncpa [#allocation3], 1
    %9096 = vsyncpa [#allocation6], 1
    %9097 = vsyncpa [#allocation9], 1
    %9098 = vsyncpa [#allocation12], 1
    %9099 = vsyncpa [#allocation4], 1
    %9100 = vsyncpa [#allocation15], 1

</llo_original>
